<compile_context>
chip_gen: v7x
topology: tpu7x:2x2x1
jax: 0.10.0
libtpu: 0.0.40
codegen_flags: <defaults>
</compile_context>

<pallas_src>
import functools
import numpy as np
import jax
import jax.numpy as jnp
from jax import lax
from jax.experimental import pallas as pl
from jax.experimental.pallas import tpu as pltpu


# Set to jnp.bfloat16 on v6e / v7x at production shapes (f32 accumulation is
# kept via preferred_element_type).  f32 preserves PyTorch fp32 numerics here.
_MM_DTYPE = jnp.float32


# ----------------------------- in-kernel helpers -----------------------------

def _mm(a, b):
    """MXU matmul, 'nn' form, f32 accumulation."""
    return jnp.dot(a.astype(_MM_DTYPE), b.astype(_MM_DTYPE),
                   preferred_element_type=jnp.float32)


def _mm_nt(a, b):
    """a @ b.T via dot_general 'nt' form (no transpose materialized)."""
    return lax.dot_general(
        a.astype(_MM_DTYPE), b.astype(_MM_DTYPE),
        (((1,), (1,)), ((), ())), preferred_element_type=jnp.float32)


def _layernorm(x, g, b, eps=1e-5):
    mu = jnp.mean(x, axis=-1, keepdims=True)
    xc = x - mu
    var = jnp.mean(xc * xc, axis=-1, keepdims=True)
    return xc * lax.rsqrt(var + eps) * g + b


def _gelu_tanh(x):
    # TODO(synk): F.gelu default is exact erf; tanh approximation used.
    c = np.float32(np.sqrt(2.0 / np.pi))
    return 0.5 * x * (1.0 + jnp.tanh(c * (x + 0.044715 * (x * x * x))))


def _tile_heads(x2, bb, l, h):
    """(bb*l, dm) rows ordered (b, l) -> (bb*h*l, dm) rows ordered (b, h, l)."""
    dm = x2.shape[-1]
    x3 = x2.reshape(bb, l, dm)
    x3 = jnp.concatenate([x3] * h, axis=1)          # sublane-aligned copies
    return x3.reshape(bb * h * l, dm)


def _mha_core(q2, k2, v2, w_o, b_o, *, bb, lq, lk, h, qmask, negmask):
    """De-looped TSLib AttentionLayer (eval mode).

    q2 (bb*lq, dm), k2/v2 (bb*lk, dm); heads and batch stacked along sublanes.
    qmask: (bb*h*lq, dm) 0/1 head-lane mask (restricts contraction per head,
    also selects the per-head rows of the output projection).
    negmask: (bb*h*lq, bb*h*lk) additive mask, 0 on (b,h)-diagonal blocks,
    -1e30 elsewhere.  Returns (bb, lq, dm)."""
    dm = q2.shape[-1]
    e = dm // h
    q_t = _tile_heads(q2, bb, lq, h) * qmask        # (bb*h*lq, dm)
    k_t = _tile_heads(k2, bb, lk, h)                # (bb*h*lk, dm)
    v_t = _tile_heads(v2, bb, lk, h)

    s = _mm_nt(q_t, k_t) * np.float32(1.0 / np.sqrt(e)) + negmask
    m = jnp.max(s, axis=-1, keepdims=True)
    p = jnp.exp(s - m)
    p = p / jnp.sum(p, axis=-1, keepdims=True)      # exact softmax (torch parity)
    o = _mm(p, v_t)                                 # (bb*h*lq, dm)
    y = _mm(o * qmask, w_o)                         # per-head W_o contributions
    y3 = y.reshape(bb, h * lq, dm)
    acc = y3[:, 0:lq, :]
    for j in range(1, h):                           # sum head groups (VPU adds)
        acc = acc + y3[:, j * lq:(j + 1) * lq, :]
    return acc + b_o


# ----------------------------- fused forward kernel -----------------------------

def _transformer2_kernel(
        # per-block activations
        x_lc_ref, x_cl_ref, mark_ref,
        # embedding / layout constants
        jpos_lc_ref, jpos_cl_ref, embed_w_ref, pos_ld_ref,
        eye_d_ref, eye_l_ref,
        qmask_self_ref, qmask_e1_ref, qmask_e2_ref,
        negm_self_ref, negm_e1_ref, negm_e2_ref,
        # encoder1 cross-attention + norm1
        e1_wqkv_ref, e1_bqkv_ref, e1_wo_ref, e1_bo_ref, n1_g_ref, n1_b_ref,
        # main encoder stack
        enc_wqkv_ref, enc_bqkv_ref, enc_wo_ref, enc_bo_ref,
        enc_w1_ref, enc_b1_ref, enc_w2_ref, enc_b2_ref,
        enc_ln1g_ref, enc_ln1b_ref, enc_ln2g_ref, enc_ln2b_ref,
        # encoder2 cross-attention back onto channel tokens
        e2_wqkv_ref, e2_bqkv_ref, e2_wo_ref, e2_bo_ref,
        # prediction head
        pred_w_ref, pred_b_ref,
        # output
        out_ref,
        *, n_heads, layer1, e_layers):
    bb, L, C = x_lc_ref.shape
    D = pos_ld_ref.shape[1]
    H = n_heads

    x_lc = x_lc_ref[...]                                    # (bb, L, C)
    x_cl = x_cl_ref[...]                                    # (bb, C, L)

    # ---- non-stationary normalization (stats over time), in both layouts ----
    mean_lc = jnp.mean(x_lc, axis=1, keepdims=True)         # (bb, 1, C)
    xc = x_lc - mean_lc
    std_lc = jnp.sqrt(jnp.mean(xc * xc, axis=1, keepdims=True) + 1e-5)
    xn_lc = xc / std_lc
    mean_cl = jnp.mean(x_cl, axis=2, keepdims=True)         # (bb, C, 1)
    xc2 = x_cl - mean_cl
    std_cl = jnp.sqrt(jnp.mean(xc2 * xc2, axis=2, keepdims=True) + 1e-5)
    xn_cl = xc2 / std_cl

    # ---- absolute channel position embedding (juedui_pos) ----
    x_blc = xn_lc + jpos_lc_ref[...]                        # (bb, L, C)
    x_bcl = xn_cl + jpos_cl_ref[...]                        # (bb, C, L)  residual stream

    # ---- DataEmbedding: circular Conv1d(k=3) + timeF, ONE fused matmul ----
    # circular shifts = static slices + concat (no MXU, no roll-op risk)
    x_prev = jnp.concatenate([x_blc[:, L - 1:, :], x_blc[:, :L - 1, :]], axis=1)
    x_next = jnp.concatenate([x_blc[:, 1:, :], x_blc[:, :1, :]], axis=1)
    taps = jnp.concatenate([x_prev, x_blc, x_next, mark_ref[...]], axis=2)
    emb2 = _mm(taps.reshape(bb * L, taps.shape[-1]), embed_w_ref[...])
    enc_out = emb2.reshape(bb, L, D) + pos_ld_ref[...]      # (bb, L, D)

    eye_d = eye_d_ref[...]
    eye_l = eye_l_ref[...]
    qmask_self = qmask_self_ref[...]
    qmask_e1 = qmask_e1_ref[...]
    qmask_e2 = qmask_e2_ref[...]
    negm_self = negm_self_ref[...]
    negm_e1 = negm_e1_ref[...]
    negm_e2 = negm_e2_ref[...]

    # ---- encoder1: d_model tokens (length-L features) attend over channels ----
    enc_dl = jnp.stack([_mm_nt(eye_d, enc_out[b]) for b in range(bb)], axis=0)
    for i in range(layer1):
        w = e1_wqkv_ref[i]                                  # (L, 3L) = [Wq|Wk|Wv]
        bq = e1_bqkv_ref[i]                                 # (1, 3L)
        q2 = _mm(enc_dl.reshape(bb * D, L), w[:, :L]) + bq[:, :L]
        kv2 = _mm(x_bcl.reshape(bb * C, L), w[:, L:]) + bq[:, L:]
        a3 = _mha_core(q2, kv2[:, :L], kv2[:, L:], e1_wo_ref[i], e1_bo_ref[i],
                       bb=bb, lq=D, lk=C, h=H, qmask=qmask_e1, negmask=negm_e1)
        enc_dl = _layernorm(enc_dl + a3, n1_g_ref[i], n1_b_ref[i])
    enc_out = jnp.stack([_mm_nt(eye_l, enc_dl[b]) for b in range(bb)], axis=0)

    # ---- main encoder stack interleaved with encoder2 cross-attention ----
    for i in range(e_layers):
        # EncoderLayer: self-attn + LN + FFN(gelu) + LN
        qkv = _mm(enc_out.reshape(bb * L, D), enc_wqkv_ref[i]) + enc_bqkv_ref[i]
        a3 = _mha_core(qkv[:, :D], qkv[:, D:2 * D], qkv[:, 2 * D:],
                       enc_wo_ref[i], enc_bo_ref[i],
                       bb=bb, lq=L, lk=L, h=H, qmask=qmask_self, negmask=negm_self)
        xln = _layernorm(enc_out + a3, enc_ln1g_ref[i], enc_ln1b_ref[i])
        y2 = _gelu_tanh(_mm(xln.reshape(bb * L, D), enc_w1_ref[i]) + enc_b1_ref[i])
        y2 = _mm(y2, enc_w2_ref[i]) + enc_b2_ref[i]
        enc_out = _layernorm(xln + y2.reshape(bb, L, D),
                             enc_ln2g_ref[i], enc_ln2b_ref[i])

        # encoder2: channel tokens attend over the d_model tokens
        w2 = e2_wqkv_ref[i]
        b2 = e2_bqkv_ref[i]
        q2 = _mm(x_bcl.reshape(bb * C, L), w2[:, :L]) + b2[:, :L]
        enc_dl = jnp.stack([_mm_nt(eye_d, enc_out[b]) for b in range(bb)], axis=0)
        kv2 = _mm(enc_dl.reshape(bb * D, L), w2[:, L:]) + b2[:, L:]
        a3 = _mha_core(q2, kv2[:, :L], kv2[:, L:], e2_wo_ref[i], e2_bo_ref[i],
                       bb=bb, lq=C, lk=D, h=H, qmask=qmask_e2, negmask=negm_e2)
        x_bcl = x_bcl + a3

    # ---- prediction head (L -> P) + de-normalization, stored as (C, P) ----
    dec2 = _mm(x_bcl.reshape(bb * C, L), pred_w_ref[...]) + pred_b_ref[...]
    P = dec2.shape[-1]
    out_ref[...] = dec2.reshape(bb, C, P) * std_cl + mean_cl


# ----------------------------- host-side constants -----------------------------

def _head_lane_qmask(bb, h, lq, dm):
    """0/1 mask, rows (b,h,q): lane d kept iff d belongs to head h."""
    e = dm // h
    m = np.zeros((h, lq, dm), np.float32)
    for i in range(h):
        m[i, :, i * e:(i + 1) * e] = 1.0
    m = m.reshape(h * lq, dm)
    return jnp.asarray(np.tile(m, (bb, 1)))


def _block_diag_neg_mask(bb, h, lq, lk):
    """Additive mask: 0 on matching (batch, head) blocks, -1e30 elsewhere."""
    rb = np.repeat(np.arange(bb), h * lq)[:, None]
    rh = np.tile(np.repeat(np.arange(h), lq), bb)[:, None]
    cb = np.repeat(np.arange(bb), h * lk)[None, :]
    ch = np.tile(np.repeat(np.arange(h), lk), bb)[None, :]
    same = (rb == cb) & (rh == ch)
    return jnp.asarray(np.where(same, 0.0, -1e30).astype(np.float32))


def _pick_block_b(batch, max_bb=8):
    """Largest divisor of batch <= min(8, batch//2): fills sublanes while
    keeping >=2 parallel grid blocks for the v7x TensorCore split."""
    target = max(1, min(max_bb, batch // 2 if batch >= 2 else 1))
    for bb in range(target, 0, -1):
        if batch % bb == 0:
            return bb
    return 1


# ----------------------------- wrapper -----------------------------

def model_forward(params, cfg, x_enc, x_mark_enc, x_dec=None, x_mark_dec=None):
    """forecast() path of Model; one fused Pallas kernel, grid = batch blocks."""
    B, L, C = x_enc.shape
    P = cfg['pred_len']
    D = cfg['d_model']
    H = cfg['n_heads']
    M = x_mark_enc.shape[-1]

    bb = _pick_block_b(B)

    x_lc = x_enc.astype(jnp.float32)
    x_cl = jnp.transpose(x_lc, (0, 2, 1))              # pre-transposed input copy
    mark = x_mark_enc.astype(jnp.float32)

    jpos_cl = params['juedui_pos'][1:C + 1]            # (C, L)
    jpos_lc = jpos_cl.T                                # (L, C)
    # fused [conv tap0 | tap1 | tap2 | timeF] embedding weight, (3C+M, D)
    embed_w = jnp.concatenate(
        [params['conv_w'].reshape(3 * C, D), params['timef_w']], axis=0)

    eye_d = jnp.eye(D, dtype=jnp.float32)
    eye_l = jnp.eye(L, dtype=jnp.float32)
    qmask_self = _head_lane_qmask(bb, H, L, D)
    qmask_e1 = _head_lane_qmask(bb, H, D, L)
    qmask_e2 = _head_lane_qmask(bb, H, C, L)
    negm_self = _block_diag_neg_mask(bb, H, L, L)
    negm_e1 = _block_diag_neg_mask(bb, H, D, C)
    negm_e2 = _block_diag_neg_mask(bb, H, C, D)

    args = (
        x_lc, x_cl, mark,
        jpos_lc, jpos_cl, embed_w, params['pos'],
        eye_d, eye_l, qmask_self, qmask_e1, qmask_e2,
        negm_self, negm_e1, negm_e2,
        params['e1_wqkv'], params['e1_bqkv'], params['e1_wo'], params['e1_bo'],
        params['n1_g'], params['n1_b'],
        params['enc_wqkv'], params['enc_bqkv'], params['enc_wo'], params['enc_bo'],
        params['enc_w1'], params['enc_b1'], params['enc_w2'], params['enc_b2'],
        params['enc_ln1g'], params['enc_ln1b'], params['enc_ln2g'], params['enc_ln2b'],
        params['e2_wqkv'], params['e2_bqkv'], params['e2_wo'], params['e2_bo'],
        params['pred_w'], params['pred_b'],
    )

    def const_spec(a):
        zeros = (0,) * a.ndim
        return pl.BlockSpec(a.shape, lambda g, _z=zeros: _z)

    in_specs = ([pl.BlockSpec((bb, L, C), lambda g: (g, 0, 0)),
                 pl.BlockSpec((bb, C, L), lambda g: (g, 0, 0)),
                 pl.BlockSpec((bb, L, M), lambda g: (g, 0, 0))]
                + [const_spec(a) for a in args[3:]])

    kernel = functools.partial(_transformer2_kernel, n_heads=H,
                               layer1=cfg['layer1'], e_layers=cfg['e_layers'])

    out_cp = pl.pallas_call(
        kernel,
        out_shape=jax.ShapeDtypeStruct((B, C, P), jnp.float32),
        grid=(B // bb,),
        in_specs=in_specs,
        out_specs=pl.BlockSpec((bb, C, P), lambda g: (g, 0, 0)),
        compiler_params=pltpu.CompilerParams(
            dimension_semantics=("parallel",),      # v7x: 2 TCs split the blocks
            vmem_limit_bytes=32 * 1024 * 1024),
    )(*args)
    # kernel emits (B, C, P); final permute to (B, P, C) done in XLA (cheap)
    return jnp.transpose(out_cp, (0, 2, 1))


# ----------------------------- parameters -----------------------------

def sinusoidal_pos(L, D):
    pos = np.arange(L, dtype=np.float32)[:, None]
    div = np.exp(np.arange(0, D, 2, dtype=np.float32) * -(np.log(10000.0) / D))
    pe = np.zeros((L, D), np.float32)
    pe[:, 0::2] = np.sin(pos * div)
    pe[:, 1::2] = np.cos(pos * div)
    return jnp.asarray(pe)


def init_params(key, cfg):
    L, C, D = cfg['seq_len'], cfg['enc_in'], cfg['d_model']
    F = cfg['d_ff']
    M = cfg['mark_dim']
    n1, ne, P = cfg['layer1'], cfg['e_layers'], cfg['pred_len']
    keys = iter(jax.random.split(key, 512))

    def rnd(*shape):
        return 0.05 * jax.random.normal(next(keys), shape, jnp.float32)

    p = {}
    p['juedui_pos'] = rnd(1000, L)
    # TODO(synk): real PyTorch Conv1d weights of shape (D, C, 3) must be
    # permuted to (3, C, D) (tap-major, in-channel, out-channel) before use.
    p['conv_w'] = rnd(3, C, D)
    p['timef_w'] = rnd(M, D)
    p['pos'] = sinusoidal_pos(L, D)

    p['e1_wqkv'] = rnd(n1, L, 3 * L)      # [Wq | Wk | Wv], (in, out)
    p['e1_bqkv'] = rnd(n1, 1, 3 * L)
    p['e1_wo'] = rnd(n1, L, L)
    p['e1_bo'] = rnd(n1, 1, L)
    p['n1_g'] = jnp.ones((n1, 1, L), jnp.float32)
    p['n1_b'] = jnp.zeros((n1, 1, L), jnp.float32)

    p['enc_wqkv'] = rnd(ne, D, 3 * D)
    p['enc_bqkv'] = rnd(ne, 1, 3 * D)
    p['enc_wo'] = rnd(ne, D, D)
    p['enc_bo'] = rnd(ne, 1, D)
    p['enc_w1'] = rnd(ne, D, F)
    p['enc_b1'] = rnd(ne, 1, F)
    p['enc_w2'] = rnd(ne, F, D)
    p['enc_b2'] = rnd(ne, 1, D)
    p['enc_ln1g'] = jnp.ones((ne, 1, D), jnp.float32)
    p['enc_ln1b'] = jnp.zeros((ne, 1, D), jnp.float32)
    p['enc_ln2g'] = jnp.ones((ne, 1, D), jnp.float32)
    p['enc_ln2b'] = jnp.zeros((ne, 1, D), jnp.float32)

    p['e2_wqkv'] = rnd(ne, L, 3 * L)
    p['e2_bqkv'] = rnd(ne, 1, 3 * L)
    p['e2_wo'] = rnd(ne, L, L)
    p['e2_bo'] = rnd(ne, 1, L)

    p['pred_w'] = rnd(L, P)
    p['pred_b'] = rnd(1, P)
    return p


# ----------------------------- main -----------------------------

if __name__ == "__main__":
    cfg = dict(seq_len=16, pred_len=8, label_len=8, enc_in=8,
               d_model=32, n_heads=4, d_ff=64, e_layers=2, layer1=1, mark_dim=4)

    key = jax.random.PRNGKey(0)
    kp, kx, km = jax.random.split(key, 3)
    params = init_params(kp, cfg)

    B = 2
    x_enc = jax.random.normal(kx, (B, cfg['seq_len'], cfg['enc_in']), jnp.float32)
    x_mark_enc = jax.random.normal(km, (B, cfg['seq_len'], cfg['mark_dim']), jnp.float32)
    # decoder inputs are unused on the forecast path but kept for signature parity
    x_dec = jnp.zeros((B, cfg['label_len'] + cfg['pred_len'], cfg['enc_in']), jnp.float32)
    x_mark_dec = jnp.zeros((B, cfg['label_len'] + cfg['pred_len'], cfg['mark_dim']), jnp.float32)

    out = model_forward(params, cfg, x_enc, x_mark_enc, x_dec, x_mark_dec)
    out = jax.block_until_ready(out)
    assert out.shape == (B, cfg['pred_len'], cfg['enc_in']), out.shape
    assert bool(jnp.all(jnp.isfinite(out)))
    print("KERNEL_OK")
</pallas_src>

<mosaic_0001>
module attributes {stable_mosaic.version = 11 : i64} {
  func.func @_transformer2_kernel(%arg0: i32, %arg1: memref<1x16x8xf32, #tpu.memory_space<vmem>>, %arg2: memref<1x8x16xf32, #tpu.memory_space<vmem>>, %arg3: memref<1x16x4xf32, #tpu.memory_space<vmem>>, %arg4: memref<16x8xf32, #tpu.memory_space<vmem>>, %arg5: memref<8x16xf32, #tpu.memory_space<vmem>>, %arg6: memref<28x32xf32, #tpu.memory_space<vmem>>, %arg7: memref<16x32xf32, #tpu.memory_space<vmem>>, %arg8: memref<32x32xf32, #tpu.memory_space<vmem>>, %arg9: memref<16x16xf32, #tpu.memory_space<vmem>>, %arg10: memref<64x32xf32, #tpu.memory_space<vmem>>, %arg11: memref<128x16xf32, #tpu.memory_space<vmem>>, %arg12: memref<32x16xf32, #tpu.memory_space<vmem>>, %arg13: memref<64x64xf32, #tpu.memory_space<vmem>>, %arg14: memref<128x32xf32, #tpu.memory_space<vmem>>, %arg15: memref<32x128xf32, #tpu.memory_space<vmem>>, %arg16: memref<1x16x48xf32, #tpu.memory_space<vmem>>, %arg17: memref<1x1x48xf32, #tpu.memory_space<vmem>>, %arg18: memref<1x16x16xf32, #tpu.memory_space<vmem>>, %arg19: memref<1x1x16xf32, #tpu.memory_space<vmem>>, %arg20: memref<1x1x16xf32, #tpu.memory_space<vmem>>, %arg21: memref<1x1x16xf32, #tpu.memory_space<vmem>>, %arg22: memref<2x32x96xf32, #tpu.memory_space<vmem>>, %arg23: memref<2x1x96xf32, #tpu.memory_space<vmem>>, %arg24: memref<2x32x32xf32, #tpu.memory_space<vmem>>, %arg25: memref<2x1x32xf32, #tpu.memory_space<vmem>>, %arg26: memref<2x32x64xf32, #tpu.memory_space<vmem>>, %arg27: memref<2x1x64xf32, #tpu.memory_space<vmem>>, %arg28: memref<2x64x32xf32, #tpu.memory_space<vmem>>, %arg29: memref<2x1x32xf32, #tpu.memory_space<vmem>>, %arg30: memref<2x1x32xf32, #tpu.memory_space<vmem>>, %arg31: memref<2x1x32xf32, #tpu.memory_space<vmem>>, %arg32: memref<2x1x32xf32, #tpu.memory_space<vmem>>, %arg33: memref<2x1x32xf32, #tpu.memory_space<vmem>>, %arg34: memref<2x16x48xf32, #tpu.memory_space<vmem>>, %arg35: memref<2x1x48xf32, #tpu.memory_space<vmem>>, %arg36: memref<2x16x16xf32, #tpu.memory_space<vmem>>, %arg37: memref<2x1x16xf32, #tpu.memory_space<vmem>>, %arg38: memref<16x8xf32, #tpu.memory_space<vmem>>, %arg39: memref<1x8xf32, #tpu.memory_space<vmem>>, %arg40: memref<1x8x8xf32, #tpu.memory_space<vmem>>) attributes {dimension_semantics = [#tpu.dimension_semantics<parallel>], iteration_bounds = array<i64: 2>, scalar_prefetch = 0 : i64, scratch_operands = 0 : i64, tpu.core_type = #tpu.core_type<tc>, window_params = [{transform_indices = @transform_0, window_bounds = array<i64: 1, 16, 8>}, {transform_indices = @transform_1, window_bounds = array<i64: 1, 8, 16>}, {transform_indices = @transform_2, window_bounds = array<i64: 1, 16, 4>}, {pipeline_mode = #tpu.pipeline_mode<synchronous>, transform_indices = @transform_3, window_bounds = array<i64: 16, 8>}, {pipeline_mode = #tpu.pipeline_mode<synchronous>, transform_indices = @transform_4, window_bounds = array<i64: 8, 16>}, {pipeline_mode = #tpu.pipeline_mode<synchronous>, transform_indices = @transform_5, window_bounds = array<i64: 28, 32>}, {pipeline_mode = #tpu.pipeline_mode<synchronous>, transform_indices = @transform_6, window_bounds = array<i64: 16, 32>}, {pipeline_mode = #tpu.pipeline_mode<synchronous>, transform_indices = @transform_7, window_bounds = array<i64: 32, 32>}, {pipeline_mode = #tpu.pipeline_mode<synchronous>, transform_indices = @transform_8, window_bounds = array<i64: 16, 16>}, {pipeline_mode = #tpu.pipeline_mode<synchronous>, transform_indices = @transform_9, window_bounds = array<i64: 64, 32>}, {pipeline_mode = #tpu.pipeline_mode<synchronous>, transform_indices = @transform_10, window_bounds = array<i64: 128, 16>}, {pipeline_mode = #tpu.pipeline_mode<synchronous>, transform_indices = @transform_11, window_bounds = array<i64: 32, 16>}, {pipeline_mode = #tpu.pipeline_mode<synchronous>, transform_indices = @transform_12, window_bounds = array<i64: 64, 64>}, {pipeline_mode = #tpu.pipeline_mode<synchronous>, transform_indices = @transform_13, window_bounds = array<i64: 128, 32>}, {pipeline_mode = #tpu.pipeline_mode<synchronous>, transform_indices = @transform_14, window_bounds = array<i64: 32, 128>}, {pipeline_mode = #tpu.pipeline_mode<synchronous>, transform_indices = @transform_15, window_bounds = array<i64: 1, 16, 48>}, {pipeline_mode = #tpu.pipeline_mode<synchronous>, transform_indices = @transform_16, window_bounds = array<i64: 1, 1, 48>}, {pipeline_mode = #tpu.pipeline_mode<synchronous>, transform_indices = @transform_17, window_bounds = array<i64: 1, 16, 16>}, {pipeline_mode = #tpu.pipeline_mode<synchronous>, transform_indices = @transform_18, window_bounds = array<i64: 1, 1, 16>}, {pipeline_mode = #tpu.pipeline_mode<synchronous>, transform_indices = @transform_19, window_bounds = array<i64: 1, 1, 16>}, {pipeline_mode = #tpu.pipeline_mode<synchronous>, transform_indices = @transform_20, window_bounds = array<i64: 1, 1, 16>}, {pipeline_mode = #tpu.pipeline_mode<synchronous>, transform_indices = @transform_21, window_bounds = array<i64: 2, 32, 96>}, {pipeline_mode = #tpu.pipeline_mode<synchronous>, transform_indices = @transform_22, window_bounds = array<i64: 2, 1, 96>}, {pipeline_mode = #tpu.pipeline_mode<synchronous>, transform_indices = @transform_23, window_bounds = array<i64: 2, 32, 32>}, {pipeline_mode = #tpu.pipeline_mode<synchronous>, transform_indices = @transform_24, window_bounds = array<i64: 2, 1, 32>}, {pipeline_mode = #tpu.pipeline_mode<synchronous>, transform_indices = @transform_25, window_bounds = array<i64: 2, 32, 64>}, {pipeline_mode = #tpu.pipeline_mode<synchronous>, transform_indices = @transform_26, window_bounds = array<i64: 2, 1, 64>}, {pipeline_mode = #tpu.pipeline_mode<synchronous>, transform_indices = @transform_27, window_bounds = array<i64: 2, 64, 32>}, {pipeline_mode = #tpu.pipeline_mode<synchronous>, transform_indices = @transform_28, window_bounds = array<i64: 2, 1, 32>}, {pipeline_mode = #tpu.pipeline_mode<synchronous>, transform_indices = @transform_29, window_bounds = array<i64: 2, 1, 32>}, {pipeline_mode = #tpu.pipeline_mode<synchronous>, transform_indices = @transform_30, window_bounds = array<i64: 2, 1, 32>}, {pipeline_mode = #tpu.pipeline_mode<synchronous>, transform_indices = @transform_31, window_bounds = array<i64: 2, 1, 32>}, {pipeline_mode = #tpu.pipeline_mode<synchronous>, transform_indices = @transform_32, window_bounds = array<i64: 2, 1, 32>}, {pipeline_mode = #tpu.pipeline_mode<synchronous>, transform_indices = @transform_33, window_bounds = array<i64: 2, 16, 48>}, {pipeline_mode = #tpu.pipeline_mode<synchronous>, transform_indices = @transform_34, window_bounds = array<i64: 2, 1, 48>}, {pipeline_mode = #tpu.pipeline_mode<synchronous>, transform_indices = @transform_35, window_bounds = array<i64: 2, 16, 16>}, {pipeline_mode = #tpu.pipeline_mode<synchronous>, transform_indices = @transform_36, window_bounds = array<i64: 2, 1, 16>}, {pipeline_mode = #tpu.pipeline_mode<synchronous>, transform_indices = @transform_37, window_bounds = array<i64: 16, 8>}, {pipeline_mode = #tpu.pipeline_mode<synchronous>, transform_indices = @transform_38, window_bounds = array<i64: 1, 8>}, {transform_indices = @transform_39, window_bounds = array<i64: 1, 8, 8>}]} {
    %c0 = arith.constant 0 : index
    %c0_0 = arith.constant 0 : index
    %c0_1 = arith.constant 0 : index
    %0 = vector.load %arg1[%c0, %c0_0, %c0_1] : memref<1x16x8xf32, #tpu.memory_space<vmem>>, vector<1x16x8xf32>
    %c0_2 = arith.constant 0 : index
    %c0_3 = arith.constant 0 : index
    %c0_4 = arith.constant 0 : index
    %1 = vector.load %arg2[%c0_2, %c0_3, %c0_4] : memref<1x8x16xf32, #tpu.memory_space<vmem>>, vector<1x8x16xf32>
    %cst = arith.constant dense<0.000000e+00> : vector<1x8xf32>
    %2 = vector.multi_reduction <add>, %0, %cst [1] : vector<1x16x8xf32> to vector<1x8xf32>
    %3 = vector.shape_cast %2 : vector<1x8xf32> to vector<1x1x8xf32>
    %cst_5 = arith.constant 1.600000e+01 : f32
    %4 = vector.broadcast %cst_5 : f32 to vector<1x1x8xf32>
    %5 = arith.divf %3, %4 : vector<1x1x8xf32>
    %6 = vector.broadcast %5 : vector<1x1x8xf32> to vector<1x16x8xf32>
    %7 = arith.subf %0, %6 : vector<1x16x8xf32>
    %8 = arith.mulf %7, %7 : vector<1x16x8xf32>
    %cst_6 = arith.constant dense<0.000000e+00> : vector<1x8xf32>
    %9 = vector.multi_reduction <add>, %8, %cst_6 [1] : vector<1x16x8xf32> to vector<1x8xf32>
    %10 = vector.shape_cast %9 : vector<1x8xf32> to vector<1x1x8xf32>
    %cst_7 = arith.constant 1.600000e+01 : f32
    %11 = vector.broadcast %cst_7 : f32 to vector<1x1x8xf32>
    %12 = arith.divf %10, %11 : vector<1x1x8xf32>
    %cst_8 = arith.constant 9.99999974E-6 : f32
    %13 = vector.broadcast %cst_8 : f32 to vector<1x1x8xf32>
    %14 = arith.addf %12, %13 : vector<1x1x8xf32>
    %15 = math.sqrt %14 : vector<1x1x8xf32>
    %16 = vector.broadcast %15 : vector<1x1x8xf32> to vector<1x16x8xf32>
    %17 = arith.divf %7, %16 : vector<1x16x8xf32>
    %cst_9 = arith.constant dense<0.000000e+00> : vector<1x8xf32>
    %18 = vector.multi_reduction <add>, %1, %cst_9 [2] : vector<1x8x16xf32> to vector<1x8xf32>
    %19 = vector.shape_cast %18 : vector<1x8xf32> to vector<1x8x1xf32>
    %cst_10 = arith.constant 1.600000e+01 : f32
    %20 = vector.broadcast %cst_10 : f32 to vector<1x8x1xf32>
    %21 = arith.divf %19, %20 : vector<1x8x1xf32>
    %22 = vector.broadcast %21 : vector<1x8x1xf32> to vector<1x8x16xf32>
    %23 = arith.subf %1, %22 : vector<1x8x16xf32>
    %24 = arith.mulf %23, %23 : vector<1x8x16xf32>
    %cst_11 = arith.constant dense<0.000000e+00> : vector<1x8xf32>
    %25 = vector.multi_reduction <add>, %24, %cst_11 [2] : vector<1x8x16xf32> to vector<1x8xf32>
    %26 = vector.shape_cast %25 : vector<1x8xf32> to vector<1x8x1xf32>
    %cst_12 = arith.constant 1.600000e+01 : f32
    %27 = vector.broadcast %cst_12 : f32 to vector<1x8x1xf32>
    %28 = arith.divf %26, %27 : vector<1x8x1xf32>
    %cst_13 = arith.constant 9.99999974E-6 : f32
    %29 = vector.broadcast %cst_13 : f32 to vector<1x8x1xf32>
    %30 = arith.addf %28, %29 : vector<1x8x1xf32>
    %31 = math.sqrt %30 : vector<1x8x1xf32>
    %32 = vector.broadcast %31 : vector<1x8x1xf32> to vector<1x8x16xf32>
    %33 = arith.divf %23, %32 : vector<1x8x16xf32>
    %c0_14 = arith.constant 0 : index
    %c0_15 = arith.constant 0 : index
    %34 = vector.load %arg4[%c0_14, %c0_15] : memref<16x8xf32, #tpu.memory_space<vmem>>, vector<16x8xf32>
    %35 = vector.shape_cast %34 : vector<16x8xf32> to vector<1x16x8xf32>
    %36 = arith.addf %17, %35 : vector<1x16x8xf32>
    %c0_16 = arith.constant 0 : index
    %c0_17 = arith.constant 0 : index
    %37 = vector.load %arg5[%c0_16, %c0_17] : memref<8x16xf32, #tpu.memory_space<vmem>>, vector<8x16xf32>
    %38 = vector.shape_cast %37 : vector<8x16xf32> to vector<1x8x16xf32>
    %39 = arith.addf %33, %38 : vector<1x8x16xf32>
    %40 = vector.extract_strided_slice %36 {offsets = [0, 15, 0], sizes = [1, 1, 8], strides = [1, 1, 1]} : vector<1x16x8xf32> to vector<1x1x8xf32>
    %41 = vector.extract_strided_slice %36 {offsets = [0, 0, 0], sizes = [1, 15, 8], strides = [1, 1, 1]} : vector<1x16x8xf32> to vector<1x15x8xf32>
    %42 = tpu.concatenate %40, %41 in 1 : vector<1x1x8xf32>, vector<1x15x8xf32> -> vector<1x16x8xf32>
    %43 = vector.extract_strided_slice %36 {offsets = [0, 1, 0], sizes = [1, 15, 8], strides = [1, 1, 1]} : vector<1x16x8xf32> to vector<1x15x8xf32>
    %44 = vector.extract_strided_slice %36 {offsets = [0, 0, 0], sizes = [1, 1, 8], strides = [1, 1, 1]} : vector<1x16x8xf32> to vector<1x1x8xf32>
    %45 = tpu.concatenate %43, %44 in 1 : vector<1x15x8xf32>, vector<1x1x8xf32> -> vector<1x16x8xf32>
    %c0_18 = arith.constant 0 : index
    %c0_19 = arith.constant 0 : index
    %c0_20 = arith.constant 0 : index
    %46 = vector.load %arg3[%c0_18, %c0_19, %c0_20] : memref<1x16x4xf32, #tpu.memory_space<vmem>>, vector<1x16x4xf32>
    %47 = tpu.concatenate %42, %36, %45, %46 in 2 : vector<1x16x8xf32>, vector<1x16x8xf32>, vector<1x16x8xf32>, vector<1x16x4xf32> -> vector<1x16x28xf32>
    %48 = vector.shape_cast %47 : vector<1x16x28xf32> to vector<16x28xf32>
    %c0_21 = arith.constant 0 : index
    %c0_22 = arith.constant 0 : index
    %49 = vector.load %arg6[%c0_21, %c0_22] : memref<28x32xf32, #tpu.memory_space<vmem>>, vector<28x32xf32>
    %cst_23 = arith.constant dense<0.000000e+00> : vector<16x32xf32>
    %50 = tpu.matmul %48, %49, %cst_23 {dimension_numbers = #tpu.dot_dimension_numbers<[1], [0], [0], [1], [0, 0, 1, 1], [], []>} : vector<16x28xf32>, vector<28x32xf32>, vector<16x32xf32> -> vector<16x32xf32>
    %51 = vector.shape_cast %50 : vector<16x32xf32> to vector<1x16x32xf32>
    %c0_24 = arith.constant 0 : index
    %c0_25 = arith.constant 0 : index
    %52 = vector.load %arg7[%c0_24, %c0_25] : memref<16x32xf32, #tpu.memory_space<vmem>>, vector<16x32xf32>
    %53 = vector.shape_cast %52 : vector<16x32xf32> to vector<1x16x32xf32>
    %54 = arith.addf %51, %53 : vector<1x16x32xf32>
    %c0_26 = arith.constant 0 : index
    %c0_27 = arith.constant 0 : index
    %55 = vector.load %arg8[%c0_26, %c0_27] : memref<32x32xf32, #tpu.memory_space<vmem>>, vector<32x32xf32>
    %c0_28 = arith.constant 0 : index
    %c0_29 = arith.constant 0 : index
    %56 = vector.load %arg9[%c0_28, %c0_29] : memref<16x16xf32, #tpu.memory_space<vmem>>, vector<16x16xf32>
    %c0_30 = arith.constant 0 : index
    %c0_31 = arith.constant 0 : index
    %57 = vector.load %arg10[%c0_30, %c0_31] : memref<64x32xf32, #tpu.memory_space<vmem>>, vector<64x32xf32>
    %c0_32 = arith.constant 0 : index
    %c0_33 = arith.constant 0 : index
    %58 = vector.load %arg11[%c0_32, %c0_33] : memref<128x16xf32, #tpu.memory_space<vmem>>, vector<128x16xf32>
    %c0_34 = arith.constant 0 : index
    %c0_35 = arith.constant 0 : index
    %59 = vector.load %arg12[%c0_34, %c0_35] : memref<32x16xf32, #tpu.memory_space<vmem>>, vector<32x16xf32>
    %c0_36 = arith.constant 0 : index
    %c0_37 = arith.constant 0 : index
    %60 = vector.load %arg13[%c0_36, %c0_37] : memref<64x64xf32, #tpu.memory_space<vmem>>, vector<64x64xf32>
    %c0_38 = arith.constant 0 : index
    %c0_39 = arith.constant 0 : index
    %61 = vector.load %arg14[%c0_38, %c0_39] : memref<128x32xf32, #tpu.memory_space<vmem>>, vector<128x32xf32>
    %c0_40 = arith.constant 0 : index
    %c0_41 = arith.constant 0 : index
    %62 = vector.load %arg15[%c0_40, %c0_41] : memref<32x128xf32, #tpu.memory_space<vmem>>, vector<32x128xf32>
    %63 = vector.shape_cast %54 : vector<1x16x32xf32> to vector<16x32xf32>
    %cst_42 = arith.constant dense<0.000000e+00> : vector<32x16xf32>
    %64 = tpu.matmul %55, %63, %cst_42 {dimension_numbers = #tpu.dot_dimension_numbers<[1], [1], [0], [0], [0, 0, 1, 0], [], []>} : vector<32x32xf32>, vector<16x32xf32>, vector<32x16xf32> -> vector<32x16xf32>
    %65 = vector.shape_cast %64 : vector<32x16xf32> to vector<1x32x16xf32>
    %c0_43 = arith.constant 0 : index
    %c0_44 = arith.constant 0 : index
    %c0_45 = arith.constant 0 : index
    %66 = vector.load %arg16[%c0_43, %c0_44, %c0_45] : memref<1x16x48xf32, #tpu.memory_space<vmem>>, vector<1x16x48xf32>
    %67 = vector.shape_cast %66 : vector<1x16x48xf32> to vector<16x48xf32>
    %c0_46 = arith.constant 0 : index
    %c0_47 = arith.constant 0 : index
    %c0_48 = arith.constant 0 : index
    %68 = vector.load %arg17[%c0_46, %c0_47, %c0_48] : memref<1x1x48xf32, #tpu.memory_space<vmem>>, vector<1x1x48xf32>
    %69 = vector.shape_cast %68 : vector<1x1x48xf32> to vector<1x48xf32>
    %70 = vector.shape_cast %65 : vector<1x32x16xf32> to vector<32x16xf32>
    %71 = vector.extract_strided_slice %67 {offsets = [0, 0], sizes = [16, 16], strides = [1, 1]} : vector<16x48xf32> to vector<16x16xf32>
    %cst_49 = arith.constant dense<0.000000e+00> : vector<32x16xf32>
    %72 = tpu.matmul %70, %71, %cst_49 {dimension_numbers = #tpu.dot_dimension_numbers<[1], [0], [0], [1], [0, 0, 1, 1], [], []>} : vector<32x16xf32>, vector<16x16xf32>, vector<32x16xf32> -> vector<32x16xf32>
    %73 = vector.extract_strided_slice %69 {offsets = [0, 0], sizes = [1, 16], strides = [1, 1]} : vector<1x48xf32> to vector<1x16xf32>
    %74 = vector.broadcast %73 : vector<1x16xf32> to vector<32x16xf32>
    %75 = arith.addf %72, %74 : vector<32x16xf32>
    %76 = vector.shape_cast %39 : vector<1x8x16xf32> to vector<8x16xf32>
    %77 = vector.extract_strided_slice %67 {offsets = [0, 16], sizes = [16, 32], strides = [1, 1]} : vector<16x48xf32> to vector<16x32xf32>
    %cst_50 = arith.constant dense<0.000000e+00> : vector<8x32xf32>
    %78 = tpu.matmul %76, %77, %cst_50 {dimension_numbers = #tpu.dot_dimension_numbers<[1], [0], [0], [1], [0, 0, 1, 1], [], []>} : vector<8x16xf32>, vector<16x32xf32>, vector<8x32xf32> -> vector<8x32xf32>
    %79 = vector.extract_strided_slice %69 {offsets = [0, 16], sizes = [1, 32], strides = [1, 1]} : vector<1x48xf32> to vector<1x32xf32>
    %80 = vector.broadcast %79 : vector<1x32xf32> to vector<8x32xf32>
    %81 = arith.addf %78, %80 : vector<8x32xf32>
    %82 = vector.extract_strided_slice %81 {offsets = [0, 0], sizes = [8, 16], strides = [1, 1]} : vector<8x32xf32> to vector<8x16xf32>
    %83 = vector.extract_strided_slice %81 {offsets = [0, 16], sizes = [8, 16], strides = [1, 1]} : vector<8x32xf32> to vector<8x16xf32>
    %c0_51 = arith.constant 0 : index
    %c0_52 = arith.constant 0 : index
    %c0_53 = arith.constant 0 : index
    %84 = vector.load %arg18[%c0_51, %c0_52, %c0_53] : memref<1x16x16xf32, #tpu.memory_space<vmem>>, vector<1x16x16xf32>
    %85 = vector.shape_cast %84 : vector<1x16x16xf32> to vector<16x16xf32>
    %c0_54 = arith.constant 0 : index
    %c0_55 = arith.constant 0 : index
    %c0_56 = arith.constant 0 : index
    %86 = vector.load %arg19[%c0_54, %c0_55, %c0_56] : memref<1x1x16xf32, #tpu.memory_space<vmem>>, vector<1x1x16xf32>
    %87 = vector.shape_cast %86 : vector<1x1x16xf32> to vector<1x16xf32>
    %88 = vector.shape_cast %75 : vector<32x16xf32> to vector<1x32x16xf32>
    %89 = tpu.concatenate %88, %88, %88, %88 in 1 : vector<1x32x16xf32>, vector<1x32x16xf32>, vector<1x32x16xf32>, vector<1x32x16xf32> -> vector<1x128x16xf32>
    %90 = vector.shape_cast %89 : vector<1x128x16xf32> to vector<128x16xf32>
    %91 = arith.mulf %90, %58 : vector<128x16xf32>
    %92 = vector.shape_cast %82 : vector<8x16xf32> to vector<1x8x16xf32>
    %93 = tpu.concatenate %92, %92, %92, %92 in 1 : vector<1x8x16xf32>, vector<1x8x16xf32>, vector<1x8x16xf32>, vector<1x8x16xf32> -> vector<1x32x16xf32>
    %94 = vector.shape_cast %93 : vector<1x32x16xf32> to vector<32x16xf32>
    %95 = vector.shape_cast %83 : vector<8x16xf32> to vector<1x8x16xf32>
    %96 = tpu.concatenate %95, %95, %95, %95 in 1 : vector<1x8x16xf32>, vector<1x8x16xf32>, vector<1x8x16xf32>, vector<1x8x16xf32> -> vector<1x32x16xf32>
    %97 = vector.shape_cast %96 : vector<1x32x16xf32> to vector<32x16xf32>
    %cst_57 = arith.constant dense<0.000000e+00> : vector<128x32xf32>
    %98 = tpu.matmul %91, %94, %cst_57 {dimension_numbers = #tpu.dot_dimension_numbers<[1], [1], [0], [0], [0, 0, 1, 0], [], []>} : vector<128x16xf32>, vector<32x16xf32>, vector<128x32xf32> -> vector<128x32xf32>
    %cst_58 = arith.constant 5.000000e-01 : f32
    %99 = vector.broadcast %cst_58 : f32 to vector<128x32xf32>
    %100 = arith.mulf %98, %99 : vector<128x32xf32>
    %101 = arith.addf %100, %61 : vector<128x32xf32>
    %cst_59 = arith.constant dense<0xFF800000> : vector<128xf32>
    %102 = vector.multi_reduction <maximumf>, %101, %cst_59 [1] : vector<128x32xf32> to vector<128xf32>
    %103 = vector.shape_cast %102 : vector<128xf32> to vector<128x1xf32>
    %104 = vector.broadcast %103 : vector<128x1xf32> to vector<128x32xf32>
    %105 = arith.subf %101, %104 : vector<128x32xf32>
    %106 = math.exp %105 : vector<128x32xf32>
    %cst_60 = arith.constant dense<0.000000e+00> : vector<128xf32>
    %107 = vector.multi_reduction <add>, %106, %cst_60 [1] : vector<128x32xf32> to vector<128xf32>
    %108 = vector.shape_cast %107 : vector<128xf32> to vector<128x1xf32>
    %109 = vector.broadcast %108 : vector<128x1xf32> to vector<128x32xf32>
    %110 = arith.divf %106, %109 : vector<128x32xf32>
    %cst_61 = arith.constant dense<0.000000e+00> : vector<128x16xf32>
    %111 = tpu.matmul %110, %97, %cst_61 {dimension_numbers = #tpu.dot_dimension_numbers<[1], [0], [0], [1], [0, 0, 1, 1], [], []>} : vector<128x32xf32>, vector<32x16xf32>, vector<128x16xf32> -> vector<128x16xf32>
    %112 = arith.mulf %111, %58 : vector<128x16xf32>
    %cst_62 = arith.constant dense<0.000000e+00> : vector<128x16xf32>
    %113 = tpu.matmul %112, %85, %cst_62 {dimension_numbers = #tpu.dot_dimension_numbers<[1], [0], [0], [1], [0, 0, 1, 1], [], []>} : vector<128x16xf32>, vector<16x16xf32>, vector<128x16xf32> -> vector<128x16xf32>
    %114 = vector.shape_cast %113 : vector<128x16xf32> to vector<1x128x16xf32>
    %115 = vector.extract_strided_slice %114 {offsets = [0, 0, 0], sizes = [1, 32, 16], strides = [1, 1, 1]} : vector<1x128x16xf32> to vector<1x32x16xf32>
    %116 = vector.extract_strided_slice %114 {offsets = [0, 32, 0], sizes = [1, 32, 16], strides = [1, 1, 1]} : vector<1x128x16xf32> to vector<1x32x16xf32>
    %117 = arith.addf %115, %116 : vector<1x32x16xf32>
    %118 = vector.extract_strided_slice %114 {offsets = [0, 64, 0], sizes = [1, 32, 16], strides = [1, 1, 1]} : vector<1x128x16xf32> to vector<1x32x16xf32>
    %119 = arith.addf %117, %118 : vector<1x32x16xf32>
    %120 = vector.extract_strided_slice %114 {offsets = [0, 96, 0], sizes = [1, 32, 16], strides = [1, 1, 1]} : vector<1x128x16xf32> to vector<1x32x16xf32>
    %121 = arith.addf %119, %120 : vector<1x32x16xf32>
    %122 = vector.shape_cast %87 : vector<1x16xf32> to vector<1x1x16xf32>
    %123 = vector.broadcast %122 : vector<1x1x16xf32> to vector<1x32x16xf32>
    %124 = arith.addf %121, %123 : vector<1x32x16xf32>
    %125 = arith.addf %65, %124 : vector<1x32x16xf32>
    %c0_63 = arith.constant 0 : index
    %c0_64 = arith.constant 0 : index
    %c0_65 = arith.constant 0 : index
    %126 = vector.load %arg20[%c0_63, %c0_64, %c0_65] : memref<1x1x16xf32, #tpu.memory_space<vmem>>, vector<1x1x16xf32>
    %127 = vector.shape_cast %126 : vector<1x1x16xf32> to vector<1x16xf32>
    %c0_66 = arith.constant 0 : index
    %c0_67 = arith.constant 0 : index
    %c0_68 = arith.constant 0 : index
    %128 = vector.load %arg21[%c0_66, %c0_67, %c0_68] : memref<1x1x16xf32, #tpu.memory_space<vmem>>, vector<1x1x16xf32>
    %129 = vector.shape_cast %128 : vector<1x1x16xf32> to vector<1x16xf32>
    %cst_69 = arith.constant dense<0.000000e+00> : vector<1x32xf32>
    %130 = vector.multi_reduction <add>, %125, %cst_69 [2] : vector<1x32x16xf32> to vector<1x32xf32>
    %131 = vector.shape_cast %130 : vector<1x32xf32> to vector<1x32x1xf32>
    %cst_70 = arith.constant 1.600000e+01 : f32
    %132 = vector.broadcast %cst_70 : f32 to vector<1x32x1xf32>
    %133 = arith.divf %131, %132 : vector<1x32x1xf32>
    %134 = vector.broadcast %133 : vector<1x32x1xf32> to vector<1x32x16xf32>
    %135 = arith.subf %125, %134 : vector<1x32x16xf32>
    %136 = arith.mulf %135, %135 : vector<1x32x16xf32>
    %cst_71 = arith.constant dense<0.000000e+00> : vector<1x32xf32>
    %137 = vector.multi_reduction <add>, %136, %cst_71 [2] : vector<1x32x16xf32> to vector<1x32xf32>
    %138 = vector.shape_cast %137 : vector<1x32xf32> to vector<1x32x1xf32>
    %cst_72 = arith.constant 1.600000e+01 : f32
    %139 = vector.broadcast %cst_72 : f32 to vector<1x32x1xf32>
    %140 = arith.divf %138, %139 : vector<1x32x1xf32>
    %cst_73 = arith.constant 9.99999974E-6 : f32
    %141 = vector.broadcast %cst_73 : f32 to vector<1x32x1xf32>
    %142 = arith.addf %140, %141 : vector<1x32x1xf32>
    %143 = math.rsqrt %142 : vector<1x32x1xf32>
    %144 = vector.broadcast %143 : vector<1x32x1xf32> to vector<1x32x16xf32>
    %145 = arith.mulf %135, %144 : vector<1x32x16xf32>
    %146 = vector.shape_cast %127 : vector<1x16xf32> to vector<1x1x16xf32>
    %147 = vector.broadcast %146 : vector<1x1x16xf32> to vector<1x32x16xf32>
    %148 = arith.mulf %145, %147 : vector<1x32x16xf32>
    %149 = vector.shape_cast %129 : vector<1x16xf32> to vector<1x1x16xf32>
    %150 = vector.broadcast %149 : vector<1x1x16xf32> to vector<1x32x16xf32>
    %151 = arith.addf %148, %150 : vector<1x32x16xf32>
    %152 = vector.shape_cast %151 : vector<1x32x16xf32> to vector<32x16xf32>
    %cst_74 = arith.constant dense<0.000000e+00> : vector<16x32xf32>
    %153 = tpu.matmul %56, %152, %cst_74 {dimension_numbers = #tpu.dot_dimension_numbers<[1], [1], [0], [0], [0, 0, 1, 0], [], []>} : vector<16x16xf32>, vector<32x16xf32>, vector<16x32xf32> -> vector<16x32xf32>
    %154 = vector.shape_cast %153 : vector<16x32xf32> to vector<1x16x32xf32>
    %155 = vector.shape_cast %154 : vector<1x16x32xf32> to vector<16x32xf32>
    %c0_75 = arith.constant 0 : index
    %c0_76 = arith.constant 0 : index
    %c0_77 = arith.constant 0 : index
    %156 = vector.load %arg22[%c0_75, %c0_76, %c0_77] : memref<2x32x96xf32, #tpu.memory_space<vmem>>, vector<1x32x96xf32>
    %157 = vector.shape_cast %156 : vector<1x32x96xf32> to vector<32x96xf32>
    %cst_78 = arith.constant dense<0.000000e+00> : vector<16x96xf32>
    %158 = tpu.matmul %155, %157, %cst_78 {dimension_numbers = #tpu.dot_dimension_numbers<[1], [0], [0], [1], [0, 0, 1, 1], [], []>} : vector<16x32xf32>, vector<32x96xf32>, vector<16x96xf32> -> vector<16x96xf32>
    %c0_79 = arith.constant 0 : index
    %c0_80 = arith.constant 0 : index
    %c0_81 = arith.constant 0 : index
    %159 = vector.load %arg23[%c0_79, %c0_80, %c0_81] : memref<2x1x96xf32, #tpu.memory_space<vmem>>, vector<1x1x96xf32>
    %160 = vector.shape_cast %159 : vector<1x1x96xf32> to vector<1x96xf32>
    %161 = vector.broadcast %160 : vector<1x96xf32> to vector<16x96xf32>
    %162 = arith.addf %158, %161 : vector<16x96xf32>
    %163 = vector.extract_strided_slice %162 {offsets = [0, 0], sizes = [16, 32], strides = [1, 1]} : vector<16x96xf32> to vector<16x32xf32>
    %164 = vector.extract_strided_slice %162 {offsets = [0, 32], sizes = [16, 32], strides = [1, 1]} : vector<16x96xf32> to vector<16x32xf32>
    %165 = vector.extract_strided_slice %162 {offsets = [0, 64], sizes = [16, 32], strides = [1, 1]} : vector<16x96xf32> to vector<16x32xf32>
    %c0_82 = arith.constant 0 : index
    %c0_83 = arith.constant 0 : index
    %c0_84 = arith.constant 0 : index
    %166 = vector.load %arg24[%c0_82, %c0_83, %c0_84] : memref<2x32x32xf32, #tpu.memory_space<vmem>>, vector<1x32x32xf32>
    %167 = vector.shape_cast %166 : vector<1x32x32xf32> to vector<32x32xf32>
    %c0_85 = arith.constant 0 : index
    %c0_86 = arith.constant 0 : index
    %c0_87 = arith.constant 0 : index
    %168 = vector.load %arg25[%c0_85, %c0_86, %c0_87] : memref<2x1x32xf32, #tpu.memory_space<vmem>>, vector<1x1x32xf32>
    %169 = vector.shape_cast %168 : vector<1x1x32xf32> to vector<1x32xf32>
    %170 = vector.shape_cast %163 : vector<16x32xf32> to vector<1x16x32xf32>
    %171 = tpu.concatenate %170, %170, %170, %170 in 1 : vector<1x16x32xf32>, vector<1x16x32xf32>, vector<1x16x32xf32>, vector<1x16x32xf32> -> vector<1x64x32xf32>
    %172 = vector.shape_cast %171 : vector<1x64x32xf32> to vector<64x32xf32>
    %173 = arith.mulf %172, %57 : vector<64x32xf32>
    %174 = vector.shape_cast %164 : vector<16x32xf32> to vector<1x16x32xf32>
    %175 = tpu.concatenate %174, %174, %174, %174 in 1 : vector<1x16x32xf32>, vector<1x16x32xf32>, vector<1x16x32xf32>, vector<1x16x32xf32> -> vector<1x64x32xf32>
    %176 = vector.shape_cast %175 : vector<1x64x32xf32> to vector<64x32xf32>
    %177 = vector.shape_cast %165 : vector<16x32xf32> to vector<1x16x32xf32>
    %178 = tpu.concatenate %177, %177, %177, %177 in 1 : vector<1x16x32xf32>, vector<1x16x32xf32>, vector<1x16x32xf32>, vector<1x16x32xf32> -> vector<1x64x32xf32>
    %179 = vector.shape_cast %178 : vector<1x64x32xf32> to vector<64x32xf32>
    %cst_88 = arith.constant dense<0.000000e+00> : vector<64x64xf32>
    %180 = tpu.matmul %173, %176, %cst_88 {dimension_numbers = #tpu.dot_dimension_numbers<[1], [1], [0], [0], [0, 0, 1, 0], [], []>} : vector<64x32xf32>, vector<64x32xf32>, vector<64x64xf32> -> vector<64x64xf32>
    %cst_89 = arith.constant 0.353553385 : f32
    %181 = vector.broadcast %cst_89 : f32 to vector<64x64xf32>
    %182 = arith.mulf %180, %181 : vector<64x64xf32>
    %183 = arith.addf %182, %60 : vector<64x64xf32>
    %cst_90 = arith.constant dense<0xFF800000> : vector<64xf32>
    %184 = vector.multi_reduction <maximumf>, %183, %cst_90 [1] : vector<64x64xf32> to vector<64xf32>
    %185 = vector.shape_cast %184 : vector<64xf32> to vector<64x1xf32>
    %186 = vector.broadcast %185 : vector<64x1xf32> to vector<64x64xf32>
    %187 = arith.subf %183, %186 : vector<64x64xf32>
    %188 = math.exp %187 : vector<64x64xf32>
    %cst_91 = arith.constant dense<0.000000e+00> : vector<64xf32>
    %189 = vector.multi_reduction <add>, %188, %cst_91 [1] : vector<64x64xf32> to vector<64xf32>
    %190 = vector.shape_cast %189 : vector<64xf32> to vector<64x1xf32>
    %191 = vector.broadcast %190 : vector<64x1xf32> to vector<64x64xf32>
    %192 = arith.divf %188, %191 : vector<64x64xf32>
    %cst_92 = arith.constant dense<0.000000e+00> : vector<64x32xf32>
    %193 = tpu.matmul %192, %179, %cst_92 {dimension_numbers = #tpu.dot_dimension_numbers<[1], [0], [0], [1], [0, 0, 1, 1], [], []>} : vector<64x64xf32>, vector<64x32xf32>, vector<64x32xf32> -> vector<64x32xf32>
    %194 = arith.mulf %193, %57 : vector<64x32xf32>
    %cst_93 = arith.constant dense<0.000000e+00> : vector<64x32xf32>
    %195 = tpu.matmul %194, %167, %cst_93 {dimension_numbers = #tpu.dot_dimension_numbers<[1], [0], [0], [1], [0, 0, 1, 1], [], []>} : vector<64x32xf32>, vector<32x32xf32>, vector<64x32xf32> -> vector<64x32xf32>
    %196 = vector.shape_cast %195 : vector<64x32xf32> to vector<1x64x32xf32>
    %197 = vector.extract_strided_slice %196 {offsets = [0, 0, 0], sizes = [1, 16, 32], strides = [1, 1, 1]} : vector<1x64x32xf32> to vector<1x16x32xf32>
    %198 = vector.extract_strided_slice %196 {offsets = [0, 16, 0], sizes = [1, 16, 32], strides = [1, 1, 1]} : vector<1x64x32xf32> to vector<1x16x32xf32>
    %199 = arith.addf %197, %198 : vector<1x16x32xf32>
    %200 = vector.extract_strided_slice %196 {offsets = [0, 32, 0], sizes = [1, 16, 32], strides = [1, 1, 1]} : vector<1x64x32xf32> to vector<1x16x32xf32>
    %201 = arith.addf %199, %200 : vector<1x16x32xf32>
    %202 = vector.extract_strided_slice %196 {offsets = [0, 48, 0], sizes = [1, 16, 32], strides = [1, 1, 1]} : vector<1x64x32xf32> to vector<1x16x32xf32>
    %203 = arith.addf %201, %202 : vector<1x16x32xf32>
    %204 = vector.shape_cast %169 : vector<1x32xf32> to vector<1x1x32xf32>
    %205 = vector.broadcast %204 : vector<1x1x32xf32> to vector<1x16x32xf32>
    %206 = arith.addf %203, %205 : vector<1x16x32xf32>
    %207 = arith.addf %154, %206 : vector<1x16x32xf32>
    %c0_94 = arith.constant 0 : index
    %c0_95 = arith.constant 0 : index
    %c0_96 = arith.constant 0 : index
    %208 = vector.load %arg30[%c0_94, %c0_95, %c0_96] : memref<2x1x32xf32, #tpu.memory_space<vmem>>, vector<1x1x32xf32>
    %209 = vector.shape_cast %208 : vector<1x1x32xf32> to vector<1x32xf32>
    %c0_97 = arith.constant 0 : index
    %c0_98 = arith.constant 0 : index
    %c0_99 = arith.constant 0 : index
    %210 = vector.load %arg31[%c0_97, %c0_98, %c0_99] : memref<2x1x32xf32, #tpu.memory_space<vmem>>, vector<1x1x32xf32>
    %211 = vector.shape_cast %210 : vector<1x1x32xf32> to vector<1x32xf32>
    %cst_100 = arith.constant dense<0.000000e+00> : vector<1x16xf32>
    %212 = vector.multi_reduction <add>, %207, %cst_100 [2] : vector<1x16x32xf32> to vector<1x16xf32>
    %213 = vector.shape_cast %212 : vector<1x16xf32> to vector<1x16x1xf32>
    %cst_101 = arith.constant 3.200000e+01 : f32
    %214 = vector.broadcast %cst_101 : f32 to vector<1x16x1xf32>
    %215 = arith.divf %213, %214 : vector<1x16x1xf32>
    %216 = vector.broadcast %215 : vector<1x16x1xf32> to vector<1x16x32xf32>
    %217 = arith.subf %207, %216 : vector<1x16x32xf32>
    %218 = arith.mulf %217, %217 : vector<1x16x32xf32>
    %cst_102 = arith.constant dense<0.000000e+00> : vector<1x16xf32>
    %219 = vector.multi_reduction <add>, %218, %cst_102 [2] : vector<1x16x32xf32> to vector<1x16xf32>
    %220 = vector.shape_cast %219 : vector<1x16xf32> to vector<1x16x1xf32>
    %cst_103 = arith.constant 3.200000e+01 : f32
    %221 = vector.broadcast %cst_103 : f32 to vector<1x16x1xf32>
    %222 = arith.divf %220, %221 : vector<1x16x1xf32>
    %cst_104 = arith.constant 9.99999974E-6 : f32
    %223 = vector.broadcast %cst_104 : f32 to vector<1x16x1xf32>
    %224 = arith.addf %222, %223 : vector<1x16x1xf32>
    %225 = math.rsqrt %224 : vector<1x16x1xf32>
    %226 = vector.broadcast %225 : vector<1x16x1xf32> to vector<1x16x32xf32>
    %227 = arith.mulf %217, %226 : vector<1x16x32xf32>
    %228 = vector.shape_cast %209 : vector<1x32xf32> to vector<1x1x32xf32>
    %229 = vector.broadcast %228 : vector<1x1x32xf32> to vector<1x16x32xf32>
    %230 = arith.mulf %227, %229 : vector<1x16x32xf32>
    %231 = vector.shape_cast %211 : vector<1x32xf32> to vector<1x1x32xf32>
    %232 = vector.broadcast %231 : vector<1x1x32xf32> to vector<1x16x32xf32>
    %233 = arith.addf %230, %232 : vector<1x16x32xf32>
    %234 = vector.shape_cast %233 : vector<1x16x32xf32> to vector<16x32xf32>
    %c0_105 = arith.constant 0 : index
    %c0_106 = arith.constant 0 : index
    %c0_107 = arith.constant 0 : index
    %235 = vector.load %arg26[%c0_105, %c0_106, %c0_107] : memref<2x32x64xf32, #tpu.memory_space<vmem>>, vector<1x32x64xf32>
    %236 = vector.shape_cast %235 : vector<1x32x64xf32> to vector<32x64xf32>
    %cst_108 = arith.constant dense<0.000000e+00> : vector<16x64xf32>
    %237 = tpu.matmul %234, %236, %cst_108 {dimension_numbers = #tpu.dot_dimension_numbers<[1], [0], [0], [1], [0, 0, 1, 1], [], []>} : vector<16x32xf32>, vector<32x64xf32>, vector<16x64xf32> -> vector<16x64xf32>
    %c0_109 = arith.constant 0 : index
    %c0_110 = arith.constant 0 : index
    %c0_111 = arith.constant 0 : index
    %238 = vector.load %arg27[%c0_109, %c0_110, %c0_111] : memref<2x1x64xf32, #tpu.memory_space<vmem>>, vector<1x1x64xf32>
    %239 = vector.shape_cast %238 : vector<1x1x64xf32> to vector<1x64xf32>
    %240 = vector.broadcast %239 : vector<1x64xf32> to vector<16x64xf32>
    %241 = arith.addf %237, %240 : vector<16x64xf32>
    %cst_112 = arith.constant 5.000000e-01 : f32
    %242 = vector.broadcast %cst_112 : f32 to vector<16x64xf32>
    %243 = arith.mulf %242, %241 : vector<16x64xf32>
    %244 = arith.mulf %241, %241 : vector<16x64xf32>
    %245 = arith.mulf %244, %241 : vector<16x64xf32>
    %cst_113 = arith.constant 4.471500e-02 : f32
    %246 = vector.broadcast %cst_113 : f32 to vector<16x64xf32>
    %247 = arith.mulf %246, %245 : vector<16x64xf32>
    %248 = arith.addf %241, %247 : vector<16x64xf32>
    %cst_114 = arith.constant 0.797884583 : f32
    %249 = vector.broadcast %cst_114 : f32 to vector<16x64xf32>
    %250 = arith.mulf %249, %248 : vector<16x64xf32>
    %251 = math.tanh %250 : vector<16x64xf32>
    %cst_115 = arith.constant 1.000000e+00 : f32
    %252 = vector.broadcast %cst_115 : f32 to vector<16x64xf32>
    %253 = arith.addf %252, %251 : vector<16x64xf32>
    %254 = arith.mulf %243, %253 : vector<16x64xf32>
    %c0_116 = arith.constant 0 : index
    %c0_117 = arith.constant 0 : index
    %c0_118 = arith.constant 0 : index
    %255 = vector.load %arg28[%c0_116, %c0_117, %c0_118] : memref<2x64x32xf32, #tpu.memory_space<vmem>>, vector<1x64x32xf32>
    %256 = vector.shape_cast %255 : vector<1x64x32xf32> to vector<64x32xf32>
    %cst_119 = arith.constant dense<0.000000e+00> : vector<16x32xf32>
    %257 = tpu.matmul %254, %256, %cst_119 {dimension_numbers = #tpu.dot_dimension_numbers<[1], [0], [0], [1], [0, 0, 1, 1], [], []>} : vector<16x64xf32>, vector<64x32xf32>, vector<16x32xf32> -> vector<16x32xf32>
    %c0_120 = arith.constant 0 : index
    %c0_121 = arith.constant 0 : index
    %c0_122 = arith.constant 0 : index
    %258 = vector.load %arg29[%c0_120, %c0_121, %c0_122] : memref<2x1x32xf32, #tpu.memory_space<vmem>>, vector<1x1x32xf32>
    %259 = vector.shape_cast %258 : vector<1x1x32xf32> to vector<1x32xf32>
    %260 = vector.broadcast %259 : vector<1x32xf32> to vector<16x32xf32>
    %261 = arith.addf %257, %260 : vector<16x32xf32>
    %262 = vector.shape_cast %261 : vector<16x32xf32> to vector<1x16x32xf32>
    %263 = arith.addf %233, %262 : vector<1x16x32xf32>
    %c0_123 = arith.constant 0 : index
    %c0_124 = arith.constant 0 : index
    %c0_125 = arith.constant 0 : index
    %264 = vector.load %arg32[%c0_123, %c0_124, %c0_125] : memref<2x1x32xf32, #tpu.memory_space<vmem>>, vector<1x1x32xf32>
    %265 = vector.shape_cast %264 : vector<1x1x32xf32> to vector<1x32xf32>
    %c0_126 = arith.constant 0 : index
    %c0_127 = arith.constant 0 : index
    %c0_128 = arith.constant 0 : index
    %266 = vector.load %arg33[%c0_126, %c0_127, %c0_128] : memref<2x1x32xf32, #tpu.memory_space<vmem>>, vector<1x1x32xf32>
    %267 = vector.shape_cast %266 : vector<1x1x32xf32> to vector<1x32xf32>
    %cst_129 = arith.constant dense<0.000000e+00> : vector<1x16xf32>
    %268 = vector.multi_reduction <add>, %263, %cst_129 [2] : vector<1x16x32xf32> to vector<1x16xf32>
    %269 = vector.shape_cast %268 : vector<1x16xf32> to vector<1x16x1xf32>
    %cst_130 = arith.constant 3.200000e+01 : f32
    %270 = vector.broadcast %cst_130 : f32 to vector<1x16x1xf32>
    %271 = arith.divf %269, %270 : vector<1x16x1xf32>
    %272 = vector.broadcast %271 : vector<1x16x1xf32> to vector<1x16x32xf32>
    %273 = arith.subf %263, %272 : vector<1x16x32xf32>
    %274 = arith.mulf %273, %273 : vector<1x16x32xf32>
    %cst_131 = arith.constant dense<0.000000e+00> : vector<1x16xf32>
    %275 = vector.multi_reduction <add>, %274, %cst_131 [2] : vector<1x16x32xf32> to vector<1x16xf32>
    %276 = vector.shape_cast %275 : vector<1x16xf32> to vector<1x16x1xf32>
    %cst_132 = arith.constant 3.200000e+01 : f32
    %277 = vector.broadcast %cst_132 : f32 to vector<1x16x1xf32>
    %278 = arith.divf %276, %277 : vector<1x16x1xf32>
    %cst_133 = arith.constant 9.99999974E-6 : f32
    %279 = vector.broadcast %cst_133 : f32 to vector<1x16x1xf32>
    %280 = arith.addf %278, %279 : vector<1x16x1xf32>
    %281 = math.rsqrt %280 : vector<1x16x1xf32>
    %282 = vector.broadcast %281 : vector<1x16x1xf32> to vector<1x16x32xf32>
    %283 = arith.mulf %273, %282 : vector<1x16x32xf32>
    %284 = vector.shape_cast %265 : vector<1x32xf32> to vector<1x1x32xf32>
    %285 = vector.broadcast %284 : vector<1x1x32xf32> to vector<1x16x32xf32>
    %286 = arith.mulf %283, %285 : vector<1x16x32xf32>
    %287 = vector.shape_cast %267 : vector<1x32xf32> to vector<1x1x32xf32>
    %288 = vector.broadcast %287 : vector<1x1x32xf32> to vector<1x16x32xf32>
    %289 = arith.addf %286, %288 : vector<1x16x32xf32>
    %c0_134 = arith.constant 0 : index
    %c0_135 = arith.constant 0 : index
    %c0_136 = arith.constant 0 : index
    %290 = vector.load %arg34[%c0_134, %c0_135, %c0_136] : memref<2x16x48xf32, #tpu.memory_space<vmem>>, vector<1x16x48xf32>
    %291 = vector.shape_cast %290 : vector<1x16x48xf32> to vector<16x48xf32>
    %c0_137 = arith.constant 0 : index
    %c0_138 = arith.constant 0 : index
    %c0_139 = arith.constant 0 : index
    %292 = vector.load %arg35[%c0_137, %c0_138, %c0_139] : memref<2x1x48xf32, #tpu.memory_space<vmem>>, vector<1x1x48xf32>
    %293 = vector.shape_cast %292 : vector<1x1x48xf32> to vector<1x48xf32>
    %294 = vector.shape_cast %39 : vector<1x8x16xf32> to vector<8x16xf32>
    %295 = vector.extract_strided_slice %291 {offsets = [0, 0], sizes = [16, 16], strides = [1, 1]} : vector<16x48xf32> to vector<16x16xf32>
    %cst_140 = arith.constant dense<0.000000e+00> : vector<8x16xf32>
    %296 = tpu.matmul %294, %295, %cst_140 {dimension_numbers = #tpu.dot_dimension_numbers<[1], [0], [0], [1], [0, 0, 1, 1], [], []>} : vector<8x16xf32>, vector<16x16xf32>, vector<8x16xf32> -> vector<8x16xf32>
    %297 = vector.extract_strided_slice %293 {offsets = [0, 0], sizes = [1, 16], strides = [1, 1]} : vector<1x48xf32> to vector<1x16xf32>
    %298 = vector.broadcast %297 : vector<1x16xf32> to vector<8x16xf32>
    %299 = arith.addf %296, %298 : vector<8x16xf32>
    %300 = vector.shape_cast %289 : vector<1x16x32xf32> to vector<16x32xf32>
    %cst_141 = arith.constant dense<0.000000e+00> : vector<32x16xf32>
    %301 = tpu.matmul %55, %300, %cst_141 {dimension_numbers = #tpu.dot_dimension_numbers<[1], [1], [0], [0], [0, 0, 1, 0], [], []>} : vector<32x32xf32>, vector<16x32xf32>, vector<32x16xf32> -> vector<32x16xf32>
    %302 = vector.shape_cast %301 : vector<32x16xf32> to vector<1x32x16xf32>
    %303 = vector.shape_cast %302 : vector<1x32x16xf32> to vector<32x16xf32>
    %304 = vector.extract_strided_slice %291 {offsets = [0, 16], sizes = [16, 32], strides = [1, 1]} : vector<16x48xf32> to vector<16x32xf32>
    %cst_142 = arith.constant dense<0.000000e+00> : vector<32x32xf32>
    %305 = tpu.matmul %303, %304, %cst_142 {dimension_numbers = #tpu.dot_dimension_numbers<[1], [0], [0], [1], [0, 0, 1, 1], [], []>} : vector<32x16xf32>, vector<16x32xf32>, vector<32x32xf32> -> vector<32x32xf32>
    %306 = vector.extract_strided_slice %293 {offsets = [0, 16], sizes = [1, 32], strides = [1, 1]} : vector<1x48xf32> to vector<1x32xf32>
    %307 = vector.broadcast %306 : vector<1x32xf32> to vector<32x32xf32>
    %308 = arith.addf %305, %307 : vector<32x32xf32>
    %309 = vector.extract_strided_slice %308 {offsets = [0, 0], sizes = [32, 16], strides = [1, 1]} : vector<32x32xf32> to vector<32x16xf32>
    %310 = vector.extract_strided_slice %308 {offsets = [0, 16], sizes = [32, 16], strides = [1, 1]} : vector<32x32xf32> to vector<32x16xf32>
    %c0_143 = arith.constant 0 : index
    %c0_144 = arith.constant 0 : index
    %c0_145 = arith.constant 0 : index
    %311 = vector.load %arg36[%c0_143, %c0_144, %c0_145] : memref<2x16x16xf32, #tpu.memory_space<vmem>>, vector<1x16x16xf32>
    %312 = vector.shape_cast %311 : vector<1x16x16xf32> to vector<16x16xf32>
    %c0_146 = arith.constant 0 : index
    %c0_147 = arith.constant 0 : index
    %c0_148 = arith.constant 0 : index
    %313 = vector.load %arg37[%c0_146, %c0_147, %c0_148] : memref<2x1x16xf32, #tpu.memory_space<vmem>>, vector<1x1x16xf32>
    %314 = vector.shape_cast %313 : vector<1x1x16xf32> to vector<1x16xf32>
    %315 = vector.shape_cast %299 : vector<8x16xf32> to vector<1x8x16xf32>
    %316 = tpu.concatenate %315, %315, %315, %315 in 1 : vector<1x8x16xf32>, vector<1x8x16xf32>, vector<1x8x16xf32>, vector<1x8x16xf32> -> vector<1x32x16xf32>
    %317 = vector.shape_cast %316 : vector<1x32x16xf32> to vector<32x16xf32>
    %318 = arith.mulf %317, %59 : vector<32x16xf32>
    %319 = vector.shape_cast %309 : vector<32x16xf32> to vector<1x32x16xf32>
    %320 = tpu.concatenate %319, %319, %319, %319 in 1 : vector<1x32x16xf32>, vector<1x32x16xf32>, vector<1x32x16xf32>, vector<1x32x16xf32> -> vector<1x128x16xf32>
    %321 = vector.shape_cast %320 : vector<1x128x16xf32> to vector<128x16xf32>
    %322 = vector.shape_cast %310 : vector<32x16xf32> to vector<1x32x16xf32>
    %323 = tpu.concatenate %322, %322, %322, %322 in 1 : vector<1x32x16xf32>, vector<1x32x16xf32>, vector<1x32x16xf32>, vector<1x32x16xf32> -> vector<1x128x16xf32>
    %324 = vector.shape_cast %323 : vector<1x128x16xf32> to vector<128x16xf32>
    %cst_149 = arith.constant dense<0.000000e+00> : vector<32x128xf32>
    %325 = tpu.matmul %318, %321, %cst_149 {dimension_numbers = #tpu.dot_dimension_numbers<[1], [1], [0], [0], [0, 0, 1, 0], [], []>} : vector<32x16xf32>, vector<128x16xf32>, vector<32x128xf32> -> vector<32x128xf32>
    %cst_150 = arith.constant 5.000000e-01 : f32
    %326 = vector.broadcast %cst_150 : f32 to vector<32x128xf32>
    %327 = arith.mulf %325, %326 : vector<32x128xf32>
    %328 = arith.addf %327, %62 : vector<32x128xf32>
    %cst_151 = arith.constant dense<0xFF800000> : vector<32xf32>
    %329 = vector.multi_reduction <maximumf>, %328, %cst_151 [1] : vector<32x128xf32> to vector<32xf32>
    %330 = vector.shape_cast %329 : vector<32xf32> to vector<32x1xf32>
    %331 = vector.broadcast %330 : vector<32x1xf32> to vector<32x128xf32>
    %332 = arith.subf %328, %331 : vector<32x128xf32>
    %333 = math.exp %332 : vector<32x128xf32>
    %cst_152 = arith.constant dense<0.000000e+00> : vector<32xf32>
    %334 = vector.multi_reduction <add>, %333, %cst_152 [1] : vector<32x128xf32> to vector<32xf32>
    %335 = vector.shape_cast %334 : vector<32xf32> to vector<32x1xf32>
    %336 = vector.broadcast %335 : vector<32x1xf32> to vector<32x128xf32>
    %337 = arith.divf %333, %336 : vector<32x128xf32>
    %cst_153 = arith.constant dense<0.000000e+00> : vector<32x16xf32>
    %338 = tpu.matmul %337, %324, %cst_153 {dimension_numbers = #tpu.dot_dimension_numbers<[1], [0], [0], [1], [0, 0, 1, 1], [], []>} : vector<32x128xf32>, vector<128x16xf32>, vector<32x16xf32> -> vector<32x16xf32>
    %339 = arith.mulf %338, %59 : vector<32x16xf32>
    %cst_154 = arith.constant dense<0.000000e+00> : vector<32x16xf32>
    %340 = tpu.matmul %339, %312, %cst_154 {dimension_numbers = #tpu.dot_dimension_numbers<[1], [0], [0], [1], [0, 0, 1, 1], [], []>} : vector<32x16xf32>, vector<16x16xf32>, vector<32x16xf32> -> vector<32x16xf32>
    %341 = vector.shape_cast %340 : vector<32x16xf32> to vector<1x32x16xf32>
    %342 = vector.extract_strided_slice %341 {offsets = [0, 0, 0], sizes = [1, 8, 16], strides = [1, 1, 1]} : vector<1x32x16xf32> to vector<1x8x16xf32>
    %343 = vector.extract_strided_slice %341 {offsets = [0, 8, 0], sizes = [1, 8, 16], strides = [1, 1, 1]} : vector<1x32x16xf32> to vector<1x8x16xf32>
    %344 = arith.addf %342, %343 : vector<1x8x16xf32>
    %345 = vector.extract_strided_slice %341 {offsets = [0, 16, 0], sizes = [1, 8, 16], strides = [1, 1, 1]} : vector<1x32x16xf32> to vector<1x8x16xf32>
    %346 = arith.addf %344, %345 : vector<1x8x16xf32>
    %347 = vector.extract_strided_slice %341 {offsets = [0, 24, 0], sizes = [1, 8, 16], strides = [1, 1, 1]} : vector<1x32x16xf32> to vector<1x8x16xf32>
    %348 = arith.addf %346, %347 : vector<1x8x16xf32>
    %349 = vector.shape_cast %314 : vector<1x16xf32> to vector<1x1x16xf32>
    %350 = vector.broadcast %349 : vector<1x1x16xf32> to vector<1x8x16xf32>
    %351 = arith.addf %348, %350 : vector<1x8x16xf32>
    %352 = arith.addf %39, %351 : vector<1x8x16xf32>
    %353 = vector.shape_cast %289 : vector<1x16x32xf32> to vector<16x32xf32>
    %c1 = arith.constant 1 : index
    %c0_155 = arith.constant 0 : index
    %c0_156 = arith.constant 0 : index
    %354 = vector.load %arg22[%c1, %c0_155, %c0_156] : memref<2x32x96xf32, #tpu.memory_space<vmem>>, vector<1x32x96xf32>
    %355 = vector.shape_cast %354 : vector<1x32x96xf32> to vector<32x96xf32>
    %cst_157 = arith.constant dense<0.000000e+00> : vector<16x96xf32>
    %356 = tpu.matmul %353, %355, %cst_157 {dimension_numbers = #tpu.dot_dimension_numbers<[1], [0], [0], [1], [0, 0, 1, 1], [], []>} : vector<16x32xf32>, vector<32x96xf32>, vector<16x96xf32> -> vector<16x96xf32>
    %c1_158 = arith.constant 1 : index
    %c0_159 = arith.constant 0 : index
    %c0_160 = arith.constant 0 : index
    %357 = vector.load %arg23[%c1_158, %c0_159, %c0_160] : memref<2x1x96xf32, #tpu.memory_space<vmem>>, vector<1x1x96xf32>
    %358 = vector.shape_cast %357 : vector<1x1x96xf32> to vector<1x96xf32>
    %359 = vector.broadcast %358 : vector<1x96xf32> to vector<16x96xf32>
    %360 = arith.addf %356, %359 : vector<16x96xf32>
    %361 = vector.extract_strided_slice %360 {offsets = [0, 0], sizes = [16, 32], strides = [1, 1]} : vector<16x96xf32> to vector<16x32xf32>
    %362 = vector.extract_strided_slice %360 {offsets = [0, 32], sizes = [16, 32], strides = [1, 1]} : vector<16x96xf32> to vector<16x32xf32>
    %363 = vector.extract_strided_slice %360 {offsets = [0, 64], sizes = [16, 32], strides = [1, 1]} : vector<16x96xf32> to vector<16x32xf32>
    %c1_161 = arith.constant 1 : index
    %c0_162 = arith.constant 0 : index
    %c0_163 = arith.constant 0 : index
    %364 = vector.load %arg24[%c1_161, %c0_162, %c0_163] : memref<2x32x32xf32, #tpu.memory_space<vmem>>, vector<1x32x32xf32>
    %365 = vector.shape_cast %364 : vector<1x32x32xf32> to vector<32x32xf32>
    %c1_164 = arith.constant 1 : index
    %c0_165 = arith.constant 0 : index
    %c0_166 = arith.constant 0 : index
    %366 = vector.load %arg25[%c1_164, %c0_165, %c0_166] : memref<2x1x32xf32, #tpu.memory_space<vmem>>, vector<1x1x32xf32>
    %367 = vector.shape_cast %366 : vector<1x1x32xf32> to vector<1x32xf32>
    %368 = vector.shape_cast %361 : vector<16x32xf32> to vector<1x16x32xf32>
    %369 = tpu.concatenate %368, %368, %368, %368 in 1 : vector<1x16x32xf32>, vector<1x16x32xf32>, vector<1x16x32xf32>, vector<1x16x32xf32> -> vector<1x64x32xf32>
    %370 = vector.shape_cast %369 : vector<1x64x32xf32> to vector<64x32xf32>
    %371 = arith.mulf %370, %57 : vector<64x32xf32>
    %372 = vector.shape_cast %362 : vector<16x32xf32> to vector<1x16x32xf32>
    %373 = tpu.concatenate %372, %372, %372, %372 in 1 : vector<1x16x32xf32>, vector<1x16x32xf32>, vector<1x16x32xf32>, vector<1x16x32xf32> -> vector<1x64x32xf32>
    %374 = vector.shape_cast %373 : vector<1x64x32xf32> to vector<64x32xf32>
    %375 = vector.shape_cast %363 : vector<16x32xf32> to vector<1x16x32xf32>
    %376 = tpu.concatenate %375, %375, %375, %375 in 1 : vector<1x16x32xf32>, vector<1x16x32xf32>, vector<1x16x32xf32>, vector<1x16x32xf32> -> vector<1x64x32xf32>
    %377 = vector.shape_cast %376 : vector<1x64x32xf32> to vector<64x32xf32>
    %cst_167 = arith.constant dense<0.000000e+00> : vector<64x64xf32>
    %378 = tpu.matmul %371, %374, %cst_167 {dimension_numbers = #tpu.dot_dimension_numbers<[1], [1], [0], [0], [0, 0, 1, 0], [], []>} : vector<64x32xf32>, vector<64x32xf32>, vector<64x64xf32> -> vector<64x64xf32>
    %cst_168 = arith.constant 0.353553385 : f32
    %379 = vector.broadcast %cst_168 : f32 to vector<64x64xf32>
    %380 = arith.mulf %378, %379 : vector<64x64xf32>
    %381 = arith.addf %380, %60 : vector<64x64xf32>
    %cst_169 = arith.constant dense<0xFF800000> : vector<64xf32>
    %382 = vector.multi_reduction <maximumf>, %381, %cst_169 [1] : vector<64x64xf32> to vector<64xf32>
    %383 = vector.shape_cast %382 : vector<64xf32> to vector<64x1xf32>
    %384 = vector.broadcast %383 : vector<64x1xf32> to vector<64x64xf32>
    %385 = arith.subf %381, %384 : vector<64x64xf32>
    %386 = math.exp %385 : vector<64x64xf32>
    %cst_170 = arith.constant dense<0.000000e+00> : vector<64xf32>
    %387 = vector.multi_reduction <add>, %386, %cst_170 [1] : vector<64x64xf32> to vector<64xf32>
    %388 = vector.shape_cast %387 : vector<64xf32> to vector<64x1xf32>
    %389 = vector.broadcast %388 : vector<64x1xf32> to vector<64x64xf32>
    %390 = arith.divf %386, %389 : vector<64x64xf32>
    %cst_171 = arith.constant dense<0.000000e+00> : vector<64x32xf32>
    %391 = tpu.matmul %390, %377, %cst_171 {dimension_numbers = #tpu.dot_dimension_numbers<[1], [0], [0], [1], [0, 0, 1, 1], [], []>} : vector<64x64xf32>, vector<64x32xf32>, vector<64x32xf32> -> vector<64x32xf32>
    %392 = arith.mulf %391, %57 : vector<64x32xf32>
    %cst_172 = arith.constant dense<0.000000e+00> : vector<64x32xf32>
    %393 = tpu.matmul %392, %365, %cst_172 {dimension_numbers = #tpu.dot_dimension_numbers<[1], [0], [0], [1], [0, 0, 1, 1], [], []>} : vector<64x32xf32>, vector<32x32xf32>, vector<64x32xf32> -> vector<64x32xf32>
    %394 = vector.shape_cast %393 : vector<64x32xf32> to vector<1x64x32xf32>
    %395 = vector.extract_strided_slice %394 {offsets = [0, 0, 0], sizes = [1, 16, 32], strides = [1, 1, 1]} : vector<1x64x32xf32> to vector<1x16x32xf32>
    %396 = vector.extract_strided_slice %394 {offsets = [0, 16, 0], sizes = [1, 16, 32], strides = [1, 1, 1]} : vector<1x64x32xf32> to vector<1x16x32xf32>
    %397 = arith.addf %395, %396 : vector<1x16x32xf32>
    %398 = vector.extract_strided_slice %394 {offsets = [0, 32, 0], sizes = [1, 16, 32], strides = [1, 1, 1]} : vector<1x64x32xf32> to vector<1x16x32xf32>
    %399 = arith.addf %397, %398 : vector<1x16x32xf32>
    %400 = vector.extract_strided_slice %394 {offsets = [0, 48, 0], sizes = [1, 16, 32], strides = [1, 1, 1]} : vector<1x64x32xf32> to vector<1x16x32xf32>
    %401 = arith.addf %399, %400 : vector<1x16x32xf32>
    %402 = vector.shape_cast %367 : vector<1x32xf32> to vector<1x1x32xf32>
    %403 = vector.broadcast %402 : vector<1x1x32xf32> to vector<1x16x32xf32>
    %404 = arith.addf %401, %403 : vector<1x16x32xf32>
    %405 = arith.addf %289, %404 : vector<1x16x32xf32>
    %c1_173 = arith.constant 1 : index
    %c0_174 = arith.constant 0 : index
    %c0_175 = arith.constant 0 : index
    %406 = vector.load %arg30[%c1_173, %c0_174, %c0_175] : memref<2x1x32xf32, #tpu.memory_space<vmem>>, vector<1x1x32xf32>
    %407 = vector.shape_cast %406 : vector<1x1x32xf32> to vector<1x32xf32>
    %c1_176 = arith.constant 1 : index
    %c0_177 = arith.constant 0 : index
    %c0_178 = arith.constant 0 : index
    %408 = vector.load %arg31[%c1_176, %c0_177, %c0_178] : memref<2x1x32xf32, #tpu.memory_space<vmem>>, vector<1x1x32xf32>
    %409 = vector.shape_cast %408 : vector<1x1x32xf32> to vector<1x32xf32>
    %cst_179 = arith.constant dense<0.000000e+00> : vector<1x16xf32>
    %410 = vector.multi_reduction <add>, %405, %cst_179 [2] : vector<1x16x32xf32> to vector<1x16xf32>
    %411 = vector.shape_cast %410 : vector<1x16xf32> to vector<1x16x1xf32>
    %cst_180 = arith.constant 3.200000e+01 : f32
    %412 = vector.broadcast %cst_180 : f32 to vector<1x16x1xf32>
    %413 = arith.divf %411, %412 : vector<1x16x1xf32>
    %414 = vector.broadcast %413 : vector<1x16x1xf32> to vector<1x16x32xf32>
    %415 = arith.subf %405, %414 : vector<1x16x32xf32>
    %416 = arith.mulf %415, %415 : vector<1x16x32xf32>
    %cst_181 = arith.constant dense<0.000000e+00> : vector<1x16xf32>
    %417 = vector.multi_reduction <add>, %416, %cst_181 [2] : vector<1x16x32xf32> to vector<1x16xf32>
    %418 = vector.shape_cast %417 : vector<1x16xf32> to vector<1x16x1xf32>
    %cst_182 = arith.constant 3.200000e+01 : f32
    %419 = vector.broadcast %cst_182 : f32 to vector<1x16x1xf32>
    %420 = arith.divf %418, %419 : vector<1x16x1xf32>
    %cst_183 = arith.constant 9.99999974E-6 : f32
    %421 = vector.broadcast %cst_183 : f32 to vector<1x16x1xf32>
    %422 = arith.addf %420, %421 : vector<1x16x1xf32>
    %423 = math.rsqrt %422 : vector<1x16x1xf32>
    %424 = vector.broadcast %423 : vector<1x16x1xf32> to vector<1x16x32xf32>
    %425 = arith.mulf %415, %424 : vector<1x16x32xf32>
    %426 = vector.shape_cast %407 : vector<1x32xf32> to vector<1x1x32xf32>
    %427 = vector.broadcast %426 : vector<1x1x32xf32> to vector<1x16x32xf32>
    %428 = arith.mulf %425, %427 : vector<1x16x32xf32>
    %429 = vector.shape_cast %409 : vector<1x32xf32> to vector<1x1x32xf32>
    %430 = vector.broadcast %429 : vector<1x1x32xf32> to vector<1x16x32xf32>
    %431 = arith.addf %428, %430 : vector<1x16x32xf32>
    %432 = vector.shape_cast %431 : vector<1x16x32xf32> to vector<16x32xf32>
    %c1_184 = arith.constant 1 : index
    %c0_185 = arith.constant 0 : index
    %c0_186 = arith.constant 0 : index
    %433 = vector.load %arg26[%c1_184, %c0_185, %c0_186] : memref<2x32x64xf32, #tpu.memory_space<vmem>>, vector<1x32x64xf32>
    %434 = vector.shape_cast %433 : vector<1x32x64xf32> to vector<32x64xf32>
    %cst_187 = arith.constant dense<0.000000e+00> : vector<16x64xf32>
    %435 = tpu.matmul %432, %434, %cst_187 {dimension_numbers = #tpu.dot_dimension_numbers<[1], [0], [0], [1], [0, 0, 1, 1], [], []>} : vector<16x32xf32>, vector<32x64xf32>, vector<16x64xf32> -> vector<16x64xf32>
    %c1_188 = arith.constant 1 : index
    %c0_189 = arith.constant 0 : index
    %c0_190 = arith.constant 0 : index
    %436 = vector.load %arg27[%c1_188, %c0_189, %c0_190] : memref<2x1x64xf32, #tpu.memory_space<vmem>>, vector<1x1x64xf32>
    %437 = vector.shape_cast %436 : vector<1x1x64xf32> to vector<1x64xf32>
    %438 = vector.broadcast %437 : vector<1x64xf32> to vector<16x64xf32>
    %439 = arith.addf %435, %438 : vector<16x64xf32>
    %cst_191 = arith.constant 5.000000e-01 : f32
    %440 = vector.broadcast %cst_191 : f32 to vector<16x64xf32>
    %441 = arith.mulf %440, %439 : vector<16x64xf32>
    %442 = arith.mulf %439, %439 : vector<16x64xf32>
    %443 = arith.mulf %442, %439 : vector<16x64xf32>
    %cst_192 = arith.constant 4.471500e-02 : f32
    %444 = vector.broadcast %cst_192 : f32 to vector<16x64xf32>
    %445 = arith.mulf %444, %443 : vector<16x64xf32>
    %446 = arith.addf %439, %445 : vector<16x64xf32>
    %cst_193 = arith.constant 0.797884583 : f32
    %447 = vector.broadcast %cst_193 : f32 to vector<16x64xf32>
    %448 = arith.mulf %447, %446 : vector<16x64xf32>
    %449 = math.tanh %448 : vector<16x64xf32>
    %cst_194 = arith.constant 1.000000e+00 : f32
    %450 = vector.broadcast %cst_194 : f32 to vector<16x64xf32>
    %451 = arith.addf %450, %449 : vector<16x64xf32>
    %452 = arith.mulf %441, %451 : vector<16x64xf32>
    %c1_195 = arith.constant 1 : index
    %c0_196 = arith.constant 0 : index
    %c0_197 = arith.constant 0 : index
    %453 = vector.load %arg28[%c1_195, %c0_196, %c0_197] : memref<2x64x32xf32, #tpu.memory_space<vmem>>, vector<1x64x32xf32>
    %454 = vector.shape_cast %453 : vector<1x64x32xf32> to vector<64x32xf32>
    %cst_198 = arith.constant dense<0.000000e+00> : vector<16x32xf32>
    %455 = tpu.matmul %452, %454, %cst_198 {dimension_numbers = #tpu.dot_dimension_numbers<[1], [0], [0], [1], [0, 0, 1, 1], [], []>} : vector<16x64xf32>, vector<64x32xf32>, vector<16x32xf32> -> vector<16x32xf32>
    %c1_199 = arith.constant 1 : index
    %c0_200 = arith.constant 0 : index
    %c0_201 = arith.constant 0 : index
    %456 = vector.load %arg29[%c1_199, %c0_200, %c0_201] : memref<2x1x32xf32, #tpu.memory_space<vmem>>, vector<1x1x32xf32>
    %457 = vector.shape_cast %456 : vector<1x1x32xf32> to vector<1x32xf32>
    %458 = vector.broadcast %457 : vector<1x32xf32> to vector<16x32xf32>
    %459 = arith.addf %455, %458 : vector<16x32xf32>
    %460 = vector.shape_cast %459 : vector<16x32xf32> to vector<1x16x32xf32>
    %461 = arith.addf %431, %460 : vector<1x16x32xf32>
    %c1_202 = arith.constant 1 : index
    %c0_203 = arith.constant 0 : index
    %c0_204 = arith.constant 0 : index
    %462 = vector.load %arg32[%c1_202, %c0_203, %c0_204] : memref<2x1x32xf32, #tpu.memory_space<vmem>>, vector<1x1x32xf32>
    %463 = vector.shape_cast %462 : vector<1x1x32xf32> to vector<1x32xf32>
    %c1_205 = arith.constant 1 : index
    %c0_206 = arith.constant 0 : index
    %c0_207 = arith.constant 0 : index
    %464 = vector.load %arg33[%c1_205, %c0_206, %c0_207] : memref<2x1x32xf32, #tpu.memory_space<vmem>>, vector<1x1x32xf32>
    %465 = vector.shape_cast %464 : vector<1x1x32xf32> to vector<1x32xf32>
    %cst_208 = arith.constant dense<0.000000e+00> : vector<1x16xf32>
    %466 = vector.multi_reduction <add>, %461, %cst_208 [2] : vector<1x16x32xf32> to vector<1x16xf32>
    %467 = vector.shape_cast %466 : vector<1x16xf32> to vector<1x16x1xf32>
    %cst_209 = arith.constant 3.200000e+01 : f32
    %468 = vector.broadcast %cst_209 : f32 to vector<1x16x1xf32>
    %469 = arith.divf %467, %468 : vector<1x16x1xf32>
    %470 = vector.broadcast %469 : vector<1x16x1xf32> to vector<1x16x32xf32>
    %471 = arith.subf %461, %470 : vector<1x16x32xf32>
    %472 = arith.mulf %471, %471 : vector<1x16x32xf32>
    %cst_210 = arith.constant dense<0.000000e+00> : vector<1x16xf32>
    %473 = vector.multi_reduction <add>, %472, %cst_210 [2] : vector<1x16x32xf32> to vector<1x16xf32>
    %474 = vector.shape_cast %473 : vector<1x16xf32> to vector<1x16x1xf32>
    %cst_211 = arith.constant 3.200000e+01 : f32
    %475 = vector.broadcast %cst_211 : f32 to vector<1x16x1xf32>
    %476 = arith.divf %474, %475 : vector<1x16x1xf32>
    %cst_212 = arith.constant 9.99999974E-6 : f32
    %477 = vector.broadcast %cst_212 : f32 to vector<1x16x1xf32>
    %478 = arith.addf %476, %477 : vector<1x16x1xf32>
    %479 = math.rsqrt %478 : vector<1x16x1xf32>
    %480 = vector.broadcast %479 : vector<1x16x1xf32> to vector<1x16x32xf32>
    %481 = arith.mulf %471, %480 : vector<1x16x32xf32>
    %482 = vector.shape_cast %463 : vector<1x32xf32> to vector<1x1x32xf32>
    %483 = vector.broadcast %482 : vector<1x1x32xf32> to vector<1x16x32xf32>
    %484 = arith.mulf %481, %483 : vector<1x16x32xf32>
    %485 = vector.shape_cast %465 : vector<1x32xf32> to vector<1x1x32xf32>
    %486 = vector.broadcast %485 : vector<1x1x32xf32> to vector<1x16x32xf32>
    %487 = arith.addf %484, %486 : vector<1x16x32xf32>
    %c1_213 = arith.constant 1 : index
    %c0_214 = arith.constant 0 : index
    %c0_215 = arith.constant 0 : index
    %488 = vector.load %arg34[%c1_213, %c0_214, %c0_215] : memref<2x16x48xf32, #tpu.memory_space<vmem>>, vector<1x16x48xf32>
    %489 = vector.shape_cast %488 : vector<1x16x48xf32> to vector<16x48xf32>
    %c1_216 = arith.constant 1 : index
    %c0_217 = arith.constant 0 : index
    %c0_218 = arith.constant 0 : index
    %490 = vector.load %arg35[%c1_216, %c0_217, %c0_218] : memref<2x1x48xf32, #tpu.memory_space<vmem>>, vector<1x1x48xf32>
    %491 = vector.shape_cast %490 : vector<1x1x48xf32> to vector<1x48xf32>
    %492 = vector.shape_cast %352 : vector<1x8x16xf32> to vector<8x16xf32>
    %493 = vector.extract_strided_slice %489 {offsets = [0, 0], sizes = [16, 16], strides = [1, 1]} : vector<16x48xf32> to vector<16x16xf32>
    %cst_219 = arith.constant dense<0.000000e+00> : vector<8x16xf32>
    %494 = tpu.matmul %492, %493, %cst_219 {dimension_numbers = #tpu.dot_dimension_numbers<[1], [0], [0], [1], [0, 0, 1, 1], [], []>} : vector<8x16xf32>, vector<16x16xf32>, vector<8x16xf32> -> vector<8x16xf32>
    %495 = vector.extract_strided_slice %491 {offsets = [0, 0], sizes = [1, 16], strides = [1, 1]} : vector<1x48xf32> to vector<1x16xf32>
    %496 = vector.broadcast %495 : vector<1x16xf32> to vector<8x16xf32>
    %497 = arith.addf %494, %496 : vector<8x16xf32>
    %498 = vector.shape_cast %487 : vector<1x16x32xf32> to vector<16x32xf32>
    %cst_220 = arith.constant dense<0.000000e+00> : vector<32x16xf32>
    %499 = tpu.matmul %55, %498, %cst_220 {dimension_numbers = #tpu.dot_dimension_numbers<[1], [1], [0], [0], [0, 0, 1, 0], [], []>} : vector<32x32xf32>, vector<16x32xf32>, vector<32x16xf32> -> vector<32x16xf32>
    %500 = vector.shape_cast %499 : vector<32x16xf32> to vector<1x32x16xf32>
    %501 = vector.shape_cast %500 : vector<1x32x16xf32> to vector<32x16xf32>
    %502 = vector.extract_strided_slice %489 {offsets = [0, 16], sizes = [16, 32], strides = [1, 1]} : vector<16x48xf32> to vector<16x32xf32>
    %cst_221 = arith.constant dense<0.000000e+00> : vector<32x32xf32>
    %503 = tpu.matmul %501, %502, %cst_221 {dimension_numbers = #tpu.dot_dimension_numbers<[1], [0], [0], [1], [0, 0, 1, 1], [], []>} : vector<32x16xf32>, vector<16x32xf32>, vector<32x32xf32> -> vector<32x32xf32>
    %504 = vector.extract_strided_slice %491 {offsets = [0, 16], sizes = [1, 32], strides = [1, 1]} : vector<1x48xf32> to vector<1x32xf32>
    %505 = vector.broadcast %504 : vector<1x32xf32> to vector<32x32xf32>
    %506 = arith.addf %503, %505 : vector<32x32xf32>
    %507 = vector.extract_strided_slice %506 {offsets = [0, 0], sizes = [32, 16], strides = [1, 1]} : vector<32x32xf32> to vector<32x16xf32>
    %508 = vector.extract_strided_slice %506 {offsets = [0, 16], sizes = [32, 16], strides = [1, 1]} : vector<32x32xf32> to vector<32x16xf32>
    %c1_222 = arith.constant 1 : index
    %c0_223 = arith.constant 0 : index
    %c0_224 = arith.constant 0 : index
    %509 = vector.load %arg36[%c1_222, %c0_223, %c0_224] : memref<2x16x16xf32, #tpu.memory_space<vmem>>, vector<1x16x16xf32>
    %510 = vector.shape_cast %509 : vector<1x16x16xf32> to vector<16x16xf32>
    %c1_225 = arith.constant 1 : index
    %c0_226 = arith.constant 0 : index
    %c0_227 = arith.constant 0 : index
    %511 = vector.load %arg37[%c1_225, %c0_226, %c0_227] : memref<2x1x16xf32, #tpu.memory_space<vmem>>, vector<1x1x16xf32>
    %512 = vector.shape_cast %511 : vector<1x1x16xf32> to vector<1x16xf32>
    %513 = vector.shape_cast %497 : vector<8x16xf32> to vector<1x8x16xf32>
    %514 = tpu.concatenate %513, %513, %513, %513 in 1 : vector<1x8x16xf32>, vector<1x8x16xf32>, vector<1x8x16xf32>, vector<1x8x16xf32> -> vector<1x32x16xf32>
    %515 = vector.shape_cast %514 : vector<1x32x16xf32> to vector<32x16xf32>
    %516 = arith.mulf %515, %59 : vector<32x16xf32>
    %517 = vector.shape_cast %507 : vector<32x16xf32> to vector<1x32x16xf32>
    %518 = tpu.concatenate %517, %517, %517, %517 in 1 : vector<1x32x16xf32>, vector<1x32x16xf32>, vector<1x32x16xf32>, vector<1x32x16xf32> -> vector<1x128x16xf32>
    %519 = vector.shape_cast %518 : vector<1x128x16xf32> to vector<128x16xf32>
    %520 = vector.shape_cast %508 : vector<32x16xf32> to vector<1x32x16xf32>
    %521 = tpu.concatenate %520, %520, %520, %520 in 1 : vector<1x32x16xf32>, vector<1x32x16xf32>, vector<1x32x16xf32>, vector<1x32x16xf32> -> vector<1x128x16xf32>
    %522 = vector.shape_cast %521 : vector<1x128x16xf32> to vector<128x16xf32>
    %cst_228 = arith.constant dense<0.000000e+00> : vector<32x128xf32>
    %523 = tpu.matmul %516, %519, %cst_228 {dimension_numbers = #tpu.dot_dimension_numbers<[1], [1], [0], [0], [0, 0, 1, 0], [], []>} : vector<32x16xf32>, vector<128x16xf32>, vector<32x128xf32> -> vector<32x128xf32>
    %cst_229 = arith.constant 5.000000e-01 : f32
    %524 = vector.broadcast %cst_229 : f32 to vector<32x128xf32>
    %525 = arith.mulf %523, %524 : vector<32x128xf32>
    %526 = arith.addf %525, %62 : vector<32x128xf32>
    %cst_230 = arith.constant dense<0xFF800000> : vector<32xf32>
    %527 = vector.multi_reduction <maximumf>, %526, %cst_230 [1] : vector<32x128xf32> to vector<32xf32>
    %528 = vector.shape_cast %527 : vector<32xf32> to vector<32x1xf32>
    %529 = vector.broadcast %528 : vector<32x1xf32> to vector<32x128xf32>
    %530 = arith.subf %526, %529 : vector<32x128xf32>
    %531 = math.exp %530 : vector<32x128xf32>
    %cst_231 = arith.constant dense<0.000000e+00> : vector<32xf32>
    %532 = vector.multi_reduction <add>, %531, %cst_231 [1] : vector<32x128xf32> to vector<32xf32>
    %533 = vector.shape_cast %532 : vector<32xf32> to vector<32x1xf32>
    %534 = vector.broadcast %533 : vector<32x1xf32> to vector<32x128xf32>
    %535 = arith.divf %531, %534 : vector<32x128xf32>
    %cst_232 = arith.constant dense<0.000000e+00> : vector<32x16xf32>
    %536 = tpu.matmul %535, %522, %cst_232 {dimension_numbers = #tpu.dot_dimension_numbers<[1], [0], [0], [1], [0, 0, 1, 1], [], []>} : vector<32x128xf32>, vector<128x16xf32>, vector<32x16xf32> -> vector<32x16xf32>
    %537 = arith.mulf %536, %59 : vector<32x16xf32>
    %cst_233 = arith.constant dense<0.000000e+00> : vector<32x16xf32>
    %538 = tpu.matmul %537, %510, %cst_233 {dimension_numbers = #tpu.dot_dimension_numbers<[1], [0], [0], [1], [0, 0, 1, 1], [], []>} : vector<32x16xf32>, vector<16x16xf32>, vector<32x16xf32> -> vector<32x16xf32>
    %539 = vector.shape_cast %538 : vector<32x16xf32> to vector<1x32x16xf32>
    %540 = vector.extract_strided_slice %539 {offsets = [0, 0, 0], sizes = [1, 8, 16], strides = [1, 1, 1]} : vector<1x32x16xf32> to vector<1x8x16xf32>
    %541 = vector.extract_strided_slice %539 {offsets = [0, 8, 0], sizes = [1, 8, 16], strides = [1, 1, 1]} : vector<1x32x16xf32> to vector<1x8x16xf32>
    %542 = arith.addf %540, %541 : vector<1x8x16xf32>
    %543 = vector.extract_strided_slice %539 {offsets = [0, 16, 0], sizes = [1, 8, 16], strides = [1, 1, 1]} : vector<1x32x16xf32> to vector<1x8x16xf32>
    %544 = arith.addf %542, %543 : vector<1x8x16xf32>
    %545 = vector.extract_strided_slice %539 {offsets = [0, 24, 0], sizes = [1, 8, 16], strides = [1, 1, 1]} : vector<1x32x16xf32> to vector<1x8x16xf32>
    %546 = arith.addf %544, %545 : vector<1x8x16xf32>
    %547 = vector.shape_cast %512 : vector<1x16xf32> to vector<1x1x16xf32>
    %548 = vector.broadcast %547 : vector<1x1x16xf32> to vector<1x8x16xf32>
    %549 = arith.addf %546, %548 : vector<1x8x16xf32>
    %550 = arith.addf %352, %549 : vector<1x8x16xf32>
    %551 = vector.shape_cast %550 : vector<1x8x16xf32> to vector<8x16xf32>
    %c0_234 = arith.constant 0 : index
    %c0_235 = arith.constant 0 : index
    %552 = vector.load %arg38[%c0_234, %c0_235] : memref<16x8xf32, #tpu.memory_space<vmem>>, vector<16x8xf32>
    %cst_236 = arith.constant dense<0.000000e+00> : vector<8x8xf32>
    %553 = tpu.matmul %551, %552, %cst_236 {dimension_numbers = #tpu.dot_dimension_numbers<[1], [0], [0], [1], [0, 0, 1, 1], [], []>} : vector<8x16xf32>, vector<16x8xf32>, vector<8x8xf32> -> vector<8x8xf32>
    %c0_237 = arith.constant 0 : index
    %c0_238 = arith.constant 0 : index
    %554 = vector.load %arg39[%c0_237, %c0_238] : memref<1x8xf32, #tpu.memory_space<vmem>>, vector<1x8xf32>
    %555 = vector.broadcast %554 : vector<1x8xf32> to vector<8x8xf32>
    %556 = arith.addf %553, %555 : vector<8x8xf32>
    %557 = vector.shape_cast %556 : vector<8x8xf32> to vector<1x8x8xf32>
    %558 = vector.broadcast %31 : vector<1x8x1xf32> to vector<1x8x8xf32>
    %559 = arith.mulf %557, %558 : vector<1x8x8xf32>
    %560 = vector.broadcast %21 : vector<1x8x1xf32> to vector<1x8x8xf32>
    %561 = arith.addf %559, %560 : vector<1x8x8xf32>
    %c0_239 = arith.constant 0 : index
    %c0_240 = arith.constant 0 : index
    %c0_241 = arith.constant 0 : index
    %562 = vector.load %arg40[%c0_239, %c0_240, %c0_241] : memref<1x8x8xf32, #tpu.memory_space<vmem>>, vector<1x8x8xf32>
    tpu.vector_store %arg40[%c0_239, %c0_240, %c0_241], %561 {strides = array<i32>} : memref<1x8x8xf32, #tpu.memory_space<vmem>>, vector<1x8x8xf32>,
    return
  }
  func.func @transform_0(%arg0: i32) -> (i32, i32, i32) {
    %c0_i32 = arith.constant 0 : i32
    %c0_i32_0 = arith.constant 0 : i32
    %c0_i32_1 = arith.constant 0 : i32
    return %arg0, %c0_i32, %c0_i32_0 : i32, i32, i32
  }
  func.func @transform_1(%arg0: i32) -> (i32, i32, i32) {
    %c0_i32 = arith.constant 0 : i32
    %c0_i32_0 = arith.constant 0 : i32
    %c0_i32_1 = arith.constant 0 : i32
    return %arg0, %c0_i32, %c0_i32_0 : i32, i32, i32
  }
  func.func @transform_2(%arg0: i32) -> (i32, i32, i32) {
    %c0_i32 = arith.constant 0 : i32
    %c0_i32_0 = arith.constant 0 : i32
    %c0_i32_1 = arith.constant 0 : i32
    return %arg0, %c0_i32, %c0_i32_0 : i32, i32, i32
  }
  func.func @transform_3(%arg0: i32) -> (i32, i32) {
    %c0_i32 = arith.constant 0 : i32
    %c0_i32_0 = arith.constant 0 : i32
    %c0_i32_1 = arith.constant 0 : i32
    return %c0_i32, %c0_i32_0 : i32, i32
  }
  func.func @transform_4(%arg0: i32) -> (i32, i32) {
    %c0_i32 = arith.constant 0 : i32
    %c0_i32_0 = arith.constant 0 : i32
    %c0_i32_1 = arith.constant 0 : i32
    return %c0_i32, %c0_i32_0 : i32, i32
  }
  func.func @transform_5(%arg0: i32) -> (i32, i32) {
    %c0_i32 = arith.constant 0 : i32
    %c0_i32_0 = arith.constant 0 : i32
    %c0_i32_1 = arith.constant 0 : i32
    return %c0_i32, %c0_i32_0 : i32, i32
  }
  func.func @transform_6(%arg0: i32) -> (i32, i32) {
    %c0_i32 = arith.constant 0 : i32
    %c0_i32_0 = arith.constant 0 : i32
    %c0_i32_1 = arith.constant 0 : i32
    return %c0_i32, %c0_i32_0 : i32, i32
  }
  func.func @transform_7(%arg0: i32) -> (i32, i32) {
    %c0_i32 = arith.constant 0 : i32
    %c0_i32_0 = arith.constant 0 : i32
    %c0_i32_1 = arith.constant 0 : i32
    return %c0_i32, %c0_i32_0 : i32, i32
  }
  func.func @transform_8(%arg0: i32) -> (i32, i32) {
    %c0_i32 = arith.constant 0 : i32
    %c0_i32_0 = arith.constant 0 : i32
    %c0_i32_1 = arith.constant 0 : i32
    return %c0_i32, %c0_i32_0 : i32, i32
  }
  func.func @transform_9(%arg0: i32) -> (i32, i32) {
    %c0_i32 = arith.constant 0 : i32
    %c0_i32_0 = arith.constant 0 : i32
    %c0_i32_1 = arith.constant 0 : i32
    return %c0_i32, %c0_i32_0 : i32, i32
  }
  func.func @transform_10(%arg0: i32) -> (i32, i32) {
    %c0_i32 = arith.constant 0 : i32
    %c0_i32_0 = arith.constant 0 : i32
    %c0_i32_1 = arith.constant 0 : i32
    return %c0_i32, %c0_i32_0 : i32, i32
  }
  func.func @transform_11(%arg0: i32) -> (i32, i32) {
    %c0_i32 = arith.constant 0 : i32
    %c0_i32_0 = arith.constant 0 : i32
    %c0_i32_1 = arith.constant 0 : i32
    return %c0_i32, %c0_i32_0 : i32, i32
  }
  func.func @transform_12(%arg0: i32) -> (i32, i32) {
    %c0_i32 = arith.constant 0 : i32
    %c0_i32_0 = arith.constant 0 : i32
    %c0_i32_1 = arith.constant 0 : i32
    return %c0_i32, %c0_i32_0 : i32, i32
  }
  func.func @transform_13(%arg0: i32) -> (i32, i32) {
    %c0_i32 = arith.constant 0 : i32
    %c0_i32_0 = arith.constant 0 : i32
    %c0_i32_1 = arith.constant 0 : i32
    return %c0_i32, %c0_i32_0 : i32, i32
  }
  func.func @transform_14(%arg0: i32) -> (i32, i32) {
    %c0_i32 = arith.constant 0 : i32
    %c0_i32_0 = arith.constant 0 : i32
    %c0_i32_1 = arith.constant 0 : i32
    return %c0_i32, %c0_i32_0 : i32, i32
  }
  func.func @transform_15(%arg0: i32) -> (i32, i32, i32) {
    %c0_i32 = arith.constant 0 : i32
    %c0_i32_0 = arith.constant 0 : i32
    %c0_i32_1 = arith.constant 0 : i32
    %c0_i32_2 = arith.constant 0 : i32
    return %c0_i32, %c0_i32_0, %c0_i32_1 : i32, i32, i32
  }
  func.func @transform_16(%arg0: i32) -> (i32, i32, i32) {
    %c0_i32 = arith.constant 0 : i32
    %c0_i32_0 = arith.constant 0 : i32
    %c0_i32_1 = arith.constant 0 : i32
    %c0_i32_2 = arith.constant 0 : i32
    return %c0_i32, %c0_i32_0, %c0_i32_1 : i32, i32, i32
  }
  func.func @transform_17(%arg0: i32) -> (i32, i32, i32) {
    %c0_i32 = arith.constant 0 : i32
    %c0_i32_0 = arith.constant 0 : i32
    %c0_i32_1 = arith.constant 0 : i32
    %c0_i32_2 = arith.constant 0 : i32
    return %c0_i32, %c0_i32_0, %c0_i32_1 : i32, i32, i32
  }
  func.func @transform_18(%arg0: i32) -> (i32, i32, i32) {
    %c0_i32 = arith.constant 0 : i32
    %c0_i32_0 = arith.constant 0 : i32
    %c0_i32_1 = arith.constant 0 : i32
    %c0_i32_2 = arith.constant 0 : i32
    return %c0_i32, %c0_i32_0, %c0_i32_1 : i32, i32, i32
  }
  func.func @transform_19(%arg0: i32) -> (i32, i32, i32) {
    %c0_i32 = arith.constant 0 : i32
    %c0_i32_0 = arith.constant 0 : i32
    %c0_i32_1 = arith.constant 0 : i32
    %c0_i32_2 = arith.constant 0 : i32
    return %c0_i32, %c0_i32_0, %c0_i32_1 : i32, i32, i32
  }
  func.func @transform_20(%arg0: i32) -> (i32, i32, i32) {
    %c0_i32 = arith.constant 0 : i32
    %c0_i32_0 = arith.constant 0 : i32
    %c0_i32_1 = arith.constant 0 : i32
    %c0_i32_2 = arith.constant 0 : i32
    return %c0_i32, %c0_i32_0, %c0_i32_1 : i32, i32, i32
  }
  func.func @transform_21(%arg0: i32) -> (i32, i32, i32) {
    %c0_i32 = arith.constant 0 : i32
    %c0_i32_0 = arith.constant 0 : i32
    %c0_i32_1 = arith.constant 0 : i32
    %c0_i32_2 = arith.constant 0 : i32
    return %c0_i32, %c0_i32_0, %c0_i32_1 : i32, i32, i32
  }
  func.func @transform_22(%arg0: i32) -> (i32, i32, i32) {
    %c0_i32 = arith.constant 0 : i32
    %c0_i32_0 = arith.constant 0 : i32
    %c0_i32_1 = arith.constant 0 : i32
    %c0_i32_2 = arith.constant 0 : i32
    return %c0_i32, %c0_i32_0, %c0_i32_1 : i32, i32, i32
  }
  func.func @transform_23(%arg0: i32) -> (i32, i32, i32) {
    %c0_i32 = arith.constant 0 : i32
    %c0_i32_0 = arith.constant 0 : i32
    %c0_i32_1 = arith.constant 0 : i32
    %c0_i32_2 = arith.constant 0 : i32
    return %c0_i32, %c0_i32_0, %c0_i32_1 : i32, i32, i32
  }
  func.func @transform_24(%arg0: i32) -> (i32, i32, i32) {
    %c0_i32 = arith.constant 0 : i32
    %c0_i32_0 = arith.constant 0 : i32
    %c0_i32_1 = arith.constant 0 : i32
    %c0_i32_2 = arith.constant 0 : i32
    return %c0_i32, %c0_i32_0, %c0_i32_1 : i32, i32, i32
  }
  func.func @transform_25(%arg0: i32) -> (i32, i32, i32) {
    %c0_i32 = arith.constant 0 : i32
    %c0_i32_0 = arith.constant 0 : i32
    %c0_i32_1 = arith.constant 0 : i32
    %c0_i32_2 = arith.constant 0 : i32
    return %c0_i32, %c0_i32_0, %c0_i32_1 : i32, i32, i32
  }
  func.func @transform_26(%arg0: i32) -> (i32, i32, i32) {
    %c0_i32 = arith.constant 0 : i32
    %c0_i32_0 = arith.constant 0 : i32
    %c0_i32_1 = arith.constant 0 : i32
    %c0_i32_2 = arith.constant 0 : i32
    return %c0_i32, %c0_i32_0, %c0_i32_1 : i32, i32, i32
  }
  func.func @transform_27(%arg0: i32) -> (i32, i32, i32) {
    %c0_i32 = arith.constant 0 : i32
    %c0_i32_0 = arith.constant 0 : i32
    %c0_i32_1 = arith.constant 0 : i32
    %c0_i32_2 = arith.constant 0 : i32
    return %c0_i32, %c0_i32_0, %c0_i32_1 : i32, i32, i32
  }
  func.func @transform_28(%arg0: i32) -> (i32, i32, i32) {
    %c0_i32 = arith.constant 0 : i32
    %c0_i32_0 = arith.constant 0 : i32
    %c0_i32_1 = arith.constant 0 : i32
    %c0_i32_2 = arith.constant 0 : i32
    return %c0_i32, %c0_i32_0, %c0_i32_1 : i32, i32, i32
  }
  func.func @transform_29(%arg0: i32) -> (i32, i32, i32) {
    %c0_i32 = arith.constant 0 : i32
    %c0_i32_0 = arith.constant 0 : i32
    %c0_i32_1 = arith.constant 0 : i32
    %c0_i32_2 = arith.constant 0 : i32
    return %c0_i32, %c0_i32_0, %c0_i32_1 : i32, i32, i32
  }
  func.func @transform_30(%arg0: i32) -> (i32, i32, i32) {
    %c0_i32 = arith.constant 0 : i32
    %c0_i32_0 = arith.constant 0 : i32
    %c0_i32_1 = arith.constant 0 : i32
    %c0_i32_2 = arith.constant 0 : i32
    return %c0_i32, %c0_i32_0, %c0_i32_1 : i32, i32, i32
  }
  func.func @transform_31(%arg0: i32) -> (i32, i32, i32) {
    %c0_i32 = arith.constant 0 : i32
    %c0_i32_0 = arith.constant 0 : i32
    %c0_i32_1 = arith.constant 0 : i32
    %c0_i32_2 = arith.constant 0 : i32
    return %c0_i32, %c0_i32_0, %c0_i32_1 : i32, i32, i32
  }
  func.func @transform_32(%arg0: i32) -> (i32, i32, i32) {
    %c0_i32 = arith.constant 0 : i32
    %c0_i32_0 = arith.constant 0 : i32
    %c0_i32_1 = arith.constant 0 : i32
    %c0_i32_2 = arith.constant 0 : i32
    return %c0_i32, %c0_i32_0, %c0_i32_1 : i32, i32, i32
  }
  func.func @transform_33(%arg0: i32) -> (i32, i32, i32) {
    %c0_i32 = arith.constant 0 : i32
    %c0_i32_0 = arith.constant 0 : i32
    %c0_i32_1 = arith.constant 0 : i32
    %c0_i32_2 = arith.constant 0 : i32
    return %c0_i32, %c0_i32_0, %c0_i32_1 : i32, i32, i32
  }
  func.func @transform_34(%arg0: i32) -> (i32, i32, i32) {
    %c0_i32 = arith.constant 0 : i32
    %c0_i32_0 = arith.constant 0 : i32
    %c0_i32_1 = arith.constant 0 : i32
    %c0_i32_2 = arith.constant 0 : i32
    return %c0_i32, %c0_i32_0, %c0_i32_1 : i32, i32, i32
  }
  func.func @transform_35(%arg0: i32) -> (i32, i32, i32) {
    %c0_i32 = arith.constant 0 : i32
    %c0_i32_0 = arith.constant 0 : i32
    %c0_i32_1 = arith.constant 0 : i32
    %c0_i32_2 = arith.constant 0 : i32
    return %c0_i32, %c0_i32_0, %c0_i32_1 : i32, i32, i32
  }
  func.func @transform_36(%arg0: i32) -> (i32, i32, i32) {
    %c0_i32 = arith.constant 0 : i32
    %c0_i32_0 = arith.constant 0 : i32
    %c0_i32_1 = arith.constant 0 : i32
    %c0_i32_2 = arith.constant 0 : i32
    return %c0_i32, %c0_i32_0, %c0_i32_1 : i32, i32, i32
  }
  func.func @transform_37(%arg0: i32) -> (i32, i32) {
    %c0_i32 = arith.constant 0 : i32
    %c0_i32_0 = arith.constant 0 : i32
    %c0_i32_1 = arith.constant 0 : i32
    return %c0_i32, %c0_i32_0 : i32, i32
  }
  func.func @transform_38(%arg0: i32) -> (i32, i32) {
    %c0_i32 = arith.constant 0 : i32
    %c0_i32_0 = arith.constant 0 : i32
    %c0_i32_1 = arith.constant 0 : i32
    return %c0_i32, %c0_i32_0 : i32, i32
  }
  func.func @transform_39(%arg0: i32) -> (i32, i32, i32) {
    %c0_i32 = arith.constant 0 : i32
    %c0_i32_0 = arith.constant 0 : i32
    %c0_i32_1 = arith.constant 0 : i32
    return %arg0, %c0_i32, %c0_i32_0 : i32, i32, i32
  }
}

</mosaic_0001>

<llo_original>
// kernel: tpu_custom_call.1
$region0: #{tpu_custom_call.1}
  #allocation0 [shape = 'u32[]', space=smem, size = 0x4, offset = 0x4, fixed_abs, tag = 'smem constant byte address 0x4 - core index']
  #allocation1 [shape = 'u32[144,128]{1,0:T(1,128)}', space=vmem, size = 0x12000, scoped, tag = 'internal scratch']
  %s0 = inlined_call_operand.smem [shape: u32[40], index: -1, kind: input, shape index: {}]
  %s1 = sld [smem:[%s0]]
  %s2 = scalar_lea.smem %s0, 1
  %s3 = sld [smem:[%s2]]
  %s4 = scalar_lea.smem %s0, 2
  %s5 = sld [smem:[%s4]]
  %s6 = scalar_lea.smem %s0, 3
  %s7 = sld [smem:[%s6]]
  %s8 = scalar_lea.smem %s0, 4
  %s9 = sld [smem:[%s8]]
  %s10 = scalar_lea.smem %s0, 5
  %s11 = sld [smem:[%s10]]
  %s12 = scalar_lea.smem %s0, 6
  %s13 = sld [smem:[%s12]]
  %s14 = scalar_lea.smem %s0, 7
  %s15 = sld [smem:[%s14]]
  %s16 = scalar_lea.smem %s0, 8
  %s17 = sld [smem:[%s16]]
  %s18 = scalar_lea.smem %s0, 9
  %s19 = sld [smem:[%s18]]
  %s20 = scalar_lea.smem %s0, 10
  %s21 = sld [smem:[%s20]]
  %s22 = scalar_lea.smem %s0, 11
  %s23 = sld [smem:[%s22]]
  %s24 = scalar_lea.smem %s0, 12
  %s25 = sld [smem:[%s24]]
  %s26 = scalar_lea.smem %s0, 13
  %s27 = sld [smem:[%s26]]
  %s28 = scalar_lea.smem %s0, 14
  %s29 = sld [smem:[%s28]]
  %s30 = scalar_lea.smem %s0, 15
  %s31 = sld [smem:[%s30]]
  %s32 = scalar_lea.smem %s0, 16
  %s33 = sld [smem:[%s32]]
  %s34 = scalar_lea.smem %s0, 17
  %s35 = sld [smem:[%s34]]
  %s36 = scalar_lea.smem %s0, 18
  %s37 = sld [smem:[%s36]]
  %s38 = scalar_lea.smem %s0, 19
  %s39 = sld [smem:[%s38]]
  %s40 = scalar_lea.smem %s0, 20
  %s41 = sld [smem:[%s40]]
  %s42 = scalar_lea.smem %s0, 21
  %s43 = sld [smem:[%s42]]
  %s44 = scalar_lea.smem %s0, 22
  %s45 = sld [smem:[%s44]]
  %s46 = scalar_lea.smem %s0, 23
  %s47 = sld [smem:[%s46]]
  %s48 = scalar_lea.smem %s0, 24
  %s49 = sld [smem:[%s48]]
  %s50 = scalar_lea.smem %s0, 25
  %s51 = sld [smem:[%s50]]
  %s52 = scalar_lea.smem %s0, 26
  %s53 = sld [smem:[%s52]]
  %s54 = scalar_lea.smem %s0, 27
  %s55 = sld [smem:[%s54]]
  %s56 = scalar_lea.smem %s0, 28
  %s57 = sld [smem:[%s56]]
  %s58 = scalar_lea.smem %s0, 29
  %s59 = sld [smem:[%s58]]
  %s60 = scalar_lea.smem %s0, 30
  %s61 = sld [smem:[%s60]]
  %s62 = scalar_lea.smem %s0, 31
  %s63 = sld [smem:[%s62]]
  %s64 = scalar_lea.smem %s0, 32
  %s65 = sld [smem:[%s64]]
  %s66 = scalar_lea.smem %s0, 33
  %s67 = sld [smem:[%s66]]
  %s68 = scalar_lea.smem %s0, 34
  %s69 = sld [smem:[%s68]]
  %s70 = scalar_lea.smem %s0, 35
  %s71 = sld [smem:[%s70]]
  %s72 = scalar_lea.smem %s0, 36
  %s73 = sld [smem:[%s72]]
  %s74 = scalar_lea.smem %s0, 37
  %s75 = sld [smem:[%s74]]
  %s76 = scalar_lea.smem %s0, 38
  %s77 = sld [smem:[%s76]]
  %s78 = scalar_lea.smem %s0, 39
  %s79 = sld [smem:[%s78]]
  %s80 = sld [smem:[#allocation0]]
  $region189: #{tpu_custom_call.1} parent=0
    _
  %s82 = ssub.s32 1, %s80
  %s83 = scalar_select 0, %s82, %s80
  $region1: #{tpu_custom_call.1} parent=0
    #allocation2 [shape = 'u8[8192]{0}', space=vmem, size = 0x2000, scoped, tag = 'output window, operand 0']
    #allocation3 [shape = 's32[2]{0}', space=sflag, size = 0x8, scoped, tag = 'scoped memory for tpu_custom_call.1']
    %84 = vsyncpa [#allocation3], 0
    %s85 = scalar_lea.sflag [#allocation3], 1
    %86 = vsyncpa %s85, 0
    loop: start=0, step=1, limit=4
    $region2: #{tpu_custom_call.1} parent=1 // loop_pre_header
      _
    $region3: #{tpu_custom_call.1} parent=1 // loop_header
      %s88 = sphi 0, %s92
      %p89 = scmp.ge.s32.totalorder %s88, 4
      %s98 = sphi 0, %s100
      %s101 = sphi 0, %s98
      %s102 = sphi 0, %s101
      %s118 = sphi 0, %s102
      %s124 = sphi 0, %s126
      %s127 = sphi 0, %s124
      %s128 = sphi 0, %s127
      %s144 = sphi 0, %s128
      %s150 = sphi 0, %s152
      %s153 = sphi 0, %s150
      %s154 = sphi 0, %s153
      %s170 = sphi 0, %s154
      %s174 = sphi 0, %s174
      %s176 = sphi 0, %s174
      %s177 = sphi 0, %s176
      %s191 = sphi 0, %s177
      %s195 = sphi 0, %s195
      %s197 = sphi 0, %s195
      %s198 = sphi 0, %s197
      %s212 = sphi 0, %s198
      %s216 = sphi 0, %s216
      %s218 = sphi 0, %s216
      %s219 = sphi 0, %s218
      %s233 = sphi 0, %s219
      %s237 = sphi 0, %s237
      %s239 = sphi 0, %s237
      %s240 = sphi 0, %s239
      %s254 = sphi 0, %s240
      %s258 = sphi 0, %s258
      %s260 = sphi 0, %s258
      %s261 = sphi 0, %s260
      %s275 = sphi 0, %s261
      %s279 = sphi 0, %s279
      %s281 = sphi 0, %s279
      %s282 = sphi 0, %s281
      %s296 = sphi 0, %s282
      %s300 = sphi 0, %s300
      %s302 = sphi 0, %s300
      %s303 = sphi 0, %s302
      %s317 = sphi 0, %s303
      %s321 = sphi 0, %s321
      %s323 = sphi 0, %s321
      %s324 = sphi 0, %s323
      %s338 = sphi 0, %s324
      %s342 = sphi 0, %s342
      %s344 = sphi 0, %s342
      %s345 = sphi 0, %s344
      %s359 = sphi 0, %s345
      %s363 = sphi 0, %s363
      %s365 = sphi 0, %s363
      %s366 = sphi 0, %s365
      %s380 = sphi 0, %s366
      %s384 = sphi 0, %s384
      %s386 = sphi 0, %s384
      %s387 = sphi 0, %s386
      %s401 = sphi 0, %s387
      %s405 = sphi 0, %s405
      %s407 = sphi 0, %s405
      %s408 = sphi 0, %s407
      %s422 = sphi 0, %s408
      %s426 = sphi 0, %s426
      %s428 = sphi 0, %s426
      %s429 = sphi 0, %s428
      %s443 = sphi 0, %s429
      %s447 = sphi 0, %s447
      %s449 = sphi 0, %s447
      %s450 = sphi 0, %s449
      %s464 = sphi 0, %s450
      %s468 = sphi 0, %s468
      %s470 = sphi 0, %s468
      %s471 = sphi 0, %s470
      %s485 = sphi 0, %s471
      %s489 = sphi 0, %s489
      %s491 = sphi 0, %s489
      %s492 = sphi 0, %s491
      %s506 = sphi 0, %s492
      %s510 = sphi 0, %s510
      %s512 = sphi 0, %s510
      %s513 = sphi 0, %s512
      %s527 = sphi 0, %s513
      %s531 = sphi 0, %s531
      %s533 = sphi 0, %s531
      %s534 = sphi 0, %s533
      %s548 = sphi 0, %s534
      %s552 = sphi 0, %s552
      %s554 = sphi 0, %s552
      %s555 = sphi 0, %s554
      %s569 = sphi 0, %s555
      %s573 = sphi 0, %s573
      %s575 = sphi 0, %s573
      %s576 = sphi 0, %s575
      %s590 = sphi 0, %s576
      %s594 = sphi 0, %s594
      %s596 = sphi 0, %s594
      %s597 = sphi 0, %s596
      %s611 = sphi 0, %s597
      %s615 = sphi 0, %s615
      %s617 = sphi 0, %s615
      %s618 = sphi 0, %s617
      %s632 = sphi 0, %s618
      %s636 = sphi 0, %s636
      %s638 = sphi 0, %s636
      %s639 = sphi 0, %s638
      %s653 = sphi 0, %s639
      %s657 = sphi 0, %s657
      %s659 = sphi 0, %s657
      %s660 = sphi 0, %s659
      %s674 = sphi 0, %s660
      %s678 = sphi 0, %s678
      %s680 = sphi 0, %s678
      %s681 = sphi 0, %s680
      %s695 = sphi 0, %s681
      %s699 = sphi 0, %s699
      %s701 = sphi 0, %s699
      %s702 = sphi 0, %s701
      %s716 = sphi 0, %s702
      %s720 = sphi 0, %s720
      %s722 = sphi 0, %s720
      %s723 = sphi 0, %s722
      %s737 = sphi 0, %s723
      %s741 = sphi 0, %s741
      %s743 = sphi 0, %s741
      %s744 = sphi 0, %s743
      %s758 = sphi 0, %s744
      %s762 = sphi 0, %s762
      %s764 = sphi 0, %s762
      %s765 = sphi 0, %s764
      %s779 = sphi 0, %s765
      %s783 = sphi 0, %s783
      %s785 = sphi 0, %s783
      %s786 = sphi 0, %s785
      %s800 = sphi 0, %s786
      %s804 = sphi 0, %s804
      %s806 = sphi 0, %s804
      %s807 = sphi 0, %s806
      %s821 = sphi 0, %s807
      %s825 = sphi 0, %s825
      %s827 = sphi 0, %s825
      %s828 = sphi 0, %s827
      %s842 = sphi 0, %s828
      %s846 = sphi 0, %s846
      %s848 = sphi 0, %s846
      %s849 = sphi 0, %s848
      %s863 = sphi 0, %s849
      %s867 = sphi 0, %s867
      %s869 = sphi 0, %s867
      %s870 = sphi 0, %s869
      %s884 = sphi 0, %s870
      %s888 = sphi 0, %s888
      %s890 = sphi 0, %s888
      %s891 = sphi 0, %s890
      %s905 = sphi 0, %s891
      %s909 = sphi 0, %s909
      %s911 = sphi 0, %s909
      %s912 = sphi 0, %s911
      %s926 = sphi 0, %s912
      %s932 = sphi 0, %s934
      %s935 = sphi 0, %s932
      %s936 = sphi 0, %s935
      %s952 = sphi 0, %s936
    $region4: #{tpu_custom_call.1} parent=1 // loop_header_branch
      %91 = sbr.rel (%p89) target = $region8
    $region5: #{tpu_custom_call.1} parent=1 // loop_body
      %s93 = ssub.s32 %s88, 1
      %s94 = ssub.s32 %s88, 2
      %s95 = sadd.s32 %s88, 1
      %s96 = ssub.s32 %s88, %s95
      %p97 = scmp.eq.s32.totalorder %s96, 0
      %s99 = sadd.s32 %s98, 1
      %s100 = scalar_select %p97, %s98, %s99
      %p103 = pneg %p97
      %p104 = scmp.eq.s32.totalorder %s88, 1
      %p105 = por %p103, %p104
      %p106 = scmp.ne.s32.totalorder %s98, %s101
      %p107 = scmp.eq.s32.totalorder %s88, 0
      %p108 = por %p106, %p107
      %p109 = scmp.ne.s32.totalorder %s98, %s101
      %p110 = scmp.eq.s32.totalorder %s93, 1
      %p111 = por %p109, %p110
      %p112 = scmp.ne.s32.totalorder %s101, %s102
      %p113 = scmp.eq.s32.totalorder %s93, 0
      %p114 = por %p112, %p113
      %p115 = scmp.ne.s32.totalorder %s101, %s102
      %p116 = scmp.eq.s32.totalorder %s94, 1
      %p117 = por %p115, %p116
      %p119 = scmp.ne.s32.totalorder %s102, %s118
      %p120 = scmp.eq.s32.totalorder %s94, 0
      %p121 = por %p119, %p120
      %s122 = ssub.s32 %s88, %s95
      %p123 = scmp.eq.s32.totalorder %s122, 0
      %s125 = sadd.s32 %s124, 1
      %s126 = scalar_select %p123, %s124, %s125
      %p129 = pneg %p123
      %p130 = scmp.eq.s32.totalorder %s88, 1
      %p131 = por %p129, %p130
      %p132 = scmp.ne.s32.totalorder %s124, %s127
      %p133 = scmp.eq.s32.totalorder %s88, 0
      %p134 = por %p132, %p133
      %p135 = scmp.ne.s32.totalorder %s124, %s127
      %p136 = scmp.eq.s32.totalorder %s93, 1
      %p137 = por %p135, %p136
      %p138 = scmp.ne.s32.totalorder %s127, %s128
      %p139 = scmp.eq.s32.totalorder %s93, 0
      %p140 = por %p138, %p139
      %p141 = scmp.ne.s32.totalorder %s127, %s128
      %p142 = scmp.eq.s32.totalorder %s94, 1
      %p143 = por %p141, %p142
      %p145 = scmp.ne.s32.totalorder %s128, %s144
      %p146 = scmp.eq.s32.totalorder %s94, 0
      %p147 = por %p145, %p146
      %s148 = ssub.s32 %s88, %s95
      %p149 = scmp.eq.s32.totalorder %s148, 0
      %s151 = sadd.s32 %s150, 1
      %s152 = scalar_select %p149, %s150, %s151
      %p155 = pneg %p149
      %p156 = scmp.eq.s32.totalorder %s88, 1
      %p157 = por %p155, %p156
      %p158 = scmp.ne.s32.totalorder %s150, %s153
      %p159 = scmp.eq.s32.totalorder %s88, 0
      %p160 = por %p158, %p159
      %p161 = scmp.ne.s32.totalorder %s150, %s153
      %p162 = scmp.eq.s32.totalorder %s93, 1
      %p163 = por %p161, %p162
      %p164 = scmp.ne.s32.totalorder %s153, %s154
      %p165 = scmp.eq.s32.totalorder %s93, 0
      %p166 = por %p164, %p165
      %p167 = scmp.ne.s32.totalorder %s153, %s154
      %p168 = scmp.eq.s32.totalorder %s94, 1
      %p169 = por %p167, %p168
      %p171 = scmp.ne.s32.totalorder %s154, %s170
      %p172 = scmp.eq.s32.totalorder %s94, 0
      %p173 = por %p171, %p172
      %s175 = sadd.s32 %s174, 1
      %p178 = scmp.eq.s32.totalorder %s88, 1
      %p179 = scmp.ne.s32.totalorder %s174, %s176
      %p180 = scmp.eq.s32.totalorder %s88, 0
      %p181 = por %p179, %p180
      %p182 = scmp.ne.s32.totalorder %s174, %s176
      %p183 = scmp.eq.s32.totalorder %s93, 1
      %p184 = por %p182, %p183
      %p185 = scmp.ne.s32.totalorder %s176, %s177
      %p186 = scmp.eq.s32.totalorder %s93, 0
      %p187 = por %p185, %p186
      %p188 = scmp.ne.s32.totalorder %s176, %s177
      %p189 = scmp.eq.s32.totalorder %s94, 1
      %p190 = por %p188, %p189
      %p192 = scmp.ne.s32.totalorder %s177, %s191
      %p193 = scmp.eq.s32.totalorder %s94, 0
      %p194 = por %p192, %p193
      %s196 = sadd.s32 %s195, 1
      %p199 = scmp.eq.s32.totalorder %s88, 1
      %p200 = scmp.ne.s32.totalorder %s195, %s197
      %p201 = scmp.eq.s32.totalorder %s88, 0
      %p202 = por %p200, %p201
      %p203 = scmp.ne.s32.totalorder %s195, %s197
      %p204 = scmp.eq.s32.totalorder %s93, 1
      %p205 = por %p203, %p204
      %p206 = scmp.ne.s32.totalorder %s197, %s198
      %p207 = scmp.eq.s32.totalorder %s93, 0
      %p208 = por %p206, %p207
      %p209 = scmp.ne.s32.totalorder %s197, %s198
      %p210 = scmp.eq.s32.totalorder %s94, 1
      %p211 = por %p209, %p210
      %p213 = scmp.ne.s32.totalorder %s198, %s212
      %p214 = scmp.eq.s32.totalorder %s94, 0
      %p215 = por %p213, %p214
      %s217 = sadd.s32 %s216, 1
      %p220 = scmp.eq.s32.totalorder %s88, 1
      %p221 = scmp.ne.s32.totalorder %s216, %s218
      %p222 = scmp.eq.s32.totalorder %s88, 0
      %p223 = por %p221, %p222
      %p224 = scmp.ne.s32.totalorder %s216, %s218
      %p225 = scmp.eq.s32.totalorder %s93, 1
      %p226 = por %p224, %p225
      %p227 = scmp.ne.s32.totalorder %s218, %s219
      %p228 = scmp.eq.s32.totalorder %s93, 0
      %p229 = por %p227, %p228
      %p230 = scmp.ne.s32.totalorder %s218, %s219
      %p231 = scmp.eq.s32.totalorder %s94, 1
      %p232 = por %p230, %p231
      %p234 = scmp.ne.s32.totalorder %s219, %s233
      %p235 = scmp.eq.s32.totalorder %s94, 0
      %p236 = por %p234, %p235
      %s238 = sadd.s32 %s237, 1
      %p241 = scmp.eq.s32.totalorder %s88, 1
      %p242 = scmp.ne.s32.totalorder %s237, %s239
      %p243 = scmp.eq.s32.totalorder %s88, 0
      %p244 = por %p242, %p243
      %p245 = scmp.ne.s32.totalorder %s237, %s239
      %p246 = scmp.eq.s32.totalorder %s93, 1
      %p247 = por %p245, %p246
      %p248 = scmp.ne.s32.totalorder %s239, %s240
      %p249 = scmp.eq.s32.totalorder %s93, 0
      %p250 = por %p248, %p249
      %p251 = scmp.ne.s32.totalorder %s239, %s240
      %p252 = scmp.eq.s32.totalorder %s94, 1
      %p253 = por %p251, %p252
      %p255 = scmp.ne.s32.totalorder %s240, %s254
      %p256 = scmp.eq.s32.totalorder %s94, 0
      %p257 = por %p255, %p256
      %s259 = sadd.s32 %s258, 1
      %p262 = scmp.eq.s32.totalorder %s88, 1
      %p263 = scmp.ne.s32.totalorder %s258, %s260
      %p264 = scmp.eq.s32.totalorder %s88, 0
      %p265 = por %p263, %p264
      %p266 = scmp.ne.s32.totalorder %s258, %s260
      %p267 = scmp.eq.s32.totalorder %s93, 1
      %p268 = por %p266, %p267
      %p269 = scmp.ne.s32.totalorder %s260, %s261
      %p270 = scmp.eq.s32.totalorder %s93, 0
      %p271 = por %p269, %p270
      %p272 = scmp.ne.s32.totalorder %s260, %s261
      %p273 = scmp.eq.s32.totalorder %s94, 1
      %p274 = por %p272, %p273
      %p276 = scmp.ne.s32.totalorder %s261, %s275
      %p277 = scmp.eq.s32.totalorder %s94, 0
      %p278 = por %p276, %p277
      %s280 = sadd.s32 %s279, 1
      %p283 = scmp.eq.s32.totalorder %s88, 1
      %p284 = scmp.ne.s32.totalorder %s279, %s281
      %p285 = scmp.eq.s32.totalorder %s88, 0
      %p286 = por %p284, %p285
      %p287 = scmp.ne.s32.totalorder %s279, %s281
      %p288 = scmp.eq.s32.totalorder %s93, 1
      %p289 = por %p287, %p288
      %p290 = scmp.ne.s32.totalorder %s281, %s282
      %p291 = scmp.eq.s32.totalorder %s93, 0
      %p292 = por %p290, %p291
      %p293 = scmp.ne.s32.totalorder %s281, %s282
      %p294 = scmp.eq.s32.totalorder %s94, 1
      %p295 = por %p293, %p294
      %p297 = scmp.ne.s32.totalorder %s282, %s296
      %p298 = scmp.eq.s32.totalorder %s94, 0
      %p299 = por %p297, %p298
      %s301 = sadd.s32 %s300, 1
      %p304 = scmp.eq.s32.totalorder %s88, 1
      %p305 = scmp.ne.s32.totalorder %s300, %s302
      %p306 = scmp.eq.s32.totalorder %s88, 0
      %p307 = por %p305, %p306
      %p308 = scmp.ne.s32.totalorder %s300, %s302
      %p309 = scmp.eq.s32.totalorder %s93, 1
      %p310 = por %p308, %p309
      %p311 = scmp.ne.s32.totalorder %s302, %s303
      %p312 = scmp.eq.s32.totalorder %s93, 0
      %p313 = por %p311, %p312
      %p314 = scmp.ne.s32.totalorder %s302, %s303
      %p315 = scmp.eq.s32.totalorder %s94, 1
      %p316 = por %p314, %p315
      %p318 = scmp.ne.s32.totalorder %s303, %s317
      %p319 = scmp.eq.s32.totalorder %s94, 0
      %p320 = por %p318, %p319
      %s322 = sadd.s32 %s321, 1
      %p325 = scmp.eq.s32.totalorder %s88, 1
      %p326 = scmp.ne.s32.totalorder %s321, %s323
      %p327 = scmp.eq.s32.totalorder %s88, 0
      %p328 = por %p326, %p327
      %p329 = scmp.ne.s32.totalorder %s321, %s323
      %p330 = scmp.eq.s32.totalorder %s93, 1
      %p331 = por %p329, %p330
      %p332 = scmp.ne.s32.totalorder %s323, %s324
      %p333 = scmp.eq.s32.totalorder %s93, 0
      %p334 = por %p332, %p333
      %p335 = scmp.ne.s32.totalorder %s323, %s324
      %p336 = scmp.eq.s32.totalorder %s94, 1
      %p337 = por %p335, %p336
      %p339 = scmp.ne.s32.totalorder %s324, %s338
      %p340 = scmp.eq.s32.totalorder %s94, 0
      %p341 = por %p339, %p340
      %s343 = sadd.s32 %s342, 1
      %p346 = scmp.eq.s32.totalorder %s88, 1
      %p347 = scmp.ne.s32.totalorder %s342, %s344
      %p348 = scmp.eq.s32.totalorder %s88, 0
      %p349 = por %p347, %p348
      %p350 = scmp.ne.s32.totalorder %s342, %s344
      %p351 = scmp.eq.s32.totalorder %s93, 1
      %p352 = por %p350, %p351
      %p353 = scmp.ne.s32.totalorder %s344, %s345
      %p354 = scmp.eq.s32.totalorder %s93, 0
      %p355 = por %p353, %p354
      %p356 = scmp.ne.s32.totalorder %s344, %s345
      %p357 = scmp.eq.s32.totalorder %s94, 1
      %p358 = por %p356, %p357
      %p360 = scmp.ne.s32.totalorder %s345, %s359
      %p361 = scmp.eq.s32.totalorder %s94, 0
      %p362 = por %p360, %p361
      %s364 = sadd.s32 %s363, 1
      %p367 = scmp.eq.s32.totalorder %s88, 1
      %p368 = scmp.ne.s32.totalorder %s363, %s365
      %p369 = scmp.eq.s32.totalorder %s88, 0
      %p370 = por %p368, %p369
      %p371 = scmp.ne.s32.totalorder %s363, %s365
      %p372 = scmp.eq.s32.totalorder %s93, 1
      %p373 = por %p371, %p372
      %p374 = scmp.ne.s32.totalorder %s365, %s366
      %p375 = scmp.eq.s32.totalorder %s93, 0
      %p376 = por %p374, %p375
      %p377 = scmp.ne.s32.totalorder %s365, %s366
      %p378 = scmp.eq.s32.totalorder %s94, 1
      %p379 = por %p377, %p378
      %p381 = scmp.ne.s32.totalorder %s366, %s380
      %p382 = scmp.eq.s32.totalorder %s94, 0
      %p383 = por %p381, %p382
      %s385 = sadd.s32 %s384, 1
      %p388 = scmp.eq.s32.totalorder %s88, 1
      %p389 = scmp.ne.s32.totalorder %s384, %s386
      %p390 = scmp.eq.s32.totalorder %s88, 0
      %p391 = por %p389, %p390
      %p392 = scmp.ne.s32.totalorder %s384, %s386
      %p393 = scmp.eq.s32.totalorder %s93, 1
      %p394 = por %p392, %p393
      %p395 = scmp.ne.s32.totalorder %s386, %s387
      %p396 = scmp.eq.s32.totalorder %s93, 0
      %p397 = por %p395, %p396
      %p398 = scmp.ne.s32.totalorder %s386, %s387
      %p399 = scmp.eq.s32.totalorder %s94, 1
      %p400 = por %p398, %p399
      %p402 = scmp.ne.s32.totalorder %s387, %s401
      %p403 = scmp.eq.s32.totalorder %s94, 0
      %p404 = por %p402, %p403
      %s406 = sadd.s32 %s405, 1
      %p409 = scmp.eq.s32.totalorder %s88, 1
      %p410 = scmp.ne.s32.totalorder %s405, %s407
      %p411 = scmp.eq.s32.totalorder %s88, 0
      %p412 = por %p410, %p411
      %p413 = scmp.ne.s32.totalorder %s405, %s407
      %p414 = scmp.eq.s32.totalorder %s93, 1
      %p415 = por %p413, %p414
      %p416 = scmp.ne.s32.totalorder %s407, %s408
      %p417 = scmp.eq.s32.totalorder %s93, 0
      %p418 = por %p416, %p417
      %p419 = scmp.ne.s32.totalorder %s407, %s408
      %p420 = scmp.eq.s32.totalorder %s94, 1
      %p421 = por %p419, %p420
      %p423 = scmp.ne.s32.totalorder %s408, %s422
      %p424 = scmp.eq.s32.totalorder %s94, 0
      %p425 = por %p423, %p424
      %s427 = sadd.s32 %s426, 1
      %p430 = scmp.eq.s32.totalorder %s88, 1
      %p431 = scmp.ne.s32.totalorder %s426, %s428
      %p432 = scmp.eq.s32.totalorder %s88, 0
      %p433 = por %p431, %p432
      %p434 = scmp.ne.s32.totalorder %s426, %s428
      %p435 = scmp.eq.s32.totalorder %s93, 1
      %p436 = por %p434, %p435
      %p437 = scmp.ne.s32.totalorder %s428, %s429
      %p438 = scmp.eq.s32.totalorder %s93, 0
      %p439 = por %p437, %p438
      %p440 = scmp.ne.s32.totalorder %s428, %s429
      %p441 = scmp.eq.s32.totalorder %s94, 1
      %p442 = por %p440, %p441
      %p444 = scmp.ne.s32.totalorder %s429, %s443
      %p445 = scmp.eq.s32.totalorder %s94, 0
      %p446 = por %p444, %p445
      %s448 = sadd.s32 %s447, 1
      %p451 = scmp.eq.s32.totalorder %s88, 1
      %p452 = scmp.ne.s32.totalorder %s447, %s449
      %p453 = scmp.eq.s32.totalorder %s88, 0
      %p454 = por %p452, %p453
      %p455 = scmp.ne.s32.totalorder %s447, %s449
      %p456 = scmp.eq.s32.totalorder %s93, 1
      %p457 = por %p455, %p456
      %p458 = scmp.ne.s32.totalorder %s449, %s450
      %p459 = scmp.eq.s32.totalorder %s93, 0
      %p460 = por %p458, %p459
      %p461 = scmp.ne.s32.totalorder %s449, %s450
      %p462 = scmp.eq.s32.totalorder %s94, 1
      %p463 = por %p461, %p462
      %p465 = scmp.ne.s32.totalorder %s450, %s464
      %p466 = scmp.eq.s32.totalorder %s94, 0
      %p467 = por %p465, %p466
      %s469 = sadd.s32 %s468, 1
      %p472 = scmp.eq.s32.totalorder %s88, 1
      %p473 = scmp.ne.s32.totalorder %s468, %s470
      %p474 = scmp.eq.s32.totalorder %s88, 0
      %p475 = por %p473, %p474
      %p476 = scmp.ne.s32.totalorder %s468, %s470
      %p477 = scmp.eq.s32.totalorder %s93, 1
      %p478 = por %p476, %p477
      %p479 = scmp.ne.s32.totalorder %s470, %s471
      %p480 = scmp.eq.s32.totalorder %s93, 0
      %p481 = por %p479, %p480
      %p482 = scmp.ne.s32.totalorder %s470, %s471
      %p483 = scmp.eq.s32.totalorder %s94, 1
      %p484 = por %p482, %p483
      %p486 = scmp.ne.s32.totalorder %s471, %s485
      %p487 = scmp.eq.s32.totalorder %s94, 0
      %p488 = por %p486, %p487
      %s490 = sadd.s32 %s489, 1
      %p493 = scmp.eq.s32.totalorder %s88, 1
      %p494 = scmp.ne.s32.totalorder %s489, %s491
      %p495 = scmp.eq.s32.totalorder %s88, 0
      %p496 = por %p494, %p495
      %p497 = scmp.ne.s32.totalorder %s489, %s491
      %p498 = scmp.eq.s32.totalorder %s93, 1
      %p499 = por %p497, %p498
      %p500 = scmp.ne.s32.totalorder %s491, %s492
      %p501 = scmp.eq.s32.totalorder %s93, 0
      %p502 = por %p500, %p501
      %p503 = scmp.ne.s32.totalorder %s491, %s492
      %p504 = scmp.eq.s32.totalorder %s94, 1
      %p505 = por %p503, %p504
      %p507 = scmp.ne.s32.totalorder %s492, %s506
      %p508 = scmp.eq.s32.totalorder %s94, 0
      %p509 = por %p507, %p508
      %s511 = sadd.s32 %s510, 1
      %p514 = scmp.eq.s32.totalorder %s88, 1
      %p515 = scmp.ne.s32.totalorder %s510, %s512
      %p516 = scmp.eq.s32.totalorder %s88, 0
      %p517 = por %p515, %p516
      %p518 = scmp.ne.s32.totalorder %s510, %s512
      %p519 = scmp.eq.s32.totalorder %s93, 1
      %p520 = por %p518, %p519
      %p521 = scmp.ne.s32.totalorder %s512, %s513
      %p522 = scmp.eq.s32.totalorder %s93, 0
      %p523 = por %p521, %p522
      %p524 = scmp.ne.s32.totalorder %s512, %s513
      %p525 = scmp.eq.s32.totalorder %s94, 1
      %p526 = por %p524, %p525
      %p528 = scmp.ne.s32.totalorder %s513, %s527
      %p529 = scmp.eq.s32.totalorder %s94, 0
      %p530 = por %p528, %p529
      %s532 = sadd.s32 %s531, 1
      %p535 = scmp.eq.s32.totalorder %s88, 1
      %p536 = scmp.ne.s32.totalorder %s531, %s533
      %p537 = scmp.eq.s32.totalorder %s88, 0
      %p538 = por %p536, %p537
      %p539 = scmp.ne.s32.totalorder %s531, %s533
      %p540 = scmp.eq.s32.totalorder %s93, 1
      %p541 = por %p539, %p540
      %p542 = scmp.ne.s32.totalorder %s533, %s534
      %p543 = scmp.eq.s32.totalorder %s93, 0
      %p544 = por %p542, %p543
      %p545 = scmp.ne.s32.totalorder %s533, %s534
      %p546 = scmp.eq.s32.totalorder %s94, 1
      %p547 = por %p545, %p546
      %p549 = scmp.ne.s32.totalorder %s534, %s548
      %p550 = scmp.eq.s32.totalorder %s94, 0
      %p551 = por %p549, %p550
      %s553 = sadd.s32 %s552, 1
      %p556 = scmp.eq.s32.totalorder %s88, 1
      %p557 = scmp.ne.s32.totalorder %s552, %s554
      %p558 = scmp.eq.s32.totalorder %s88, 0
      %p559 = por %p557, %p558
      %p560 = scmp.ne.s32.totalorder %s552, %s554
      %p561 = scmp.eq.s32.totalorder %s93, 1
      %p562 = por %p560, %p561
      %p563 = scmp.ne.s32.totalorder %s554, %s555
      %p564 = scmp.eq.s32.totalorder %s93, 0
      %p565 = por %p563, %p564
      %p566 = scmp.ne.s32.totalorder %s554, %s555
      %p567 = scmp.eq.s32.totalorder %s94, 1
      %p568 = por %p566, %p567
      %p570 = scmp.ne.s32.totalorder %s555, %s569
      %p571 = scmp.eq.s32.totalorder %s94, 0
      %p572 = por %p570, %p571
      %s574 = sadd.s32 %s573, 1
      %p577 = scmp.eq.s32.totalorder %s88, 1
      %p578 = scmp.ne.s32.totalorder %s573, %s575
      %p579 = scmp.eq.s32.totalorder %s88, 0
      %p580 = por %p578, %p579
      %p581 = scmp.ne.s32.totalorder %s573, %s575
      %p582 = scmp.eq.s32.totalorder %s93, 1
      %p583 = por %p581, %p582
      %p584 = scmp.ne.s32.totalorder %s575, %s576
      %p585 = scmp.eq.s32.totalorder %s93, 0
      %p586 = por %p584, %p585
      %p587 = scmp.ne.s32.totalorder %s575, %s576
      %p588 = scmp.eq.s32.totalorder %s94, 1
      %p589 = por %p587, %p588
      %p591 = scmp.ne.s32.totalorder %s576, %s590
      %p592 = scmp.eq.s32.totalorder %s94, 0
      %p593 = por %p591, %p592
      %s595 = sadd.s32 %s594, 1
      %p598 = scmp.eq.s32.totalorder %s88, 1
      %p599 = scmp.ne.s32.totalorder %s594, %s596
      %p600 = scmp.eq.s32.totalorder %s88, 0
      %p601 = por %p599, %p600
      %p602 = scmp.ne.s32.totalorder %s594, %s596
      %p603 = scmp.eq.s32.totalorder %s93, 1
      %p604 = por %p602, %p603
      %p605 = scmp.ne.s32.totalorder %s596, %s597
      %p606 = scmp.eq.s32.totalorder %s93, 0
      %p607 = por %p605, %p606
      %p608 = scmp.ne.s32.totalorder %s596, %s597
      %p609 = scmp.eq.s32.totalorder %s94, 1
      %p610 = por %p608, %p609
      %p612 = scmp.ne.s32.totalorder %s597, %s611
      %p613 = scmp.eq.s32.totalorder %s94, 0
      %p614 = por %p612, %p613
      %s616 = sadd.s32 %s615, 1
      %p619 = scmp.eq.s32.totalorder %s88, 1
      %p620 = scmp.ne.s32.totalorder %s615, %s617
      %p621 = scmp.eq.s32.totalorder %s88, 0
      %p622 = por %p620, %p621
      %p623 = scmp.ne.s32.totalorder %s615, %s617
      %p624 = scmp.eq.s32.totalorder %s93, 1
      %p625 = por %p623, %p624
      %p626 = scmp.ne.s32.totalorder %s617, %s618
      %p627 = scmp.eq.s32.totalorder %s93, 0
      %p628 = por %p626, %p627
      %p629 = scmp.ne.s32.totalorder %s617, %s618
      %p630 = scmp.eq.s32.totalorder %s94, 1
      %p631 = por %p629, %p630
      %p633 = scmp.ne.s32.totalorder %s618, %s632
      %p634 = scmp.eq.s32.totalorder %s94, 0
      %p635 = por %p633, %p634
      %s637 = sadd.s32 %s636, 1
      %p640 = scmp.eq.s32.totalorder %s88, 1
      %p641 = scmp.ne.s32.totalorder %s636, %s638
      %p642 = scmp.eq.s32.totalorder %s88, 0
      %p643 = por %p641, %p642
      %p644 = scmp.ne.s32.totalorder %s636, %s638
      %p645 = scmp.eq.s32.totalorder %s93, 1
      %p646 = por %p644, %p645
      %p647 = scmp.ne.s32.totalorder %s638, %s639
      %p648 = scmp.eq.s32.totalorder %s93, 0
      %p649 = por %p647, %p648
      %p650 = scmp.ne.s32.totalorder %s638, %s639
      %p651 = scmp.eq.s32.totalorder %s94, 1
      %p652 = por %p650, %p651
      %p654 = scmp.ne.s32.totalorder %s639, %s653
      %p655 = scmp.eq.s32.totalorder %s94, 0
      %p656 = por %p654, %p655
      %s658 = sadd.s32 %s657, 1
      %p661 = scmp.eq.s32.totalorder %s88, 1
      %p662 = scmp.ne.s32.totalorder %s657, %s659
      %p663 = scmp.eq.s32.totalorder %s88, 0
      %p664 = por %p662, %p663
      %p665 = scmp.ne.s32.totalorder %s657, %s659
      %p666 = scmp.eq.s32.totalorder %s93, 1
      %p667 = por %p665, %p666
      %p668 = scmp.ne.s32.totalorder %s659, %s660
      %p669 = scmp.eq.s32.totalorder %s93, 0
      %p670 = por %p668, %p669
      %p671 = scmp.ne.s32.totalorder %s659, %s660
      %p672 = scmp.eq.s32.totalorder %s94, 1
      %p673 = por %p671, %p672
      %p675 = scmp.ne.s32.totalorder %s660, %s674
      %p676 = scmp.eq.s32.totalorder %s94, 0
      %p677 = por %p675, %p676
      %s679 = sadd.s32 %s678, 1
      %p682 = scmp.eq.s32.totalorder %s88, 1
      %p683 = scmp.ne.s32.totalorder %s678, %s680
      %p684 = scmp.eq.s32.totalorder %s88, 0
      %p685 = por %p683, %p684
      %p686 = scmp.ne.s32.totalorder %s678, %s680
      %p687 = scmp.eq.s32.totalorder %s93, 1
      %p688 = por %p686, %p687
      %p689 = scmp.ne.s32.totalorder %s680, %s681
      %p690 = scmp.eq.s32.totalorder %s93, 0
      %p691 = por %p689, %p690
      %p692 = scmp.ne.s32.totalorder %s680, %s681
      %p693 = scmp.eq.s32.totalorder %s94, 1
      %p694 = por %p692, %p693
      %p696 = scmp.ne.s32.totalorder %s681, %s695
      %p697 = scmp.eq.s32.totalorder %s94, 0
      %p698 = por %p696, %p697
      %s700 = sadd.s32 %s699, 1
      %p703 = scmp.eq.s32.totalorder %s88, 1
      %p704 = scmp.ne.s32.totalorder %s699, %s701
      %p705 = scmp.eq.s32.totalorder %s88, 0
      %p706 = por %p704, %p705
      %p707 = scmp.ne.s32.totalorder %s699, %s701
      %p708 = scmp.eq.s32.totalorder %s93, 1
      %p709 = por %p707, %p708
      %p710 = scmp.ne.s32.totalorder %s701, %s702
      %p711 = scmp.eq.s32.totalorder %s93, 0
      %p712 = por %p710, %p711
      %p713 = scmp.ne.s32.totalorder %s701, %s702
      %p714 = scmp.eq.s32.totalorder %s94, 1
      %p715 = por %p713, %p714
      %p717 = scmp.ne.s32.totalorder %s702, %s716
      %p718 = scmp.eq.s32.totalorder %s94, 0
      %p719 = por %p717, %p718
      %s721 = sadd.s32 %s720, 1
      %p724 = scmp.eq.s32.totalorder %s88, 1
      %p725 = scmp.ne.s32.totalorder %s720, %s722
      %p726 = scmp.eq.s32.totalorder %s88, 0
      %p727 = por %p725, %p726
      %p728 = scmp.ne.s32.totalorder %s720, %s722
      %p729 = scmp.eq.s32.totalorder %s93, 1
      %p730 = por %p728, %p729
      %p731 = scmp.ne.s32.totalorder %s722, %s723
      %p732 = scmp.eq.s32.totalorder %s93, 0
      %p733 = por %p731, %p732
      %p734 = scmp.ne.s32.totalorder %s722, %s723
      %p735 = scmp.eq.s32.totalorder %s94, 1
      %p736 = por %p734, %p735
      %p738 = scmp.ne.s32.totalorder %s723, %s737
      %p739 = scmp.eq.s32.totalorder %s94, 0
      %p740 = por %p738, %p739
      %s742 = sadd.s32 %s741, 1
      %p745 = scmp.eq.s32.totalorder %s88, 1
      %p746 = scmp.ne.s32.totalorder %s741, %s743
      %p747 = scmp.eq.s32.totalorder %s88, 0
      %p748 = por %p746, %p747
      %p749 = scmp.ne.s32.totalorder %s741, %s743
      %p750 = scmp.eq.s32.totalorder %s93, 1
      %p751 = por %p749, %p750
      %p752 = scmp.ne.s32.totalorder %s743, %s744
      %p753 = scmp.eq.s32.totalorder %s93, 0
      %p754 = por %p752, %p753
      %p755 = scmp.ne.s32.totalorder %s743, %s744
      %p756 = scmp.eq.s32.totalorder %s94, 1
      %p757 = por %p755, %p756
      %p759 = scmp.ne.s32.totalorder %s744, %s758
      %p760 = scmp.eq.s32.totalorder %s94, 0
      %p761 = por %p759, %p760
      %s763 = sadd.s32 %s762, 1
      %p766 = scmp.eq.s32.totalorder %s88, 1
      %p767 = scmp.ne.s32.totalorder %s762, %s764
      %p768 = scmp.eq.s32.totalorder %s88, 0
      %p769 = por %p767, %p768
      %p770 = scmp.ne.s32.totalorder %s762, %s764
      %p771 = scmp.eq.s32.totalorder %s93, 1
      %p772 = por %p770, %p771
      %p773 = scmp.ne.s32.totalorder %s764, %s765
      %p774 = scmp.eq.s32.totalorder %s93, 0
      %p775 = por %p773, %p774
      %p776 = scmp.ne.s32.totalorder %s764, %s765
      %p777 = scmp.eq.s32.totalorder %s94, 1
      %p778 = por %p776, %p777
      %p780 = scmp.ne.s32.totalorder %s765, %s779
      %p781 = scmp.eq.s32.totalorder %s94, 0
      %p782 = por %p780, %p781
      %s784 = sadd.s32 %s783, 1
      %p787 = scmp.eq.s32.totalorder %s88, 1
      %p788 = scmp.ne.s32.totalorder %s783, %s785
      %p789 = scmp.eq.s32.totalorder %s88, 0
      %p790 = por %p788, %p789
      %p791 = scmp.ne.s32.totalorder %s783, %s785
      %p792 = scmp.eq.s32.totalorder %s93, 1
      %p793 = por %p791, %p792
      %p794 = scmp.ne.s32.totalorder %s785, %s786
      %p795 = scmp.eq.s32.totalorder %s93, 0
      %p796 = por %p794, %p795
      %p797 = scmp.ne.s32.totalorder %s785, %s786
      %p798 = scmp.eq.s32.totalorder %s94, 1
      %p799 = por %p797, %p798
      %p801 = scmp.ne.s32.totalorder %s786, %s800
      %p802 = scmp.eq.s32.totalorder %s94, 0
      %p803 = por %p801, %p802
      %s805 = sadd.s32 %s804, 1
      %p808 = scmp.eq.s32.totalorder %s88, 1
      %p809 = scmp.ne.s32.totalorder %s804, %s806
      %p810 = scmp.eq.s32.totalorder %s88, 0
      %p811 = por %p809, %p810
      %p812 = scmp.ne.s32.totalorder %s804, %s806
      %p813 = scmp.eq.s32.totalorder %s93, 1
      %p814 = por %p812, %p813
      %p815 = scmp.ne.s32.totalorder %s806, %s807
      %p816 = scmp.eq.s32.totalorder %s93, 0
      %p817 = por %p815, %p816
      %p818 = scmp.ne.s32.totalorder %s806, %s807
      %p819 = scmp.eq.s32.totalorder %s94, 1
      %p820 = por %p818, %p819
      %p822 = scmp.ne.s32.totalorder %s807, %s821
      %p823 = scmp.eq.s32.totalorder %s94, 0
      %p824 = por %p822, %p823
      %s826 = sadd.s32 %s825, 1
      %p829 = scmp.eq.s32.totalorder %s88, 1
      %p830 = scmp.ne.s32.totalorder %s825, %s827
      %p831 = scmp.eq.s32.totalorder %s88, 0
      %p832 = por %p830, %p831
      %p833 = scmp.ne.s32.totalorder %s825, %s827
      %p834 = scmp.eq.s32.totalorder %s93, 1
      %p835 = por %p833, %p834
      %p836 = scmp.ne.s32.totalorder %s827, %s828
      %p837 = scmp.eq.s32.totalorder %s93, 0
      %p838 = por %p836, %p837
      %p839 = scmp.ne.s32.totalorder %s827, %s828
      %p840 = scmp.eq.s32.totalorder %s94, 1
      %p841 = por %p839, %p840
      %p843 = scmp.ne.s32.totalorder %s828, %s842
      %p844 = scmp.eq.s32.totalorder %s94, 0
      %p845 = por %p843, %p844
      %s847 = sadd.s32 %s846, 1
      %p850 = scmp.eq.s32.totalorder %s88, 1
      %p851 = scmp.ne.s32.totalorder %s846, %s848
      %p852 = scmp.eq.s32.totalorder %s88, 0
      %p853 = por %p851, %p852
      %p854 = scmp.ne.s32.totalorder %s846, %s848
      %p855 = scmp.eq.s32.totalorder %s93, 1
      %p856 = por %p854, %p855
      %p857 = scmp.ne.s32.totalorder %s848, %s849
      %p858 = scmp.eq.s32.totalorder %s93, 0
      %p859 = por %p857, %p858
      %p860 = scmp.ne.s32.totalorder %s848, %s849
      %p861 = scmp.eq.s32.totalorder %s94, 1
      %p862 = por %p860, %p861
      %p864 = scmp.ne.s32.totalorder %s849, %s863
      %p865 = scmp.eq.s32.totalorder %s94, 0
      %p866 = por %p864, %p865
      %s868 = sadd.s32 %s867, 1
      %p871 = scmp.eq.s32.totalorder %s88, 1
      %p872 = scmp.ne.s32.totalorder %s867, %s869
      %p873 = scmp.eq.s32.totalorder %s88, 0
      %p874 = por %p872, %p873
      %p875 = scmp.ne.s32.totalorder %s867, %s869
      %p876 = scmp.eq.s32.totalorder %s93, 1
      %p877 = por %p875, %p876
      %p878 = scmp.ne.s32.totalorder %s869, %s870
      %p879 = scmp.eq.s32.totalorder %s93, 0
      %p880 = por %p878, %p879
      %p881 = scmp.ne.s32.totalorder %s869, %s870
      %p882 = scmp.eq.s32.totalorder %s94, 1
      %p883 = por %p881, %p882
      %p885 = scmp.ne.s32.totalorder %s870, %s884
      %p886 = scmp.eq.s32.totalorder %s94, 0
      %p887 = por %p885, %p886
      %s889 = sadd.s32 %s888, 1
      %p892 = scmp.eq.s32.totalorder %s88, 1
      %p893 = scmp.ne.s32.totalorder %s888, %s890
      %p894 = scmp.eq.s32.totalorder %s88, 0
      %p895 = por %p893, %p894
      %p896 = scmp.ne.s32.totalorder %s888, %s890
      %p897 = scmp.eq.s32.totalorder %s93, 1
      %p898 = por %p896, %p897
      %p899 = scmp.ne.s32.totalorder %s890, %s891
      %p900 = scmp.eq.s32.totalorder %s93, 0
      %p901 = por %p899, %p900
      %p902 = scmp.ne.s32.totalorder %s890, %s891
      %p903 = scmp.eq.s32.totalorder %s94, 1
      %p904 = por %p902, %p903
      %p906 = scmp.ne.s32.totalorder %s891, %s905
      %p907 = scmp.eq.s32.totalorder %s94, 0
      %p908 = por %p906, %p907
      %s910 = sadd.s32 %s909, 1
      %p913 = scmp.eq.s32.totalorder %s88, 1
      %p914 = scmp.ne.s32.totalorder %s909, %s911
      %p915 = scmp.eq.s32.totalorder %s88, 0
      %p916 = por %p914, %p915
      %p917 = scmp.ne.s32.totalorder %s909, %s911
      %p918 = scmp.eq.s32.totalorder %s93, 1
      %p919 = por %p917, %p918
      %p920 = scmp.ne.s32.totalorder %s911, %s912
      %p921 = scmp.eq.s32.totalorder %s93, 0
      %p922 = por %p920, %p921
      %p923 = scmp.ne.s32.totalorder %s911, %s912
      %p924 = scmp.eq.s32.totalorder %s94, 1
      %p925 = por %p923, %p924
      %p927 = scmp.ne.s32.totalorder %s912, %s926
      %p928 = scmp.eq.s32.totalorder %s94, 0
      %p929 = por %p927, %p928
      %s930 = ssub.s32 %s88, %s95
      %p931 = scmp.eq.s32.totalorder %s930, 0
      %s933 = sadd.s32 %s932, 1
      %s934 = scalar_select %p931, %s932, %s933
      %p937 = pneg %p931
      %p938 = scmp.eq.s32.totalorder %s88, 1
      %p939 = por %p937, %p938
      %p940 = scmp.ne.s32.totalorder %s932, %s935
      %p941 = scmp.eq.s32.totalorder %s88, 0
      %p942 = por %p940, %p941
      %p943 = scmp.ne.s32.totalorder %s932, %s935
      %p944 = scmp.eq.s32.totalorder %s93, 1
      %p945 = por %p943, %p944
      %p946 = scmp.ne.s32.totalorder %s935, %s936
      %p947 = scmp.eq.s32.totalorder %s93, 0
      %p948 = por %p946, %p947
      %p949 = scmp.ne.s32.totalorder %s935, %s936
      %p950 = scmp.eq.s32.totalorder %s94, 1
      %p951 = por %p949, %p950
      %p953 = scmp.ne.s32.totalorder %s936, %s952
      %p954 = scmp.eq.s32.totalorder %s94, 0
      %p955 = por %p953, %p954
      %p956 = scmp.le.s32.totalorder 1, %s88
      %p957 = scmp.lt.s32.totalorder %s88, 3
      %p958 = pnand %p956, %p957
      %p959 = pneg %p958
      // Predicated region
      $region9: #{tpu_custom_call.1} parent=5 // pred_check
        _
      $region10: #{tpu_custom_call.1} parent=5 // pred_check_branch
        %961 = sbr.rel (%p958) target = $region12
      $region11: #{tpu_custom_call.1} parent=5 // pred_region
        %s962 = ssub.s32 %s88, 1
        // Predicated region
        $region13: #{tpu_custom_call.1} parent=11 // pred_check
          %p963 = pneg %p187
        $region14: #{tpu_custom_call.1} parent=11 // pred_check_branch
          %965 = sbr.rel (%p963) target = $region16
        $region15: #{tpu_custom_call.1} parent=11 // pred_region
          _
        $region16: #{tpu_custom_call.1} parent=11 // pred_fallthru
          _
        // Predicated region
        $region17: #{tpu_custom_call.1} parent=11 // pred_check
          %p966 = pneg %p208
        $region18: #{tpu_custom_call.1} parent=11 // pred_check_branch
          %968 = sbr.rel (%p966) target = $region20
        $region19: #{tpu_custom_call.1} parent=11 // pred_region
          _
        $region20: #{tpu_custom_call.1} parent=11 // pred_fallthru
          _
        // Predicated region
        $region21: #{tpu_custom_call.1} parent=11 // pred_check
          %p969 = pneg %p229
        $region22: #{tpu_custom_call.1} parent=11 // pred_check_branch
          %971 = sbr.rel (%p969) target = $region24
        $region23: #{tpu_custom_call.1} parent=11 // pred_region
          _
        $region24: #{tpu_custom_call.1} parent=11 // pred_fallthru
          _
        // Predicated region
        $region25: #{tpu_custom_call.1} parent=11 // pred_check
          %p972 = pneg %p250
        $region26: #{tpu_custom_call.1} parent=11 // pred_check_branch
          %974 = sbr.rel (%p972) target = $region28
        $region27: #{tpu_custom_call.1} parent=11 // pred_region
          _
        $region28: #{tpu_custom_call.1} parent=11 // pred_fallthru
          _
        // Predicated region
        $region29: #{tpu_custom_call.1} parent=11 // pred_check
          %p975 = pneg %p271
        $region30: #{tpu_custom_call.1} parent=11 // pred_check_branch
          %977 = sbr.rel (%p975) target = $region32
        $region31: #{tpu_custom_call.1} parent=11 // pred_region
          _
        $region32: #{tpu_custom_call.1} parent=11 // pred_fallthru
          _
        // Predicated region
        $region33: #{tpu_custom_call.1} parent=11 // pred_check
          %p978 = pneg %p292
        $region34: #{tpu_custom_call.1} parent=11 // pred_check_branch
          %980 = sbr.rel (%p978) target = $region36
        $region35: #{tpu_custom_call.1} parent=11 // pred_region
          _
        $region36: #{tpu_custom_call.1} parent=11 // pred_fallthru
          _
        // Predicated region
        $region37: #{tpu_custom_call.1} parent=11 // pred_check
          %p981 = pneg %p313
        $region38: #{tpu_custom_call.1} parent=11 // pred_check_branch
          %983 = sbr.rel (%p981) target = $region40
        $region39: #{tpu_custom_call.1} parent=11 // pred_region
          _
        $region40: #{tpu_custom_call.1} parent=11 // pred_fallthru
          _
        // Predicated region
        $region41: #{tpu_custom_call.1} parent=11 // pred_check
          %p984 = pneg %p334
        $region42: #{tpu_custom_call.1} parent=11 // pred_check_branch
          %986 = sbr.rel (%p984) target = $region44
        $region43: #{tpu_custom_call.1} parent=11 // pred_region
          _
        $region44: #{tpu_custom_call.1} parent=11 // pred_fallthru
          _
        // Predicated region
        $region45: #{tpu_custom_call.1} parent=11 // pred_check
          %p987 = pneg %p355
        $region46: #{tpu_custom_call.1} parent=11 // pred_check_branch
          %989 = sbr.rel (%p987) target = $region48
        $region47: #{tpu_custom_call.1} parent=11 // pred_region
          _
        $region48: #{tpu_custom_call.1} parent=11 // pred_fallthru
          _
        // Predicated region
        $region49: #{tpu_custom_call.1} parent=11 // pred_check
          %p990 = pneg %p376
        $region50: #{tpu_custom_call.1} parent=11 // pred_check_branch
          %992 = sbr.rel (%p990) target = $region52
        $region51: #{tpu_custom_call.1} parent=11 // pred_region
          _
        $region52: #{tpu_custom_call.1} parent=11 // pred_fallthru
          _
        // Predicated region
        $region53: #{tpu_custom_call.1} parent=11 // pred_check
          %p993 = pneg %p397
        $region54: #{tpu_custom_call.1} parent=11 // pred_check_branch
          %995 = sbr.rel (%p993) target = $region56
        $region55: #{tpu_custom_call.1} parent=11 // pred_region
          _
        $region56: #{tpu_custom_call.1} parent=11 // pred_fallthru
          _
        // Predicated region
        $region57: #{tpu_custom_call.1} parent=11 // pred_check
          %p996 = pneg %p418
        $region58: #{tpu_custom_call.1} parent=11 // pred_check_branch
          %998 = sbr.rel (%p996) target = $region60
        $region59: #{tpu_custom_call.1} parent=11 // pred_region
          _
        $region60: #{tpu_custom_call.1} parent=11 // pred_fallthru
          _
        // Predicated region
        $region61: #{tpu_custom_call.1} parent=11 // pred_check
          %p999 = pneg %p439
        $region62: #{tpu_custom_call.1} parent=11 // pred_check_branch
          %1001 = sbr.rel (%p999) target = $region64
        $region63: #{tpu_custom_call.1} parent=11 // pred_region
          _
        $region64: #{tpu_custom_call.1} parent=11 // pred_fallthru
          _
        // Predicated region
        $region65: #{tpu_custom_call.1} parent=11 // pred_check
          %p1002 = pneg %p460
        $region66: #{tpu_custom_call.1} parent=11 // pred_check_branch
          %1004 = sbr.rel (%p1002) target = $region68
        $region67: #{tpu_custom_call.1} parent=11 // pred_region
          _
        $region68: #{tpu_custom_call.1} parent=11 // pred_fallthru
          _
        // Predicated region
        $region69: #{tpu_custom_call.1} parent=11 // pred_check
          %p1005 = pneg %p481
        $region70: #{tpu_custom_call.1} parent=11 // pred_check_branch
          %1007 = sbr.rel (%p1005) target = $region72
        $region71: #{tpu_custom_call.1} parent=11 // pred_region
          _
        $region72: #{tpu_custom_call.1} parent=11 // pred_fallthru
          _
        // Predicated region
        $region73: #{tpu_custom_call.1} parent=11 // pred_check
          %p1008 = pneg %p502
        $region74: #{tpu_custom_call.1} parent=11 // pred_check_branch
          %1010 = sbr.rel (%p1008) target = $region76
        $region75: #{tpu_custom_call.1} parent=11 // pred_region
          _
        $region76: #{tpu_custom_call.1} parent=11 // pred_fallthru
          _
        // Predicated region
        $region77: #{tpu_custom_call.1} parent=11 // pred_check
          %p1011 = pneg %p523
        $region78: #{tpu_custom_call.1} parent=11 // pred_check_branch
          %1013 = sbr.rel (%p1011) target = $region80
        $region79: #{tpu_custom_call.1} parent=11 // pred_region
          _
        $region80: #{tpu_custom_call.1} parent=11 // pred_fallthru
          _
        // Predicated region
        $region81: #{tpu_custom_call.1} parent=11 // pred_check
          %p1014 = pneg %p544
        $region82: #{tpu_custom_call.1} parent=11 // pred_check_branch
          %1016 = sbr.rel (%p1014) target = $region84
        $region83: #{tpu_custom_call.1} parent=11 // pred_region
          _
        $region84: #{tpu_custom_call.1} parent=11 // pred_fallthru
          _
        // Predicated region
        $region85: #{tpu_custom_call.1} parent=11 // pred_check
          %p1017 = pneg %p565
        $region86: #{tpu_custom_call.1} parent=11 // pred_check_branch
          %1019 = sbr.rel (%p1017) target = $region88
        $region87: #{tpu_custom_call.1} parent=11 // pred_region
          _
        $region88: #{tpu_custom_call.1} parent=11 // pred_fallthru
          _
        // Predicated region
        $region89: #{tpu_custom_call.1} parent=11 // pred_check
          %p1020 = pneg %p586
        $region90: #{tpu_custom_call.1} parent=11 // pred_check_branch
          %1022 = sbr.rel (%p1020) target = $region92
        $region91: #{tpu_custom_call.1} parent=11 // pred_region
          _
        $region92: #{tpu_custom_call.1} parent=11 // pred_fallthru
          _
        // Predicated region
        $region93: #{tpu_custom_call.1} parent=11 // pred_check
          %p1023 = pneg %p607
        $region94: #{tpu_custom_call.1} parent=11 // pred_check_branch
          %1025 = sbr.rel (%p1023) target = $region96
        $region95: #{tpu_custom_call.1} parent=11 // pred_region
          _
        $region96: #{tpu_custom_call.1} parent=11 // pred_fallthru
          _
        // Predicated region
        $region97: #{tpu_custom_call.1} parent=11 // pred_check
          %p1026 = pneg %p628
        $region98: #{tpu_custom_call.1} parent=11 // pred_check_branch
          %1028 = sbr.rel (%p1026) target = $region100
        $region99: #{tpu_custom_call.1} parent=11 // pred_region
          _
        $region100: #{tpu_custom_call.1} parent=11 // pred_fallthru
          _
        // Predicated region
        $region101: #{tpu_custom_call.1} parent=11 // pred_check
          %p1029 = pneg %p649
        $region102: #{tpu_custom_call.1} parent=11 // pred_check_branch
          %1031 = sbr.rel (%p1029) target = $region104
        $region103: #{tpu_custom_call.1} parent=11 // pred_region
          _
        $region104: #{tpu_custom_call.1} parent=11 // pred_fallthru
          _
        // Predicated region
        $region105: #{tpu_custom_call.1} parent=11 // pred_check
          %p1032 = pneg %p670
        $region106: #{tpu_custom_call.1} parent=11 // pred_check_branch
          %1034 = sbr.rel (%p1032) target = $region108
        $region107: #{tpu_custom_call.1} parent=11 // pred_region
          _
        $region108: #{tpu_custom_call.1} parent=11 // pred_fallthru
          _
        // Predicated region
        $region109: #{tpu_custom_call.1} parent=11 // pred_check
          %p1035 = pneg %p691
        $region110: #{tpu_custom_call.1} parent=11 // pred_check_branch
          %1037 = sbr.rel (%p1035) target = $region112
        $region111: #{tpu_custom_call.1} parent=11 // pred_region
          _
        $region112: #{tpu_custom_call.1} parent=11 // pred_fallthru
          _
        // Predicated region
        $region113: #{tpu_custom_call.1} parent=11 // pred_check
          %p1038 = pneg %p712
        $region114: #{tpu_custom_call.1} parent=11 // pred_check_branch
          %1040 = sbr.rel (%p1038) target = $region116
        $region115: #{tpu_custom_call.1} parent=11 // pred_region
          _
        $region116: #{tpu_custom_call.1} parent=11 // pred_fallthru
          _
        // Predicated region
        $region117: #{tpu_custom_call.1} parent=11 // pred_check
          %p1041 = pneg %p733
        $region118: #{tpu_custom_call.1} parent=11 // pred_check_branch
          %1043 = sbr.rel (%p1041) target = $region120
        $region119: #{tpu_custom_call.1} parent=11 // pred_region
          _
        $region120: #{tpu_custom_call.1} parent=11 // pred_fallthru
          _
        // Predicated region
        $region121: #{tpu_custom_call.1} parent=11 // pred_check
          %p1044 = pneg %p754
        $region122: #{tpu_custom_call.1} parent=11 // pred_check_branch
          %1046 = sbr.rel (%p1044) target = $region124
        $region123: #{tpu_custom_call.1} parent=11 // pred_region
          _
        $region124: #{tpu_custom_call.1} parent=11 // pred_fallthru
          _
        // Predicated region
        $region125: #{tpu_custom_call.1} parent=11 // pred_check
          %p1047 = pneg %p775
        $region126: #{tpu_custom_call.1} parent=11 // pred_check_branch
          %1049 = sbr.rel (%p1047) target = $region128
        $region127: #{tpu_custom_call.1} parent=11 // pred_region
          _
        $region128: #{tpu_custom_call.1} parent=11 // pred_fallthru
          _
        // Predicated region
        $region129: #{tpu_custom_call.1} parent=11 // pred_check
          %p1050 = pneg %p796
        $region130: #{tpu_custom_call.1} parent=11 // pred_check_branch
          %1052 = sbr.rel (%p1050) target = $region132
        $region131: #{tpu_custom_call.1} parent=11 // pred_region
          _
        $region132: #{tpu_custom_call.1} parent=11 // pred_fallthru
          _
        // Predicated region
        $region133: #{tpu_custom_call.1} parent=11 // pred_check
          %p1053 = pneg %p817
        $region134: #{tpu_custom_call.1} parent=11 // pred_check_branch
          %1055 = sbr.rel (%p1053) target = $region136
        $region135: #{tpu_custom_call.1} parent=11 // pred_region
          _
        $region136: #{tpu_custom_call.1} parent=11 // pred_fallthru
          _
        // Predicated region
        $region137: #{tpu_custom_call.1} parent=11 // pred_check
          %p1056 = pneg %p838
        $region138: #{tpu_custom_call.1} parent=11 // pred_check_branch
          %1058 = sbr.rel (%p1056) target = $region140
        $region139: #{tpu_custom_call.1} parent=11 // pred_region
          _
        $region140: #{tpu_custom_call.1} parent=11 // pred_fallthru
          _
        // Predicated region
        $region141: #{tpu_custom_call.1} parent=11 // pred_check
          %p1059 = pneg %p859
        $region142: #{tpu_custom_call.1} parent=11 // pred_check_branch
          %1061 = sbr.rel (%p1059) target = $region144
        $region143: #{tpu_custom_call.1} parent=11 // pred_region
          _
        $region144: #{tpu_custom_call.1} parent=11 // pred_fallthru
          _
        // Predicated region
        $region145: #{tpu_custom_call.1} parent=11 // pred_check
          %p1062 = pneg %p880
        $region146: #{tpu_custom_call.1} parent=11 // pred_check_branch
          %1064 = sbr.rel (%p1062) target = $region148
        $region147: #{tpu_custom_call.1} parent=11 // pred_region
          _
        $region148: #{tpu_custom_call.1} parent=11 // pred_fallthru
          _
        // Predicated region
        $region149: #{tpu_custom_call.1} parent=11 // pred_check
          %p1065 = pneg %p901
        $region150: #{tpu_custom_call.1} parent=11 // pred_check_branch
          %1067 = sbr.rel (%p1065) target = $region152
        $region151: #{tpu_custom_call.1} parent=11 // pred_region
          _
        $region152: #{tpu_custom_call.1} parent=11 // pred_fallthru
          _
        // Predicated region
        $region153: #{tpu_custom_call.1} parent=11 // pred_check
          %p1068 = pneg %p922
        $region154: #{tpu_custom_call.1} parent=11 // pred_check_branch
          %1070 = sbr.rel (%p1068) target = $region156
        $region155: #{tpu_custom_call.1} parent=11 // pred_region
          _
        $region156: #{tpu_custom_call.1} parent=11 // pred_fallthru
          _
      $region12: #{tpu_custom_call.1} parent=5 // pred_fallthru
        _
      %p1071 = scmp.lt.s32.totalorder %s88, 2
      // Predicated region
      $region157: #{tpu_custom_call.1} parent=5 // pred_check
        %p1072 = pneg %p1071
      $region158: #{tpu_custom_call.1} parent=5 // pred_check_branch
        %1074 = sbr.rel (%p1072) target = $region160
      $region159: #{tpu_custom_call.1} parent=5 // pred_region
        // Predicated region
        $region161: #{tpu_custom_call.1} parent=159 // pred_check
          %p1075 = pneg %p108
        $region162: #{tpu_custom_call.1} parent=159 // pred_check_branch
          %1077 = sbr.rel (%p1075) target = $region164
        $region163: #{tpu_custom_call.1} parent=159 // pred_region
          %p1078 = scmp.lt.s32.totalorder %s88, 1
          %s1079 = scalar_select %p1078, %s88, 1
          %s1080 = smul.addr %s1079, 2
          %s1081 = smul.addr %s1080, 8
          %s1082 = scalar_lea.vmem %s1, %s1081
        $region164: #{tpu_custom_call.1} parent=159 // pred_fallthru
          _
        // Predicated region
        $region165: #{tpu_custom_call.1} parent=159 // pred_check
          %p1083 = pneg %p134
        $region166: #{tpu_custom_call.1} parent=159 // pred_check_branch
          %1085 = sbr.rel (%p1083) target = $region168
        $region167: #{tpu_custom_call.1} parent=159 // pred_region
          %p1086 = scmp.lt.s32.totalorder %s88, 1
          %s1087 = scalar_select %p1086, %s88, 1
          %s1088 = smul.addr %s1087, 8
          %s1089 = scalar_lea.vmem %s3, %s1088
        $region168: #{tpu_custom_call.1} parent=159 // pred_fallthru
          _
        // Predicated region
        $region169: #{tpu_custom_call.1} parent=159 // pred_check
          %p1090 = pneg %p160
        $region170: #{tpu_custom_call.1} parent=159 // pred_check_branch
          %1092 = sbr.rel (%p1090) target = $region172
        $region171: #{tpu_custom_call.1} parent=159 // pred_region
          %p1093 = scmp.lt.s32.totalorder %s88, 1
          %s1094 = scalar_select %p1093, %s88, 1
          %s1095 = smul.addr %s1094, 2
          %s1096 = smul.addr %s1095, 8
          %s1097 = scalar_lea.vmem %s5, %s1096
        $region172: #{tpu_custom_call.1} parent=159 // pred_fallthru
          _
      $region160: #{tpu_custom_call.1} parent=5 // pred_fallthru
        _
      %p1098 = scmp.le.s32.totalorder 1, %s88
      %p1099 = scmp.lt.s32.totalorder %s88, 3
      %p1100 = pnand %p1098, %p1099
      %p1101 = pneg %p1100
      // Predicated region
      $region173: #{tpu_custom_call.1} parent=5 // pred_check
        _
      $region174: #{tpu_custom_call.1} parent=5 // pred_check_branch
        %1103 = sbr.rel (%p1100) target = $region176
      $region175: #{tpu_custom_call.1} parent=5 // pred_region
        %s1104 = ssub.s32 %s88, 1
        %p1105 = scmp.lt.s32.totalorder %s93, 1
        %s1106 = scalar_select %p1105, %s93, 1
        %s1107 = smul.addr %s1106, 2
        %s1108 = smul.addr %s1107, 8
        %s1109 = scalar_lea.vmem %s1, %s1108
        %p1110 = pneg %p114
        %p1111 = pneg %p111
        %p1112 = scmp.lt.s32.totalorder %s93, 1
        %s1113 = scalar_select %p1112, %s93, 1
        %s1114 = smul.addr %s1113, 8
        %s1115 = scalar_lea.vmem %s3, %s1114
        %p1116 = pneg %p140
        %p1117 = pneg %p137
        %p1118 = scmp.lt.s32.totalorder %s93, 1
        %s1119 = scalar_select %p1118, %s93, 1
        %s1120 = smul.addr %s1119, 2
        %s1121 = smul.addr %s1120, 8
        %s1122 = scalar_lea.vmem %s5, %s1121
        %p1123 = pneg %p166
        %p1124 = pneg %p163
        %p1125 = pneg %p187
        %p1126 = pneg %p184
        %p1127 = pneg %p208
        %p1128 = pneg %p205
        %p1129 = pneg %p229
        %p1130 = pneg %p226
        %p1131 = pneg %p250
        %p1132 = pneg %p247
        %p1133 = pneg %p271
        %p1134 = pneg %p268
        %p1135 = pneg %p292
        %p1136 = pneg %p289
        %p1137 = pneg %p313
        %p1138 = pneg %p310
        %p1139 = pneg %p334
        %p1140 = pneg %p331
        %p1141 = pneg %p355
        %p1142 = pneg %p352
        %p1143 = pneg %p376
        %p1144 = pneg %p373
        %p1145 = pneg %p397
        %p1146 = pneg %p394
        %p1147 = pneg %p418
        %p1148 = pneg %p415
        %p1149 = pneg %p439
        %p1150 = pneg %p436
        %p1151 = pneg %p460
        %p1152 = pneg %p457
        %p1153 = pneg %p481
        %p1154 = pneg %p478
        %p1155 = pneg %p502
        %p1156 = pneg %p499
        %p1157 = pneg %p523
        %p1158 = pneg %p520
        %p1159 = pneg %p544
        %p1160 = pneg %p541
        %p1161 = pneg %p565
        %p1162 = pneg %p562
        %p1163 = pneg %p586
        %p1164 = pneg %p583
        %p1165 = pneg %p607
        %p1166 = pneg %p604
        %p1167 = pneg %p628
        %p1168 = pneg %p625
        %p1169 = pneg %p649
        %p1170 = pneg %p646
        %p1171 = pneg %p670
        %p1172 = pneg %p667
        %p1173 = pneg %p691
        %p1174 = pneg %p688
        %p1175 = pneg %p712
        %p1176 = pneg %p709
        %p1177 = pneg %p733
        %p1178 = pneg %p730
        %p1179 = pneg %p754
        %p1180 = pneg %p751
        %p1181 = pneg %p775
        %p1182 = pneg %p772
        %p1183 = pneg %p796
        %p1184 = pneg %p793
        %p1185 = pneg %p817
        %p1186 = pneg %p814
        %p1187 = pneg %p838
        %p1188 = pneg %p835
        %p1189 = pneg %p859
        %p1190 = pneg %p856
        %p1191 = pneg %p880
        %p1192 = pneg %p877
        %p1193 = pneg %p901
        %p1194 = pneg %p898
        %p1195 = pneg %p922
        %p1196 = pneg %p919
        %p1197 = pneg %p948
        %p1198 = pneg %p945
        %s1199 = sand.u32 %s935, 1
        %s1200 = scalar_lea.sflag [#allocation3], %s1199
        %s1201 = sand.u32 %s935, 1
        %s1202 = smul.addr %s1201, 8
        %s1203 = scalar_lea.vmem [#allocation2], %s1202
        %p1204 = scmp.lt.s32.totalorder %s93, 1
        %s1205 = scalar_select %p1204, %s93, 1
        %s1206 = smul.addr %s1205, 2
        %s1207 = smul.addr %s1206, 8
        %s1208 = scalar_lea.vmem %s1, %s1207
        %p1209 = scmp.lt.s32.totalorder %s93, 1
        %s1210 = scalar_select %p1209, %s93, 1
        %s1211 = smul.addr %s1210, 8
        %s1212 = scalar_lea.vmem %s3, %s1211
        %p1213 = scmp.lt.s32.totalorder %s93, 1
        %s1214 = scalar_select %p1213, %s93, 1
        %s1215 = smul.addr %s1214, 2
        %s1216 = smul.addr %s1215, 8
        %s1217 = scalar_lea.vmem %s5, %s1216
        %v1218 = vld [vmem:[%s1208] sm:$0xff]
        %v1219 = vld [vmem:[%s1208 + $0x8] sm:$0xff]
        %v1220 = vld [vmem:[%s1212] sm:$0xff]
        %vm1221 = vcmask 64512
        %v1222 = vsel %vm1221, %v1218, 0.0
        %v1223 = vsel %vm1221, %v1219, 0.0
        %v1224 = vadd.f32 %v1222, %v1223
        %v1225 = vrot.slane %v1224, 4
        %v1226 = vadd.f32 %v1224, %v1225
        %v1227 = vrot.slane %v1226, 2
        %v1228 = vadd.f32 %v1226, %v1227
        %v1229 = vrot.slane %v1228, 1
        %v1230 = vadd.f32 %v1228, %v1229
        %v1231 = vrcp.pop 16.0
        %v1232 = vmul.f32 %v1230, %v1231
        %v1233 = vsub.f32 %v1218, %v1232
        %v1234 = vsub.f32 %v1219, %v1232
        %v1235 = vmul.f32 %v1233, %v1233
        %v1236 = vmul.f32 %v1234, %v1234
        %v1237 = vsel %vm1221, %v1235, 0.0
        %v1238 = vsel %vm1221, %v1236, 0.0
        %v1239 = vadd.f32 %v1237, %v1238
        %v1240 = vrot.slane %v1239, 4
        %v1241 = vadd.f32 %v1239, %v1240
        %v1242 = vrot.slane %v1241, 2
        %v1243 = vadd.f32 %v1241, %v1242
        %v1244 = vrot.slane %v1243, 1
        %v1245 = vadd.f32 %v1243, %v1244
        %v1246 = vmul.f32 %v1245, %v1231
        %v1247 = vadd.f32 %v1246, 1e-05
        %v1248 = vrsqrt.pop %v1247
        %v1249 = vmul.f32 %v1247, %v1248
        %vm1250 = vcmp.eq.f32.partialorder %v1247, inf
        %v1251 = vsel %vm1250, %v1247, %v1249
        %vm1252 = vcmp.eq.f32.partialorder %v1247, 0.0
        %v1253 = vand.u32 %v1247, 2147483648
        %v1254 = vsel %vm1252, %v1253, %v1251
        %v1255 = vrcp.pop %v1254
        %v1256 = vmul.f32 %v1233, %v1255
        %v1257 = vmul.f32 %v1234, %v1255
        %vm1258 = vcmask 130048
        %v1259 = vsel %vm1258, %v1220, 0.0
        %1260 = vadd.xlane.f32.xlu0 %v1259
        %v1261 = vpop.xlane.xlu0 %1260
        %v1262 = vmul.f32 %v1261, %v1231
        %v1263 = vsub.f32 %v1220, %v1262
        %v1264 = vmul.f32 %v1263, %v1263
        %v1265 = vsel %vm1258, %v1264, 0.0
        %1266 = vadd.xlane.f32.xlu0 %v1265
        %v1267 = vpop.xlane.xlu0 %1266
        %v1268 = vmul.f32 %v1267, %v1231
        %v1269 = vadd.f32 %v1268, 1e-05
        %v1270 = vrsqrt.pop %v1269
        %v1271 = vmul.f32 %v1269, %v1270
        %vm1272 = vcmp.eq.f32.partialorder %v1269, inf
        %v1273 = vsel %vm1272, %v1269, %v1271
        %vm1274 = vcmp.eq.f32.partialorder %v1269, 0.0
        %v1275 = vand.u32 %v1269, 2147483648
        %v1276 = vsel %vm1274, %v1275, %v1273
        %v1277 = vrcp.pop %v1276
        %v1278 = vmul.f32 %v1263, %v1277
        %v1279 = vld [vmem:[%s7] sm:$0xff]
        %v1280 = vld [vmem:[%s7 + $0x8] sm:$0xff]
        %v1281 = vadd.f32 %v1256, %v1279
        %v1282 = vadd.f32 %v1257, %v1280
        %v1283 = vld [vmem:[%s9] sm:$0xff]
        %v1284 = vadd.f32 %v1278, %v1283
        %v1286 = vrot.slane %v1282, 7
        %vm1289 = vcmask 1040384
        %v1290 = vrot.slane %v1281, 7
        %v1291 = vsel %vm1289, %v1290, %v1286
        %v1294 = vsel %vm1289, %v1286, %v1290
        %vm1295 = vcmask 1046528
        %v1296 = vrot.slane %v1281, 1
        %v1297 = vrot.slane %v1282, 1
        %v1298 = vsel %vm1295, %v1296, %v1297
        %v1301 = vsel %vm1295, %v1297, %v1296
        %v1302 = vld [vmem:[%s1217] sm:$0xff]
        %v1303 = vld [vmem:[%s1217 + $0x8] sm:$0xff]
        %1304 = vrot.lane.b32.xlu0 %v1281, 8
        %v1305 = vpop.permute.xlu0 %1304
        %1306 = vrot.lane.b32.xlu0 %v1282, 8
        %v1307 = vpop.permute.xlu0 %1306
        %1311 = vrot.lane.b32.xlu0 %v1298, 16
        %v1312 = vpop.permute.xlu0 %1311
        %1313 = vrot.lane.b32.xlu0 %v1301, 16
        %v1314 = vpop.permute.xlu0 %1313
        %1319 = vrot.lane.b32.xlu0 %v1302, 24
        %v1320 = vpop.permute.xlu0 %1319
        %1321 = vrot.lane.b32.xlu0 %v1303, 24
        %v1322 = vpop.permute.xlu0 %1321
        %v1325 = vsel %vm1221, %v1294, %v1305
        %v1326 = vsel %vm1221, %v1291, %v1307
        %v1327 = vsel %vm1258, %v1325, %v1312
        %v1328 = vsel %vm1258, %v1326, %v1314
        %vm1329 = vcmask 195584
        %v1330 = vsel %vm1329, %v1327, %v1320
        %v1331 = vsel %vm1329, %v1328, %v1322
        %v1332 = vld [vmem:[%s11] sm:$0xff]
        %v1333 = vld [vmem:[%s11 + $0x8] sm:$0xff]
        %v1334 = vld [vmem:[%s11 + $0x10] sm:$0xff]
        %v1335 = vld [vmem:[%s11 + $0x18] sm:$0xf]
        %vm1336 = vcmask 228352
        %v1338 = vsel %vm1336, %v1330, 0
        %v1341 = vsel %vm1336, %v1331, 0
        %vm1343 = vcmask 1043456
        %v1345 = vsel %vm1343, %v1335, 0
        %1347 = vmatprep.subr.mxu0 0.0
        %1348 = vmatpush1.msra.mxu0 %v1332
        %1349 = vmatprep.subr.mxu0 0.0
        %1350 = vmatpush1.msra.mxu0 %v1333
        %1351 = vmatprep.subr.mxu0 0.0
        %1352 = vmatpush1.msra.mxu0 %v1334
        %1353 = vmatprep.subr.mxu0 0.0
        %1354 = vmatpush1.msra.mxu0 %v1345
        %1355 = vmatprep.subr.mxu0 0.0
        %1356 = vmatpush1.msra.mxu0 0.0
        %1357 = vmatprep.subr.mxu0 0.0
        %1358 = vmatpush1.msra.mxu0 0.0
        %1359 = vmatprep.subr.mxu0 0.0
        %1360 = vmatpush1.msra.mxu0 0.0
        %1361 = vmatprep.subr.mxu0 0.0
        %1362 = vmatpush1.msra.mxu0 0.0
        %1363 = vmatprep.subr.mxu0 0.0
        %1364 = vmatpush1.msra.mxu0 0.0
        %1365 = vmatprep.subr.mxu0 0.0
        %1366 = vmatpush1.msra.mxu0 0.0
        %1367 = vmatprep.subr.mxu0 0.0
        %1368 = vmatpush1.msra.mxu0 0.0
        %1369 = vmatprep.subr.mxu0 0.0
        %1370 = vmatpush1.msra.mxu0 0.0
        %1371 = vmatprep.subr.mxu0 0.0
        %1372 = vmatpush1.msra.mxu0 0.0
        %1373 = vmatprep.subr.mxu0 0.0
        %1374 = vmatpush1.msra.mxu0 0.0
        %1375 = vmatprep.subr.mxu0 0.0
        %1376 = vmatpush1.msra.mxu0 0.0
        %1377 = vmatprep.subr.mxu0 0.0
        %1378 = vmatpush1.msra.mxu0 0.0
        %1379 = vmatprep.subr.mxu0 0.0
        %1380 = vmatpush1.msra.mxu0 0.0
        %1381 = vmatprep.subr.mxu0 0.0
        %1382 = vmatpush1.msra.mxu0 0.0
        %1383 = vmatprep.subr.mxu0 0.0
        %1384 = vmatpush1.msra.mxu0 0.0
        %1385 = vmatprep.subr.mxu0 0.0
        %1386 = vmatpush1.msra.mxu0 0.0
        %1387 = vmatprep.subr.mxu0 0.0
        %1388 = vmatpush1.msra.mxu0 0.0
        %1389 = vmatprep.subr.mxu0 0.0
        %1390 = vmatpush1.msra.mxu0 0.0
        %1391 = vmatprep.subr.mxu0 0.0
        %1392 = vmatpush1.msra.mxu0 0.0
        %1393 = vmatprep.subr.mxu0 0.0
        %1394 = vmatpush1.msra.mxu0 0.0
        %1395 = vmatprep.subr.mxu0 0.0
        %1396 = vmatpush1.msra.mxu0 0.0
        %1397 = vmatprep.subr.mxu0 0.0
        %1398 = vmatpush1.msra.mxu0 0.0
        %1399 = vmatprep.subr.mxu0 0.0
        %1400 = vmatpush1.msra.mxu0 0.0
        %1401 = vmatprep.subr.mxu0 0.0
        %1402 = vmatpush1.msra.mxu0 0.0
        %1403 = vmatprep.subr.mxu0 0.0
        %1404 = vmatpush1.msra.mxu0 0.0
        %1405 = vmatprep.subr.mxu0 0.0
        %1406 = vmatpush1.msra.mxu0 0.0
        %1407 = vmatprep.subr.mxu0 0.0
        %1408 = vmatpush1.msra.mxu0 0.0
        %1409 = vmatprep.subr.mxu0 0.0
        %1410 = vmatpush1.msra.mxu0 0.0
        %1411 = vmatprep.mubr.f32.mxu0 0.0
        %1412 = vmatmul.mubr.f32.gmra.mrb[0].mxu0 %v1338
        %v1413 = vpop.f32.mrb[0].mxu0
        %v1414 = vadd.f32 0.0, %v1413
        %v1415 = vpop.f32.mrb[0].mxu0
        %1416 = vmatprep.mubr.f32.mxu0 0.0
        %1417 = vmatmul.mubr.f32.gmra.mrb[0].mxu0 %v1341
        %v1418 = vpop.f32.mrb[0].mxu0
        %v1419 = vadd.f32 0.0, %v1418
        %v1420 = vpop.f32.mrb[0].mxu0
        %1421 = vdwg.mxu0
        %v1422 = vld [vmem:[%s13] sm:$0xff]
        %v1423 = vld [vmem:[%s13 + $0x8] sm:$0xff]
        %v1424 = vadd.f32 %v1414, %v1422
        %v1425 = vadd.f32 %v1419, %v1423
        %v1426 = vld [vmem:[%s15] sm:$0xff]
        %v1427 = vld [vmem:[%s15 + $0x8] sm:$0xff]
        %v1428 = vld [vmem:[%s15 + $0x10] sm:$0xff]
        %v1429 = vld [vmem:[%s15 + $0x18] sm:$0xff]
        %v1430 = vld [vmem:[%s17] sm:$0xff]
        %v1431 = vld [vmem:[%s17 + $0x8] sm:$0xff]
        %v1432 = vld [vmem:[%s19] sm:$0xff]
        %v1433 = vld [vmem:[%s19 + $0x8] sm:$0xff]
        %v1434 = vld [vmem:[%s19 + $0x10] sm:$0xff]
        %v1435 = vld [vmem:[%s19 + $0x18] sm:$0xff]
        %v1436 = vld [vmem:[%s19 + $0x20] sm:$0xff]
        %v1437 = vld [vmem:[%s19 + $0x28] sm:$0xff]
        %v1438 = vld [vmem:[%s19 + $0x30] sm:$0xff]
        %v1439 = vld [vmem:[%s19 + $0x38] sm:$0xff]
        %v1440 = vld [vmem:[%s21] sm:$0xff]
        %v1441 = vld [vmem:[%s21 + $0x8] sm:$0xff]
        %v1442 = vld [vmem:[%s21 + $0x10] sm:$0xff]
        %v1443 = vld [vmem:[%s21 + $0x18] sm:$0xff]
        %v1444 = vld [vmem:[%s21 + $0x20] sm:$0xff]
        %v1445 = vld [vmem:[%s21 + $0x28] sm:$0xff]
        %v1446 = vld [vmem:[%s21 + $0x30] sm:$0xff]
        %v1447 = vld [vmem:[%s21 + $0x38] sm:$0xff]
        %v1448 = vld [vmem:[%s21 + $0x40] sm:$0xff]
        %v1449 = vld [vmem:[%s21 + $0x48] sm:$0xff]
        %v1450 = vld [vmem:[%s21 + $0x50] sm:$0xff]
        %v1451 = vld [vmem:[%s21 + $0x58] sm:$0xff]
        %v1452 = vld [vmem:[%s21 + $0x60] sm:$0xff]
        %v1453 = vld [vmem:[%s21 + $0x68] sm:$0xff]
        %v1454 = vld [vmem:[%s21 + $0x70] sm:$0xff]
        %v1455 = vld [vmem:[%s21 + $0x78] sm:$0xff]
        %v1456 = vld [vmem:[%s23] sm:$0xff]
        %v1457 = vld [vmem:[%s23 + $0x8] sm:$0xff]
        %v1458 = vld [vmem:[%s23 + $0x10] sm:$0xff]
        %v1459 = vld [vmem:[%s23 + $0x18] sm:$0xff]
        %v1460 = vld [vmem:[%s25] sm:$0xff]
        %v1461 = vld [vmem:[%s25 + $0x8] sm:$0xff]
        %v1462 = vld [vmem:[%s25 + $0x10] sm:$0xff]
        %v1463 = vld [vmem:[%s25 + $0x18] sm:$0xff]
        %v1464 = vld [vmem:[%s25 + $0x20] sm:$0xff]
        %v1465 = vld [vmem:[%s25 + $0x28] sm:$0xff]
        %v1466 = vld [vmem:[%s25 + $0x30] sm:$0xff]
        %v1467 = vld [vmem:[%s25 + $0x38] sm:$0xff]
        %v1468 = vld [vmem:[%s27] sm:$0xff]
        %v1469 = vld [vmem:[%s27 + $0x8] sm:$0xff]
        %v1470 = vld [vmem:[%s27 + $0x10] sm:$0xff]
        %v1471 = vld [vmem:[%s27 + $0x18] sm:$0xff]
        %v1472 = vld [vmem:[%s27 + $0x20] sm:$0xff]
        %v1473 = vld [vmem:[%s27 + $0x28] sm:$0xff]
        %v1474 = vld [vmem:[%s27 + $0x30] sm:$0xff]
        %v1475 = vld [vmem:[%s27 + $0x38] sm:$0xff]
        %v1476 = vld [vmem:[%s27 + $0x40] sm:$0xff]
        %v1477 = vld [vmem:[%s27 + $0x48] sm:$0xff]
        %v1478 = vld [vmem:[%s27 + $0x50] sm:$0xff]
        %v1479 = vld [vmem:[%s27 + $0x58] sm:$0xff]
        %v1480 = vld [vmem:[%s27 + $0x60] sm:$0xff]
        %v1481 = vld [vmem:[%s27 + $0x68] sm:$0xff]
        %v1482 = vld [vmem:[%s27 + $0x70] sm:$0xff]
        %v1483 = vld [vmem:[%s27 + $0x78] sm:$0xff]
        %v1484 = vld [vmem:[%s29] sm:$0xff]
        %v1485 = vld [vmem:[%s29 + $0x8] sm:$0xff]
        %v1486 = vld [vmem:[%s29 + $0x10] sm:$0xff]
        %v1487 = vld [vmem:[%s29 + $0x18] sm:$0xff]
        %vm1488 = vcmask 261120
        %v1490 = vsel %vm1488, %v1426, 0
        %v1493 = vsel %vm1488, %v1427, 0
        %v1496 = vsel %vm1488, %v1428, 0
        %v1499 = vsel %vm1488, %v1429, 0
        %v1502 = vsel %vm1488, %v1424, 0
        %v1505 = vsel %vm1488, %v1425, 0
        %1507 = vmatprep.subr.mxu0 0.0
        %1508 = vmatpush1.xpose.msra.mxu0 %v1502
        %1509 = vmatprep.subr.mxu0 0.0
        %1510 = vmatpush1.xpose.msra.mxu0 %v1505
        %1511 = vmatprep.subr.mxu0 0.0
        %1512 = vmatpush1.xpose.msra.mxu0 0.0
        %1513 = vmatprep.subr.mxu0 0.0
        %1514 = vmatpush1.xpose.msra.mxu0 0.0
        %1515 = vmatprep.subr.mxu0 0.0
        %1516 = vmatpush1.xpose.msra.mxu0 0.0
        %1517 = vmatprep.subr.mxu0 0.0
        %1518 = vmatpush1.xpose.msra.mxu0 0.0
        %1519 = vmatprep.subr.mxu0 0.0
        %1520 = vmatpush1.xpose.msra.mxu0 0.0
        %1521 = vmatprep.subr.mxu0 0.0
        %1522 = vmatpush1.xpose.msra.mxu0 0.0
        %1523 = vmatprep.subr.mxu0 0.0
        %1524 = vmatpush1.xpose.msra.mxu0 0.0
        %1525 = vmatprep.subr.mxu0 0.0
        %1526 = vmatpush1.xpose.msra.mxu0 0.0
        %1527 = vmatprep.subr.mxu0 0.0
        %1528 = vmatpush1.xpose.msra.mxu0 0.0
        %1529 = vmatprep.subr.mxu0 0.0
        %1530 = vmatpush1.xpose.msra.mxu0 0.0
        %1531 = vmatprep.subr.mxu0 0.0
        %1532 = vmatpush1.xpose.msra.mxu0 0.0
        %1533 = vmatprep.subr.mxu0 0.0
        %1534 = vmatpush1.xpose.msra.mxu0 0.0
        %1535 = vmatprep.subr.mxu0 0.0
        %1536 = vmatpush1.xpose.msra.mxu0 0.0
        %1537 = vmatprep.subr.mxu0 0.0
        %1538 = vmatpush1.xpose.msra.mxu0 0.0
        %1539 = vmatprep.subr.mxu0 0.0
        %1540 = vmatpush1.xpose.msra.mxu0 0.0
        %1541 = vmatprep.subr.mxu0 0.0
        %1542 = vmatpush1.xpose.msra.mxu0 0.0
        %1543 = vmatprep.subr.mxu0 0.0
        %1544 = vmatpush1.xpose.msra.mxu0 0.0
        %1545 = vmatprep.subr.mxu0 0.0
        %1546 = vmatpush1.xpose.msra.mxu0 0.0
        %1547 = vmatprep.subr.mxu0 0.0
        %1548 = vmatpush1.xpose.msra.mxu0 0.0
        %1549 = vmatprep.subr.mxu0 0.0
        %1550 = vmatpush1.xpose.msra.mxu0 0.0
        %1551 = vmatprep.subr.mxu0 0.0
        %1552 = vmatpush1.xpose.msra.mxu0 0.0
        %1553 = vmatprep.subr.mxu0 0.0
        %1554 = vmatpush1.xpose.msra.mxu0 0.0
        %1555 = vmatprep.subr.mxu0 0.0
        %1556 = vmatpush1.xpose.msra.mxu0 0.0
        %1557 = vmatprep.subr.mxu0 0.0
        %1558 = vmatpush1.xpose.msra.mxu0 0.0
        %1559 = vmatprep.subr.mxu0 0.0
        %1560 = vmatpush1.xpose.msra.mxu0 0.0
        %1561 = vmatprep.subr.mxu0 0.0
        %1562 = vmatpush1.xpose.msra.mxu0 0.0
        %1563 = vmatprep.subr.mxu0 0.0
        %1564 = vmatpush1.xpose.msra.mxu0 0.0
        %1565 = vmatprep.subr.mxu0 0.0
        %1566 = vmatpush1.xpose.msra.mxu0 0.0
        %1567 = vmatprep.subr.mxu0 0.0
        %1568 = vmatpush1.xpose.msra.mxu0 0.0
        %1569 = vmatprep.subr.mxu0 0.0
        %1570 = vmatpush1.xpose.msra.mxu0 0.0
        %1571 = vmatprep.mubr.f32.mxu0 0.0
        %1572 = vmatmul.mubr.f32.gmra.mrb[0].mxu0 %v1490
        %v1573 = vpop.f32.mrb[0].mxu0
        %v1574 = vadd.f32 0.0, %v1573
        %v1575 = vpop.f32.mrb[0].mxu0
        %1576 = vmatprep.mubr.f32.mxu0 0.0
        %1577 = vmatmul.mubr.f32.gmra.mrb[0].mxu0 %v1493
        %v1578 = vpop.f32.mrb[0].mxu0
        %v1579 = vadd.f32 0.0, %v1578
        %v1580 = vpop.f32.mrb[0].mxu0
        %1581 = vmatprep.mubr.f32.mxu0 0.0
        %1582 = vmatmul.mubr.f32.gmra.mrb[0].mxu0 %v1496
        %v1583 = vpop.f32.mrb[0].mxu0
        %v1584 = vadd.f32 0.0, %v1583
        %v1585 = vpop.f32.mrb[0].mxu0
        %1586 = vmatprep.mubr.f32.mxu0 0.0
        %1587 = vmatmul.mubr.f32.gmra.mrb[0].mxu0 %v1499
        %v1588 = vpop.f32.mrb[0].mxu0
        %v1589 = vadd.f32 0.0, %v1588
        %v1590 = vpop.f32.mrb[0].mxu0
        %1591 = vdwg.mxu0
        %v1592 = vld [vmem:[%s31] sm:$0xff]
        %v1593 = vld [vmem:[%s31 + $0x8] sm:$0xff]
        %v1594 = vld [vmem:[%s33] sm:$0x1]
        %v1596 = vlaneseq
        %v1597 = vshrl.u32 %v1596, 7
        %v1598 = vsub.s32 0, %v1597
        %v1599 = vrot.slane %v1594, %v1598
        %v1602 = vsel %vm1258, %v1574, 0
        %v1605 = vsel %vm1258, %v1579, 0
        %v1608 = vsel %vm1258, %v1584, 0
        %v1611 = vsel %vm1258, %v1589, 0
        %1613 = vmatprep.subr.mxu0 0.0
        %1614 = vmatpush1.msra.mxu0 %v1592
        %1615 = vmatprep.subr.mxu0 0.0
        %1616 = vmatpush1.msra.mxu0 %v1593
        %1617 = vmatprep.subr.mxu0 0.0
        %1618 = vmatpush1.msra.mxu0 0.0
        %1619 = vmatprep.subr.mxu0 0.0
        %1620 = vmatpush1.msra.mxu0 0.0
        %1621 = vmatprep.subr.mxu0 0.0
        %1622 = vmatpush1.msra.mxu0 0.0
        %1623 = vmatprep.subr.mxu0 0.0
        %1624 = vmatpush1.msra.mxu0 0.0
        %1625 = vmatprep.subr.mxu0 0.0
        %1626 = vmatpush1.msra.mxu0 0.0
        %1627 = vmatprep.subr.mxu0 0.0
        %1628 = vmatpush1.msra.mxu0 0.0
        %1629 = vmatprep.subr.mxu0 0.0
        %1630 = vmatpush1.msra.mxu0 0.0
        %1631 = vmatprep.subr.mxu0 0.0
        %1632 = vmatpush1.msra.mxu0 0.0
        %1633 = vmatprep.subr.mxu0 0.0
        %1634 = vmatpush1.msra.mxu0 0.0
        %1635 = vmatprep.subr.mxu0 0.0
        %1636 = vmatpush1.msra.mxu0 0.0
        %1637 = vmatprep.subr.mxu0 0.0
        %1638 = vmatpush1.msra.mxu0 0.0
        %1639 = vmatprep.subr.mxu0 0.0
        %1640 = vmatpush1.msra.mxu0 0.0
        %1641 = vmatprep.subr.mxu0 0.0
        %1642 = vmatpush1.msra.mxu0 0.0
        %1643 = vmatprep.subr.mxu0 0.0
        %1644 = vmatpush1.msra.mxu0 0.0
        %1645 = vmatprep.subr.mxu0 0.0
        %1646 = vmatpush1.msra.mxu0 0.0
        %1647 = vmatprep.subr.mxu0 0.0
        %1648 = vmatpush1.msra.mxu0 0.0
        %1649 = vmatprep.subr.mxu0 0.0
        %1650 = vmatpush1.msra.mxu0 0.0
        %1651 = vmatprep.subr.mxu0 0.0
        %1652 = vmatpush1.msra.mxu0 0.0
        %1653 = vmatprep.subr.mxu0 0.0
        %1654 = vmatpush1.msra.mxu0 0.0
        %1655 = vmatprep.subr.mxu0 0.0
        %1656 = vmatpush1.msra.mxu0 0.0
        %1657 = vmatprep.subr.mxu0 0.0
        %1658 = vmatpush1.msra.mxu0 0.0
        %1659 = vmatprep.subr.mxu0 0.0
        %1660 = vmatpush1.msra.mxu0 0.0
        %1661 = vmatprep.subr.mxu0 0.0
        %1662 = vmatpush1.msra.mxu0 0.0
        %1663 = vmatprep.subr.mxu0 0.0
        %1664 = vmatpush1.msra.mxu0 0.0
        %1665 = vmatprep.subr.mxu0 0.0
        %1666 = vmatpush1.msra.mxu0 0.0
        %1667 = vmatprep.subr.mxu0 0.0
        %1668 = vmatpush1.msra.mxu0 0.0
        %1669 = vmatprep.subr.mxu0 0.0
        %1670 = vmatpush1.msra.mxu0 0.0
        %1671 = vmatprep.subr.mxu0 0.0
        %1672 = vmatpush1.msra.mxu0 0.0
        %1673 = vmatprep.subr.mxu0 0.0
        %1674 = vmatpush1.msra.mxu0 0.0
        %1675 = vmatprep.subr.mxu0 0.0
        %1676 = vmatpush1.msra.mxu0 0.0
        %1677 = vmatprep.mubr.f32.mxu0 0.0
        %1678 = vmatmul.mubr.f32.gmra.mrb[0].mxu0 %v1602
        %v1679 = vpop.f32.mrb[0].mxu0
        %v1680 = vadd.f32 %v1599, %v1679
        %v1681 = vpop.f32.mrb[0].mxu0
        %1682 = vmatprep.mubr.f32.mxu0 0.0
        %1683 = vmatmul.mubr.f32.gmra.mrb[0].mxu0 %v1605
        %v1684 = vpop.f32.mrb[0].mxu0
        %v1685 = vadd.f32 %v1599, %v1684
        %v1686 = vpop.f32.mrb[0].mxu0
        %1687 = vmatprep.mubr.f32.mxu0 0.0
        %1688 = vmatmul.mubr.f32.gmra.mrb[0].mxu0 %v1608
        %v1689 = vpop.f32.mrb[0].mxu0
        %v1690 = vadd.f32 %v1599, %v1689
        %v1691 = vpop.f32.mrb[0].mxu0
        %1692 = vmatprep.mubr.f32.mxu0 0.0
        %1693 = vmatmul.mubr.f32.gmra.mrb[0].mxu0 %v1611
        %v1694 = vpop.f32.mrb[0].mxu0
        %v1695 = vadd.f32 %v1599, %v1694
        %v1696 = vpop.f32.mrb[0].mxu0
        %1697 = vdwg.mxu0
        %1700 = vrot.lane.b32.xlu0 %v1592, 112
        %v1701 = vpop.permute.xlu0 %1700
        %1702 = vrot.lane.b32.xlu0 %v1593, 112
        %v1703 = vpop.permute.xlu0 %1702
        %1706 = vrot.lane.b32.xlu0 %v1599, 112
        %v1707 = vpop.permute.xlu0 %1706
        %v1710 = vsel %vm1258, %v1284, 0
        %1712 = vmatprep.subr.mxu0 0.0
        %1713 = vmatpush1.msra.mxu0 %v1701
        %1714 = vmatprep.subr.mxu0 0.0
        %1715 = vmatpush1.msra.mxu0 %v1703
        %1716 = vmatprep.subr.mxu0 0.0
        %1717 = vmatpush1.msra.mxu0 0.0
        %1718 = vmatprep.subr.mxu0 0.0
        %1719 = vmatpush1.msra.mxu0 0.0
        %1720 = vmatprep.subr.mxu0 0.0
        %1721 = vmatpush1.msra.mxu0 0.0
        %1722 = vmatprep.subr.mxu0 0.0
        %1723 = vmatpush1.msra.mxu0 0.0
        %1724 = vmatprep.subr.mxu0 0.0
        %1725 = vmatpush1.msra.mxu0 0.0
        %1726 = vmatprep.subr.mxu0 0.0
        %1727 = vmatpush1.msra.mxu0 0.0
        %1728 = vmatprep.subr.mxu0 0.0
        %1729 = vmatpush1.msra.mxu0 0.0
        %1730 = vmatprep.subr.mxu0 0.0
        %1731 = vmatpush1.msra.mxu0 0.0
        %1732 = vmatprep.subr.mxu0 0.0
        %1733 = vmatpush1.msra.mxu0 0.0
        %1734 = vmatprep.subr.mxu0 0.0
        %1735 = vmatpush1.msra.mxu0 0.0
        %1736 = vmatprep.subr.mxu0 0.0
        %1737 = vmatpush1.msra.mxu0 0.0
        %1738 = vmatprep.subr.mxu0 0.0
        %1739 = vmatpush1.msra.mxu0 0.0
        %1740 = vmatprep.subr.mxu0 0.0
        %1741 = vmatpush1.msra.mxu0 0.0
        %1742 = vmatprep.subr.mxu0 0.0
        %1743 = vmatpush1.msra.mxu0 0.0
        %1744 = vmatprep.subr.mxu0 0.0
        %1745 = vmatpush1.msra.mxu0 0.0
        %1746 = vmatprep.subr.mxu0 0.0
        %1747 = vmatpush1.msra.mxu0 0.0
        %1748 = vmatprep.subr.mxu0 0.0
        %1749 = vmatpush1.msra.mxu0 0.0
        %1750 = vmatprep.subr.mxu0 0.0
        %1751 = vmatpush1.msra.mxu0 0.0
        %1752 = vmatprep.subr.mxu0 0.0
        %1753 = vmatpush1.msra.mxu0 0.0
        %1754 = vmatprep.subr.mxu0 0.0
        %1755 = vmatpush1.msra.mxu0 0.0
        %1756 = vmatprep.subr.mxu0 0.0
        %1757 = vmatpush1.msra.mxu0 0.0
        %1758 = vmatprep.subr.mxu0 0.0
        %1759 = vmatpush1.msra.mxu0 0.0
        %1760 = vmatprep.subr.mxu0 0.0
        %1761 = vmatpush1.msra.mxu0 0.0
        %1762 = vmatprep.subr.mxu0 0.0
        %1763 = vmatpush1.msra.mxu0 0.0
        %1764 = vmatprep.subr.mxu0 0.0
        %1765 = vmatpush1.msra.mxu0 0.0
        %1766 = vmatprep.subr.mxu0 0.0
        %1767 = vmatpush1.msra.mxu0 0.0
        %1768 = vmatprep.subr.mxu0 0.0
        %1769 = vmatpush1.msra.mxu0 0.0
        %1770 = vmatprep.subr.mxu0 0.0
        %1771 = vmatpush1.msra.mxu0 0.0
        %1772 = vmatprep.subr.mxu0 0.0
        %1773 = vmatpush1.msra.mxu0 0.0
        %1774 = vmatprep.subr.mxu0 0.0
        %1775 = vmatpush1.msra.mxu0 0.0
        %1776 = vmatprep.mubr.f32.mxu0 0.0
        %1777 = vmatmul.mubr.f32.gmra.mrb[0].mxu0 %v1710
        %v1778 = vpop.f32.mrb[0].mxu0
        %v1779 = vadd.f32 %v1707, %v1778
        %v1780 = vpop.f32.mrb[0].mxu0
        %1781 = vdwg.mxu0
        %v1782 = vld [vmem:[%s35] sm:$0xff]
        %v1783 = vld [vmem:[%s35 + $0x8] sm:$0xff]
        %v1784 = vld [vmem:[%s37] sm:$0x1]
        %v1785 = vmul.f32 %v1680, %v1440
        %v1786 = vmul.f32 %v1685, %v1441
        %v1787 = vmul.f32 %v1690, %v1442
        %v1788 = vmul.f32 %v1695, %v1443
        %v1789 = vmul.f32 %v1680, %v1444
        %v1790 = vmul.f32 %v1685, %v1445
        %v1791 = vmul.f32 %v1690, %v1446
        %v1792 = vmul.f32 %v1695, %v1447
        %v1793 = vmul.f32 %v1680, %v1448
        %v1794 = vmul.f32 %v1685, %v1449
        %v1795 = vmul.f32 %v1690, %v1450
        %v1796 = vmul.f32 %v1695, %v1451
        %v1797 = vmul.f32 %v1680, %v1452
        %v1798 = vmul.f32 %v1685, %v1453
        %v1799 = vmul.f32 %v1690, %v1454
        %v1800 = vmul.f32 %v1695, %v1455
        %v1802 = vsel %vm1258, %v1785, 0
        %v1805 = vsel %vm1258, %v1786, 0
        %v1808 = vsel %vm1258, %v1787, 0
        %v1811 = vsel %vm1258, %v1788, 0
        %v1814 = vsel %vm1258, %v1789, 0
        %v1817 = vsel %vm1258, %v1790, 0
        %v1820 = vsel %vm1258, %v1791, 0
        %v1823 = vsel %vm1258, %v1792, 0
        %v1826 = vsel %vm1258, %v1793, 0
        %v1829 = vsel %vm1258, %v1794, 0
        %v1832 = vsel %vm1258, %v1795, 0
        %v1835 = vsel %vm1258, %v1796, 0
        %v1838 = vsel %vm1258, %v1797, 0
        %v1841 = vsel %vm1258, %v1798, 0
        %v1844 = vsel %vm1258, %v1799, 0
        %v1847 = vsel %vm1258, %v1800, 0
        %v1850 = vsel %vm1258, %v1779, 0
        %1852 = vmatprep.subr.mxu0 0.0
        %1853 = vmatpush1.xpose.msra.mxu0 %v1850
        %1854 = vmatprep.subr.mxu0 0.0
        %1855 = vmatpush1.xpose.msra.mxu0 %v1850
        %1856 = vmatprep.subr.mxu0 0.0
        %1857 = vmatpush1.xpose.msra.mxu0 %v1850
        %1858 = vmatprep.subr.mxu0 0.0
        %1859 = vmatpush1.xpose.msra.mxu0 %v1850
        %1860 = vmatprep.subr.mxu0 0.0
        %1861 = vmatpush1.xpose.msra.mxu0 0.0
        %1862 = vmatprep.subr.mxu0 0.0
        %1863 = vmatpush1.xpose.msra.mxu0 0.0
        %1864 = vmatprep.subr.mxu0 0.0
        %1865 = vmatpush1.xpose.msra.mxu0 0.0
        %1866 = vmatprep.subr.mxu0 0.0
        %1867 = vmatpush1.xpose.msra.mxu0 0.0
        %1868 = vmatprep.subr.mxu0 0.0
        %1869 = vmatpush1.xpose.msra.mxu0 0.0
        %1870 = vmatprep.subr.mxu0 0.0
        %1871 = vmatpush1.xpose.msra.mxu0 0.0
        %1872 = vmatprep.subr.mxu0 0.0
        %1873 = vmatpush1.xpose.msra.mxu0 0.0
        %1874 = vmatprep.subr.mxu0 0.0
        %1875 = vmatpush1.xpose.msra.mxu0 0.0
        %1876 = vmatprep.subr.mxu0 0.0
        %1877 = vmatpush1.xpose.msra.mxu0 0.0
        %1878 = vmatprep.subr.mxu0 0.0
        %1879 = vmatpush1.xpose.msra.mxu0 0.0
        %1880 = vmatprep.subr.mxu0 0.0
        %1881 = vmatpush1.xpose.msra.mxu0 0.0
        %1882 = vmatprep.subr.mxu0 0.0
        %1883 = vmatpush1.xpose.msra.mxu0 0.0
        %1884 = vmatprep.subr.mxu0 0.0
        %1885 = vmatpush1.xpose.msra.mxu0 0.0
        %1886 = vmatprep.subr.mxu0 0.0
        %1887 = vmatpush1.xpose.msra.mxu0 0.0
        %1888 = vmatprep.subr.mxu0 0.0
        %1889 = vmatpush1.xpose.msra.mxu0 0.0
        %1890 = vmatprep.subr.mxu0 0.0
        %1891 = vmatpush1.xpose.msra.mxu0 0.0
        %1892 = vmatprep.subr.mxu0 0.0
        %1893 = vmatpush1.xpose.msra.mxu0 0.0
        %1894 = vmatprep.subr.mxu0 0.0
        %1895 = vmatpush1.xpose.msra.mxu0 0.0
        %1896 = vmatprep.subr.mxu0 0.0
        %1897 = vmatpush1.xpose.msra.mxu0 0.0
        %1898 = vmatprep.subr.mxu0 0.0
        %1899 = vmatpush1.xpose.msra.mxu0 0.0
        %1900 = vmatprep.subr.mxu0 0.0
        %1901 = vmatpush1.xpose.msra.mxu0 0.0
        %1902 = vmatprep.subr.mxu0 0.0
        %1903 = vmatpush1.xpose.msra.mxu0 0.0
        %1904 = vmatprep.subr.mxu0 0.0
        %1905 = vmatpush1.xpose.msra.mxu0 0.0
        %1906 = vmatprep.subr.mxu0 0.0
        %1907 = vmatpush1.xpose.msra.mxu0 0.0
        %1908 = vmatprep.subr.mxu0 0.0
        %1909 = vmatpush1.xpose.msra.mxu0 0.0
        %1910 = vmatprep.subr.mxu0 0.0
        %1911 = vmatpush1.xpose.msra.mxu0 0.0
        %1912 = vmatprep.subr.mxu0 0.0
        %1913 = vmatpush1.xpose.msra.mxu0 0.0
        %1914 = vmatprep.subr.mxu0 0.0
        %1915 = vmatpush1.xpose.msra.mxu0 0.0
        %1916 = vmatprep.mubr.f32.mxu0 0.0
        %1917 = vmatmul.mubr.f32.gmra.mrb[0].mxu0 %v1802
        %v1918 = vpop.f32.mrb[0].mxu0
        %v1919 = vadd.f32 0.0, %v1918
        %v1920 = vpop.f32.mrb[0].mxu0
        %1921 = vmatprep.mubr.f32.mxu0 0.0
        %1922 = vmatmul.mubr.f32.gmra.mrb[0].mxu0 %v1805
        %v1923 = vpop.f32.mrb[0].mxu0
        %v1924 = vadd.f32 0.0, %v1923
        %v1925 = vpop.f32.mrb[0].mxu0
        %1926 = vmatprep.mubr.f32.mxu0 0.0
        %1927 = vmatmul.mubr.f32.gmra.mrb[0].mxu0 %v1808
        %v1928 = vpop.f32.mrb[0].mxu0
        %v1929 = vadd.f32 0.0, %v1928
        %v1930 = vpop.f32.mrb[0].mxu0
        %1931 = vmatprep.mubr.f32.mxu0 0.0
        %1932 = vmatmul.mubr.f32.gmra.mrb[0].mxu0 %v1811
        %v1933 = vpop.f32.mrb[0].mxu0
        %v1934 = vadd.f32 0.0, %v1933
        %v1935 = vpop.f32.mrb[0].mxu0
        %1936 = vmatprep.mubr.f32.mxu0 0.0
        %1937 = vmatmul.mubr.f32.gmra.mrb[0].mxu0 %v1814
        %v1938 = vpop.f32.mrb[0].mxu0
        %v1939 = vadd.f32 0.0, %v1938
        %v1940 = vpop.f32.mrb[0].mxu0
        %1941 = vmatprep.mubr.f32.mxu0 0.0
        %1942 = vmatmul.mubr.f32.gmra.mrb[0].mxu0 %v1817
        %v1943 = vpop.f32.mrb[0].mxu0
        %v1944 = vadd.f32 0.0, %v1943
        %v1945 = vpop.f32.mrb[0].mxu0
        %1946 = vmatprep.mubr.f32.mxu0 0.0
        %1947 = vmatmul.mubr.f32.gmra.mrb[0].mxu0 %v1820
        %v1948 = vpop.f32.mrb[0].mxu0
        %v1949 = vadd.f32 0.0, %v1948
        %v1950 = vpop.f32.mrb[0].mxu0
        %1951 = vmatprep.mubr.f32.mxu0 0.0
        %1952 = vmatmul.mubr.f32.gmra.mrb[0].mxu0 %v1823
        %v1953 = vpop.f32.mrb[0].mxu0
        %v1954 = vadd.f32 0.0, %v1953
        %v1955 = vpop.f32.mrb[0].mxu0
        %1956 = vmatprep.mubr.f32.mxu0 0.0
        %1957 = vmatmul.mubr.f32.gmra.mrb[0].mxu0 %v1826
        %v1958 = vpop.f32.mrb[0].mxu0
        %v1959 = vadd.f32 0.0, %v1958
        %v1960 = vpop.f32.mrb[0].mxu0
        %1961 = vmatprep.mubr.f32.mxu0 0.0
        %1962 = vmatmul.mubr.f32.gmra.mrb[0].mxu0 %v1829
        %v1963 = vpop.f32.mrb[0].mxu0
        %v1964 = vadd.f32 0.0, %v1963
        %v1965 = vpop.f32.mrb[0].mxu0
        %1966 = vmatprep.mubr.f32.mxu0 0.0
        %1967 = vmatmul.mubr.f32.gmra.mrb[0].mxu0 %v1832
        %v1968 = vpop.f32.mrb[0].mxu0
        %v1969 = vadd.f32 0.0, %v1968
        %v1970 = vpop.f32.mrb[0].mxu0
        %1971 = vmatprep.mubr.f32.mxu0 0.0
        %1972 = vmatmul.mubr.f32.gmra.mrb[0].mxu0 %v1835
        %v1973 = vpop.f32.mrb[0].mxu0
        %v1974 = vadd.f32 0.0, %v1973
        %v1975 = vpop.f32.mrb[0].mxu0
        %1976 = vmatprep.mubr.f32.mxu0 0.0
        %1977 = vmatmul.mubr.f32.gmra.mrb[0].mxu0 %v1838
        %v1978 = vpop.f32.mrb[0].mxu0
        %v1979 = vadd.f32 0.0, %v1978
        %v1980 = vpop.f32.mrb[0].mxu0
        %1981 = vmatprep.mubr.f32.mxu0 0.0
        %1982 = vmatmul.mubr.f32.gmra.mrb[0].mxu0 %v1841
        %v1983 = vpop.f32.mrb[0].mxu0
        %v1984 = vadd.f32 0.0, %v1983
        %v1985 = vpop.f32.mrb[0].mxu0
        %1986 = vmatprep.mubr.f32.mxu0 0.0
        %1987 = vmatmul.mubr.f32.gmra.mrb[0].mxu0 %v1844
        %v1988 = vpop.f32.mrb[0].mxu0
        %v1989 = vadd.f32 0.0, %v1988
        %v1990 = vpop.f32.mrb[0].mxu0
        %1991 = vmatprep.mubr.f32.mxu0 0.0
        %1992 = vmatmul.mubr.f32.gmra.mrb[0].mxu0 %v1847
        %v1993 = vpop.f32.mrb[0].mxu0
        %v1994 = vadd.f32 0.0, %v1993
        %v1995 = vpop.f32.mrb[0].mxu0
        %1996 = vdwg.mxu0
        %v1997 = vmul.f32 %v1919, 0.5
        %v1998 = vmul.f32 %v1924, 0.5
        %v1999 = vmul.f32 %v1929, 0.5
        %v2000 = vmul.f32 %v1934, 0.5
        %v2001 = vmul.f32 %v1939, 0.5
        %v2002 = vmul.f32 %v1944, 0.5
        %v2003 = vmul.f32 %v1949, 0.5
        %v2004 = vmul.f32 %v1954, 0.5
        %v2005 = vmul.f32 %v1959, 0.5
        %v2006 = vmul.f32 %v1964, 0.5
        %v2007 = vmul.f32 %v1969, 0.5
        %v2008 = vmul.f32 %v1974, 0.5
        %v2009 = vmul.f32 %v1979, 0.5
        %v2010 = vmul.f32 %v1984, 0.5
        %v2011 = vmul.f32 %v1989, 0.5
        %v2012 = vmul.f32 %v1994, 0.5
        %v2013 = vadd.f32 %v1997, %v1468
        %v2014 = vadd.f32 %v1998, %v1469
        %v2015 = vadd.f32 %v1999, %v1470
        %v2016 = vadd.f32 %v2000, %v1471
        %v2017 = vadd.f32 %v2001, %v1472
        %v2018 = vadd.f32 %v2002, %v1473
        %v2019 = vadd.f32 %v2003, %v1474
        %v2020 = vadd.f32 %v2004, %v1475
        %v2021 = vadd.f32 %v2005, %v1476
        %v2022 = vadd.f32 %v2006, %v1477
        %v2023 = vadd.f32 %v2007, %v1478
        %v2024 = vadd.f32 %v2008, %v1479
        %v2025 = vadd.f32 %v2009, %v1480
        %v2026 = vadd.f32 %v2010, %v1481
        %v2027 = vadd.f32 %v2011, %v1482
        %v2028 = vadd.f32 %v2012, %v1483
        %v2029 = vsel %vm1488, %v2013, -inf
        %2030 = vmax.xlane.f32.xlu0 %v2029
        %v2031 = vpop.xlane.xlu0 %2030
        %v2032 = vsel %vm1488, %v2014, -inf
        %2033 = vmax.xlane.f32.xlu0 %v2032
        %v2034 = vpop.xlane.xlu0 %2033
        %v2035 = vsel %vm1488, %v2015, -inf
        %2036 = vmax.xlane.f32.xlu0 %v2035
        %v2037 = vpop.xlane.xlu0 %2036
        %v2038 = vsel %vm1488, %v2016, -inf
        %2039 = vmax.xlane.f32.xlu0 %v2038
        %v2040 = vpop.xlane.xlu0 %2039
        %v2041 = vsel %vm1488, %v2017, -inf
        %2042 = vmax.xlane.f32.xlu0 %v2041
        %v2043 = vpop.xlane.xlu0 %2042
        %v2044 = vsel %vm1488, %v2018, -inf
        %2045 = vmax.xlane.f32.xlu0 %v2044
        %v2046 = vpop.xlane.xlu0 %2045
        %v2047 = vsel %vm1488, %v2019, -inf
        %2048 = vmax.xlane.f32.xlu0 %v2047
        %v2049 = vpop.xlane.xlu0 %2048
        %v2050 = vsel %vm1488, %v2020, -inf
        %2051 = vmax.xlane.f32.xlu0 %v2050
        %v2052 = vpop.xlane.xlu0 %2051
        %v2053 = vsel %vm1488, %v2021, -inf
        %2054 = vmax.xlane.f32.xlu0 %v2053
        %v2055 = vpop.xlane.xlu0 %2054
        %v2056 = vsel %vm1488, %v2022, -inf
        %2057 = vmax.xlane.f32.xlu0 %v2056
        %v2058 = vpop.xlane.xlu0 %2057
        %v2059 = vsel %vm1488, %v2023, -inf
        %2060 = vmax.xlane.f32.xlu0 %v2059
        %v2061 = vpop.xlane.xlu0 %2060
        %v2062 = vsel %vm1488, %v2024, -inf
        %2063 = vmax.xlane.f32.xlu0 %v2062
        %v2064 = vpop.xlane.xlu0 %2063
        %v2065 = vsel %vm1488, %v2025, -inf
        %2066 = vmax.xlane.f32.xlu0 %v2065
        %v2067 = vpop.xlane.xlu0 %2066
        %v2068 = vsel %vm1488, %v2026, -inf
        %2069 = vmax.xlane.f32.xlu0 %v2068
        %v2070 = vpop.xlane.xlu0 %2069
        %v2071 = vsel %vm1488, %v2027, -inf
        %2072 = vmax.xlane.f32.xlu0 %v2071
        %v2073 = vpop.xlane.xlu0 %2072
        %v2074 = vsel %vm1488, %v2028, -inf
        %2075 = vmax.xlane.f32.xlu0 %v2074
        %v2076 = vpop.xlane.xlu0 %2075
        %v2077 = vsub.f32 %v2013, %v2031
        %v2078 = vsub.f32 %v2014, %v2034
        %v2079 = vsub.f32 %v2015, %v2037
        %v2080 = vsub.f32 %v2016, %v2040
        %v2081 = vsub.f32 %v2017, %v2043
        %v2082 = vsub.f32 %v2018, %v2046
        %v2083 = vsub.f32 %v2019, %v2049
        %v2084 = vsub.f32 %v2020, %v2052
        %v2085 = vsub.f32 %v2021, %v2055
        %v2086 = vsub.f32 %v2022, %v2058
        %v2087 = vsub.f32 %v2023, %v2061
        %v2088 = vsub.f32 %v2024, %v2064
        %v2089 = vsub.f32 %v2025, %v2067
        %v2090 = vsub.f32 %v2026, %v2070
        %v2091 = vsub.f32 %v2027, %v2073
        %v2092 = vsub.f32 %v2028, %v2076
        %v2093 = vmul.f32 %v2077, 1.442695
        %v2094 = vpow.pop %v2093
        %v2095 = vmul.f32 %v2078, 1.442695
        %v2096 = vpow.pop %v2095
        %v2097 = vmul.f32 %v2079, 1.442695
        %v2098 = vpow.pop %v2097
        %v2099 = vmul.f32 %v2080, 1.442695
        %v2100 = vpow.pop %v2099
        %v2101 = vmul.f32 %v2081, 1.442695
        %v2102 = vpow.pop %v2101
        %v2103 = vmul.f32 %v2082, 1.442695
        %v2104 = vpow.pop %v2103
        %v2105 = vmul.f32 %v2083, 1.442695
        %v2106 = vpow.pop %v2105
        %v2107 = vmul.f32 %v2084, 1.442695
        %v2108 = vpow.pop %v2107
        %v2109 = vmul.f32 %v2085, 1.442695
        %v2110 = vpow.pop %v2109
        %v2111 = vmul.f32 %v2086, 1.442695
        %v2112 = vpow.pop %v2111
        %v2113 = vmul.f32 %v2087, 1.442695
        %v2114 = vpow.pop %v2113
        %v2115 = vmul.f32 %v2088, 1.442695
        %v2116 = vpow.pop %v2115
        %v2117 = vmul.f32 %v2089, 1.442695
        %v2118 = vpow.pop %v2117
        %v2119 = vmul.f32 %v2090, 1.442695
        %v2120 = vpow.pop %v2119
        %v2121 = vmul.f32 %v2091, 1.442695
        %v2122 = vpow.pop %v2121
        %v2123 = vmul.f32 %v2092, 1.442695
        %v2124 = vpow.pop %v2123
        %v2125 = vsel %vm1488, %v2094, 0.0
        %2126 = vadd.xlane.f32.xlu0 %v2125
        %v2127 = vpop.xlane.xlu0 %2126
        %v2128 = vsel %vm1488, %v2096, 0.0
        %2129 = vadd.xlane.f32.xlu0 %v2128
        %v2130 = vpop.xlane.xlu0 %2129
        %v2131 = vsel %vm1488, %v2098, 0.0
        %2132 = vadd.xlane.f32.xlu0 %v2131
        %v2133 = vpop.xlane.xlu0 %2132
        %v2134 = vsel %vm1488, %v2100, 0.0
        %2135 = vadd.xlane.f32.xlu0 %v2134
        %v2136 = vpop.xlane.xlu0 %2135
        %v2137 = vsel %vm1488, %v2102, 0.0
        %2138 = vadd.xlane.f32.xlu0 %v2137
        %v2139 = vpop.xlane.xlu0 %2138
        %v2140 = vsel %vm1488, %v2104, 0.0
        %2141 = vadd.xlane.f32.xlu0 %v2140
        %v2142 = vpop.xlane.xlu0 %2141
        %v2143 = vsel %vm1488, %v2106, 0.0
        %2144 = vadd.xlane.f32.xlu0 %v2143
        %v2145 = vpop.xlane.xlu0 %2144
        %v2146 = vsel %vm1488, %v2108, 0.0
        %2147 = vadd.xlane.f32.xlu0 %v2146
        %v2148 = vpop.xlane.xlu0 %2147
        %v2149 = vsel %vm1488, %v2110, 0.0
        %2150 = vadd.xlane.f32.xlu0 %v2149
        %v2151 = vpop.xlane.xlu0 %2150
        %v2152 = vsel %vm1488, %v2112, 0.0
        %2153 = vadd.xlane.f32.xlu0 %v2152
        %v2154 = vpop.xlane.xlu0 %2153
        %v2155 = vsel %vm1488, %v2114, 0.0
        %2156 = vadd.xlane.f32.xlu0 %v2155
        %v2157 = vpop.xlane.xlu0 %2156
        %v2158 = vsel %vm1488, %v2116, 0.0
        %2159 = vadd.xlane.f32.xlu0 %v2158
        %v2160 = vpop.xlane.xlu0 %2159
        %v2161 = vsel %vm1488, %v2118, 0.0
        %2162 = vadd.xlane.f32.xlu0 %v2161
        %v2163 = vpop.xlane.xlu0 %2162
        %v2164 = vsel %vm1488, %v2120, 0.0
        %2165 = vadd.xlane.f32.xlu0 %v2164
        %v2166 = vpop.xlane.xlu0 %2165
        %v2167 = vsel %vm1488, %v2122, 0.0
        %2168 = vadd.xlane.f32.xlu0 %v2167
        %v2169 = vpop.xlane.xlu0 %2168
        %v2170 = vsel %vm1488, %v2124, 0.0
        %2171 = vadd.xlane.f32.xlu0 %v2170
        %v2172 = vpop.xlane.xlu0 %2171
        %v2173 = vrcp.pop %v2127
        %v2174 = vmul.f32 %v2094, %v2173
        %v2175 = vrcp.pop %v2130
        %v2176 = vmul.f32 %v2096, %v2175
        %v2177 = vrcp.pop %v2133
        %v2178 = vmul.f32 %v2098, %v2177
        %v2179 = vrcp.pop %v2136
        %v2180 = vmul.f32 %v2100, %v2179
        %v2181 = vrcp.pop %v2139
        %v2182 = vmul.f32 %v2102, %v2181
        %v2183 = vrcp.pop %v2142
        %v2184 = vmul.f32 %v2104, %v2183
        %v2185 = vrcp.pop %v2145
        %v2186 = vmul.f32 %v2106, %v2185
        %v2187 = vrcp.pop %v2148
        %v2188 = vmul.f32 %v2108, %v2187
        %v2189 = vrcp.pop %v2151
        %v2190 = vmul.f32 %v2110, %v2189
        %v2191 = vrcp.pop %v2154
        %v2192 = vmul.f32 %v2112, %v2191
        %v2193 = vrcp.pop %v2157
        %v2194 = vmul.f32 %v2114, %v2193
        %v2195 = vrcp.pop %v2160
        %v2196 = vmul.f32 %v2116, %v2195
        %v2197 = vrcp.pop %v2163
        %v2198 = vmul.f32 %v2118, %v2197
        %v2199 = vrcp.pop %v2166
        %v2200 = vmul.f32 %v2120, %v2199
        %v2201 = vrcp.pop %v2169
        %v2202 = vmul.f32 %v2122, %v2201
        %v2203 = vrcp.pop %v2172
        %v2204 = vmul.f32 %v2124, %v2203
        %2205 = vrot.lane.b32.xlu0 %v1779, 112
        %v2206 = vpop.permute.xlu0 %2205
        %v2209 = vsel %vm1488, %v2174, 0
        %v2212 = vsel %vm1488, %v2176, 0
        %v2215 = vsel %vm1488, %v2178, 0
        %v2218 = vsel %vm1488, %v2180, 0
        %v2221 = vsel %vm1488, %v2182, 0
        %v2224 = vsel %vm1488, %v2184, 0
        %v2227 = vsel %vm1488, %v2186, 0
        %v2230 = vsel %vm1488, %v2188, 0
        %v2233 = vsel %vm1488, %v2190, 0
        %v2236 = vsel %vm1488, %v2192, 0
        %v2239 = vsel %vm1488, %v2194, 0
        %v2242 = vsel %vm1488, %v2196, 0
        %v2245 = vsel %vm1488, %v2198, 0
        %v2248 = vsel %vm1488, %v2200, 0
        %v2251 = vsel %vm1488, %v2202, 0
        %v2254 = vsel %vm1488, %v2204, 0
        %2256 = vmatprep.subr.mxu0 0.0
        %2257 = vmatpush1.msra.mxu0 %v2206
        %2258 = vmatprep.subr.mxu0 0.0
        %2259 = vmatpush1.msra.mxu0 %v2206
        %2260 = vmatprep.subr.mxu0 0.0
        %2261 = vmatpush1.msra.mxu0 %v2206
        %2262 = vmatprep.subr.mxu0 0.0
        %2263 = vmatpush1.msra.mxu0 %v2206
        %2264 = vmatprep.subr.mxu0 0.0
        %2265 = vmatpush1.msra.mxu0 0.0
        %2266 = vmatprep.subr.mxu0 0.0
        %2267 = vmatpush1.msra.mxu0 0.0
        %2268 = vmatprep.subr.mxu0 0.0
        %2269 = vmatpush1.msra.mxu0 0.0
        %2270 = vmatprep.subr.mxu0 0.0
        %2271 = vmatpush1.msra.mxu0 0.0
        %2272 = vmatprep.subr.mxu0 0.0
        %2273 = vmatpush1.msra.mxu0 0.0
        %2274 = vmatprep.subr.mxu0 0.0
        %2275 = vmatpush1.msra.mxu0 0.0
        %2276 = vmatprep.subr.mxu0 0.0
        %2277 = vmatpush1.msra.mxu0 0.0
        %2278 = vmatprep.subr.mxu0 0.0
        %2279 = vmatpush1.msra.mxu0 0.0
        %2280 = vmatprep.subr.mxu0 0.0
        %2281 = vmatpush1.msra.mxu0 0.0
        %2282 = vmatprep.subr.mxu0 0.0
        %2283 = vmatpush1.msra.mxu0 0.0
        %2284 = vmatprep.subr.mxu0 0.0
        %2285 = vmatpush1.msra.mxu0 0.0
        %2286 = vmatprep.subr.mxu0 0.0
        %2287 = vmatpush1.msra.mxu0 0.0
        %2288 = vmatprep.subr.mxu0 0.0
        %2289 = vmatpush1.msra.mxu0 0.0
        %2290 = vmatprep.subr.mxu0 0.0
        %2291 = vmatpush1.msra.mxu0 0.0
        %2292 = vmatprep.subr.mxu0 0.0
        %2293 = vmatpush1.msra.mxu0 0.0
        %2294 = vmatprep.subr.mxu0 0.0
        %2295 = vmatpush1.msra.mxu0 0.0
        %2296 = vmatprep.subr.mxu0 0.0
        %2297 = vmatpush1.msra.mxu0 0.0
        %2298 = vmatprep.subr.mxu0 0.0
        %2299 = vmatpush1.msra.mxu0 0.0
        %2300 = vmatprep.subr.mxu0 0.0
        %2301 = vmatpush1.msra.mxu0 0.0
        %2302 = vmatprep.subr.mxu0 0.0
        %2303 = vmatpush1.msra.mxu0 0.0
        %2304 = vmatprep.subr.mxu0 0.0
        %2305 = vmatpush1.msra.mxu0 0.0
        %2306 = vmatprep.subr.mxu0 0.0
        %2307 = vmatpush1.msra.mxu0 0.0
        %2308 = vmatprep.subr.mxu0 0.0
        %2309 = vmatpush1.msra.mxu0 0.0
        %2310 = vmatprep.subr.mxu0 0.0
        %2311 = vmatpush1.msra.mxu0 0.0
        %2312 = vmatprep.subr.mxu0 0.0
        %2313 = vmatpush1.msra.mxu0 0.0
        %2314 = vmatprep.subr.mxu0 0.0
        %2315 = vmatpush1.msra.mxu0 0.0
        %2316 = vmatprep.subr.mxu0 0.0
        %2317 = vmatpush1.msra.mxu0 0.0
        %2318 = vmatprep.subr.mxu0 0.0
        %2319 = vmatpush1.msra.mxu0 0.0
        %2320 = vmatprep.mubr.f32.mxu0 0.0
        %2321 = vmatmul.mubr.f32.gmra.mrb[0].mxu0 %v2209
        %v2322 = vpop.f32.mrb[0].mxu0
        %v2323 = vadd.f32 0.0, %v2322
        %v2324 = vpop.f32.mrb[0].mxu0
        %2325 = vmatprep.mubr.f32.mxu0 0.0
        %2326 = vmatmul.mubr.f32.gmra.mrb[0].mxu0 %v2212
        %v2327 = vpop.f32.mrb[0].mxu0
        %v2328 = vadd.f32 0.0, %v2327
        %v2329 = vpop.f32.mrb[0].mxu0
        %2330 = vmatprep.mubr.f32.mxu0 0.0
        %2331 = vmatmul.mubr.f32.gmra.mrb[0].mxu0 %v2215
        %v2332 = vpop.f32.mrb[0].mxu0
        %v2333 = vadd.f32 0.0, %v2332
        %v2334 = vpop.f32.mrb[0].mxu0
        %2335 = vmatprep.mubr.f32.mxu0 0.0
        %2336 = vmatmul.mubr.f32.gmra.mrb[0].mxu0 %v2218
        %v2337 = vpop.f32.mrb[0].mxu0
        %v2338 = vadd.f32 0.0, %v2337
        %v2339 = vpop.f32.mrb[0].mxu0
        %2340 = vmatprep.mubr.f32.mxu0 0.0
        %2341 = vmatmul.mubr.f32.gmra.mrb[0].mxu0 %v2221
        %v2342 = vpop.f32.mrb[0].mxu0
        %v2343 = vadd.f32 0.0, %v2342
        %v2344 = vpop.f32.mrb[0].mxu0
        %2345 = vmatprep.mubr.f32.mxu0 0.0
        %2346 = vmatmul.mubr.f32.gmra.mrb[0].mxu0 %v2224
        %v2347 = vpop.f32.mrb[0].mxu0
        %v2348 = vadd.f32 0.0, %v2347
        %v2349 = vpop.f32.mrb[0].mxu0
        %2350 = vmatprep.mubr.f32.mxu0 0.0
        %2351 = vmatmul.mubr.f32.gmra.mrb[0].mxu0 %v2227
        %v2352 = vpop.f32.mrb[0].mxu0
        %v2353 = vadd.f32 0.0, %v2352
        %v2354 = vpop.f32.mrb[0].mxu0
        %2355 = vmatprep.mubr.f32.mxu0 0.0
        %2356 = vmatmul.mubr.f32.gmra.mrb[0].mxu0 %v2230
        %v2357 = vpop.f32.mrb[0].mxu0
        %v2358 = vadd.f32 0.0, %v2357
        %v2359 = vpop.f32.mrb[0].mxu0
        %2360 = vmatprep.mubr.f32.mxu0 0.0
        %2361 = vmatmul.mubr.f32.gmra.mrb[0].mxu0 %v2233
        %v2362 = vpop.f32.mrb[0].mxu0
        %v2363 = vadd.f32 0.0, %v2362
        %v2364 = vpop.f32.mrb[0].mxu0
        %2365 = vmatprep.mubr.f32.mxu0 0.0
        %2366 = vmatmul.mubr.f32.gmra.mrb[0].mxu0 %v2236
        %v2367 = vpop.f32.mrb[0].mxu0
        %v2368 = vadd.f32 0.0, %v2367
        %v2369 = vpop.f32.mrb[0].mxu0
        %2370 = vmatprep.mubr.f32.mxu0 0.0
        %2371 = vmatmul.mubr.f32.gmra.mrb[0].mxu0 %v2239
        %v2372 = vpop.f32.mrb[0].mxu0
        %v2373 = vadd.f32 0.0, %v2372
        %v2374 = vpop.f32.mrb[0].mxu0
        %2375 = vmatprep.mubr.f32.mxu0 0.0
        %2376 = vmatmul.mubr.f32.gmra.mrb[0].mxu0 %v2242
        %v2377 = vpop.f32.mrb[0].mxu0
        %v2378 = vadd.f32 0.0, %v2377
        %v2379 = vpop.f32.mrb[0].mxu0
        %2380 = vmatprep.mubr.f32.mxu0 0.0
        %2381 = vmatmul.mubr.f32.gmra.mrb[0].mxu0 %v2245
        %v2382 = vpop.f32.mrb[0].mxu0
        %v2383 = vadd.f32 0.0, %v2382
        %v2384 = vpop.f32.mrb[0].mxu0
        %2385 = vmatprep.mubr.f32.mxu0 0.0
        %2386 = vmatmul.mubr.f32.gmra.mrb[0].mxu0 %v2248
        %v2387 = vpop.f32.mrb[0].mxu0
        %v2388 = vadd.f32 0.0, %v2387
        %v2389 = vpop.f32.mrb[0].mxu0
        %2390 = vmatprep.mubr.f32.mxu0 0.0
        %2391 = vmatmul.mubr.f32.gmra.mrb[0].mxu0 %v2251
        %v2392 = vpop.f32.mrb[0].mxu0
        %v2393 = vadd.f32 0.0, %v2392
        %v2394 = vpop.f32.mrb[0].mxu0
        %2395 = vmatprep.mubr.f32.mxu0 0.0
        %2396 = vmatmul.mubr.f32.gmra.mrb[0].mxu0 %v2254
        %v2397 = vpop.f32.mrb[0].mxu0
        %v2398 = vadd.f32 0.0, %v2397
        %v2399 = vpop.f32.mrb[0].mxu0
        %2400 = vdwg.mxu0
        %v2401 = vmul.f32 %v2323, %v1440
        %v2402 = vmul.f32 %v2328, %v1441
        %v2403 = vmul.f32 %v2333, %v1442
        %v2404 = vmul.f32 %v2338, %v1443
        %v2405 = vmul.f32 %v2343, %v1444
        %v2406 = vmul.f32 %v2348, %v1445
        %v2407 = vmul.f32 %v2353, %v1446
        %v2408 = vmul.f32 %v2358, %v1447
        %v2409 = vmul.f32 %v2363, %v1448
        %v2410 = vmul.f32 %v2368, %v1449
        %v2411 = vmul.f32 %v2373, %v1450
        %v2412 = vmul.f32 %v2378, %v1451
        %v2413 = vmul.f32 %v2383, %v1452
        %v2414 = vmul.f32 %v2388, %v1453
        %v2415 = vmul.f32 %v2393, %v1454
        %v2416 = vmul.f32 %v2398, %v1455
        %v2418 = vsel %vm1258, %v2401, 0
        %v2421 = vsel %vm1258, %v2402, 0
        %v2424 = vsel %vm1258, %v2403, 0
        %v2427 = vsel %vm1258, %v2404, 0
        %v2430 = vsel %vm1258, %v2405, 0
        %v2433 = vsel %vm1258, %v2406, 0
        %v2436 = vsel %vm1258, %v2407, 0
        %v2439 = vsel %vm1258, %v2408, 0
        %v2442 = vsel %vm1258, %v2409, 0
        %v2445 = vsel %vm1258, %v2410, 0
        %v2448 = vsel %vm1258, %v2411, 0
        %v2451 = vsel %vm1258, %v2412, 0
        %v2454 = vsel %vm1258, %v2413, 0
        %v2457 = vsel %vm1258, %v2414, 0
        %v2460 = vsel %vm1258, %v2415, 0
        %v2463 = vsel %vm1258, %v2416, 0
        %2465 = vmatprep.subr.mxu0 0.0
        %2466 = vmatpush1.msra.mxu0 %v1782
        %2467 = vmatprep.subr.mxu0 0.0
        %2468 = vmatpush1.msra.mxu0 %v1783
        %2469 = vmatprep.subr.mxu0 0.0
        %2470 = vmatpush1.msra.mxu0 0.0
        %2471 = vmatprep.subr.mxu0 0.0
        %2472 = vmatpush1.msra.mxu0 0.0
        %2473 = vmatprep.subr.mxu0 0.0
        %2474 = vmatpush1.msra.mxu0 0.0
        %2475 = vmatprep.subr.mxu0 0.0
        %2476 = vmatpush1.msra.mxu0 0.0
        %2477 = vmatprep.subr.mxu0 0.0
        %2478 = vmatpush1.msra.mxu0 0.0
        %2479 = vmatprep.subr.mxu0 0.0
        %2480 = vmatpush1.msra.mxu0 0.0
        %2481 = vmatprep.subr.mxu0 0.0
        %2482 = vmatpush1.msra.mxu0 0.0
        %2483 = vmatprep.subr.mxu0 0.0
        %2484 = vmatpush1.msra.mxu0 0.0
        %2485 = vmatprep.subr.mxu0 0.0
        %2486 = vmatpush1.msra.mxu0 0.0
        %2487 = vmatprep.subr.mxu0 0.0
        %2488 = vmatpush1.msra.mxu0 0.0
        %2489 = vmatprep.subr.mxu0 0.0
        %2490 = vmatpush1.msra.mxu0 0.0
        %2491 = vmatprep.subr.mxu0 0.0
        %2492 = vmatpush1.msra.mxu0 0.0
        %2493 = vmatprep.subr.mxu0 0.0
        %2494 = vmatpush1.msra.mxu0 0.0
        %2495 = vmatprep.subr.mxu0 0.0
        %2496 = vmatpush1.msra.mxu0 0.0
        %2497 = vmatprep.subr.mxu0 0.0
        %2498 = vmatpush1.msra.mxu0 0.0
        %2499 = vmatprep.subr.mxu0 0.0
        %2500 = vmatpush1.msra.mxu0 0.0
        %2501 = vmatprep.subr.mxu0 0.0
        %2502 = vmatpush1.msra.mxu0 0.0
        %2503 = vmatprep.subr.mxu0 0.0
        %2504 = vmatpush1.msra.mxu0 0.0
        %2505 = vmatprep.subr.mxu0 0.0
        %2506 = vmatpush1.msra.mxu0 0.0
        %2507 = vmatprep.subr.mxu0 0.0
        %2508 = vmatpush1.msra.mxu0 0.0
        %2509 = vmatprep.subr.mxu0 0.0
        %2510 = vmatpush1.msra.mxu0 0.0
        %2511 = vmatprep.subr.mxu0 0.0
        %2512 = vmatpush1.msra.mxu0 0.0
        %2513 = vmatprep.subr.mxu0 0.0
        %2514 = vmatpush1.msra.mxu0 0.0
        %2515 = vmatprep.subr.mxu0 0.0
        %2516 = vmatpush1.msra.mxu0 0.0
        %2517 = vmatprep.subr.mxu0 0.0
        %2518 = vmatpush1.msra.mxu0 0.0
        %2519 = vmatprep.subr.mxu0 0.0
        %2520 = vmatpush1.msra.mxu0 0.0
        %2521 = vmatprep.subr.mxu0 0.0
        %2522 = vmatpush1.msra.mxu0 0.0
        %2523 = vmatprep.subr.mxu0 0.0
        %2524 = vmatpush1.msra.mxu0 0.0
        %2525 = vmatprep.subr.mxu0 0.0
        %2526 = vmatpush1.msra.mxu0 0.0
        %2527 = vmatprep.subr.mxu0 0.0
        %2528 = vmatpush1.msra.mxu0 0.0
        %2529 = vmatprep.mubr.f32.mxu0 0.0
        %2530 = vmatmul.mubr.f32.gmra.mrb[0].mxu0 %v2418
        %v2531 = vpop.f32.mrb[0].mxu0
        %v2532 = vadd.f32 0.0, %v2531
        %v2533 = vpop.f32.mrb[0].mxu0
        %2534 = vmatprep.mubr.f32.mxu0 0.0
        %2535 = vmatmul.mubr.f32.gmra.mrb[0].mxu0 %v2421
        %v2536 = vpop.f32.mrb[0].mxu0
        %v2537 = vadd.f32 0.0, %v2536
        %v2538 = vpop.f32.mrb[0].mxu0
        %2539 = vmatprep.mubr.f32.mxu0 0.0
        %2540 = vmatmul.mubr.f32.gmra.mrb[0].mxu0 %v2424
        %v2541 = vpop.f32.mrb[0].mxu0
        %v2542 = vadd.f32 0.0, %v2541
        %v2543 = vpop.f32.mrb[0].mxu0
        %2544 = vmatprep.mubr.f32.mxu0 0.0
        %2545 = vmatmul.mubr.f32.gmra.mrb[0].mxu0 %v2427
        %v2546 = vpop.f32.mrb[0].mxu0
        %v2547 = vadd.f32 0.0, %v2546
        %v2548 = vpop.f32.mrb[0].mxu0
        %2549 = vmatprep.mubr.f32.mxu0 0.0
        %2550 = vmatmul.mubr.f32.gmra.mrb[0].mxu0 %v2430
        %v2551 = vpop.f32.mrb[0].mxu0
        %v2552 = vadd.f32 0.0, %v2551
        %v2553 = vpop.f32.mrb[0].mxu0
        %2554 = vmatprep.mubr.f32.mxu0 0.0
        %2555 = vmatmul.mubr.f32.gmra.mrb[0].mxu0 %v2433
        %v2556 = vpop.f32.mrb[0].mxu0
        %v2557 = vadd.f32 0.0, %v2556
        %v2558 = vpop.f32.mrb[0].mxu0
        %2559 = vmatprep.mubr.f32.mxu0 0.0
        %2560 = vmatmul.mubr.f32.gmra.mrb[0].mxu0 %v2436
        %v2561 = vpop.f32.mrb[0].mxu0
        %v2562 = vadd.f32 0.0, %v2561
        %v2563 = vpop.f32.mrb[0].mxu0
        %2564 = vmatprep.mubr.f32.mxu0 0.0
        %2565 = vmatmul.mubr.f32.gmra.mrb[0].mxu0 %v2439
        %v2566 = vpop.f32.mrb[0].mxu0
        %v2567 = vadd.f32 0.0, %v2566
        %v2568 = vpop.f32.mrb[0].mxu0
        %2569 = vmatprep.mubr.f32.mxu0 0.0
        %2570 = vmatmul.mubr.f32.gmra.mrb[0].mxu0 %v2442
        %v2571 = vpop.f32.mrb[0].mxu0
        %v2572 = vadd.f32 0.0, %v2571
        %v2573 = vpop.f32.mrb[0].mxu0
        %2574 = vmatprep.mubr.f32.mxu0 0.0
        %2575 = vmatmul.mubr.f32.gmra.mrb[0].mxu0 %v2445
        %v2576 = vpop.f32.mrb[0].mxu0
        %v2577 = vadd.f32 0.0, %v2576
        %v2578 = vpop.f32.mrb[0].mxu0
        %2579 = vmatprep.mubr.f32.mxu0 0.0
        %2580 = vmatmul.mubr.f32.gmra.mrb[0].mxu0 %v2448
        %v2581 = vpop.f32.mrb[0].mxu0
        %v2582 = vadd.f32 0.0, %v2581
        %v2583 = vpop.f32.mrb[0].mxu0
        %2584 = vmatprep.mubr.f32.mxu0 0.0
        %2585 = vmatmul.mubr.f32.gmra.mrb[0].mxu0 %v2451
        %v2586 = vpop.f32.mrb[0].mxu0
        %v2587 = vadd.f32 0.0, %v2586
        %v2588 = vpop.f32.mrb[0].mxu0
        %2589 = vmatprep.mubr.f32.mxu0 0.0
        %2590 = vmatmul.mubr.f32.gmra.mrb[0].mxu0 %v2454
        %v2591 = vpop.f32.mrb[0].mxu0
        %v2592 = vadd.f32 0.0, %v2591
        %v2593 = vpop.f32.mrb[0].mxu0
        %2594 = vmatprep.mubr.f32.mxu0 0.0
        %2595 = vmatmul.mubr.f32.gmra.mrb[0].mxu0 %v2457
        %v2596 = vpop.f32.mrb[0].mxu0
        %v2597 = vadd.f32 0.0, %v2596
        %v2598 = vpop.f32.mrb[0].mxu0
        %2599 = vmatprep.mubr.f32.mxu0 0.0
        %2600 = vmatmul.mubr.f32.gmra.mrb[0].mxu0 %v2460
        %v2601 = vpop.f32.mrb[0].mxu0
        %v2602 = vadd.f32 0.0, %v2601
        %v2603 = vpop.f32.mrb[0].mxu0
        %2604 = vmatprep.mubr.f32.mxu0 0.0
        %2605 = vmatmul.mubr.f32.gmra.mrb[0].mxu0 %v2463
        %v2606 = vpop.f32.mrb[0].mxu0
        %v2607 = vadd.f32 0.0, %v2606
        %v2608 = vpop.f32.mrb[0].mxu0
        %2609 = vdwg.mxu0
        %v2610 = vadd.f32 %v2532, %v2552
        %v2611 = vadd.f32 %v2537, %v2557
        %v2612 = vadd.f32 %v2542, %v2562
        %v2613 = vadd.f32 %v2547, %v2567
        %v2614 = vadd.f32 %v2610, %v2572
        %v2615 = vadd.f32 %v2611, %v2577
        %v2616 = vadd.f32 %v2612, %v2582
        %v2617 = vadd.f32 %v2613, %v2587
        %v2618 = vadd.f32 %v2614, %v2592
        %v2619 = vadd.f32 %v2615, %v2597
        %v2620 = vadd.f32 %v2616, %v2602
        %v2621 = vadd.f32 %v2617, %v2607
        %v2623 = vlaneseq
        %v2624 = vshrl.u32 %v2623, 7
        %v2625 = vsub.s32 0, %v2624
        %v2626 = vrot.slane %v1784, %v2625
        %v2628 = vadd.f32 %v2618, %v2626
        %v2629 = vadd.f32 %v2619, %v2626
        %v2630 = vadd.f32 %v2620, %v2626
        %v2631 = vadd.f32 %v2621, %v2626
        %v2632 = vadd.f32 %v1574, %v2628
        %v2633 = vadd.f32 %v1579, %v2629
        %v2634 = vadd.f32 %v1584, %v2630
        %v2635 = vadd.f32 %v1589, %v2631
        %v2636 = vld [vmem:[%s39] sm:$0x1]
        %v2637 = vld [vmem:[%s41] sm:$0x1]
        %v2638 = vsel %vm1258, %v2632, 0.0
        %2639 = vadd.xlane.f32.xlu0 %v2638
        %v2640 = vpop.xlane.xlu0 %2639
        %v2641 = vsel %vm1258, %v2633, 0.0
        %2642 = vadd.xlane.f32.xlu0 %v2641
        %v2643 = vpop.xlane.xlu0 %2642
        %v2644 = vsel %vm1258, %v2634, 0.0
        %2645 = vadd.xlane.f32.xlu0 %v2644
        %v2646 = vpop.xlane.xlu0 %2645
        %v2647 = vsel %vm1258, %v2635, 0.0
        %2648 = vadd.xlane.f32.xlu0 %v2647
        %v2649 = vpop.xlane.xlu0 %2648
        %v2650 = vmul.f32 %v2640, %v1231
        %v2651 = vmul.f32 %v2643, %v1231
        %v2652 = vmul.f32 %v2646, %v1231
        %v2653 = vmul.f32 %v2649, %v1231
        %v2654 = vsub.f32 %v2632, %v2650
        %v2655 = vsub.f32 %v2633, %v2651
        %v2656 = vsub.f32 %v2634, %v2652
        %v2657 = vsub.f32 %v2635, %v2653
        %v2658 = vmul.f32 %v2654, %v2654
        %v2659 = vmul.f32 %v2655, %v2655
        %v2660 = vmul.f32 %v2656, %v2656
        %v2661 = vmul.f32 %v2657, %v2657
        %v2662 = vsel %vm1258, %v2658, 0.0
        %2663 = vadd.xlane.f32.xlu0 %v2662
        %v2664 = vpop.xlane.xlu0 %2663
        %v2665 = vsel %vm1258, %v2659, 0.0
        %2666 = vadd.xlane.f32.xlu0 %v2665
        %v2667 = vpop.xlane.xlu0 %2666
        %v2668 = vsel %vm1258, %v2660, 0.0
        %2669 = vadd.xlane.f32.xlu0 %v2668
        %v2670 = vpop.xlane.xlu0 %2669
        %v2671 = vsel %vm1258, %v2661, 0.0
        %2672 = vadd.xlane.f32.xlu0 %v2671
        %v2673 = vpop.xlane.xlu0 %2672
        %v2674 = vmul.f32 %v2664, %v1231
        %v2675 = vmul.f32 %v2667, %v1231
        %v2676 = vmul.f32 %v2670, %v1231
        %v2677 = vmul.f32 %v2673, %v1231
        %v2678 = vadd.f32 %v2674, 1e-05
        %v2679 = vadd.f32 %v2675, 1e-05
        %v2680 = vadd.f32 %v2676, 1e-05
        %v2681 = vadd.f32 %v2677, 1e-05
        %v2682 = vrsqrt.pop %v2678
        %v2683 = vrsqrt.pop %v2679
        %v2684 = vrsqrt.pop %v2680
        %v2685 = vrsqrt.pop %v2681
        %v2686 = vmul.f32 %v2654, %v2682
        %v2687 = vmul.f32 %v2655, %v2683
        %v2688 = vmul.f32 %v2656, %v2684
        %v2689 = vmul.f32 %v2657, %v2685
        %v2691 = vlaneseq
        %v2692 = vshrl.u32 %v2691, 7
        %v2693 = vsub.s32 0, %v2692
        %v2694 = vrot.slane %v2636, %v2693
        %v2696 = vmul.f32 %v2686, %v2694
        %v2697 = vmul.f32 %v2687, %v2694
        %v2698 = vmul.f32 %v2688, %v2694
        %v2699 = vmul.f32 %v2689, %v2694
        %v2701 = vlaneseq
        %v2702 = vshrl.u32 %v2701, 7
        %v2703 = vsub.s32 0, %v2702
        %v2704 = vrot.slane %v2637, %v2703
        %v2706 = vadd.f32 %v2696, %v2704
        %v2707 = vadd.f32 %v2697, %v2704
        %v2708 = vadd.f32 %v2698, %v2704
        %v2709 = vadd.f32 %v2699, %v2704
        %v2711 = vsel %vm1258, %v1430, 0
        %v2714 = vsel %vm1258, %v1431, 0
        %v2717 = vsel %vm1258, %v2706, 0
        %v2720 = vsel %vm1258, %v2707, 0
        %v2723 = vsel %vm1258, %v2708, 0
        %v2726 = vsel %vm1258, %v2709, 0
        %2728 = vmatprep.subr.mxu0 0.0
        %2729 = vmatpush1.xpose.msra.mxu0 %v2717
        %2730 = vmatprep.subr.mxu0 0.0
        %2731 = vmatpush1.xpose.msra.mxu0 %v2720
        %2732 = vmatprep.subr.mxu0 0.0
        %2733 = vmatpush1.xpose.msra.mxu0 %v2723
        %2734 = vmatprep.subr.mxu0 0.0
        %2735 = vmatpush1.xpose.msra.mxu0 %v2726
        %2736 = vmatprep.subr.mxu0 0.0
        %2737 = vmatpush1.xpose.msra.mxu0 0.0
        %2738 = vmatprep.subr.mxu0 0.0
        %2739 = vmatpush1.xpose.msra.mxu0 0.0
        %2740 = vmatprep.subr.mxu0 0.0
        %2741 = vmatpush1.xpose.msra.mxu0 0.0
        %2742 = vmatprep.subr.mxu0 0.0
        %2743 = vmatpush1.xpose.msra.mxu0 0.0
        %2744 = vmatprep.subr.mxu0 0.0
        %2745 = vmatpush1.xpose.msra.mxu0 0.0
        %2746 = vmatprep.subr.mxu0 0.0
        %2747 = vmatpush1.xpose.msra.mxu0 0.0
        %2748 = vmatprep.subr.mxu0 0.0
        %2749 = vmatpush1.xpose.msra.mxu0 0.0
        %2750 = vmatprep.subr.mxu0 0.0
        %2751 = vmatpush1.xpose.msra.mxu0 0.0
        %2752 = vmatprep.subr.mxu0 0.0
        %2753 = vmatpush1.xpose.msra.mxu0 0.0
        %2754 = vmatprep.subr.mxu0 0.0
        %2755 = vmatpush1.xpose.msra.mxu0 0.0
        %2756 = vmatprep.subr.mxu0 0.0
        %2757 = vmatpush1.xpose.msra.mxu0 0.0
        %2758 = vmatprep.subr.mxu0 0.0
        %2759 = vmatpush1.xpose.msra.mxu0 0.0
        %2760 = vmatprep.subr.mxu0 0.0
        %2761 = vmatpush1.xpose.msra.mxu0 0.0
        %2762 = vmatprep.subr.mxu0 0.0
        %2763 = vmatpush1.xpose.msra.mxu0 0.0
        %2764 = vmatprep.subr.mxu0 0.0
        %2765 = vmatpush1.xpose.msra.mxu0 0.0
        %2766 = vmatprep.subr.mxu0 0.0
        %2767 = vmatpush1.xpose.msra.mxu0 0.0
        %2768 = vmatprep.subr.mxu0 0.0
        %2769 = vmatpush1.xpose.msra.mxu0 0.0
        %2770 = vmatprep.subr.mxu0 0.0
        %2771 = vmatpush1.xpose.msra.mxu0 0.0
        %2772 = vmatprep.subr.mxu0 0.0
        %2773 = vmatpush1.xpose.msra.mxu0 0.0
        %2774 = vmatprep.subr.mxu0 0.0
        %2775 = vmatpush1.xpose.msra.mxu0 0.0
        %2776 = vmatprep.subr.mxu0 0.0
        %2777 = vmatpush1.xpose.msra.mxu0 0.0
        %2778 = vmatprep.subr.mxu0 0.0
        %2779 = vmatpush1.xpose.msra.mxu0 0.0
        %2780 = vmatprep.subr.mxu0 0.0
        %2781 = vmatpush1.xpose.msra.mxu0 0.0
        %2782 = vmatprep.subr.mxu0 0.0
        %2783 = vmatpush1.xpose.msra.mxu0 0.0
        %2784 = vmatprep.subr.mxu0 0.0
        %2785 = vmatpush1.xpose.msra.mxu0 0.0
        %2786 = vmatprep.subr.mxu0 0.0
        %2787 = vmatpush1.xpose.msra.mxu0 0.0
        %2788 = vmatprep.subr.mxu0 0.0
        %2789 = vmatpush1.xpose.msra.mxu0 0.0
        %2790 = vmatprep.subr.mxu0 0.0
        %2791 = vmatpush1.xpose.msra.mxu0 0.0
        %2792 = vmatprep.mubr.f32.mxu0 0.0
        %2793 = vmatmul.mubr.f32.gmra.mrb[0].mxu0 %v2711
        %v2794 = vpop.f32.mrb[0].mxu0
        %v2795 = vadd.f32 0.0, %v2794
        %v2796 = vpop.f32.mrb[0].mxu0
        %2797 = vmatprep.mubr.f32.mxu0 0.0
        %2798 = vmatmul.mubr.f32.gmra.mrb[0].mxu0 %v2714
        %v2799 = vpop.f32.mrb[0].mxu0
        %v2800 = vadd.f32 0.0, %v2799
        %v2801 = vpop.f32.mrb[0].mxu0
        %2802 = vdwg.mxu0
        %v2803 = vld [vmem:[%s43] sm:$0xff]
        %v2804 = vld [vmem:[%s43 + $0x8] sm:$0xff]
        %v2805 = vld [vmem:[%s43 + $0x10] sm:$0xff]
        %v2806 = vld [vmem:[%s43 + $0x18] sm:$0xff]
        %v2807 = vld [vmem:[%s45] sm:$0x1]
        %v2809 = vlaneseq
        %v2810 = vshrl.u32 %v2809, 7
        %v2811 = vsub.s32 0, %v2810
        %v2812 = vrot.slane %v2807, %v2811
        %v2815 = vsel %vm1488, %v2795, 0
        %v2818 = vsel %vm1488, %v2800, 0
        %2820 = vmatprep.subr.mxu0 0.0
        %2821 = vmatpush1.msra.mxu0 %v2803
        %2822 = vmatprep.subr.mxu0 0.0
        %2823 = vmatpush1.msra.mxu0 %v2804
        %2824 = vmatprep.subr.mxu0 0.0
        %2825 = vmatpush1.msra.mxu0 %v2805
        %2826 = vmatprep.subr.mxu0 0.0
        %2827 = vmatpush1.msra.mxu0 %v2806
        %2828 = vmatprep.subr.mxu0 0.0
        %2829 = vmatpush1.msra.mxu0 0.0
        %2830 = vmatprep.subr.mxu0 0.0
        %2831 = vmatpush1.msra.mxu0 0.0
        %2832 = vmatprep.subr.mxu0 0.0
        %2833 = vmatpush1.msra.mxu0 0.0
        %2834 = vmatprep.subr.mxu0 0.0
        %2835 = vmatpush1.msra.mxu0 0.0
        %2836 = vmatprep.subr.mxu0 0.0
        %2837 = vmatpush1.msra.mxu0 0.0
        %2838 = vmatprep.subr.mxu0 0.0
        %2839 = vmatpush1.msra.mxu0 0.0
        %2840 = vmatprep.subr.mxu0 0.0
        %2841 = vmatpush1.msra.mxu0 0.0
        %2842 = vmatprep.subr.mxu0 0.0
        %2843 = vmatpush1.msra.mxu0 0.0
        %2844 = vmatprep.subr.mxu0 0.0
        %2845 = vmatpush1.msra.mxu0 0.0
        %2846 = vmatprep.subr.mxu0 0.0
        %2847 = vmatpush1.msra.mxu0 0.0
        %2848 = vmatprep.subr.mxu0 0.0
        %2849 = vmatpush1.msra.mxu0 0.0
        %2850 = vmatprep.subr.mxu0 0.0
        %2851 = vmatpush1.msra.mxu0 0.0
        %2852 = vmatprep.subr.mxu0 0.0
        %2853 = vmatpush1.msra.mxu0 0.0
        %2854 = vmatprep.subr.mxu0 0.0
        %2855 = vmatpush1.msra.mxu0 0.0
        %2856 = vmatprep.subr.mxu0 0.0
        %2857 = vmatpush1.msra.mxu0 0.0
        %2858 = vmatprep.subr.mxu0 0.0
        %2859 = vmatpush1.msra.mxu0 0.0
        %2860 = vmatprep.subr.mxu0 0.0
        %2861 = vmatpush1.msra.mxu0 0.0
        %2862 = vmatprep.subr.mxu0 0.0
        %2863 = vmatpush1.msra.mxu0 0.0
        %2864 = vmatprep.subr.mxu0 0.0
        %2865 = vmatpush1.msra.mxu0 0.0
        %2866 = vmatprep.subr.mxu0 0.0
        %2867 = vmatpush1.msra.mxu0 0.0
        %2868 = vmatprep.subr.mxu0 0.0
        %2869 = vmatpush1.msra.mxu0 0.0
        %2870 = vmatprep.subr.mxu0 0.0
        %2871 = vmatpush1.msra.mxu0 0.0
        %2872 = vmatprep.subr.mxu0 0.0
        %2873 = vmatpush1.msra.mxu0 0.0
        %2874 = vmatprep.subr.mxu0 0.0
        %2875 = vmatpush1.msra.mxu0 0.0
        %2876 = vmatprep.subr.mxu0 0.0
        %2877 = vmatpush1.msra.mxu0 0.0
        %2878 = vmatprep.subr.mxu0 0.0
        %2879 = vmatpush1.msra.mxu0 0.0
        %2880 = vmatprep.subr.mxu0 0.0
        %2881 = vmatpush1.msra.mxu0 0.0
        %2882 = vmatprep.subr.mxu0 0.0
        %2883 = vmatpush1.msra.mxu0 0.0
        %2884 = vmatprep.mubr.f32.mxu0 0.0
        %2885 = vmatmul.mubr.f32.gmra.mrb[0].mxu0 %v2815
        %v2886 = vpop.f32.mrb[0].mxu0
        %v2887 = vadd.f32 %v2812, %v2886
        %v2888 = vpop.f32.mrb[0].mxu0
        %2889 = vmatprep.mubr.f32.mxu0 0.0
        %2890 = vmatmul.mubr.f32.gmra.mrb[0].mxu0 %v2818
        %v2891 = vpop.f32.mrb[0].mxu0
        %v2892 = vadd.f32 %v2812, %v2891
        %v2893 = vpop.f32.mrb[0].mxu0
        %2894 = vdwg.mxu0
        %v2895 = vld [vmem:[%s47] sm:$0xff]
        %v2896 = vld [vmem:[%s47 + $0x8] sm:$0xff]
        %v2897 = vld [vmem:[%s47 + $0x10] sm:$0xff]
        %v2898 = vld [vmem:[%s47 + $0x18] sm:$0xff]
        %v2899 = vld [vmem:[%s49] sm:$0x1]
        %v2900 = vmul.f32 %v2887, %v1432
        %v2901 = vmul.f32 %v2892, %v1433
        %v2902 = vmul.f32 %v2887, %v1434
        %v2903 = vmul.f32 %v2892, %v1435
        %v2904 = vmul.f32 %v2887, %v1436
        %v2905 = vmul.f32 %v2892, %v1437
        %v2906 = vmul.f32 %v2887, %v1438
        %v2907 = vmul.f32 %v2892, %v1439
        %2910 = vrot.lane.b32.xlu0 %v2887, 96
        %v2911 = vpop.permute.xlu0 %2910
        %2912 = vrot.lane.b32.xlu0 %v2892, 96
        %v2913 = vpop.permute.xlu0 %2912
        %v2915 = vsel %vm1488, %v2900, 0
        %v2918 = vsel %vm1488, %v2901, 0
        %v2921 = vsel %vm1488, %v2902, 0
        %v2924 = vsel %vm1488, %v2903, 0
        %v2927 = vsel %vm1488, %v2904, 0
        %v2930 = vsel %vm1488, %v2905, 0
        %v2933 = vsel %vm1488, %v2906, 0
        %v2936 = vsel %vm1488, %v2907, 0
        %v2938 = vsel %vm1488, %v2911, 0
        %v2940 = vsel %vm1488, %v2913, 0
        %2942 = vmatprep.subr.mxu0 0.0
        %2943 = vmatpush1.xpose.msra.mxu0 %v2938
        %2944 = vmatprep.subr.mxu0 0.0
        %2945 = vmatpush1.xpose.msra.mxu0 %v2940
        %2946 = vmatprep.subr.mxu0 0.0
        %2947 = vmatpush1.xpose.msra.mxu0 %v2938
        %2948 = vmatprep.subr.mxu0 0.0
        %2949 = vmatpush1.xpose.msra.mxu0 %v2940
        %2950 = vmatprep.subr.mxu0 0.0
        %2951 = vmatpush1.xpose.msra.mxu0 %v2938
        %2952 = vmatprep.subr.mxu0 0.0
        %2953 = vmatpush1.xpose.msra.mxu0 %v2940
        %2954 = vmatprep.subr.mxu0 0.0
        %2955 = vmatpush1.xpose.msra.mxu0 %v2938
        %2956 = vmatprep.subr.mxu0 0.0
        %2957 = vmatpush1.xpose.msra.mxu0 %v2940
        %2958 = vmatprep.subr.mxu0 0.0
        %2959 = vmatpush1.xpose.msra.mxu0 0.0
        %2960 = vmatprep.subr.mxu0 0.0
        %2961 = vmatpush1.xpose.msra.mxu0 0.0
        %2962 = vmatprep.subr.mxu0 0.0
        %2963 = vmatpush1.xpose.msra.mxu0 0.0
        %2964 = vmatprep.subr.mxu0 0.0
        %2965 = vmatpush1.xpose.msra.mxu0 0.0
        %2966 = vmatprep.subr.mxu0 0.0
        %2967 = vmatpush1.xpose.msra.mxu0 0.0
        %2968 = vmatprep.subr.mxu0 0.0
        %2969 = vmatpush1.xpose.msra.mxu0 0.0
        %2970 = vmatprep.subr.mxu0 0.0
        %2971 = vmatpush1.xpose.msra.mxu0 0.0
        %2972 = vmatprep.subr.mxu0 0.0
        %2973 = vmatpush1.xpose.msra.mxu0 0.0
        %2974 = vmatprep.subr.mxu0 0.0
        %2975 = vmatpush1.xpose.msra.mxu0 0.0
        %2976 = vmatprep.subr.mxu0 0.0
        %2977 = vmatpush1.xpose.msra.mxu0 0.0
        %2978 = vmatprep.subr.mxu0 0.0
        %2979 = vmatpush1.xpose.msra.mxu0 0.0
        %2980 = vmatprep.subr.mxu0 0.0
        %2981 = vmatpush1.xpose.msra.mxu0 0.0
        %2982 = vmatprep.subr.mxu0 0.0
        %2983 = vmatpush1.xpose.msra.mxu0 0.0
        %2984 = vmatprep.subr.mxu0 0.0
        %2985 = vmatpush1.xpose.msra.mxu0 0.0
        %2986 = vmatprep.subr.mxu0 0.0
        %2987 = vmatpush1.xpose.msra.mxu0 0.0
        %2988 = vmatprep.subr.mxu0 0.0
        %2989 = vmatpush1.xpose.msra.mxu0 0.0
        %2990 = vmatprep.subr.mxu0 0.0
        %2991 = vmatpush1.xpose.msra.mxu0 0.0
        %2992 = vmatprep.subr.mxu0 0.0
        %2993 = vmatpush1.xpose.msra.mxu0 0.0
        %2994 = vmatprep.subr.mxu0 0.0
        %2995 = vmatpush1.xpose.msra.mxu0 0.0
        %2996 = vmatprep.subr.mxu0 0.0
        %2997 = vmatpush1.xpose.msra.mxu0 0.0
        %2998 = vmatprep.subr.mxu0 0.0
        %2999 = vmatpush1.xpose.msra.mxu0 0.0
        %3000 = vmatprep.subr.mxu0 0.0
        %3001 = vmatpush1.xpose.msra.mxu0 0.0
        %3002 = vmatprep.subr.mxu0 0.0
        %3003 = vmatpush1.xpose.msra.mxu0 0.0
        %3004 = vmatprep.subr.mxu0 0.0
        %3005 = vmatpush1.xpose.msra.mxu0 0.0
        %3006 = vmatprep.mubr.f32.mxu0 0.0
        %3007 = vmatmul.mubr.f32.gmra.mrb[0].mxu0 %v2915
        %v3008 = vpop.f32.mrb[0].mxu0
        %v3009 = vadd.f32 0.0, %v3008
        %v3010 = vpop.f32.mrb[0].mxu0
        %3011 = vmatprep.mubr.f32.mxu0 0.0
        %3012 = vmatmul.mubr.f32.gmra.mrb[0].mxu0 %v2918
        %v3013 = vpop.f32.mrb[0].mxu0
        %v3014 = vadd.f32 0.0, %v3013
        %v3015 = vpop.f32.mrb[0].mxu0
        %3016 = vmatprep.mubr.f32.mxu0 0.0
        %3017 = vmatmul.mubr.f32.gmra.mrb[0].mxu0 %v2921
        %v3018 = vpop.f32.mrb[0].mxu0
        %v3019 = vadd.f32 0.0, %v3018
        %v3020 = vpop.f32.mrb[0].mxu0
        %3021 = vmatprep.mubr.f32.mxu0 0.0
        %3022 = vmatmul.mubr.f32.gmra.mrb[0].mxu0 %v2924
        %v3023 = vpop.f32.mrb[0].mxu0
        %v3024 = vadd.f32 0.0, %v3023
        %v3025 = vpop.f32.mrb[0].mxu0
        %3026 = vmatprep.mubr.f32.mxu0 0.0
        %3027 = vmatmul.mubr.f32.gmra.mrb[0].mxu0 %v2927
        %v3028 = vpop.f32.mrb[0].mxu0
        %v3029 = vadd.f32 0.0, %v3028
        %v3030 = vpop.f32.mrb[0].mxu0
        %3031 = vmatprep.mubr.f32.mxu0 0.0
        %3032 = vmatmul.mubr.f32.gmra.mrb[0].mxu0 %v2930
        %v3033 = vpop.f32.mrb[0].mxu0
        %v3034 = vadd.f32 0.0, %v3033
        %v3035 = vpop.f32.mrb[0].mxu0
        %3036 = vmatprep.mubr.f32.mxu0 0.0
        %3037 = vmatmul.mubr.f32.gmra.mrb[0].mxu0 %v2933
        %v3038 = vpop.f32.mrb[0].mxu0
        %v3039 = vadd.f32 0.0, %v3038
        %v3040 = vpop.f32.mrb[0].mxu0
        %3041 = vmatprep.mubr.f32.mxu0 0.0
        %3042 = vmatmul.mubr.f32.gmra.mrb[0].mxu0 %v2936
        %v3043 = vpop.f32.mrb[0].mxu0
        %v3044 = vadd.f32 0.0, %v3043
        %v3045 = vpop.f32.mrb[0].mxu0
        %3046 = vdwg.mxu0
        %v3047 = vmul.f32 %v3009, 0.35355338
        %v3048 = vmul.f32 %v3014, 0.35355338
        %v3049 = vmul.f32 %v3019, 0.35355338
        %v3050 = vmul.f32 %v3024, 0.35355338
        %v3051 = vmul.f32 %v3029, 0.35355338
        %v3052 = vmul.f32 %v3034, 0.35355338
        %v3053 = vmul.f32 %v3039, 0.35355338
        %v3054 = vmul.f32 %v3044, 0.35355338
        %v3055 = vadd.f32 %v3047, %v1460
        %v3056 = vadd.f32 %v3048, %v1461
        %v3057 = vadd.f32 %v3049, %v1462
        %v3058 = vadd.f32 %v3050, %v1463
        %v3059 = vadd.f32 %v3051, %v1464
        %v3060 = vadd.f32 %v3052, %v1465
        %v3061 = vadd.f32 %v3053, %v1466
        %v3062 = vadd.f32 %v3054, %v1467
        %vm3063 = vcmask 523264
        %v3064 = vsel %vm3063, %v3055, -inf
        %3065 = vmax.xlane.f32.xlu0 %v3064
        %v3066 = vpop.xlane.xlu0 %3065
        %v3067 = vsel %vm3063, %v3056, -inf
        %3068 = vmax.xlane.f32.xlu0 %v3067
        %v3069 = vpop.xlane.xlu0 %3068
        %v3070 = vsel %vm3063, %v3057, -inf
        %3071 = vmax.xlane.f32.xlu0 %v3070
        %v3072 = vpop.xlane.xlu0 %3071
        %v3073 = vsel %vm3063, %v3058, -inf
        %3074 = vmax.xlane.f32.xlu0 %v3073
        %v3075 = vpop.xlane.xlu0 %3074
        %v3076 = vsel %vm3063, %v3059, -inf
        %3077 = vmax.xlane.f32.xlu0 %v3076
        %v3078 = vpop.xlane.xlu0 %3077
        %v3079 = vsel %vm3063, %v3060, -inf
        %3080 = vmax.xlane.f32.xlu0 %v3079
        %v3081 = vpop.xlane.xlu0 %3080
        %v3082 = vsel %vm3063, %v3061, -inf
        %3083 = vmax.xlane.f32.xlu0 %v3082
        %v3084 = vpop.xlane.xlu0 %3083
        %v3085 = vsel %vm3063, %v3062, -inf
        %3086 = vmax.xlane.f32.xlu0 %v3085
        %v3087 = vpop.xlane.xlu0 %3086
        %v3088 = vsub.f32 %v3055, %v3066
        %v3089 = vsub.f32 %v3056, %v3069
        %v3090 = vsub.f32 %v3057, %v3072
        %v3091 = vsub.f32 %v3058, %v3075
        %v3092 = vsub.f32 %v3059, %v3078
        %v3093 = vsub.f32 %v3060, %v3081
        %v3094 = vsub.f32 %v3061, %v3084
        %v3095 = vsub.f32 %v3062, %v3087
        %v3096 = vmul.f32 %v3088, 1.442695
        %v3097 = vpow.pop %v3096
        %v3098 = vmul.f32 %v3089, 1.442695
        %v3099 = vpow.pop %v3098
        %v3100 = vmul.f32 %v3090, 1.442695
        %v3101 = vpow.pop %v3100
        %v3102 = vmul.f32 %v3091, 1.442695
        %v3103 = vpow.pop %v3102
        %v3104 = vmul.f32 %v3092, 1.442695
        %v3105 = vpow.pop %v3104
        %v3106 = vmul.f32 %v3093, 1.442695
        %v3107 = vpow.pop %v3106
        %v3108 = vmul.f32 %v3094, 1.442695
        %v3109 = vpow.pop %v3108
        %v3110 = vmul.f32 %v3095, 1.442695
        %v3111 = vpow.pop %v3110
        %v3112 = vsel %vm3063, %v3097, 0.0
        %3113 = vadd.xlane.f32.xlu0 %v3112
        %v3114 = vpop.xlane.xlu0 %3113
        %v3115 = vsel %vm3063, %v3099, 0.0
        %3116 = vadd.xlane.f32.xlu0 %v3115
        %v3117 = vpop.xlane.xlu0 %3116
        %v3118 = vsel %vm3063, %v3101, 0.0
        %3119 = vadd.xlane.f32.xlu0 %v3118
        %v3120 = vpop.xlane.xlu0 %3119
        %v3121 = vsel %vm3063, %v3103, 0.0
        %3122 = vadd.xlane.f32.xlu0 %v3121
        %v3123 = vpop.xlane.xlu0 %3122
        %v3124 = vsel %vm3063, %v3105, 0.0
        %3125 = vadd.xlane.f32.xlu0 %v3124
        %v3126 = vpop.xlane.xlu0 %3125
        %v3127 = vsel %vm3063, %v3107, 0.0
        %3128 = vadd.xlane.f32.xlu0 %v3127
        %v3129 = vpop.xlane.xlu0 %3128
        %v3130 = vsel %vm3063, %v3109, 0.0
        %3131 = vadd.xlane.f32.xlu0 %v3130
        %v3132 = vpop.xlane.xlu0 %3131
        %v3133 = vsel %vm3063, %v3111, 0.0
        %3134 = vadd.xlane.f32.xlu0 %v3133
        %v3135 = vpop.xlane.xlu0 %3134
        %v3136 = vrcp.pop %v3114
        %v3137 = vmul.f32 %v3097, %v3136
        %v3138 = vrcp.pop %v3117
        %v3139 = vmul.f32 %v3099, %v3138
        %v3140 = vrcp.pop %v3120
        %v3141 = vmul.f32 %v3101, %v3140
        %v3142 = vrcp.pop %v3123
        %v3143 = vmul.f32 %v3103, %v3142
        %v3144 = vrcp.pop %v3126
        %v3145 = vmul.f32 %v3105, %v3144
        %v3146 = vrcp.pop %v3129
        %v3147 = vmul.f32 %v3107, %v3146
        %v3148 = vrcp.pop %v3132
        %v3149 = vmul.f32 %v3109, %v3148
        %v3150 = vrcp.pop %v3135
        %v3151 = vmul.f32 %v3111, %v3150
        %3152 = vrot.lane.b32.xlu0 %v2887, 64
        %v3153 = vpop.permute.xlu0 %3152
        %3154 = vrot.lane.b32.xlu0 %v2892, 64
        %v3155 = vpop.permute.xlu0 %3154
        %v3159 = vsel %vm3063, %v3137, 0
        %v3162 = vsel %vm3063, %v3139, 0
        %v3165 = vsel %vm3063, %v3141, 0
        %v3168 = vsel %vm3063, %v3143, 0
        %v3171 = vsel %vm3063, %v3145, 0
        %v3174 = vsel %vm3063, %v3147, 0
        %v3177 = vsel %vm3063, %v3149, 0
        %v3180 = vsel %vm3063, %v3151, 0
        %3182 = vmatprep.subr.mxu0 0.0
        %3183 = vmatpush1.msra.mxu0 %v3153
        %3184 = vmatprep.subr.mxu0 0.0
        %3185 = vmatpush1.msra.mxu0 %v3155
        %3186 = vmatprep.subr.mxu0 0.0
        %3187 = vmatpush1.msra.mxu0 %v3153
        %3188 = vmatprep.subr.mxu0 0.0
        %3189 = vmatpush1.msra.mxu0 %v3155
        %3190 = vmatprep.subr.mxu0 0.0
        %3191 = vmatpush1.msra.mxu0 %v3153
        %3192 = vmatprep.subr.mxu0 0.0
        %3193 = vmatpush1.msra.mxu0 %v3155
        %3194 = vmatprep.subr.mxu0 0.0
        %3195 = vmatpush1.msra.mxu0 %v3153
        %3196 = vmatprep.subr.mxu0 0.0
        %3197 = vmatpush1.msra.mxu0 %v3155
        %3198 = vmatprep.subr.mxu0 0.0
        %3199 = vmatpush1.msra.mxu0 0.0
        %3200 = vmatprep.subr.mxu0 0.0
        %3201 = vmatpush1.msra.mxu0 0.0
        %3202 = vmatprep.subr.mxu0 0.0
        %3203 = vmatpush1.msra.mxu0 0.0
        %3204 = vmatprep.subr.mxu0 0.0
        %3205 = vmatpush1.msra.mxu0 0.0
        %3206 = vmatprep.subr.mxu0 0.0
        %3207 = vmatpush1.msra.mxu0 0.0
        %3208 = vmatprep.subr.mxu0 0.0
        %3209 = vmatpush1.msra.mxu0 0.0
        %3210 = vmatprep.subr.mxu0 0.0
        %3211 = vmatpush1.msra.mxu0 0.0
        %3212 = vmatprep.subr.mxu0 0.0
        %3213 = vmatpush1.msra.mxu0 0.0
        %3214 = vmatprep.subr.mxu0 0.0
        %3215 = vmatpush1.msra.mxu0 0.0
        %3216 = vmatprep.subr.mxu0 0.0
        %3217 = vmatpush1.msra.mxu0 0.0
        %3218 = vmatprep.subr.mxu0 0.0
        %3219 = vmatpush1.msra.mxu0 0.0
        %3220 = vmatprep.subr.mxu0 0.0
        %3221 = vmatpush1.msra.mxu0 0.0
        %3222 = vmatprep.subr.mxu0 0.0
        %3223 = vmatpush1.msra.mxu0 0.0
        %3224 = vmatprep.subr.mxu0 0.0
        %3225 = vmatpush1.msra.mxu0 0.0
        %3226 = vmatprep.subr.mxu0 0.0
        %3227 = vmatpush1.msra.mxu0 0.0
        %3228 = vmatprep.subr.mxu0 0.0
        %3229 = vmatpush1.msra.mxu0 0.0
        %3230 = vmatprep.subr.mxu0 0.0
        %3231 = vmatpush1.msra.mxu0 0.0
        %3232 = vmatprep.subr.mxu0 0.0
        %3233 = vmatpush1.msra.mxu0 0.0
        %3234 = vmatprep.subr.mxu0 0.0
        %3235 = vmatpush1.msra.mxu0 0.0
        %3236 = vmatprep.subr.mxu0 0.0
        %3237 = vmatpush1.msra.mxu0 0.0
        %3238 = vmatprep.subr.mxu0 0.0
        %3239 = vmatpush1.msra.mxu0 0.0
        %3240 = vmatprep.subr.mxu0 0.0
        %3241 = vmatpush1.msra.mxu0 0.0
        %3242 = vmatprep.subr.mxu0 0.0
        %3243 = vmatpush1.msra.mxu0 0.0
        %3244 = vmatprep.subr.mxu0 0.0
        %3245 = vmatpush1.msra.mxu0 0.0
        %3246 = vmatprep.mubr.f32.mxu0 0.0
        %3247 = vmatmul.mubr.f32.gmra.mrb[0].mxu0 %v3159
        %v3248 = vpop.f32.mrb[0].mxu0
        %v3249 = vadd.f32 0.0, %v3248
        %v3250 = vpop.f32.mrb[0].mxu0
        %3251 = vmatprep.mubr.f32.mxu0 0.0
        %3252 = vmatmul.mubr.f32.gmra.mrb[0].mxu0 %v3162
        %v3253 = vpop.f32.mrb[0].mxu0
        %v3254 = vadd.f32 0.0, %v3253
        %v3255 = vpop.f32.mrb[0].mxu0
        %3256 = vmatprep.mubr.f32.mxu0 0.0
        %3257 = vmatmul.mubr.f32.gmra.mrb[0].mxu0 %v3165
        %v3258 = vpop.f32.mrb[0].mxu0
        %v3259 = vadd.f32 0.0, %v3258
        %v3260 = vpop.f32.mrb[0].mxu0
        %3261 = vmatprep.mubr.f32.mxu0 0.0
        %3262 = vmatmul.mubr.f32.gmra.mrb[0].mxu0 %v3168
        %v3263 = vpop.f32.mrb[0].mxu0
        %v3264 = vadd.f32 0.0, %v3263
        %v3265 = vpop.f32.mrb[0].mxu0
        %3266 = vmatprep.mubr.f32.mxu0 0.0
        %3267 = vmatmul.mubr.f32.gmra.mrb[0].mxu0 %v3171
        %v3268 = vpop.f32.mrb[0].mxu0
        %v3269 = vadd.f32 0.0, %v3268
        %v3270 = vpop.f32.mrb[0].mxu0
        %3271 = vmatprep.mubr.f32.mxu0 0.0
        %3272 = vmatmul.mubr.f32.gmra.mrb[0].mxu0 %v3174
        %v3273 = vpop.f32.mrb[0].mxu0
        %v3274 = vadd.f32 0.0, %v3273
        %v3275 = vpop.f32.mrb[0].mxu0
        %3276 = vmatprep.mubr.f32.mxu0 0.0
        %3277 = vmatmul.mubr.f32.gmra.mrb[0].mxu0 %v3177
        %v3278 = vpop.f32.mrb[0].mxu0
        %v3279 = vadd.f32 0.0, %v3278
        %v3280 = vpop.f32.mrb[0].mxu0
        %3281 = vmatprep.mubr.f32.mxu0 0.0
        %3282 = vmatmul.mubr.f32.gmra.mrb[0].mxu0 %v3180
        %v3283 = vpop.f32.mrb[0].mxu0
        %v3284 = vadd.f32 0.0, %v3283
        %v3285 = vpop.f32.mrb[0].mxu0
        %3286 = vdwg.mxu0
        %v3287 = vmul.f32 %v3249, %v1432
        %v3288 = vmul.f32 %v3254, %v1433
        %v3289 = vmul.f32 %v3259, %v1434
        %v3290 = vmul.f32 %v3264, %v1435
        %v3291 = vmul.f32 %v3269, %v1436
        %v3292 = vmul.f32 %v3274, %v1437
        %v3293 = vmul.f32 %v3279, %v1438
        %v3294 = vmul.f32 %v3284, %v1439
        %v3296 = vsel %vm1488, %v3287, 0
        %v3299 = vsel %vm1488, %v3288, 0
        %v3302 = vsel %vm1488, %v3289, 0
        %v3305 = vsel %vm1488, %v3290, 0
        %v3308 = vsel %vm1488, %v3291, 0
        %v3311 = vsel %vm1488, %v3292, 0
        %v3314 = vsel %vm1488, %v3293, 0
        %v3317 = vsel %vm1488, %v3294, 0
        %3319 = vmatprep.subr.mxu0 0.0
        %3320 = vmatpush1.msra.mxu0 %v2895
        %3321 = vmatprep.subr.mxu0 0.0
        %3322 = vmatpush1.msra.mxu0 %v2896
        %3323 = vmatprep.subr.mxu0 0.0
        %3324 = vmatpush1.msra.mxu0 %v2897
        %3325 = vmatprep.subr.mxu0 0.0
        %3326 = vmatpush1.msra.mxu0 %v2898
        %3327 = vmatprep.subr.mxu0 0.0
        %3328 = vmatpush1.msra.mxu0 0.0
        %3329 = vmatprep.subr.mxu0 0.0
        %3330 = vmatpush1.msra.mxu0 0.0
        %3331 = vmatprep.subr.mxu0 0.0
        %3332 = vmatpush1.msra.mxu0 0.0
        %3333 = vmatprep.subr.mxu0 0.0
        %3334 = vmatpush1.msra.mxu0 0.0
        %3335 = vmatprep.subr.mxu0 0.0
        %3336 = vmatpush1.msra.mxu0 0.0
        %3337 = vmatprep.subr.mxu0 0.0
        %3338 = vmatpush1.msra.mxu0 0.0
        %3339 = vmatprep.subr.mxu0 0.0
        %3340 = vmatpush1.msra.mxu0 0.0
        %3341 = vmatprep.subr.mxu0 0.0
        %3342 = vmatpush1.msra.mxu0 0.0
        %3343 = vmatprep.subr.mxu0 0.0
        %3344 = vmatpush1.msra.mxu0 0.0
        %3345 = vmatprep.subr.mxu0 0.0
        %3346 = vmatpush1.msra.mxu0 0.0
        %3347 = vmatprep.subr.mxu0 0.0
        %3348 = vmatpush1.msra.mxu0 0.0
        %3349 = vmatprep.subr.mxu0 0.0
        %3350 = vmatpush1.msra.mxu0 0.0
        %3351 = vmatprep.subr.mxu0 0.0
        %3352 = vmatpush1.msra.mxu0 0.0
        %3353 = vmatprep.subr.mxu0 0.0
        %3354 = vmatpush1.msra.mxu0 0.0
        %3355 = vmatprep.subr.mxu0 0.0
        %3356 = vmatpush1.msra.mxu0 0.0
        %3357 = vmatprep.subr.mxu0 0.0
        %3358 = vmatpush1.msra.mxu0 0.0
        %3359 = vmatprep.subr.mxu0 0.0
        %3360 = vmatpush1.msra.mxu0 0.0
        %3361 = vmatprep.subr.mxu0 0.0
        %3362 = vmatpush1.msra.mxu0 0.0
        %3363 = vmatprep.subr.mxu0 0.0
        %3364 = vmatpush1.msra.mxu0 0.0
        %3365 = vmatprep.subr.mxu0 0.0
        %3366 = vmatpush1.msra.mxu0 0.0
        %3367 = vmatprep.subr.mxu0 0.0
        %3368 = vmatpush1.msra.mxu0 0.0
        %3369 = vmatprep.subr.mxu0 0.0
        %3370 = vmatpush1.msra.mxu0 0.0
        %3371 = vmatprep.subr.mxu0 0.0
        %3372 = vmatpush1.msra.mxu0 0.0
        %3373 = vmatprep.subr.mxu0 0.0
        %3374 = vmatpush1.msra.mxu0 0.0
        %3375 = vmatprep.subr.mxu0 0.0
        %3376 = vmatpush1.msra.mxu0 0.0
        %3377 = vmatprep.subr.mxu0 0.0
        %3378 = vmatpush1.msra.mxu0 0.0
        %3379 = vmatprep.subr.mxu0 0.0
        %3380 = vmatpush1.msra.mxu0 0.0
        %3381 = vmatprep.subr.mxu0 0.0
        %3382 = vmatpush1.msra.mxu0 0.0
        %3383 = vmatprep.mubr.f32.mxu0 0.0
        %3384 = vmatmul.mubr.f32.gmra.mrb[0].mxu0 %v3296
        %v3385 = vpop.f32.mrb[0].mxu0
        %v3386 = vadd.f32 0.0, %v3385
        %v3387 = vpop.f32.mrb[0].mxu0
        %3388 = vmatprep.mubr.f32.mxu0 0.0
        %3389 = vmatmul.mubr.f32.gmra.mrb[0].mxu0 %v3299
        %v3390 = vpop.f32.mrb[0].mxu0
        %v3391 = vadd.f32 0.0, %v3390
        %v3392 = vpop.f32.mrb[0].mxu0
        %3393 = vmatprep.mubr.f32.mxu0 0.0
        %3394 = vmatmul.mubr.f32.gmra.mrb[0].mxu0 %v3302
        %v3395 = vpop.f32.mrb[0].mxu0
        %v3396 = vadd.f32 0.0, %v3395
        %v3397 = vpop.f32.mrb[0].mxu0
        %3398 = vmatprep.mubr.f32.mxu0 0.0
        %3399 = vmatmul.mubr.f32.gmra.mrb[0].mxu0 %v3305
        %v3400 = vpop.f32.mrb[0].mxu0
        %v3401 = vadd.f32 0.0, %v3400
        %v3402 = vpop.f32.mrb[0].mxu0
        %3403 = vmatprep.mubr.f32.mxu0 0.0
        %3404 = vmatmul.mubr.f32.gmra.mrb[0].mxu0 %v3308
        %v3405 = vpop.f32.mrb[0].mxu0
        %v3406 = vadd.f32 0.0, %v3405
        %v3407 = vpop.f32.mrb[0].mxu0
        %3408 = vmatprep.mubr.f32.mxu0 0.0
        %3409 = vmatmul.mubr.f32.gmra.mrb[0].mxu0 %v3311
        %v3410 = vpop.f32.mrb[0].mxu0
        %v3411 = vadd.f32 0.0, %v3410
        %v3412 = vpop.f32.mrb[0].mxu0
        %3413 = vmatprep.mubr.f32.mxu0 0.0
        %3414 = vmatmul.mubr.f32.gmra.mrb[0].mxu0 %v3314
        %v3415 = vpop.f32.mrb[0].mxu0
        %v3416 = vadd.f32 0.0, %v3415
        %v3417 = vpop.f32.mrb[0].mxu0
        %3418 = vmatprep.mubr.f32.mxu0 0.0
        %3419 = vmatmul.mubr.f32.gmra.mrb[0].mxu0 %v3317
        %v3420 = vpop.f32.mrb[0].mxu0
        %v3421 = vadd.f32 0.0, %v3420
        %v3422 = vpop.f32.mrb[0].mxu0
        %3423 = vdwg.mxu0
        %v3424 = vadd.f32 %v3386, %v3396
        %v3425 = vadd.f32 %v3391, %v3401
        %v3426 = vadd.f32 %v3424, %v3406
        %v3427 = vadd.f32 %v3425, %v3411
        %v3428 = vadd.f32 %v3426, %v3416
        %v3429 = vadd.f32 %v3427, %v3421
        %v3431 = vlaneseq
        %v3432 = vshrl.u32 %v3431, 7
        %v3433 = vsub.s32 0, %v3432
        %v3434 = vrot.slane %v2899, %v3433
        %v3436 = vadd.f32 %v3428, %v3434
        %v3437 = vadd.f32 %v3429, %v3434
        %v3438 = vadd.f32 %v2795, %v3436
        %v3439 = vadd.f32 %v2800, %v3437
        %v3440 = vld [vmem:[%s59] sm:$0x1]
        %v3441 = vld [vmem:[%s61] sm:$0x1]
        %v3442 = vsel %vm1488, %v3438, 0.0
        %3443 = vadd.xlane.f32.xlu0 %v3442
        %v3444 = vpop.xlane.xlu0 %3443
        %v3445 = vsel %vm1488, %v3439, 0.0
        %3446 = vadd.xlane.f32.xlu0 %v3445
        %v3447 = vpop.xlane.xlu0 %3446
        %v3448 = vrcp.pop 32.0
        %v3449 = vmul.f32 %v3444, %v3448
        %v3450 = vmul.f32 %v3447, %v3448
        %v3451 = vsub.f32 %v3438, %v3449
        %v3452 = vsub.f32 %v3439, %v3450
        %v3453 = vmul.f32 %v3451, %v3451
        %v3454 = vmul.f32 %v3452, %v3452
        %v3455 = vsel %vm1488, %v3453, 0.0
        %3456 = vadd.xlane.f32.xlu0 %v3455
        %v3457 = vpop.xlane.xlu0 %3456
        %v3458 = vsel %vm1488, %v3454, 0.0
        %3459 = vadd.xlane.f32.xlu0 %v3458
        %v3460 = vpop.xlane.xlu0 %3459
        %v3461 = vmul.f32 %v3457, %v3448
        %v3462 = vmul.f32 %v3460, %v3448
        %v3463 = vadd.f32 %v3461, 1e-05
        %v3464 = vadd.f32 %v3462, 1e-05
        %v3465 = vrsqrt.pop %v3463
        %v3466 = vrsqrt.pop %v3464
        %v3467 = vmul.f32 %v3451, %v3465
        %v3468 = vmul.f32 %v3452, %v3466
        %v3470 = vlaneseq
        %v3471 = vshrl.u32 %v3470, 7
        %v3472 = vsub.s32 0, %v3471
        %v3473 = vrot.slane %v3440, %v3472
        %v3475 = vmul.f32 %v3467, %v3473
        %v3476 = vmul.f32 %v3468, %v3473
        %v3478 = vlaneseq
        %v3479 = vshrl.u32 %v3478, 7
        %v3480 = vsub.s32 0, %v3479
        %v3481 = vrot.slane %v3441, %v3480
        %v3483 = vadd.f32 %v3475, %v3481
        %v3484 = vadd.f32 %v3476, %v3481
        %v3485 = vld [vmem:[%s51] sm:$0xff]
        %v3486 = vld [vmem:[%s51 + $0x8] sm:$0xff]
        %v3487 = vld [vmem:[%s51 + $0x10] sm:$0xff]
        %v3488 = vld [vmem:[%s51 + $0x18] sm:$0xff]
        %v3489 = vld [vmem:[%s53] sm:$0x1]
        %v3491 = vlaneseq
        %v3492 = vshrl.u32 %v3491, 7
        %v3493 = vsub.s32 0, %v3492
        %v3494 = vrot.slane %v3489, %v3493
        %v3497 = vsel %vm1488, %v3483, 0
        %v3500 = vsel %vm1488, %v3484, 0
        %3502 = vmatprep.subr.mxu0 0.0
        %3503 = vmatpush1.msra.mxu0 %v3485
        %3504 = vmatprep.subr.mxu0 0.0
        %3505 = vmatpush1.msra.mxu0 %v3486
        %3506 = vmatprep.subr.mxu0 0.0
        %3507 = vmatpush1.msra.mxu0 %v3487
        %3508 = vmatprep.subr.mxu0 0.0
        %3509 = vmatpush1.msra.mxu0 %v3488
        %3510 = vmatprep.subr.mxu0 0.0
        %3511 = vmatpush1.msra.mxu0 0.0
        %3512 = vmatprep.subr.mxu0 0.0
        %3513 = vmatpush1.msra.mxu0 0.0
        %3514 = vmatprep.subr.mxu0 0.0
        %3515 = vmatpush1.msra.mxu0 0.0
        %3516 = vmatprep.subr.mxu0 0.0
        %3517 = vmatpush1.msra.mxu0 0.0
        %3518 = vmatprep.subr.mxu0 0.0
        %3519 = vmatpush1.msra.mxu0 0.0
        %3520 = vmatprep.subr.mxu0 0.0
        %3521 = vmatpush1.msra.mxu0 0.0
        %3522 = vmatprep.subr.mxu0 0.0
        %3523 = vmatpush1.msra.mxu0 0.0
        %3524 = vmatprep.subr.mxu0 0.0
        %3525 = vmatpush1.msra.mxu0 0.0
        %3526 = vmatprep.subr.mxu0 0.0
        %3527 = vmatpush1.msra.mxu0 0.0
        %3528 = vmatprep.subr.mxu0 0.0
        %3529 = vmatpush1.msra.mxu0 0.0
        %3530 = vmatprep.subr.mxu0 0.0
        %3531 = vmatpush1.msra.mxu0 0.0
        %3532 = vmatprep.subr.mxu0 0.0
        %3533 = vmatpush1.msra.mxu0 0.0
        %3534 = vmatprep.subr.mxu0 0.0
        %3535 = vmatpush1.msra.mxu0 0.0
        %3536 = vmatprep.subr.mxu0 0.0
        %3537 = vmatpush1.msra.mxu0 0.0
        %3538 = vmatprep.subr.mxu0 0.0
        %3539 = vmatpush1.msra.mxu0 0.0
        %3540 = vmatprep.subr.mxu0 0.0
        %3541 = vmatpush1.msra.mxu0 0.0
        %3542 = vmatprep.subr.mxu0 0.0
        %3543 = vmatpush1.msra.mxu0 0.0
        %3544 = vmatprep.subr.mxu0 0.0
        %3545 = vmatpush1.msra.mxu0 0.0
        %3546 = vmatprep.subr.mxu0 0.0
        %3547 = vmatpush1.msra.mxu0 0.0
        %3548 = vmatprep.subr.mxu0 0.0
        %3549 = vmatpush1.msra.mxu0 0.0
        %3550 = vmatprep.subr.mxu0 0.0
        %3551 = vmatpush1.msra.mxu0 0.0
        %3552 = vmatprep.subr.mxu0 0.0
        %3553 = vmatpush1.msra.mxu0 0.0
        %3554 = vmatprep.subr.mxu0 0.0
        %3555 = vmatpush1.msra.mxu0 0.0
        %3556 = vmatprep.subr.mxu0 0.0
        %3557 = vmatpush1.msra.mxu0 0.0
        %3558 = vmatprep.subr.mxu0 0.0
        %3559 = vmatpush1.msra.mxu0 0.0
        %3560 = vmatprep.subr.mxu0 0.0
        %3561 = vmatpush1.msra.mxu0 0.0
        %3562 = vmatprep.subr.mxu0 0.0
        %3563 = vmatpush1.msra.mxu0 0.0
        %3564 = vmatprep.subr.mxu0 0.0
        %3565 = vmatpush1.msra.mxu0 0.0
        %3566 = vmatprep.mubr.f32.mxu0 0.0
        %3567 = vmatmul.mubr.f32.gmra.mrb[0].mxu0 %v3497
        %v3568 = vpop.f32.mrb[0].mxu0
        %v3569 = vadd.f32 %v3494, %v3568
        %v3570 = vpop.f32.mrb[0].mxu0
        %3571 = vmatprep.mubr.f32.mxu0 0.0
        %3572 = vmatmul.mubr.f32.gmra.mrb[0].mxu0 %v3500
        %v3573 = vpop.f32.mrb[0].mxu0
        %v3574 = vadd.f32 %v3494, %v3573
        %v3575 = vpop.f32.mrb[0].mxu0
        %3576 = vdwg.mxu0
        %v3577 = vmul.f32 %v3569, 0.5
        %v3578 = vmul.f32 %v3574, 0.5
        %v3579 = vmul.f32 %v3569, %v3569
        %v3580 = vmul.f32 %v3574, %v3574
        %v3581 = vmul.f32 %v3579, %v3569
        %v3582 = vmul.f32 %v3580, %v3574
        %v3583 = vmul.f32 %v3581, 0.044715
        %v3584 = vmul.f32 %v3582, 0.044715
        %v3585 = vadd.f32 %v3569, %v3583
        %v3586 = vadd.f32 %v3574, %v3584
        %v3587 = vmul.f32 %v3585, 0.7978846
        %v3588 = vmul.f32 %v3586, 0.7978846
        %v3589 = vtanh.pop %v3587
        %v3590 = vtanh.pop %v3588
        %v3591 = vadd.f32 %v3589, 1.0
        %v3592 = vadd.f32 %v3590, 1.0
        %v3593 = vmul.f32 %v3577, %v3591
        %v3594 = vmul.f32 %v3578, %v3592
        %v3595 = vld [vmem:[%s55] sm:$0xff]
        %v3596 = vld [vmem:[%s55 + $0x8] sm:$0xff]
        %v3597 = vld [vmem:[%s55 + $0x10] sm:$0xff]
        %v3598 = vld [vmem:[%s55 + $0x18] sm:$0xff]
        %v3599 = vld [vmem:[%s55 + $0x20] sm:$0xff]
        %v3600 = vld [vmem:[%s55 + $0x28] sm:$0xff]
        %v3601 = vld [vmem:[%s55 + $0x30] sm:$0xff]
        %v3602 = vld [vmem:[%s55 + $0x38] sm:$0xff]
        %v3603 = vld [vmem:[%s57] sm:$0x1]
        %v3605 = vlaneseq
        %v3606 = vshrl.u32 %v3605, 7
        %v3607 = vsub.s32 0, %v3606
        %v3608 = vrot.slane %v3603, %v3607
        %v3611 = vsel %vm3063, %v3593, 0
        %v3614 = vsel %vm3063, %v3594, 0
        %3616 = vmatprep.subr.mxu0 0.0
        %3617 = vmatpush1.msra.mxu0 %v3595
        %3618 = vmatprep.subr.mxu0 0.0
        %3619 = vmatpush1.msra.mxu0 %v3596
        %3620 = vmatprep.subr.mxu0 0.0
        %3621 = vmatpush1.msra.mxu0 %v3597
        %3622 = vmatprep.subr.mxu0 0.0
        %3623 = vmatpush1.msra.mxu0 %v3598
        %3624 = vmatprep.subr.mxu0 0.0
        %3625 = vmatpush1.msra.mxu0 %v3599
        %3626 = vmatprep.subr.mxu0 0.0
        %3627 = vmatpush1.msra.mxu0 %v3600
        %3628 = vmatprep.subr.mxu0 0.0
        %3629 = vmatpush1.msra.mxu0 %v3601
        %3630 = vmatprep.subr.mxu0 0.0
        %3631 = vmatpush1.msra.mxu0 %v3602
        %3632 = vmatprep.subr.mxu0 0.0
        %3633 = vmatpush1.msra.mxu0 0.0
        %3634 = vmatprep.subr.mxu0 0.0
        %3635 = vmatpush1.msra.mxu0 0.0
        %3636 = vmatprep.subr.mxu0 0.0
        %3637 = vmatpush1.msra.mxu0 0.0
        %3638 = vmatprep.subr.mxu0 0.0
        %3639 = vmatpush1.msra.mxu0 0.0
        %3640 = vmatprep.subr.mxu0 0.0
        %3641 = vmatpush1.msra.mxu0 0.0
        %3642 = vmatprep.subr.mxu0 0.0
        %3643 = vmatpush1.msra.mxu0 0.0
        %3644 = vmatprep.subr.mxu0 0.0
        %3645 = vmatpush1.msra.mxu0 0.0
        %3646 = vmatprep.subr.mxu0 0.0
        %3647 = vmatpush1.msra.mxu0 0.0
        %3648 = vmatprep.subr.mxu0 0.0
        %3649 = vmatpush1.msra.mxu0 0.0
        %3650 = vmatprep.subr.mxu0 0.0
        %3651 = vmatpush1.msra.mxu0 0.0
        %3652 = vmatprep.subr.mxu0 0.0
        %3653 = vmatpush1.msra.mxu0 0.0
        %3654 = vmatprep.subr.mxu0 0.0
        %3655 = vmatpush1.msra.mxu0 0.0
        %3656 = vmatprep.subr.mxu0 0.0
        %3657 = vmatpush1.msra.mxu0 0.0
        %3658 = vmatprep.subr.mxu0 0.0
        %3659 = vmatpush1.msra.mxu0 0.0
        %3660 = vmatprep.subr.mxu0 0.0
        %3661 = vmatpush1.msra.mxu0 0.0
        %3662 = vmatprep.subr.mxu0 0.0
        %3663 = vmatpush1.msra.mxu0 0.0
        %3664 = vmatprep.subr.mxu0 0.0
        %3665 = vmatpush1.msra.mxu0 0.0
        %3666 = vmatprep.subr.mxu0 0.0
        %3667 = vmatpush1.msra.mxu0 0.0
        %3668 = vmatprep.subr.mxu0 0.0
        %3669 = vmatpush1.msra.mxu0 0.0
        %3670 = vmatprep.subr.mxu0 0.0
        %3671 = vmatpush1.msra.mxu0 0.0
        %3672 = vmatprep.subr.mxu0 0.0
        %3673 = vmatpush1.msra.mxu0 0.0
        %3674 = vmatprep.subr.mxu0 0.0
        %3675 = vmatpush1.msra.mxu0 0.0
        %3676 = vmatprep.subr.mxu0 0.0
        %3677 = vmatpush1.msra.mxu0 0.0
        %3678 = vmatprep.subr.mxu0 0.0
        %3679 = vmatpush1.msra.mxu0 0.0
        %3680 = vmatprep.mubr.f32.mxu0 0.0
        %3681 = vmatmul.mubr.f32.gmra.mrb[0].mxu0 %v3611
        %v3682 = vpop.f32.mrb[0].mxu0
        %v3683 = vadd.f32 %v3608, %v3682
        %v3684 = vpop.f32.mrb[0].mxu0
        %3685 = vmatprep.mubr.f32.mxu0 0.0
        %3686 = vmatmul.mubr.f32.gmra.mrb[0].mxu0 %v3614
        %v3687 = vpop.f32.mrb[0].mxu0
        %v3688 = vadd.f32 %v3608, %v3687
        %v3689 = vpop.f32.mrb[0].mxu0
        %3690 = vdwg.mxu0
        %v3691 = vadd.f32 %v3483, %v3683
        %v3692 = vadd.f32 %v3484, %v3688
        %v3693 = vld [vmem:[%s63] sm:$0x1]
        %v3694 = vld [vmem:[%s65] sm:$0x1]
        %v3695 = vsel %vm1488, %v3691, 0.0
        %3696 = vadd.xlane.f32.xlu0 %v3695
        %v3697 = vpop.xlane.xlu0 %3696
        %v3698 = vsel %vm1488, %v3692, 0.0
        %3699 = vadd.xlane.f32.xlu0 %v3698
        %v3700 = vpop.xlane.xlu0 %3699
        %v3701 = vmul.f32 %v3697, %v3448
        %v3702 = vmul.f32 %v3700, %v3448
        %v3703 = vsub.f32 %v3691, %v3701
        %v3704 = vsub.f32 %v3692, %v3702
        %v3705 = vmul.f32 %v3703, %v3703
        %v3706 = vmul.f32 %v3704, %v3704
        %v3707 = vsel %vm1488, %v3705, 0.0
        %3708 = vadd.xlane.f32.xlu0 %v3707
        %v3709 = vpop.xlane.xlu0 %3708
        %v3710 = vsel %vm1488, %v3706, 0.0
        %3711 = vadd.xlane.f32.xlu0 %v3710
        %v3712 = vpop.xlane.xlu0 %3711
        %v3713 = vmul.f32 %v3709, %v3448
        %v3714 = vmul.f32 %v3712, %v3448
        %v3715 = vadd.f32 %v3713, 1e-05
        %v3716 = vadd.f32 %v3714, 1e-05
        %v3717 = vrsqrt.pop %v3715
        %v3718 = vrsqrt.pop %v3716
        %v3719 = vmul.f32 %v3703, %v3717
        %v3720 = vmul.f32 %v3704, %v3718
        %v3722 = vlaneseq
        %v3723 = vshrl.u32 %v3722, 7
        %v3724 = vsub.s32 0, %v3723
        %v3725 = vrot.slane %v3693, %v3724
        %v3727 = vmul.f32 %v3719, %v3725
        %v3728 = vmul.f32 %v3720, %v3725
        %v3730 = vlaneseq
        %v3731 = vshrl.u32 %v3730, 7
        %v3732 = vsub.s32 0, %v3731
        %v3733 = vrot.slane %v3694, %v3732
        %v3735 = vadd.f32 %v3727, %v3733
        %v3736 = vadd.f32 %v3728, %v3733
        %v3737 = vld [vmem:[%s67] sm:$0xff]
        %v3738 = vld [vmem:[%s67 + $0x8] sm:$0xff]
        %v3739 = vld [vmem:[%s69] sm:$0x1]
        %v3741 = vlaneseq
        %v3742 = vshrl.u32 %v3741, 7
        %v3743 = vsub.s32 0, %v3742
        %v3744 = vrot.slane %v3739, %v3743
        %3746 = vmatprep.subr.mxu0 0.0
        %3747 = vmatpush1.msra.mxu0 %v3737
        %3748 = vmatprep.subr.mxu0 0.0
        %3749 = vmatpush1.msra.mxu0 %v3738
        %3750 = vmatprep.subr.mxu0 0.0
        %3751 = vmatpush1.msra.mxu0 0.0
        %3752 = vmatprep.subr.mxu0 0.0
        %3753 = vmatpush1.msra.mxu0 0.0
        %3754 = vmatprep.subr.mxu0 0.0
        %3755 = vmatpush1.msra.mxu0 0.0
        %3756 = vmatprep.subr.mxu0 0.0
        %3757 = vmatpush1.msra.mxu0 0.0
        %3758 = vmatprep.subr.mxu0 0.0
        %3759 = vmatpush1.msra.mxu0 0.0
        %3760 = vmatprep.subr.mxu0 0.0
        %3761 = vmatpush1.msra.mxu0 0.0
        %3762 = vmatprep.subr.mxu0 0.0
        %3763 = vmatpush1.msra.mxu0 0.0
        %3764 = vmatprep.subr.mxu0 0.0
        %3765 = vmatpush1.msra.mxu0 0.0
        %3766 = vmatprep.subr.mxu0 0.0
        %3767 = vmatpush1.msra.mxu0 0.0
        %3768 = vmatprep.subr.mxu0 0.0
        %3769 = vmatpush1.msra.mxu0 0.0
        %3770 = vmatprep.subr.mxu0 0.0
        %3771 = vmatpush1.msra.mxu0 0.0
        %3772 = vmatprep.subr.mxu0 0.0
        %3773 = vmatpush1.msra.mxu0 0.0
        %3774 = vmatprep.subr.mxu0 0.0
        %3775 = vmatpush1.msra.mxu0 0.0
        %3776 = vmatprep.subr.mxu0 0.0
        %3777 = vmatpush1.msra.mxu0 0.0
        %3778 = vmatprep.subr.mxu0 0.0
        %3779 = vmatpush1.msra.mxu0 0.0
        %3780 = vmatprep.subr.mxu0 0.0
        %3781 = vmatpush1.msra.mxu0 0.0
        %3782 = vmatprep.subr.mxu0 0.0
        %3783 = vmatpush1.msra.mxu0 0.0
        %3784 = vmatprep.subr.mxu0 0.0
        %3785 = vmatpush1.msra.mxu0 0.0
        %3786 = vmatprep.subr.mxu0 0.0
        %3787 = vmatpush1.msra.mxu0 0.0
        %3788 = vmatprep.subr.mxu0 0.0
        %3789 = vmatpush1.msra.mxu0 0.0
        %3790 = vmatprep.subr.mxu0 0.0
        %3791 = vmatpush1.msra.mxu0 0.0
        %3792 = vmatprep.subr.mxu0 0.0
        %3793 = vmatpush1.msra.mxu0 0.0
        %3794 = vmatprep.subr.mxu0 0.0
        %3795 = vmatpush1.msra.mxu0 0.0
        %3796 = vmatprep.subr.mxu0 0.0
        %3797 = vmatpush1.msra.mxu0 0.0
        %3798 = vmatprep.subr.mxu0 0.0
        %3799 = vmatpush1.msra.mxu0 0.0
        %3800 = vmatprep.subr.mxu0 0.0
        %3801 = vmatpush1.msra.mxu0 0.0
        %3802 = vmatprep.subr.mxu0 0.0
        %3803 = vmatpush1.msra.mxu0 0.0
        %3804 = vmatprep.subr.mxu0 0.0
        %3805 = vmatpush1.msra.mxu0 0.0
        %3806 = vmatprep.subr.mxu0 0.0
        %3807 = vmatpush1.msra.mxu0 0.0
        %3808 = vmatprep.subr.mxu0 0.0
        %3809 = vmatpush1.msra.mxu0 0.0
        %3810 = vmatprep.mubr.f32.mxu0 0.0
        %3811 = vmatmul.mubr.f32.gmra.mrb[0].mxu0 %v1710
        %v3812 = vpop.f32.mrb[0].mxu0
        %v3813 = vadd.f32 %v3744, %v3812
        %v3814 = vpop.f32.mrb[0].mxu0
        %3815 = vdwg.mxu0
        %v3817 = vsel %vm1488, %v3735, 0
        %v3820 = vsel %vm1488, %v3736, 0
        %3822 = vmatprep.subr.mxu0 0.0
        %3823 = vmatpush1.xpose.msra.mxu0 %v3817
        %3824 = vmatprep.subr.mxu0 0.0
        %3825 = vmatpush1.xpose.msra.mxu0 %v3820
        %3826 = vmatprep.subr.mxu0 0.0
        %3827 = vmatpush1.xpose.msra.mxu0 0.0
        %3828 = vmatprep.subr.mxu0 0.0
        %3829 = vmatpush1.xpose.msra.mxu0 0.0
        %3830 = vmatprep.subr.mxu0 0.0
        %3831 = vmatpush1.xpose.msra.mxu0 0.0
        %3832 = vmatprep.subr.mxu0 0.0
        %3833 = vmatpush1.xpose.msra.mxu0 0.0
        %3834 = vmatprep.subr.mxu0 0.0
        %3835 = vmatpush1.xpose.msra.mxu0 0.0
        %3836 = vmatprep.subr.mxu0 0.0
        %3837 = vmatpush1.xpose.msra.mxu0 0.0
        %3838 = vmatprep.subr.mxu0 0.0
        %3839 = vmatpush1.xpose.msra.mxu0 0.0
        %3840 = vmatprep.subr.mxu0 0.0
        %3841 = vmatpush1.xpose.msra.mxu0 0.0
        %3842 = vmatprep.subr.mxu0 0.0
        %3843 = vmatpush1.xpose.msra.mxu0 0.0
        %3844 = vmatprep.subr.mxu0 0.0
        %3845 = vmatpush1.xpose.msra.mxu0 0.0
        %3846 = vmatprep.subr.mxu0 0.0
        %3847 = vmatpush1.xpose.msra.mxu0 0.0
        %3848 = vmatprep.subr.mxu0 0.0
        %3849 = vmatpush1.xpose.msra.mxu0 0.0
        %3850 = vmatprep.subr.mxu0 0.0
        %3851 = vmatpush1.xpose.msra.mxu0 0.0
        %3852 = vmatprep.subr.mxu0 0.0
        %3853 = vmatpush1.xpose.msra.mxu0 0.0
        %3854 = vmatprep.subr.mxu0 0.0
        %3855 = vmatpush1.xpose.msra.mxu0 0.0
        %3856 = vmatprep.subr.mxu0 0.0
        %3857 = vmatpush1.xpose.msra.mxu0 0.0
        %3858 = vmatprep.subr.mxu0 0.0
        %3859 = vmatpush1.xpose.msra.mxu0 0.0
        %3860 = vmatprep.subr.mxu0 0.0
        %3861 = vmatpush1.xpose.msra.mxu0 0.0
        %3862 = vmatprep.subr.mxu0 0.0
        %3863 = vmatpush1.xpose.msra.mxu0 0.0
        %3864 = vmatprep.subr.mxu0 0.0
        %3865 = vmatpush1.xpose.msra.mxu0 0.0
        %3866 = vmatprep.subr.mxu0 0.0
        %3867 = vmatpush1.xpose.msra.mxu0 0.0
        %3868 = vmatprep.subr.mxu0 0.0
        %3869 = vmatpush1.xpose.msra.mxu0 0.0
        %3870 = vmatprep.subr.mxu0 0.0
        %3871 = vmatpush1.xpose.msra.mxu0 0.0
        %3872 = vmatprep.subr.mxu0 0.0
        %3873 = vmatpush1.xpose.msra.mxu0 0.0
        %3874 = vmatprep.subr.mxu0 0.0
        %3875 = vmatpush1.xpose.msra.mxu0 0.0
        %3876 = vmatprep.subr.mxu0 0.0
        %3877 = vmatpush1.xpose.msra.mxu0 0.0
        %3878 = vmatprep.subr.mxu0 0.0
        %3879 = vmatpush1.xpose.msra.mxu0 0.0
        %3880 = vmatprep.subr.mxu0 0.0
        %3881 = vmatpush1.xpose.msra.mxu0 0.0
        %3882 = vmatprep.subr.mxu0 0.0
        %3883 = vmatpush1.xpose.msra.mxu0 0.0
        %3884 = vmatprep.subr.mxu0 0.0
        %3885 = vmatpush1.xpose.msra.mxu0 0.0
        %3886 = vmatprep.mubr.f32.mxu0 0.0
        %3887 = vmatmul.mubr.f32.gmra.mrb[0].mxu0 %v1490
        %v3888 = vpop.f32.mrb[0].mxu0
        %v3889 = vadd.f32 0.0, %v3888
        %v3890 = vpop.f32.mrb[0].mxu0
        %3891 = vmatprep.mubr.f32.mxu0 0.0
        %3892 = vmatmul.mubr.f32.gmra.mrb[0].mxu0 %v1493
        %v3893 = vpop.f32.mrb[0].mxu0
        %v3894 = vadd.f32 0.0, %v3893
        %v3895 = vpop.f32.mrb[0].mxu0
        %3896 = vmatprep.mubr.f32.mxu0 0.0
        %3897 = vmatmul.mubr.f32.gmra.mrb[0].mxu0 %v1496
        %v3898 = vpop.f32.mrb[0].mxu0
        %v3899 = vadd.f32 0.0, %v3898
        %v3900 = vpop.f32.mrb[0].mxu0
        %3901 = vmatprep.mubr.f32.mxu0 0.0
        %3902 = vmatmul.mubr.f32.gmra.mrb[0].mxu0 %v1499
        %v3903 = vpop.f32.mrb[0].mxu0
        %v3904 = vadd.f32 0.0, %v3903
        %v3905 = vpop.f32.mrb[0].mxu0
        %3906 = vdwg.mxu0
        %3909 = vrot.lane.b32.xlu0 %v3737, 112
        %v3910 = vpop.permute.xlu0 %3909
        %3911 = vrot.lane.b32.xlu0 %v3738, 112
        %v3912 = vpop.permute.xlu0 %3911
        %3915 = vrot.lane.b32.xlu0 %v3744, 112
        %v3916 = vpop.permute.xlu0 %3915
        %v3919 = vsel %vm1258, %v3889, 0
        %v3922 = vsel %vm1258, %v3894, 0
        %v3925 = vsel %vm1258, %v3899, 0
        %v3928 = vsel %vm1258, %v3904, 0
        %3930 = vmatprep.subr.mxu0 0.0
        %3931 = vmatpush1.msra.mxu0 %v3910
        %3932 = vmatprep.subr.mxu0 0.0
        %3933 = vmatpush1.msra.mxu0 %v3912
        %3934 = vmatprep.subr.mxu0 0.0
        %3935 = vmatpush1.msra.mxu0 0.0
        %3936 = vmatprep.subr.mxu0 0.0
        %3937 = vmatpush1.msra.mxu0 0.0
        %3938 = vmatprep.subr.mxu0 0.0
        %3939 = vmatpush1.msra.mxu0 0.0
        %3940 = vmatprep.subr.mxu0 0.0
        %3941 = vmatpush1.msra.mxu0 0.0
        %3942 = vmatprep.subr.mxu0 0.0
        %3943 = vmatpush1.msra.mxu0 0.0
        %3944 = vmatprep.subr.mxu0 0.0
        %3945 = vmatpush1.msra.mxu0 0.0
        %3946 = vmatprep.subr.mxu0 0.0
        %3947 = vmatpush1.msra.mxu0 0.0
        %3948 = vmatprep.subr.mxu0 0.0
        %3949 = vmatpush1.msra.mxu0 0.0
        %3950 = vmatprep.subr.mxu0 0.0
        %3951 = vmatpush1.msra.mxu0 0.0
        %3952 = vmatprep.subr.mxu0 0.0
        %3953 = vmatpush1.msra.mxu0 0.0
        %3954 = vmatprep.subr.mxu0 0.0
        %3955 = vmatpush1.msra.mxu0 0.0
        %3956 = vmatprep.subr.mxu0 0.0
        %3957 = vmatpush1.msra.mxu0 0.0
        %3958 = vmatprep.subr.mxu0 0.0
        %3959 = vmatpush1.msra.mxu0 0.0
        %3960 = vmatprep.subr.mxu0 0.0
        %3961 = vmatpush1.msra.mxu0 0.0
        %3962 = vmatprep.subr.mxu0 0.0
        %3963 = vmatpush1.msra.mxu0 0.0
        %3964 = vmatprep.subr.mxu0 0.0
        %3965 = vmatpush1.msra.mxu0 0.0
        %3966 = vmatprep.subr.mxu0 0.0
        %3967 = vmatpush1.msra.mxu0 0.0
        %3968 = vmatprep.subr.mxu0 0.0
        %3969 = vmatpush1.msra.mxu0 0.0
        %3970 = vmatprep.subr.mxu0 0.0
        %3971 = vmatpush1.msra.mxu0 0.0
        %3972 = vmatprep.subr.mxu0 0.0
        %3973 = vmatpush1.msra.mxu0 0.0
        %3974 = vmatprep.subr.mxu0 0.0
        %3975 = vmatpush1.msra.mxu0 0.0
        %3976 = vmatprep.subr.mxu0 0.0
        %3977 = vmatpush1.msra.mxu0 0.0
        %3978 = vmatprep.subr.mxu0 0.0
        %3979 = vmatpush1.msra.mxu0 0.0
        %3980 = vmatprep.subr.mxu0 0.0
        %3981 = vmatpush1.msra.mxu0 0.0
        %3982 = vmatprep.subr.mxu0 0.0
        %3983 = vmatpush1.msra.mxu0 0.0
        %3984 = vmatprep.subr.mxu0 0.0
        %3985 = vmatpush1.msra.mxu0 0.0
        %3986 = vmatprep.subr.mxu0 0.0
        %3987 = vmatpush1.msra.mxu0 0.0
        %3988 = vmatprep.subr.mxu0 0.0
        %3989 = vmatpush1.msra.mxu0 0.0
        %3990 = vmatprep.subr.mxu0 0.0
        %3991 = vmatpush1.msra.mxu0 0.0
        %3992 = vmatprep.subr.mxu0 0.0
        %3993 = vmatpush1.msra.mxu0 0.0
        %3994 = vmatprep.mubr.f32.mxu0 0.0
        %3995 = vmatmul.mubr.f32.gmra.mrb[0].mxu0 %v3919
        %v3996 = vpop.f32.mrb[0].mxu0
        %v3997 = vadd.f32 %v3916, %v3996
        %v3998 = vpop.f32.mrb[0].mxu0
        %3999 = vmatprep.mubr.f32.mxu0 0.0
        %4000 = vmatmul.mubr.f32.gmra.mrb[0].mxu0 %v3922
        %v4001 = vpop.f32.mrb[0].mxu0
        %v4002 = vadd.f32 %v3916, %v4001
        %v4003 = vpop.f32.mrb[0].mxu0
        %4004 = vmatprep.mubr.f32.mxu0 0.0
        %4005 = vmatmul.mubr.f32.gmra.mrb[0].mxu0 %v3925
        %v4006 = vpop.f32.mrb[0].mxu0
        %v4007 = vadd.f32 %v3916, %v4006
        %v4008 = vpop.f32.mrb[0].mxu0
        %4009 = vmatprep.mubr.f32.mxu0 0.0
        %4010 = vmatmul.mubr.f32.gmra.mrb[0].mxu0 %v3928
        %v4011 = vpop.f32.mrb[0].mxu0
        %v4012 = vadd.f32 %v3916, %v4011
        %v4013 = vpop.f32.mrb[0].mxu0
        %4014 = vdwg.mxu0
        %v4015 = vld [vmem:[%s71] sm:$0xff]
        %v4016 = vld [vmem:[%s71 + $0x8] sm:$0xff]
        %v4017 = vld [vmem:[%s73] sm:$0x1]
        %v4018 = vmul.f32 %v3813, %v1456
        %v4019 = vmul.f32 %v3813, %v1457
        %v4020 = vmul.f32 %v3813, %v1458
        %v4021 = vmul.f32 %v3813, %v1459
        %v4023 = vsel %vm1258, %v4018, 0
        %v4026 = vsel %vm1258, %v4019, 0
        %v4029 = vsel %vm1258, %v4020, 0
        %v4032 = vsel %vm1258, %v4021, 0
        %v4035 = vsel %vm1258, %v3997, 0
        %v4038 = vsel %vm1258, %v4002, 0
        %v4041 = vsel %vm1258, %v4007, 0
        %v4044 = vsel %vm1258, %v4012, 0
        %4046 = vmatprep.subr.mxu0 0.0
        %4047 = vmatpush1.xpose.msra.mxu0 %v4035
        %4048 = vmatprep.subr.mxu0 0.0
        %4049 = vmatpush1.xpose.msra.mxu0 %v4038
        %4050 = vmatprep.subr.mxu0 0.0
        %4051 = vmatpush1.xpose.msra.mxu0 %v4041
        %4052 = vmatprep.subr.mxu0 0.0
        %4053 = vmatpush1.xpose.msra.mxu0 %v4044
        %4054 = vmatprep.subr.mxu0 0.0
        %4055 = vmatpush1.xpose.msra.mxu0 %v4035
        %4056 = vmatprep.subr.mxu0 0.0
        %4057 = vmatpush1.xpose.msra.mxu0 %v4038
        %4058 = vmatprep.subr.mxu0 0.0
        %4059 = vmatpush1.xpose.msra.mxu0 %v4041
        %4060 = vmatprep.subr.mxu0 0.0
        %4061 = vmatpush1.xpose.msra.mxu0 %v4044
        %4062 = vmatprep.subr.mxu0 0.0
        %4063 = vmatpush1.xpose.msra.mxu0 %v4035
        %4064 = vmatprep.subr.mxu0 0.0
        %4065 = vmatpush1.xpose.msra.mxu0 %v4038
        %4066 = vmatprep.subr.mxu0 0.0
        %4067 = vmatpush1.xpose.msra.mxu0 %v4041
        %4068 = vmatprep.subr.mxu0 0.0
        %4069 = vmatpush1.xpose.msra.mxu0 %v4044
        %4070 = vmatprep.subr.mxu0 0.0
        %4071 = vmatpush1.xpose.msra.mxu0 %v4035
        %4072 = vmatprep.subr.mxu0 0.0
        %4073 = vmatpush1.xpose.msra.mxu0 %v4038
        %4074 = vmatprep.subr.mxu0 0.0
        %4075 = vmatpush1.xpose.msra.mxu0 %v4041
        %4076 = vmatprep.subr.mxu0 0.0
        %4077 = vmatpush1.xpose.msra.mxu0 %v4044
        %4078 = vmatprep.subr.mxu0 0.0
        %4079 = vmatpush1.xpose.msra.mxu0 0.0
        %4080 = vmatprep.subr.mxu0 0.0
        %4081 = vmatpush1.xpose.msra.mxu0 0.0
        %4082 = vmatprep.subr.mxu0 0.0
        %4083 = vmatpush1.xpose.msra.mxu0 0.0
        %4084 = vmatprep.subr.mxu0 0.0
        %4085 = vmatpush1.xpose.msra.mxu0 0.0
        %4086 = vmatprep.subr.mxu0 0.0
        %4087 = vmatpush1.xpose.msra.mxu0 0.0
        %4088 = vmatprep.subr.mxu0 0.0
        %4089 = vmatpush1.xpose.msra.mxu0 0.0
        %4090 = vmatprep.subr.mxu0 0.0
        %4091 = vmatpush1.xpose.msra.mxu0 0.0
        %4092 = vmatprep.subr.mxu0 0.0
        %4093 = vmatpush1.xpose.msra.mxu0 0.0
        %4094 = vmatprep.subr.mxu0 0.0
        %4095 = vmatpush1.xpose.msra.mxu0 0.0
        %4096 = vmatprep.subr.mxu0 0.0
        %4097 = vmatpush1.xpose.msra.mxu0 0.0
        %4098 = vmatprep.subr.mxu0 0.0
        %4099 = vmatpush1.xpose.msra.mxu0 0.0
        %4100 = vmatprep.subr.mxu0 0.0
        %4101 = vmatpush1.xpose.msra.mxu0 0.0
        %4102 = vmatprep.subr.mxu0 0.0
        %4103 = vmatpush1.xpose.msra.mxu0 0.0
        %4104 = vmatprep.subr.mxu0 0.0
        %4105 = vmatpush1.xpose.msra.mxu0 0.0
        %4106 = vmatprep.subr.mxu0 0.0
        %4107 = vmatpush1.xpose.msra.mxu0 0.0
        %4108 = vmatprep.subr.mxu0 0.0
        %4109 = vmatpush1.xpose.msra.mxu0 0.0
        %4110 = vmatprep.mubr.f32.mxu0 0.0
        %4111 = vmatmul.mubr.f32.gmra.mrb[0].mxu0 %v4023
        %v4112 = vpop.f32.mrb[0].mxu0
        %v4113 = vadd.f32 0.0, %v4112
        %v4114 = vpop.f32.mrb[0].mxu0
        %4115 = vmatprep.mubr.f32.mxu0 0.0
        %4116 = vmatmul.mubr.f32.gmra.mrb[0].mxu0 %v4026
        %v4117 = vpop.f32.mrb[0].mxu0
        %v4118 = vadd.f32 0.0, %v4117
        %v4119 = vpop.f32.mrb[0].mxu0
        %4120 = vmatprep.mubr.f32.mxu0 0.0
        %4121 = vmatmul.mubr.f32.gmra.mrb[0].mxu0 %v4029
        %v4122 = vpop.f32.mrb[0].mxu0
        %v4123 = vadd.f32 0.0, %v4122
        %v4124 = vpop.f32.mrb[0].mxu0
        %4125 = vmatprep.mubr.f32.mxu0 0.0
        %4126 = vmatmul.mubr.f32.gmra.mrb[0].mxu0 %v4032
        %v4127 = vpop.f32.mrb[0].mxu0
        %v4128 = vadd.f32 0.0, %v4127
        %v4129 = vpop.f32.mrb[0].mxu0
        %4130 = vdwg.mxu0
        %v4131 = vmul.f32 %v4113, 0.5
        %v4132 = vmul.f32 %v4118, 0.5
        %v4133 = vmul.f32 %v4123, 0.5
        %v4134 = vmul.f32 %v4128, 0.5
        %v4135 = vadd.f32 %v4131, %v1484
        %v4136 = vadd.f32 %v4132, %v1485
        %v4137 = vadd.f32 %v4133, %v1486
        %v4138 = vadd.f32 %v4134, %v1487
        %4139 = vmax.xlane.f32.xlu0 %v4135
        %v4140 = vpop.xlane.xlu0 %4139
        %4141 = vmax.xlane.f32.xlu0 %v4136
        %v4142 = vpop.xlane.xlu0 %4141
        %4143 = vmax.xlane.f32.xlu0 %v4137
        %v4144 = vpop.xlane.xlu0 %4143
        %4145 = vmax.xlane.f32.xlu0 %v4138
        %v4146 = vpop.xlane.xlu0 %4145
        %v4147 = vsub.f32 %v4135, %v4140
        %v4148 = vsub.f32 %v4136, %v4142
        %v4149 = vsub.f32 %v4137, %v4144
        %v4150 = vsub.f32 %v4138, %v4146
        %v4151 = vmul.f32 %v4147, 1.442695
        %v4152 = vpow.pop %v4151
        %v4153 = vmul.f32 %v4148, 1.442695
        %v4154 = vpow.pop %v4153
        %v4155 = vmul.f32 %v4149, 1.442695
        %v4156 = vpow.pop %v4155
        %v4157 = vmul.f32 %v4150, 1.442695
        %v4158 = vpow.pop %v4157
        %4159 = vadd.xlane.f32.xlu0 %v4152
        %v4160 = vpop.xlane.xlu0 %4159
        %4161 = vadd.xlane.f32.xlu0 %v4154
        %v4162 = vpop.xlane.xlu0 %4161
        %4163 = vadd.xlane.f32.xlu0 %v4156
        %v4164 = vpop.xlane.xlu0 %4163
        %4165 = vadd.xlane.f32.xlu0 %v4158
        %v4166 = vpop.xlane.xlu0 %4165
        %v4167 = vrcp.pop %v4160
        %v4168 = vmul.f32 %v4152, %v4167
        %v4169 = vrcp.pop %v4162
        %v4170 = vmul.f32 %v4154, %v4169
        %v4171 = vrcp.pop %v4164
        %v4172 = vmul.f32 %v4156, %v4171
        %v4173 = vrcp.pop %v4166
        %v4174 = vmul.f32 %v4158, %v4173
        %4175 = vrot.lane.b32.xlu0 %v3997, 112
        %v4176 = vpop.permute.xlu0 %4175
        %4177 = vrot.lane.b32.xlu0 %v4002, 112
        %v4178 = vpop.permute.xlu0 %4177
        %4179 = vrot.lane.b32.xlu0 %v4007, 112
        %v4180 = vpop.permute.xlu0 %4179
        %4181 = vrot.lane.b32.xlu0 %v4012, 112
        %v4182 = vpop.permute.xlu0 %4181
        %4187 = vmatprep.subr.mxu0 0.0
        %4188 = vmatpush1.msra.mxu0 %v4176
        %4189 = vmatprep.subr.mxu0 0.0
        %4190 = vmatpush1.msra.mxu0 %v4178
        %4191 = vmatprep.subr.mxu0 0.0
        %4192 = vmatpush1.msra.mxu0 %v4180
        %4193 = vmatprep.subr.mxu0 0.0
        %4194 = vmatpush1.msra.mxu0 %v4182
        %4195 = vmatprep.subr.mxu0 0.0
        %4196 = vmatpush1.msra.mxu0 %v4176
        %4197 = vmatprep.subr.mxu0 0.0
        %4198 = vmatpush1.msra.mxu0 %v4178
        %4199 = vmatprep.subr.mxu0 0.0
        %4200 = vmatpush1.msra.mxu0 %v4180
        %4201 = vmatprep.subr.mxu0 0.0
        %4202 = vmatpush1.msra.mxu0 %v4182
        %4203 = vmatprep.subr.mxu0 0.0
        %4204 = vmatpush1.msra.mxu0 %v4176
        %4205 = vmatprep.subr.mxu0 0.0
        %4206 = vmatpush1.msra.mxu0 %v4178
        %4207 = vmatprep.subr.mxu0 0.0
        %4208 = vmatpush1.msra.mxu0 %v4180
        %4209 = vmatprep.subr.mxu0 0.0
        %4210 = vmatpush1.msra.mxu0 %v4182
        %4211 = vmatprep.subr.mxu0 0.0
        %4212 = vmatpush1.msra.mxu0 %v4176
        %4213 = vmatprep.subr.mxu0 0.0
        %4214 = vmatpush1.msra.mxu0 %v4178
        %4215 = vmatprep.subr.mxu0 0.0
        %4216 = vmatpush1.msra.mxu0 %v4180
        %4217 = vmatprep.subr.mxu0 0.0
        %4218 = vmatpush1.msra.mxu0 %v4182
        %4219 = vmatprep.subr.mxu0 0.0
        %4220 = vmatpush1.msra.mxu0 0.0
        %4221 = vmatprep.subr.mxu0 0.0
        %4222 = vmatpush1.msra.mxu0 0.0
        %4223 = vmatprep.subr.mxu0 0.0
        %4224 = vmatpush1.msra.mxu0 0.0
        %4225 = vmatprep.subr.mxu0 0.0
        %4226 = vmatpush1.msra.mxu0 0.0
        %4227 = vmatprep.subr.mxu0 0.0
        %4228 = vmatpush1.msra.mxu0 0.0
        %4229 = vmatprep.subr.mxu0 0.0
        %4230 = vmatpush1.msra.mxu0 0.0
        %4231 = vmatprep.subr.mxu0 0.0
        %4232 = vmatpush1.msra.mxu0 0.0
        %4233 = vmatprep.subr.mxu0 0.0
        %4234 = vmatpush1.msra.mxu0 0.0
        %4235 = vmatprep.subr.mxu0 0.0
        %4236 = vmatpush1.msra.mxu0 0.0
        %4237 = vmatprep.subr.mxu0 0.0
        %4238 = vmatpush1.msra.mxu0 0.0
        %4239 = vmatprep.subr.mxu0 0.0
        %4240 = vmatpush1.msra.mxu0 0.0
        %4241 = vmatprep.subr.mxu0 0.0
        %4242 = vmatpush1.msra.mxu0 0.0
        %4243 = vmatprep.subr.mxu0 0.0
        %4244 = vmatpush1.msra.mxu0 0.0
        %4245 = vmatprep.subr.mxu0 0.0
        %4246 = vmatpush1.msra.mxu0 0.0
        %4247 = vmatprep.subr.mxu0 0.0
        %4248 = vmatpush1.msra.mxu0 0.0
        %4249 = vmatprep.subr.mxu0 0.0
        %4250 = vmatpush1.msra.mxu0 0.0
        %4251 = vmatprep.mubr.f32.mxu0 0.0
        %4252 = vmatmul.mubr.f32.gmra.mrb[0].mxu0 %v4168
        %v4253 = vpop.f32.mrb[0].mxu0
        %v4254 = vadd.f32 0.0, %v4253
        %v4255 = vpop.f32.mrb[0].mxu0
        %4256 = vmatprep.mubr.f32.mxu0 0.0
        %4257 = vmatmul.mubr.f32.gmra.mrb[0].mxu0 %v4170
        %v4258 = vpop.f32.mrb[0].mxu0
        %v4259 = vadd.f32 0.0, %v4258
        %v4260 = vpop.f32.mrb[0].mxu0
        %4261 = vmatprep.mubr.f32.mxu0 0.0
        %4262 = vmatmul.mubr.f32.gmra.mrb[0].mxu0 %v4172
        %v4263 = vpop.f32.mrb[0].mxu0
        %v4264 = vadd.f32 0.0, %v4263
        %v4265 = vpop.f32.mrb[0].mxu0
        %4266 = vmatprep.mubr.f32.mxu0 0.0
        %4267 = vmatmul.mubr.f32.gmra.mrb[0].mxu0 %v4174
        %v4268 = vpop.f32.mrb[0].mxu0
        %v4269 = vadd.f32 0.0, %v4268
        %v4270 = vpop.f32.mrb[0].mxu0
        %4271 = vdwg.mxu0
        %v4272 = vmul.f32 %v4254, %v1456
        %v4273 = vmul.f32 %v4259, %v1457
        %v4274 = vmul.f32 %v4264, %v1458
        %v4275 = vmul.f32 %v4269, %v1459
        %v4277 = vsel %vm1258, %v4272, 0
        %v4280 = vsel %vm1258, %v4273, 0
        %v4283 = vsel %vm1258, %v4274, 0
        %v4286 = vsel %vm1258, %v4275, 0
        %4288 = vmatprep.subr.mxu0 0.0
        %4289 = vmatpush1.msra.mxu0 %v4015
        %4290 = vmatprep.subr.mxu0 0.0
        %4291 = vmatpush1.msra.mxu0 %v4016
        %4292 = vmatprep.subr.mxu0 0.0
        %4293 = vmatpush1.msra.mxu0 0.0
        %4294 = vmatprep.subr.mxu0 0.0
        %4295 = vmatpush1.msra.mxu0 0.0
        %4296 = vmatprep.subr.mxu0 0.0
        %4297 = vmatpush1.msra.mxu0 0.0
        %4298 = vmatprep.subr.mxu0 0.0
        %4299 = vmatpush1.msra.mxu0 0.0
        %4300 = vmatprep.subr.mxu0 0.0
        %4301 = vmatpush1.msra.mxu0 0.0
        %4302 = vmatprep.subr.mxu0 0.0
        %4303 = vmatpush1.msra.mxu0 0.0
        %4304 = vmatprep.subr.mxu0 0.0
        %4305 = vmatpush1.msra.mxu0 0.0
        %4306 = vmatprep.subr.mxu0 0.0
        %4307 = vmatpush1.msra.mxu0 0.0
        %4308 = vmatprep.subr.mxu0 0.0
        %4309 = vmatpush1.msra.mxu0 0.0
        %4310 = vmatprep.subr.mxu0 0.0
        %4311 = vmatpush1.msra.mxu0 0.0
        %4312 = vmatprep.subr.mxu0 0.0
        %4313 = vmatpush1.msra.mxu0 0.0
        %4314 = vmatprep.subr.mxu0 0.0
        %4315 = vmatpush1.msra.mxu0 0.0
        %4316 = vmatprep.subr.mxu0 0.0
        %4317 = vmatpush1.msra.mxu0 0.0
        %4318 = vmatprep.subr.mxu0 0.0
        %4319 = vmatpush1.msra.mxu0 0.0
        %4320 = vmatprep.subr.mxu0 0.0
        %4321 = vmatpush1.msra.mxu0 0.0
        %4322 = vmatprep.subr.mxu0 0.0
        %4323 = vmatpush1.msra.mxu0 0.0
        %4324 = vmatprep.subr.mxu0 0.0
        %4325 = vmatpush1.msra.mxu0 0.0
        %4326 = vmatprep.subr.mxu0 0.0
        %4327 = vmatpush1.msra.mxu0 0.0
        %4328 = vmatprep.subr.mxu0 0.0
        %4329 = vmatpush1.msra.mxu0 0.0
        %4330 = vmatprep.subr.mxu0 0.0
        %4331 = vmatpush1.msra.mxu0 0.0
        %4332 = vmatprep.subr.mxu0 0.0
        %4333 = vmatpush1.msra.mxu0 0.0
        %4334 = vmatprep.subr.mxu0 0.0
        %4335 = vmatpush1.msra.mxu0 0.0
        %4336 = vmatprep.subr.mxu0 0.0
        %4337 = vmatpush1.msra.mxu0 0.0
        %4338 = vmatprep.subr.mxu0 0.0
        %4339 = vmatpush1.msra.mxu0 0.0
        %4340 = vmatprep.subr.mxu0 0.0
        %4341 = vmatpush1.msra.mxu0 0.0
        %4342 = vmatprep.subr.mxu0 0.0
        %4343 = vmatpush1.msra.mxu0 0.0
        %4344 = vmatprep.subr.mxu0 0.0
        %4345 = vmatpush1.msra.mxu0 0.0
        %4346 = vmatprep.subr.mxu0 0.0
        %4347 = vmatpush1.msra.mxu0 0.0
        %4348 = vmatprep.subr.mxu0 0.0
        %4349 = vmatpush1.msra.mxu0 0.0
        %4350 = vmatprep.subr.mxu0 0.0
        %4351 = vmatpush1.msra.mxu0 0.0
        %4352 = vmatprep.mubr.f32.mxu0 0.0
        %4353 = vmatmul.mubr.f32.gmra.mrb[0].mxu0 %v4277
        %v4354 = vpop.f32.mrb[0].mxu0
        %v4355 = vadd.f32 0.0, %v4354
        %v4356 = vpop.f32.mrb[0].mxu0
        %4357 = vmatprep.mubr.f32.mxu0 0.0
        %4358 = vmatmul.mubr.f32.gmra.mrb[0].mxu0 %v4280
        %v4359 = vpop.f32.mrb[0].mxu0
        %v4360 = vadd.f32 0.0, %v4359
        %v4361 = vpop.f32.mrb[0].mxu0
        %4362 = vmatprep.mubr.f32.mxu0 0.0
        %4363 = vmatmul.mubr.f32.gmra.mrb[0].mxu0 %v4283
        %v4364 = vpop.f32.mrb[0].mxu0
        %v4365 = vadd.f32 0.0, %v4364
        %v4366 = vpop.f32.mrb[0].mxu0
        %4367 = vmatprep.mubr.f32.mxu0 0.0
        %4368 = vmatmul.mubr.f32.gmra.mrb[0].mxu0 %v4286
        %v4369 = vpop.f32.mrb[0].mxu0
        %v4370 = vadd.f32 0.0, %v4369
        %v4371 = vpop.f32.mrb[0].mxu0
        %4372 = vdwg.mxu0
        %v4373 = vadd.f32 %v4355, %v4360
        %v4374 = vadd.f32 %v4373, %v4365
        %v4375 = vadd.f32 %v4374, %v4370
        %v4377 = vlaneseq
        %v4378 = vshrl.u32 %v4377, 7
        %v4379 = vsub.s32 0, %v4378
        %v4380 = vrot.slane %v4017, %v4379
        %v4382 = vadd.f32 %v4375, %v4380
        %v4383 = vadd.f32 %v1284, %v4382
        %s4384 = scalar_lea.vmem %s43, 32
        %v4385 = vld [vmem:[%s4384] sm:$0xff]
        %v4386 = vld [vmem:[%s4384 + $0x8] sm:$0xff]
        %v4387 = vld [vmem:[%s4384 + $0x10] sm:$0xff]
        %v4388 = vld [vmem:[%s4384 + $0x18] sm:$0xff]
        %s4389 = scalar_lea.vmem %s45, 1
        %v4390 = vld [vmem:[%s4389] sm:$0x1]
        %v4392 = vlaneseq
        %v4393 = vshrl.u32 %v4392, 7
        %v4394 = vsub.s32 0, %v4393
        %v4395 = vrot.slane %v4390, %v4394
        %4397 = vmatprep.subr.mxu0 0.0
        %4398 = vmatpush1.msra.mxu0 %v4385
        %4399 = vmatprep.subr.mxu0 0.0
        %4400 = vmatpush1.msra.mxu0 %v4386
        %4401 = vmatprep.subr.mxu0 0.0
        %4402 = vmatpush1.msra.mxu0 %v4387
        %4403 = vmatprep.subr.mxu0 0.0
        %4404 = vmatpush1.msra.mxu0 %v4388
        %4405 = vmatprep.subr.mxu0 0.0
        %4406 = vmatpush1.msra.mxu0 0.0
        %4407 = vmatprep.subr.mxu0 0.0
        %4408 = vmatpush1.msra.mxu0 0.0
        %4409 = vmatprep.subr.mxu0 0.0
        %4410 = vmatpush1.msra.mxu0 0.0
        %4411 = vmatprep.subr.mxu0 0.0
        %4412 = vmatpush1.msra.mxu0 0.0
        %4413 = vmatprep.subr.mxu0 0.0
        %4414 = vmatpush1.msra.mxu0 0.0
        %4415 = vmatprep.subr.mxu0 0.0
        %4416 = vmatpush1.msra.mxu0 0.0
        %4417 = vmatprep.subr.mxu0 0.0
        %4418 = vmatpush1.msra.mxu0 0.0
        %4419 = vmatprep.subr.mxu0 0.0
        %4420 = vmatpush1.msra.mxu0 0.0
        %4421 = vmatprep.subr.mxu0 0.0
        %4422 = vmatpush1.msra.mxu0 0.0
        %4423 = vmatprep.subr.mxu0 0.0
        %4424 = vmatpush1.msra.mxu0 0.0
        %4425 = vmatprep.subr.mxu0 0.0
        %4426 = vmatpush1.msra.mxu0 0.0
        %4427 = vmatprep.subr.mxu0 0.0
        %4428 = vmatpush1.msra.mxu0 0.0
        %4429 = vmatprep.subr.mxu0 0.0
        %4430 = vmatpush1.msra.mxu0 0.0
        %4431 = vmatprep.subr.mxu0 0.0
        %4432 = vmatpush1.msra.mxu0 0.0
        %4433 = vmatprep.subr.mxu0 0.0
        %4434 = vmatpush1.msra.mxu0 0.0
        %4435 = vmatprep.subr.mxu0 0.0
        %4436 = vmatpush1.msra.mxu0 0.0
        %4437 = vmatprep.subr.mxu0 0.0
        %4438 = vmatpush1.msra.mxu0 0.0
        %4439 = vmatprep.subr.mxu0 0.0
        %4440 = vmatpush1.msra.mxu0 0.0
        %4441 = vmatprep.subr.mxu0 0.0
        %4442 = vmatpush1.msra.mxu0 0.0
        %4443 = vmatprep.subr.mxu0 0.0
        %4444 = vmatpush1.msra.mxu0 0.0
        %4445 = vmatprep.subr.mxu0 0.0
        %4446 = vmatpush1.msra.mxu0 0.0
        %4447 = vmatprep.subr.mxu0 0.0
        %4448 = vmatpush1.msra.mxu0 0.0
        %4449 = vmatprep.subr.mxu0 0.0
        %4450 = vmatpush1.msra.mxu0 0.0
        %4451 = vmatprep.subr.mxu0 0.0
        %4452 = vmatpush1.msra.mxu0 0.0
        %4453 = vmatprep.subr.mxu0 0.0
        %4454 = vmatpush1.msra.mxu0 0.0
        %4455 = vmatprep.subr.mxu0 0.0
        %4456 = vmatpush1.msra.mxu0 0.0
        %4457 = vmatprep.subr.mxu0 0.0
        %4458 = vmatpush1.msra.mxu0 0.0
        %4459 = vmatprep.subr.mxu0 0.0
        %4460 = vmatpush1.msra.mxu0 0.0
        %4461 = vmatprep.mubr.f32.mxu0 0.0
        %4462 = vmatmul.mubr.f32.gmra.mrb[0].mxu0 %v3817
        %v4463 = vpop.f32.mrb[0].mxu0
        %v4464 = vadd.f32 %v4395, %v4463
        %v4465 = vpop.f32.mrb[0].mxu0
        %4466 = vmatprep.mubr.f32.mxu0 0.0
        %4467 = vmatmul.mubr.f32.gmra.mrb[0].mxu0 %v3820
        %v4468 = vpop.f32.mrb[0].mxu0
        %v4469 = vadd.f32 %v4395, %v4468
        %v4470 = vpop.f32.mrb[0].mxu0
        %4471 = vdwg.mxu0
        %s4472 = scalar_lea.vmem %s47, 32
        %v4473 = vld [vmem:[%s4472] sm:$0xff]
        %v4474 = vld [vmem:[%s4472 + $0x8] sm:$0xff]
        %v4475 = vld [vmem:[%s4472 + $0x10] sm:$0xff]
        %v4476 = vld [vmem:[%s4472 + $0x18] sm:$0xff]
        %s4477 = scalar_lea.vmem %s49, 1
        %v4478 = vld [vmem:[%s4477] sm:$0x1]
        %v4479 = vmul.f32 %v4464, %v1432
        %v4480 = vmul.f32 %v4469, %v1433
        %v4481 = vmul.f32 %v4464, %v1434
        %v4482 = vmul.f32 %v4469, %v1435
        %v4483 = vmul.f32 %v4464, %v1436
        %v4484 = vmul.f32 %v4469, %v1437
        %v4485 = vmul.f32 %v4464, %v1438
        %v4486 = vmul.f32 %v4469, %v1439
        %4489 = vrot.lane.b32.xlu0 %v4464, 96
        %v4490 = vpop.permute.xlu0 %4489
        %4491 = vrot.lane.b32.xlu0 %v4469, 96
        %v4492 = vpop.permute.xlu0 %4491
        %v4494 = vsel %vm1488, %v4479, 0
        %v4497 = vsel %vm1488, %v4480, 0
        %v4500 = vsel %vm1488, %v4481, 0
        %v4503 = vsel %vm1488, %v4482, 0
        %v4506 = vsel %vm1488, %v4483, 0
        %v4509 = vsel %vm1488, %v4484, 0
        %v4512 = vsel %vm1488, %v4485, 0
        %v4515 = vsel %vm1488, %v4486, 0
        %v4517 = vsel %vm1488, %v4490, 0
        %v4519 = vsel %vm1488, %v4492, 0
        %4521 = vmatprep.subr.mxu0 0.0
        %4522 = vmatpush1.xpose.msra.mxu0 %v4517
        %4523 = vmatprep.subr.mxu0 0.0
        %4524 = vmatpush1.xpose.msra.mxu0 %v4519
        %4525 = vmatprep.subr.mxu0 0.0
        %4526 = vmatpush1.xpose.msra.mxu0 %v4517
        %4527 = vmatprep.subr.mxu0 0.0
        %4528 = vmatpush1.xpose.msra.mxu0 %v4519
        %4529 = vmatprep.subr.mxu0 0.0
        %4530 = vmatpush1.xpose.msra.mxu0 %v4517
        %4531 = vmatprep.subr.mxu0 0.0
        %4532 = vmatpush1.xpose.msra.mxu0 %v4519
        %4533 = vmatprep.subr.mxu0 0.0
        %4534 = vmatpush1.xpose.msra.mxu0 %v4517
        %4535 = vmatprep.subr.mxu0 0.0
        %4536 = vmatpush1.xpose.msra.mxu0 %v4519
        %4537 = vmatprep.subr.mxu0 0.0
        %4538 = vmatpush1.xpose.msra.mxu0 0.0
        %4539 = vmatprep.subr.mxu0 0.0
        %4540 = vmatpush1.xpose.msra.mxu0 0.0
        %4541 = vmatprep.subr.mxu0 0.0
        %4542 = vmatpush1.xpose.msra.mxu0 0.0
        %4543 = vmatprep.subr.mxu0 0.0
        %4544 = vmatpush1.xpose.msra.mxu0 0.0
        %4545 = vmatprep.subr.mxu0 0.0
        %4546 = vmatpush1.xpose.msra.mxu0 0.0
        %4547 = vmatprep.subr.mxu0 0.0
        %4548 = vmatpush1.xpose.msra.mxu0 0.0
        %4549 = vmatprep.subr.mxu0 0.0
        %4550 = vmatpush1.xpose.msra.mxu0 0.0
        %4551 = vmatprep.subr.mxu0 0.0
        %4552 = vmatpush1.xpose.msra.mxu0 0.0
        %4553 = vmatprep.subr.mxu0 0.0
        %4554 = vmatpush1.xpose.msra.mxu0 0.0
        %4555 = vmatprep.subr.mxu0 0.0
        %4556 = vmatpush1.xpose.msra.mxu0 0.0
        %4557 = vmatprep.subr.mxu0 0.0
        %4558 = vmatpush1.xpose.msra.mxu0 0.0
        %4559 = vmatprep.subr.mxu0 0.0
        %4560 = vmatpush1.xpose.msra.mxu0 0.0
        %4561 = vmatprep.subr.mxu0 0.0
        %4562 = vmatpush1.xpose.msra.mxu0 0.0
        %4563 = vmatprep.subr.mxu0 0.0
        %4564 = vmatpush1.xpose.msra.mxu0 0.0
        %4565 = vmatprep.subr.mxu0 0.0
        %4566 = vmatpush1.xpose.msra.mxu0 0.0
        %4567 = vmatprep.subr.mxu0 0.0
        %4568 = vmatpush1.xpose.msra.mxu0 0.0
        %4569 = vmatprep.subr.mxu0 0.0
        %4570 = vmatpush1.xpose.msra.mxu0 0.0
        %4571 = vmatprep.subr.mxu0 0.0
        %4572 = vmatpush1.xpose.msra.mxu0 0.0
        %4573 = vmatprep.subr.mxu0 0.0
        %4574 = vmatpush1.xpose.msra.mxu0 0.0
        %4575 = vmatprep.subr.mxu0 0.0
        %4576 = vmatpush1.xpose.msra.mxu0 0.0
        %4577 = vmatprep.subr.mxu0 0.0
        %4578 = vmatpush1.xpose.msra.mxu0 0.0
        %4579 = vmatprep.subr.mxu0 0.0
        %4580 = vmatpush1.xpose.msra.mxu0 0.0
        %4581 = vmatprep.subr.mxu0 0.0
        %4582 = vmatpush1.xpose.msra.mxu0 0.0
        %4583 = vmatprep.subr.mxu0 0.0
        %4584 = vmatpush1.xpose.msra.mxu0 0.0
        %4585 = vmatprep.mubr.f32.mxu0 0.0
        %4586 = vmatmul.mubr.f32.gmra.mrb[0].mxu0 %v4494
        %v4587 = vpop.f32.mrb[0].mxu0
        %v4588 = vadd.f32 0.0, %v4587
        %v4589 = vpop.f32.mrb[0].mxu0
        %4590 = vmatprep.mubr.f32.mxu0 0.0
        %4591 = vmatmul.mubr.f32.gmra.mrb[0].mxu0 %v4497
        %v4592 = vpop.f32.mrb[0].mxu0
        %v4593 = vadd.f32 0.0, %v4592
        %v4594 = vpop.f32.mrb[0].mxu0
        %4595 = vmatprep.mubr.f32.mxu0 0.0
        %4596 = vmatmul.mubr.f32.gmra.mrb[0].mxu0 %v4500
        %v4597 = vpop.f32.mrb[0].mxu0
        %v4598 = vadd.f32 0.0, %v4597
        %v4599 = vpop.f32.mrb[0].mxu0
        %4600 = vmatprep.mubr.f32.mxu0 0.0
        %4601 = vmatmul.mubr.f32.gmra.mrb[0].mxu0 %v4503
        %v4602 = vpop.f32.mrb[0].mxu0
        %v4603 = vadd.f32 0.0, %v4602
        %v4604 = vpop.f32.mrb[0].mxu0
        %4605 = vmatprep.mubr.f32.mxu0 0.0
        %4606 = vmatmul.mubr.f32.gmra.mrb[0].mxu0 %v4506
        %v4607 = vpop.f32.mrb[0].mxu0
        %v4608 = vadd.f32 0.0, %v4607
        %v4609 = vpop.f32.mrb[0].mxu0
        %4610 = vmatprep.mubr.f32.mxu0 0.0
        %4611 = vmatmul.mubr.f32.gmra.mrb[0].mxu0 %v4509
        %v4612 = vpop.f32.mrb[0].mxu0
        %v4613 = vadd.f32 0.0, %v4612
        %v4614 = vpop.f32.mrb[0].mxu0
        %4615 = vmatprep.mubr.f32.mxu0 0.0
        %4616 = vmatmul.mubr.f32.gmra.mrb[0].mxu0 %v4512
        %v4617 = vpop.f32.mrb[0].mxu0
        %v4618 = vadd.f32 0.0, %v4617
        %v4619 = vpop.f32.mrb[0].mxu0
        %4620 = vmatprep.mubr.f32.mxu0 0.0
        %4621 = vmatmul.mubr.f32.gmra.mrb[0].mxu0 %v4515
        %v4622 = vpop.f32.mrb[0].mxu0
        %v4623 = vadd.f32 0.0, %v4622
        %v4624 = vpop.f32.mrb[0].mxu0
        %4625 = vdwg.mxu0
        %v4626 = vmul.f32 %v4588, 0.35355338
        %v4627 = vmul.f32 %v4593, 0.35355338
        %v4628 = vmul.f32 %v4598, 0.35355338
        %v4629 = vmul.f32 %v4603, 0.35355338
        %v4630 = vmul.f32 %v4608, 0.35355338
        %v4631 = vmul.f32 %v4613, 0.35355338
        %v4632 = vmul.f32 %v4618, 0.35355338
        %v4633 = vmul.f32 %v4623, 0.35355338
        %v4634 = vadd.f32 %v4626, %v1460
        %v4635 = vadd.f32 %v4627, %v1461
        %v4636 = vadd.f32 %v4628, %v1462
        %v4637 = vadd.f32 %v4629, %v1463
        %v4638 = vadd.f32 %v4630, %v1464
        %v4639 = vadd.f32 %v4631, %v1465
        %v4640 = vadd.f32 %v4632, %v1466
        %v4641 = vadd.f32 %v4633, %v1467
        %v4642 = vsel %vm3063, %v4634, -inf
        %4643 = vmax.xlane.f32.xlu0 %v4642
        %v4644 = vpop.xlane.xlu0 %4643
        %v4645 = vsel %vm3063, %v4635, -inf
        %4646 = vmax.xlane.f32.xlu0 %v4645
        %v4647 = vpop.xlane.xlu0 %4646
        %v4648 = vsel %vm3063, %v4636, -inf
        %4649 = vmax.xlane.f32.xlu0 %v4648
        %v4650 = vpop.xlane.xlu0 %4649
        %v4651 = vsel %vm3063, %v4637, -inf
        %4652 = vmax.xlane.f32.xlu0 %v4651
        %v4653 = vpop.xlane.xlu0 %4652
        %v4654 = vsel %vm3063, %v4638, -inf
        %4655 = vmax.xlane.f32.xlu0 %v4654
        %v4656 = vpop.xlane.xlu0 %4655
        %v4657 = vsel %vm3063, %v4639, -inf
        %4658 = vmax.xlane.f32.xlu0 %v4657
        %v4659 = vpop.xlane.xlu0 %4658
        %v4660 = vsel %vm3063, %v4640, -inf
        %4661 = vmax.xlane.f32.xlu0 %v4660
        %v4662 = vpop.xlane.xlu0 %4661
        %v4663 = vsel %vm3063, %v4641, -inf
        %4664 = vmax.xlane.f32.xlu0 %v4663
        %v4665 = vpop.xlane.xlu0 %4664
        %v4666 = vsub.f32 %v4634, %v4644
        %v4667 = vsub.f32 %v4635, %v4647
        %v4668 = vsub.f32 %v4636, %v4650
        %v4669 = vsub.f32 %v4637, %v4653
        %v4670 = vsub.f32 %v4638, %v4656
        %v4671 = vsub.f32 %v4639, %v4659
        %v4672 = vsub.f32 %v4640, %v4662
        %v4673 = vsub.f32 %v4641, %v4665
        %v4674 = vmul.f32 %v4666, 1.442695
        %v4675 = vpow.pop %v4674
        %v4676 = vmul.f32 %v4667, 1.442695
        %v4677 = vpow.pop %v4676
        %v4678 = vmul.f32 %v4668, 1.442695
        %v4679 = vpow.pop %v4678
        %v4680 = vmul.f32 %v4669, 1.442695
        %v4681 = vpow.pop %v4680
        %v4682 = vmul.f32 %v4670, 1.442695
        %v4683 = vpow.pop %v4682
        %v4684 = vmul.f32 %v4671, 1.442695
        %v4685 = vpow.pop %v4684
        %v4686 = vmul.f32 %v4672, 1.442695
        %v4687 = vpow.pop %v4686
        %v4688 = vmul.f32 %v4673, 1.442695
        %v4689 = vpow.pop %v4688
        %v4690 = vsel %vm3063, %v4675, 0.0
        %4691 = vadd.xlane.f32.xlu0 %v4690
        %v4692 = vpop.xlane.xlu0 %4691
        %v4693 = vsel %vm3063, %v4677, 0.0
        %4694 = vadd.xlane.f32.xlu0 %v4693
        %v4695 = vpop.xlane.xlu0 %4694
        %v4696 = vsel %vm3063, %v4679, 0.0
        %4697 = vadd.xlane.f32.xlu0 %v4696
        %v4698 = vpop.xlane.xlu0 %4697
        %v4699 = vsel %vm3063, %v4681, 0.0
        %4700 = vadd.xlane.f32.xlu0 %v4699
        %v4701 = vpop.xlane.xlu0 %4700
        %v4702 = vsel %vm3063, %v4683, 0.0
        %4703 = vadd.xlane.f32.xlu0 %v4702
        %v4704 = vpop.xlane.xlu0 %4703
        %v4705 = vsel %vm3063, %v4685, 0.0
        %4706 = vadd.xlane.f32.xlu0 %v4705
        %v4707 = vpop.xlane.xlu0 %4706
        %v4708 = vsel %vm3063, %v4687, 0.0
        %4709 = vadd.xlane.f32.xlu0 %v4708
        %v4710 = vpop.xlane.xlu0 %4709
        %v4711 = vsel %vm3063, %v4689, 0.0
        %4712 = vadd.xlane.f32.xlu0 %v4711
        %v4713 = vpop.xlane.xlu0 %4712
        %v4714 = vrcp.pop %v4692
        %v4715 = vmul.f32 %v4675, %v4714
        %v4716 = vrcp.pop %v4695
        %v4717 = vmul.f32 %v4677, %v4716
        %v4718 = vrcp.pop %v4698
        %v4719 = vmul.f32 %v4679, %v4718
        %v4720 = vrcp.pop %v4701
        %v4721 = vmul.f32 %v4681, %v4720
        %v4722 = vrcp.pop %v4704
        %v4723 = vmul.f32 %v4683, %v4722
        %v4724 = vrcp.pop %v4707
        %v4725 = vmul.f32 %v4685, %v4724
        %v4726 = vrcp.pop %v4710
        %v4727 = vmul.f32 %v4687, %v4726
        %v4728 = vrcp.pop %v4713
        %v4729 = vmul.f32 %v4689, %v4728
        %4730 = vrot.lane.b32.xlu0 %v4464, 64
        %v4731 = vpop.permute.xlu0 %4730
        %4732 = vrot.lane.b32.xlu0 %v4469, 64
        %v4733 = vpop.permute.xlu0 %4732
        %v4737 = vsel %vm3063, %v4715, 0
        %v4740 = vsel %vm3063, %v4717, 0
        %v4743 = vsel %vm3063, %v4719, 0
        %v4746 = vsel %vm3063, %v4721, 0
        %v4749 = vsel %vm3063, %v4723, 0
        %v4752 = vsel %vm3063, %v4725, 0
        %v4755 = vsel %vm3063, %v4727, 0
        %v4758 = vsel %vm3063, %v4729, 0
        %4760 = vmatprep.subr.mxu0 0.0
        %4761 = vmatpush1.msra.mxu0 %v4731
        %4762 = vmatprep.subr.mxu0 0.0
        %4763 = vmatpush1.msra.mxu0 %v4733
        %4764 = vmatprep.subr.mxu0 0.0
        %4765 = vmatpush1.msra.mxu0 %v4731
        %4766 = vmatprep.subr.mxu0 0.0
        %4767 = vmatpush1.msra.mxu0 %v4733
        %4768 = vmatprep.subr.mxu0 0.0
        %4769 = vmatpush1.msra.mxu0 %v4731
        %4770 = vmatprep.subr.mxu0 0.0
        %4771 = vmatpush1.msra.mxu0 %v4733
        %4772 = vmatprep.subr.mxu0 0.0
        %4773 = vmatpush1.msra.mxu0 %v4731
        %4774 = vmatprep.subr.mxu0 0.0
        %4775 = vmatpush1.msra.mxu0 %v4733
        %4776 = vmatprep.subr.mxu0 0.0
        %4777 = vmatpush1.msra.mxu0 0.0
        %4778 = vmatprep.subr.mxu0 0.0
        %4779 = vmatpush1.msra.mxu0 0.0
        %4780 = vmatprep.subr.mxu0 0.0
        %4781 = vmatpush1.msra.mxu0 0.0
        %4782 = vmatprep.subr.mxu0 0.0
        %4783 = vmatpush1.msra.mxu0 0.0
        %4784 = vmatprep.subr.mxu0 0.0
        %4785 = vmatpush1.msra.mxu0 0.0
        %4786 = vmatprep.subr.mxu0 0.0
        %4787 = vmatpush1.msra.mxu0 0.0
        %4788 = vmatprep.subr.mxu0 0.0
        %4789 = vmatpush1.msra.mxu0 0.0
        %4790 = vmatprep.subr.mxu0 0.0
        %4791 = vmatpush1.msra.mxu0 0.0
        %4792 = vmatprep.subr.mxu0 0.0
        %4793 = vmatpush1.msra.mxu0 0.0
        %4794 = vmatprep.subr.mxu0 0.0
        %4795 = vmatpush1.msra.mxu0 0.0
        %4796 = vmatprep.subr.mxu0 0.0
        %4797 = vmatpush1.msra.mxu0 0.0
        %4798 = vmatprep.subr.mxu0 0.0
        %4799 = vmatpush1.msra.mxu0 0.0
        %4800 = vmatprep.subr.mxu0 0.0
        %4801 = vmatpush1.msra.mxu0 0.0
        %4802 = vmatprep.subr.mxu0 0.0
        %4803 = vmatpush1.msra.mxu0 0.0
        %4804 = vmatprep.subr.mxu0 0.0
        %4805 = vmatpush1.msra.mxu0 0.0
        %4806 = vmatprep.subr.mxu0 0.0
        %4807 = vmatpush1.msra.mxu0 0.0
        %4808 = vmatprep.subr.mxu0 0.0
        %4809 = vmatpush1.msra.mxu0 0.0
        %4810 = vmatprep.subr.mxu0 0.0
        %4811 = vmatpush1.msra.mxu0 0.0
        %4812 = vmatprep.subr.mxu0 0.0
        %4813 = vmatpush1.msra.mxu0 0.0
        %4814 = vmatprep.subr.mxu0 0.0
        %4815 = vmatpush1.msra.mxu0 0.0
        %4816 = vmatprep.subr.mxu0 0.0
        %4817 = vmatpush1.msra.mxu0 0.0
        %4818 = vmatprep.subr.mxu0 0.0
        %4819 = vmatpush1.msra.mxu0 0.0
        %4820 = vmatprep.subr.mxu0 0.0
        %4821 = vmatpush1.msra.mxu0 0.0
        %4822 = vmatprep.subr.mxu0 0.0
        %4823 = vmatpush1.msra.mxu0 0.0
        %4824 = vmatprep.mubr.f32.mxu0 0.0
        %4825 = vmatmul.mubr.f32.gmra.mrb[0].mxu0 %v4737
        %v4826 = vpop.f32.mrb[0].mxu0
        %v4827 = vadd.f32 0.0, %v4826
        %v4828 = vpop.f32.mrb[0].mxu0
        %4829 = vmatprep.mubr.f32.mxu0 0.0
        %4830 = vmatmul.mubr.f32.gmra.mrb[0].mxu0 %v4740
        %v4831 = vpop.f32.mrb[0].mxu0
        %v4832 = vadd.f32 0.0, %v4831
        %v4833 = vpop.f32.mrb[0].mxu0
        %4834 = vmatprep.mubr.f32.mxu0 0.0
        %4835 = vmatmul.mubr.f32.gmra.mrb[0].mxu0 %v4743
        %v4836 = vpop.f32.mrb[0].mxu0
        %v4837 = vadd.f32 0.0, %v4836
        %v4838 = vpop.f32.mrb[0].mxu0
        %4839 = vmatprep.mubr.f32.mxu0 0.0
        %4840 = vmatmul.mubr.f32.gmra.mrb[0].mxu0 %v4746
        %v4841 = vpop.f32.mrb[0].mxu0
        %v4842 = vadd.f32 0.0, %v4841
        %v4843 = vpop.f32.mrb[0].mxu0
        %4844 = vmatprep.mubr.f32.mxu0 0.0
        %4845 = vmatmul.mubr.f32.gmra.mrb[0].mxu0 %v4749
        %v4846 = vpop.f32.mrb[0].mxu0
        %v4847 = vadd.f32 0.0, %v4846
        %v4848 = vpop.f32.mrb[0].mxu0
        %4849 = vmatprep.mubr.f32.mxu0 0.0
        %4850 = vmatmul.mubr.f32.gmra.mrb[0].mxu0 %v4752
        %v4851 = vpop.f32.mrb[0].mxu0
        %v4852 = vadd.f32 0.0, %v4851
        %v4853 = vpop.f32.mrb[0].mxu0
        %4854 = vmatprep.mubr.f32.mxu0 0.0
        %4855 = vmatmul.mubr.f32.gmra.mrb[0].mxu0 %v4755
        %v4856 = vpop.f32.mrb[0].mxu0
        %v4857 = vadd.f32 0.0, %v4856
        %v4858 = vpop.f32.mrb[0].mxu0
        %4859 = vmatprep.mubr.f32.mxu0 0.0
        %4860 = vmatmul.mubr.f32.gmra.mrb[0].mxu0 %v4758
        %v4861 = vpop.f32.mrb[0].mxu0
        %v4862 = vadd.f32 0.0, %v4861
        %v4863 = vpop.f32.mrb[0].mxu0
        %4864 = vdwg.mxu0
        %v4865 = vmul.f32 %v4827, %v1432
        %v4866 = vmul.f32 %v4832, %v1433
        %v4867 = vmul.f32 %v4837, %v1434
        %v4868 = vmul.f32 %v4842, %v1435
        %v4869 = vmul.f32 %v4847, %v1436
        %v4870 = vmul.f32 %v4852, %v1437
        %v4871 = vmul.f32 %v4857, %v1438
        %v4872 = vmul.f32 %v4862, %v1439
        %v4874 = vsel %vm1488, %v4865, 0
        %v4877 = vsel %vm1488, %v4866, 0
        %v4880 = vsel %vm1488, %v4867, 0
        %v4883 = vsel %vm1488, %v4868, 0
        %v4886 = vsel %vm1488, %v4869, 0
        %v4889 = vsel %vm1488, %v4870, 0
        %v4892 = vsel %vm1488, %v4871, 0
        %v4895 = vsel %vm1488, %v4872, 0
        %4897 = vmatprep.subr.mxu0 0.0
        %4898 = vmatpush1.msra.mxu0 %v4473
        %4899 = vmatprep.subr.mxu0 0.0
        %4900 = vmatpush1.msra.mxu0 %v4474
        %4901 = vmatprep.subr.mxu0 0.0
        %4902 = vmatpush1.msra.mxu0 %v4475
        %4903 = vmatprep.subr.mxu0 0.0
        %4904 = vmatpush1.msra.mxu0 %v4476
        %4905 = vmatprep.subr.mxu0 0.0
        %4906 = vmatpush1.msra.mxu0 0.0
        %4907 = vmatprep.subr.mxu0 0.0
        %4908 = vmatpush1.msra.mxu0 0.0
        %4909 = vmatprep.subr.mxu0 0.0
        %4910 = vmatpush1.msra.mxu0 0.0
        %4911 = vmatprep.subr.mxu0 0.0
        %4912 = vmatpush1.msra.mxu0 0.0
        %4913 = vmatprep.subr.mxu0 0.0
        %4914 = vmatpush1.msra.mxu0 0.0
        %4915 = vmatprep.subr.mxu0 0.0
        %4916 = vmatpush1.msra.mxu0 0.0
        %4917 = vmatprep.subr.mxu0 0.0
        %4918 = vmatpush1.msra.mxu0 0.0
        %4919 = vmatprep.subr.mxu0 0.0
        %4920 = vmatpush1.msra.mxu0 0.0
        %4921 = vmatprep.subr.mxu0 0.0
        %4922 = vmatpush1.msra.mxu0 0.0
        %4923 = vmatprep.subr.mxu0 0.0
        %4924 = vmatpush1.msra.mxu0 0.0
        %4925 = vmatprep.subr.mxu0 0.0
        %4926 = vmatpush1.msra.mxu0 0.0
        %4927 = vmatprep.subr.mxu0 0.0
        %4928 = vmatpush1.msra.mxu0 0.0
        %4929 = vmatprep.subr.mxu0 0.0
        %4930 = vmatpush1.msra.mxu0 0.0
        %4931 = vmatprep.subr.mxu0 0.0
        %4932 = vmatpush1.msra.mxu0 0.0
        %4933 = vmatprep.subr.mxu0 0.0
        %4934 = vmatpush1.msra.mxu0 0.0
        %4935 = vmatprep.subr.mxu0 0.0
        %4936 = vmatpush1.msra.mxu0 0.0
        %4937 = vmatprep.subr.mxu0 0.0
        %4938 = vmatpush1.msra.mxu0 0.0
        %4939 = vmatprep.subr.mxu0 0.0
        %4940 = vmatpush1.msra.mxu0 0.0
        %4941 = vmatprep.subr.mxu0 0.0
        %4942 = vmatpush1.msra.mxu0 0.0
        %4943 = vmatprep.subr.mxu0 0.0
        %4944 = vmatpush1.msra.mxu0 0.0
        %4945 = vmatprep.subr.mxu0 0.0
        %4946 = vmatpush1.msra.mxu0 0.0
        %4947 = vmatprep.subr.mxu0 0.0
        %4948 = vmatpush1.msra.mxu0 0.0
        %4949 = vmatprep.subr.mxu0 0.0
        %4950 = vmatpush1.msra.mxu0 0.0
        %4951 = vmatprep.subr.mxu0 0.0
        %4952 = vmatpush1.msra.mxu0 0.0
        %4953 = vmatprep.subr.mxu0 0.0
        %4954 = vmatpush1.msra.mxu0 0.0
        %4955 = vmatprep.subr.mxu0 0.0
        %4956 = vmatpush1.msra.mxu0 0.0
        %4957 = vmatprep.subr.mxu0 0.0
        %4958 = vmatpush1.msra.mxu0 0.0
        %4959 = vmatprep.subr.mxu0 0.0
        %4960 = vmatpush1.msra.mxu0 0.0
        %4961 = vmatprep.mubr.f32.mxu0 0.0
        %4962 = vmatmul.mubr.f32.gmra.mrb[0].mxu0 %v4874
        %v4963 = vpop.f32.mrb[0].mxu0
        %v4964 = vadd.f32 0.0, %v4963
        %v4965 = vpop.f32.mrb[0].mxu0
        %4966 = vmatprep.mubr.f32.mxu0 0.0
        %4967 = vmatmul.mubr.f32.gmra.mrb[0].mxu0 %v4877
        %v4968 = vpop.f32.mrb[0].mxu0
        %v4969 = vadd.f32 0.0, %v4968
        %v4970 = vpop.f32.mrb[0].mxu0
        %4971 = vmatprep.mubr.f32.mxu0 0.0
        %4972 = vmatmul.mubr.f32.gmra.mrb[0].mxu0 %v4880
        %v4973 = vpop.f32.mrb[0].mxu0
        %v4974 = vadd.f32 0.0, %v4973
        %v4975 = vpop.f32.mrb[0].mxu0
        %4976 = vmatprep.mubr.f32.mxu0 0.0
        %4977 = vmatmul.mubr.f32.gmra.mrb[0].mxu0 %v4883
        %v4978 = vpop.f32.mrb[0].mxu0
        %v4979 = vadd.f32 0.0, %v4978
        %v4980 = vpop.f32.mrb[0].mxu0
        %4981 = vmatprep.mubr.f32.mxu0 0.0
        %4982 = vmatmul.mubr.f32.gmra.mrb[0].mxu0 %v4886
        %v4983 = vpop.f32.mrb[0].mxu0
        %v4984 = vadd.f32 0.0, %v4983
        %v4985 = vpop.f32.mrb[0].mxu0
        %4986 = vmatprep.mubr.f32.mxu0 0.0
        %4987 = vmatmul.mubr.f32.gmra.mrb[0].mxu0 %v4889
        %v4988 = vpop.f32.mrb[0].mxu0
        %v4989 = vadd.f32 0.0, %v4988
        %v4990 = vpop.f32.mrb[0].mxu0
        %4991 = vmatprep.mubr.f32.mxu0 0.0
        %4992 = vmatmul.mubr.f32.gmra.mrb[0].mxu0 %v4892
        %v4993 = vpop.f32.mrb[0].mxu0
        %v4994 = vadd.f32 0.0, %v4993
        %v4995 = vpop.f32.mrb[0].mxu0
        %4996 = vmatprep.mubr.f32.mxu0 0.0
        %4997 = vmatmul.mubr.f32.gmra.mrb[0].mxu0 %v4895
        %v4998 = vpop.f32.mrb[0].mxu0
        %v4999 = vadd.f32 0.0, %v4998
        %v5000 = vpop.f32.mrb[0].mxu0
        %5001 = vdwg.mxu0
        %v5002 = vadd.f32 %v4964, %v4974
        %v5003 = vadd.f32 %v4969, %v4979
        %v5004 = vadd.f32 %v5002, %v4984
        %v5005 = vadd.f32 %v5003, %v4989
        %v5006 = vadd.f32 %v5004, %v4994
        %v5007 = vadd.f32 %v5005, %v4999
        %v5009 = vlaneseq
        %v5010 = vshrl.u32 %v5009, 7
        %v5011 = vsub.s32 0, %v5010
        %v5012 = vrot.slane %v4478, %v5011
        %v5014 = vadd.f32 %v5006, %v5012
        %v5015 = vadd.f32 %v5007, %v5012
        %v5016 = vadd.f32 %v3735, %v5014
        %v5017 = vadd.f32 %v3736, %v5015
        %s5018 = scalar_lea.vmem %s59, 1
        %v5019 = vld [vmem:[%s5018] sm:$0x1]
        %s5020 = scalar_lea.vmem %s61, 1
        %v5021 = vld [vmem:[%s5020] sm:$0x1]
        %v5022 = vsel %vm1488, %v5016, 0.0
        %5023 = vadd.xlane.f32.xlu0 %v5022
        %v5024 = vpop.xlane.xlu0 %5023
        %v5025 = vsel %vm1488, %v5017, 0.0
        %5026 = vadd.xlane.f32.xlu0 %v5025
        %v5027 = vpop.xlane.xlu0 %5026
        %v5028 = vmul.f32 %v5024, %v3448
        %v5029 = vmul.f32 %v5027, %v3448
        %v5030 = vsub.f32 %v5016, %v5028
        %v5031 = vsub.f32 %v5017, %v5029
        %v5032 = vmul.f32 %v5030, %v5030
        %v5033 = vmul.f32 %v5031, %v5031
        %v5034 = vsel %vm1488, %v5032, 0.0
        %5035 = vadd.xlane.f32.xlu0 %v5034
        %v5036 = vpop.xlane.xlu0 %5035
        %v5037 = vsel %vm1488, %v5033, 0.0
        %5038 = vadd.xlane.f32.xlu0 %v5037
        %v5039 = vpop.xlane.xlu0 %5038
        %v5040 = vmul.f32 %v5036, %v3448
        %v5041 = vmul.f32 %v5039, %v3448
        %v5042 = vadd.f32 %v5040, 1e-05
        %v5043 = vadd.f32 %v5041, 1e-05
        %v5044 = vrsqrt.pop %v5042
        %v5045 = vrsqrt.pop %v5043
        %v5046 = vmul.f32 %v5030, %v5044
        %v5047 = vmul.f32 %v5031, %v5045
        %v5049 = vlaneseq
        %v5050 = vshrl.u32 %v5049, 7
        %v5051 = vsub.s32 0, %v5050
        %v5052 = vrot.slane %v5019, %v5051
        %v5054 = vmul.f32 %v5046, %v5052
        %v5055 = vmul.f32 %v5047, %v5052
        %v5057 = vlaneseq
        %v5058 = vshrl.u32 %v5057, 7
        %v5059 = vsub.s32 0, %v5058
        %v5060 = vrot.slane %v5021, %v5059
        %v5062 = vadd.f32 %v5054, %v5060
        %v5063 = vadd.f32 %v5055, %v5060
        %s5064 = scalar_lea.vmem %s51, 32
        %v5065 = vld [vmem:[%s5064] sm:$0xff]
        %v5066 = vld [vmem:[%s5064 + $0x8] sm:$0xff]
        %v5067 = vld [vmem:[%s5064 + $0x10] sm:$0xff]
        %v5068 = vld [vmem:[%s5064 + $0x18] sm:$0xff]
        %s5069 = scalar_lea.vmem %s53, 1
        %v5070 = vld [vmem:[%s5069] sm:$0x1]
        %v5072 = vlaneseq
        %v5073 = vshrl.u32 %v5072, 7
        %v5074 = vsub.s32 0, %v5073
        %v5075 = vrot.slane %v5070, %v5074
        %v5078 = vsel %vm1488, %v5062, 0
        %v5081 = vsel %vm1488, %v5063, 0
        %5083 = vmatprep.subr.mxu0 0.0
        %5084 = vmatpush1.msra.mxu0 %v5065
        %5085 = vmatprep.subr.mxu0 0.0
        %5086 = vmatpush1.msra.mxu0 %v5066
        %5087 = vmatprep.subr.mxu0 0.0
        %5088 = vmatpush1.msra.mxu0 %v5067
        %5089 = vmatprep.subr.mxu0 0.0
        %5090 = vmatpush1.msra.mxu0 %v5068
        %5091 = vmatprep.subr.mxu0 0.0
        %5092 = vmatpush1.msra.mxu0 0.0
        %5093 = vmatprep.subr.mxu0 0.0
        %5094 = vmatpush1.msra.mxu0 0.0
        %5095 = vmatprep.subr.mxu0 0.0
        %5096 = vmatpush1.msra.mxu0 0.0
        %5097 = vmatprep.subr.mxu0 0.0
        %5098 = vmatpush1.msra.mxu0 0.0
        %5099 = vmatprep.subr.mxu0 0.0
        %5100 = vmatpush1.msra.mxu0 0.0
        %5101 = vmatprep.subr.mxu0 0.0
        %5102 = vmatpush1.msra.mxu0 0.0
        %5103 = vmatprep.subr.mxu0 0.0
        %5104 = vmatpush1.msra.mxu0 0.0
        %5105 = vmatprep.subr.mxu0 0.0
        %5106 = vmatpush1.msra.mxu0 0.0
        %5107 = vmatprep.subr.mxu0 0.0
        %5108 = vmatpush1.msra.mxu0 0.0
        %5109 = vmatprep.subr.mxu0 0.0
        %5110 = vmatpush1.msra.mxu0 0.0
        %5111 = vmatprep.subr.mxu0 0.0
        %5112 = vmatpush1.msra.mxu0 0.0
        %5113 = vmatprep.subr.mxu0 0.0
        %5114 = vmatpush1.msra.mxu0 0.0
        %5115 = vmatprep.subr.mxu0 0.0
        %5116 = vmatpush1.msra.mxu0 0.0
        %5117 = vmatprep.subr.mxu0 0.0
        %5118 = vmatpush1.msra.mxu0 0.0
        %5119 = vmatprep.subr.mxu0 0.0
        %5120 = vmatpush1.msra.mxu0 0.0
        %5121 = vmatprep.subr.mxu0 0.0
        %5122 = vmatpush1.msra.mxu0 0.0
        %5123 = vmatprep.subr.mxu0 0.0
        %5124 = vmatpush1.msra.mxu0 0.0
        %5125 = vmatprep.subr.mxu0 0.0
        %5126 = vmatpush1.msra.mxu0 0.0
        %5127 = vmatprep.subr.mxu0 0.0
        %5128 = vmatpush1.msra.mxu0 0.0
        %5129 = vmatprep.subr.mxu0 0.0
        %5130 = vmatpush1.msra.mxu0 0.0
        %5131 = vmatprep.subr.mxu0 0.0
        %5132 = vmatpush1.msra.mxu0 0.0
        %5133 = vmatprep.subr.mxu0 0.0
        %5134 = vmatpush1.msra.mxu0 0.0
        %5135 = vmatprep.subr.mxu0 0.0
        %5136 = vmatpush1.msra.mxu0 0.0
        %5137 = vmatprep.subr.mxu0 0.0
        %5138 = vmatpush1.msra.mxu0 0.0
        %5139 = vmatprep.subr.mxu0 0.0
        %5140 = vmatpush1.msra.mxu0 0.0
        %5141 = vmatprep.subr.mxu0 0.0
        %5142 = vmatpush1.msra.mxu0 0.0
        %5143 = vmatprep.subr.mxu0 0.0
        %5144 = vmatpush1.msra.mxu0 0.0
        %5145 = vmatprep.subr.mxu0 0.0
        %5146 = vmatpush1.msra.mxu0 0.0
        %5147 = vmatprep.mubr.f32.mxu0 0.0
        %5148 = vmatmul.mubr.f32.gmra.mrb[0].mxu0 %v5078
        %v5149 = vpop.f32.mrb[0].mxu0
        %v5150 = vadd.f32 %v5075, %v5149
        %v5151 = vpop.f32.mrb[0].mxu0
        %5152 = vmatprep.mubr.f32.mxu0 0.0
        %5153 = vmatmul.mubr.f32.gmra.mrb[0].mxu0 %v5081
        %v5154 = vpop.f32.mrb[0].mxu0
        %v5155 = vadd.f32 %v5075, %v5154
        %v5156 = vpop.f32.mrb[0].mxu0
        %5157 = vdwg.mxu0
        %v5158 = vmul.f32 %v5150, 0.5
        %v5159 = vmul.f32 %v5155, 0.5
        %v5160 = vmul.f32 %v5150, %v5150
        %v5161 = vmul.f32 %v5155, %v5155
        %v5162 = vmul.f32 %v5160, %v5150
        %v5163 = vmul.f32 %v5161, %v5155
        %v5164 = vmul.f32 %v5162, 0.044715
        %v5165 = vmul.f32 %v5163, 0.044715
        %v5166 = vadd.f32 %v5150, %v5164
        %v5167 = vadd.f32 %v5155, %v5165
        %v5168 = vmul.f32 %v5166, 0.7978846
        %v5169 = vmul.f32 %v5167, 0.7978846
        %v5170 = vtanh.pop %v5168
        %v5171 = vtanh.pop %v5169
        %v5172 = vadd.f32 %v5170, 1.0
        %v5173 = vadd.f32 %v5171, 1.0
        %v5174 = vmul.f32 %v5158, %v5172
        %v5175 = vmul.f32 %v5159, %v5173
        %s5176 = scalar_lea.vmem %s55, 64
        %v5177 = vld [vmem:[%s5176] sm:$0xff]
        %v5178 = vld [vmem:[%s5176 + $0x8] sm:$0xff]
        %v5179 = vld [vmem:[%s5176 + $0x10] sm:$0xff]
        %v5180 = vld [vmem:[%s5176 + $0x18] sm:$0xff]
        %v5181 = vld [vmem:[%s5176 + $0x20] sm:$0xff]
        %v5182 = vld [vmem:[%s5176 + $0x28] sm:$0xff]
        %v5183 = vld [vmem:[%s5176 + $0x30] sm:$0xff]
        %v5184 = vld [vmem:[%s5176 + $0x38] sm:$0xff]
        %s5185 = scalar_lea.vmem %s57, 1
        %v5186 = vld [vmem:[%s5185] sm:$0x1]
        %v5188 = vlaneseq
        %v5189 = vshrl.u32 %v5188, 7
        %v5190 = vsub.s32 0, %v5189
        %v5191 = vrot.slane %v5186, %v5190
        %v5194 = vsel %vm3063, %v5174, 0
        %v5197 = vsel %vm3063, %v5175, 0
        %5199 = vmatprep.subr.mxu0 0.0
        %5200 = vmatpush1.msra.mxu0 %v5177
        %5201 = vmatprep.subr.mxu0 0.0
        %5202 = vmatpush1.msra.mxu0 %v5178
        %5203 = vmatprep.subr.mxu0 0.0
        %5204 = vmatpush1.msra.mxu0 %v5179
        %5205 = vmatprep.subr.mxu0 0.0
        %5206 = vmatpush1.msra.mxu0 %v5180
        %5207 = vmatprep.subr.mxu0 0.0
        %5208 = vmatpush1.msra.mxu0 %v5181
        %5209 = vmatprep.subr.mxu0 0.0
        %5210 = vmatpush1.msra.mxu0 %v5182
        %5211 = vmatprep.subr.mxu0 0.0
        %5212 = vmatpush1.msra.mxu0 %v5183
        %5213 = vmatprep.subr.mxu0 0.0
        %5214 = vmatpush1.msra.mxu0 %v5184
        %5215 = vmatprep.subr.mxu0 0.0
        %5216 = vmatpush1.msra.mxu0 0.0
        %5217 = vmatprep.subr.mxu0 0.0
        %5218 = vmatpush1.msra.mxu0 0.0
        %5219 = vmatprep.subr.mxu0 0.0
        %5220 = vmatpush1.msra.mxu0 0.0
        %5221 = vmatprep.subr.mxu0 0.0
        %5222 = vmatpush1.msra.mxu0 0.0
        %5223 = vmatprep.subr.mxu0 0.0
        %5224 = vmatpush1.msra.mxu0 0.0
        %5225 = vmatprep.subr.mxu0 0.0
        %5226 = vmatpush1.msra.mxu0 0.0
        %5227 = vmatprep.subr.mxu0 0.0
        %5228 = vmatpush1.msra.mxu0 0.0
        %5229 = vmatprep.subr.mxu0 0.0
        %5230 = vmatpush1.msra.mxu0 0.0
        %5231 = vmatprep.subr.mxu0 0.0
        %5232 = vmatpush1.msra.mxu0 0.0
        %5233 = vmatprep.subr.mxu0 0.0
        %5234 = vmatpush1.msra.mxu0 0.0
        %5235 = vmatprep.subr.mxu0 0.0
        %5236 = vmatpush1.msra.mxu0 0.0
        %5237 = vmatprep.subr.mxu0 0.0
        %5238 = vmatpush1.msra.mxu0 0.0
        %5239 = vmatprep.subr.mxu0 0.0
        %5240 = vmatpush1.msra.mxu0 0.0
        %5241 = vmatprep.subr.mxu0 0.0
        %5242 = vmatpush1.msra.mxu0 0.0
        %5243 = vmatprep.subr.mxu0 0.0
        %5244 = vmatpush1.msra.mxu0 0.0
        %5245 = vmatprep.subr.mxu0 0.0
        %5246 = vmatpush1.msra.mxu0 0.0
        %5247 = vmatprep.subr.mxu0 0.0
        %5248 = vmatpush1.msra.mxu0 0.0
        %5249 = vmatprep.subr.mxu0 0.0
        %5250 = vmatpush1.msra.mxu0 0.0
        %5251 = vmatprep.subr.mxu0 0.0
        %5252 = vmatpush1.msra.mxu0 0.0
        %5253 = vmatprep.subr.mxu0 0.0
        %5254 = vmatpush1.msra.mxu0 0.0
        %5255 = vmatprep.subr.mxu0 0.0
        %5256 = vmatpush1.msra.mxu0 0.0
        %5257 = vmatprep.subr.mxu0 0.0
        %5258 = vmatpush1.msra.mxu0 0.0
        %5259 = vmatprep.subr.mxu0 0.0
        %5260 = vmatpush1.msra.mxu0 0.0
        %5261 = vmatprep.subr.mxu0 0.0
        %5262 = vmatpush1.msra.mxu0 0.0
        %5263 = vmatprep.mubr.f32.mxu0 0.0
        %5264 = vmatmul.mubr.f32.gmra.mrb[0].mxu0 %v5194
        %v5265 = vpop.f32.mrb[0].mxu0
        %v5266 = vadd.f32 %v5191, %v5265
        %v5267 = vpop.f32.mrb[0].mxu0
        %5268 = vmatprep.mubr.f32.mxu0 0.0
        %5269 = vmatmul.mubr.f32.gmra.mrb[0].mxu0 %v5197
        %v5270 = vpop.f32.mrb[0].mxu0
        %v5271 = vadd.f32 %v5191, %v5270
        %v5272 = vpop.f32.mrb[0].mxu0
        %5273 = vdwg.mxu0
        %v5274 = vadd.f32 %v5062, %v5266
        %v5275 = vadd.f32 %v5063, %v5271
        %s5276 = scalar_lea.vmem %s63, 1
        %v5277 = vld [vmem:[%s5276] sm:$0x1]
        %s5278 = scalar_lea.vmem %s65, 1
        %v5279 = vld [vmem:[%s5278] sm:$0x1]
        %v5280 = vsel %vm1488, %v5274, 0.0
        %5281 = vadd.xlane.f32.xlu0 %v5280
        %v5282 = vpop.xlane.xlu0 %5281
        %v5283 = vsel %vm1488, %v5275, 0.0
        %5284 = vadd.xlane.f32.xlu0 %v5283
        %v5285 = vpop.xlane.xlu0 %5284
        %v5286 = vmul.f32 %v5282, %v3448
        %v5287 = vmul.f32 %v5285, %v3448
        %v5288 = vsub.f32 %v5274, %v5286
        %v5289 = vsub.f32 %v5275, %v5287
        %v5290 = vmul.f32 %v5288, %v5288
        %v5291 = vmul.f32 %v5289, %v5289
        %v5292 = vsel %vm1488, %v5290, 0.0
        %5293 = vadd.xlane.f32.xlu0 %v5292
        %v5294 = vpop.xlane.xlu0 %5293
        %v5295 = vsel %vm1488, %v5291, 0.0
        %5296 = vadd.xlane.f32.xlu0 %v5295
        %v5297 = vpop.xlane.xlu0 %5296
        %v5298 = vmul.f32 %v5294, %v3448
        %v5299 = vmul.f32 %v5297, %v3448
        %v5300 = vadd.f32 %v5298, 1e-05
        %v5301 = vadd.f32 %v5299, 1e-05
        %v5302 = vrsqrt.pop %v5300
        %v5303 = vrsqrt.pop %v5301
        %v5304 = vmul.f32 %v5288, %v5302
        %v5305 = vmul.f32 %v5289, %v5303
        %v5307 = vlaneseq
        %v5308 = vshrl.u32 %v5307, 7
        %v5309 = vsub.s32 0, %v5308
        %v5310 = vrot.slane %v5277, %v5309
        %v5312 = vmul.f32 %v5304, %v5310
        %v5313 = vmul.f32 %v5305, %v5310
        %v5315 = vlaneseq
        %v5316 = vshrl.u32 %v5315, 7
        %v5317 = vsub.s32 0, %v5316
        %v5318 = vrot.slane %v5279, %v5317
        %v5320 = vadd.f32 %v5312, %v5318
        %v5321 = vadd.f32 %v5313, %v5318
        %s5322 = scalar_lea.vmem %s67, 16
        %v5323 = vld [vmem:[%s5322] sm:$0xff]
        %v5324 = vld [vmem:[%s5322 + $0x8] sm:$0xff]
        %s5325 = scalar_lea.vmem %s69, 1
        %v5326 = vld [vmem:[%s5325] sm:$0x1]
        %v5328 = vlaneseq
        %v5329 = vshrl.u32 %v5328, 7
        %v5330 = vsub.s32 0, %v5329
        %v5331 = vrot.slane %v5326, %v5330
        %v5334 = vsel %vm1258, %v4383, 0
        %5336 = vmatprep.subr.mxu0 0.0
        %5337 = vmatpush1.msra.mxu0 %v5323
        %5338 = vmatprep.subr.mxu0 0.0
        %5339 = vmatpush1.msra.mxu0 %v5324
        %5340 = vmatprep.subr.mxu0 0.0
        %5341 = vmatpush1.msra.mxu0 0.0
        %5342 = vmatprep.subr.mxu0 0.0
        %5343 = vmatpush1.msra.mxu0 0.0
        %5344 = vmatprep.subr.mxu0 0.0
        %5345 = vmatpush1.msra.mxu0 0.0
        %5346 = vmatprep.subr.mxu0 0.0
        %5347 = vmatpush1.msra.mxu0 0.0
        %5348 = vmatprep.subr.mxu0 0.0
        %5349 = vmatpush1.msra.mxu0 0.0
        %5350 = vmatprep.subr.mxu0 0.0
        %5351 = vmatpush1.msra.mxu0 0.0
        %5352 = vmatprep.subr.mxu0 0.0
        %5353 = vmatpush1.msra.mxu0 0.0
        %5354 = vmatprep.subr.mxu0 0.0
        %5355 = vmatpush1.msra.mxu0 0.0
        %5356 = vmatprep.subr.mxu0 0.0
        %5357 = vmatpush1.msra.mxu0 0.0
        %5358 = vmatprep.subr.mxu0 0.0
        %5359 = vmatpush1.msra.mxu0 0.0
        %5360 = vmatprep.subr.mxu0 0.0
        %5361 = vmatpush1.msra.mxu0 0.0
        %5362 = vmatprep.subr.mxu0 0.0
        %5363 = vmatpush1.msra.mxu0 0.0
        %5364 = vmatprep.subr.mxu0 0.0
        %5365 = vmatpush1.msra.mxu0 0.0
        %5366 = vmatprep.subr.mxu0 0.0
        %5367 = vmatpush1.msra.mxu0 0.0
        %5368 = vmatprep.subr.mxu0 0.0
        %5369 = vmatpush1.msra.mxu0 0.0
        %5370 = vmatprep.subr.mxu0 0.0
        %5371 = vmatpush1.msra.mxu0 0.0
        %5372 = vmatprep.subr.mxu0 0.0
        %5373 = vmatpush1.msra.mxu0 0.0
        %5374 = vmatprep.subr.mxu0 0.0
        %5375 = vmatpush1.msra.mxu0 0.0
        %5376 = vmatprep.subr.mxu0 0.0
        %5377 = vmatpush1.msra.mxu0 0.0
        %5378 = vmatprep.subr.mxu0 0.0
        %5379 = vmatpush1.msra.mxu0 0.0
        %5380 = vmatprep.subr.mxu0 0.0
        %5381 = vmatpush1.msra.mxu0 0.0
        %5382 = vmatprep.subr.mxu0 0.0
        %5383 = vmatpush1.msra.mxu0 0.0
        %5384 = vmatprep.subr.mxu0 0.0
        %5385 = vmatpush1.msra.mxu0 0.0
        %5386 = vmatprep.subr.mxu0 0.0
        %5387 = vmatpush1.msra.mxu0 0.0
        %5388 = vmatprep.subr.mxu0 0.0
        %5389 = vmatpush1.msra.mxu0 0.0
        %5390 = vmatprep.subr.mxu0 0.0
        %5391 = vmatpush1.msra.mxu0 0.0
        %5392 = vmatprep.subr.mxu0 0.0
        %5393 = vmatpush1.msra.mxu0 0.0
        %5394 = vmatprep.subr.mxu0 0.0
        %5395 = vmatpush1.msra.mxu0 0.0
        %5396 = vmatprep.subr.mxu0 0.0
        %5397 = vmatpush1.msra.mxu0 0.0
        %5398 = vmatprep.subr.mxu0 0.0
        %5399 = vmatpush1.msra.mxu0 0.0
        %5400 = vmatprep.mubr.f32.mxu0 0.0
        %5401 = vmatmul.mubr.f32.gmra.mrb[0].mxu0 %v5334
        %v5402 = vpop.f32.mrb[0].mxu0
        %v5403 = vadd.f32 %v5331, %v5402
        %v5404 = vpop.f32.mrb[0].mxu0
        %5405 = vdwg.mxu0
        %v5407 = vsel %vm1488, %v5320, 0
        %v5410 = vsel %vm1488, %v5321, 0
        %5412 = vmatprep.subr.mxu0 0.0
        %5413 = vmatpush1.xpose.msra.mxu0 %v5407
        %5414 = vmatprep.subr.mxu0 0.0
        %5415 = vmatpush1.xpose.msra.mxu0 %v5410
        %5416 = vmatprep.subr.mxu0 0.0
        %5417 = vmatpush1.xpose.msra.mxu0 0.0
        %5418 = vmatprep.subr.mxu0 0.0
        %5419 = vmatpush1.xpose.msra.mxu0 0.0
        %5420 = vmatprep.subr.mxu0 0.0
        %5421 = vmatpush1.xpose.msra.mxu0 0.0
        %5422 = vmatprep.subr.mxu0 0.0
        %5423 = vmatpush1.xpose.msra.mxu0 0.0
        %5424 = vmatprep.subr.mxu0 0.0
        %5425 = vmatpush1.xpose.msra.mxu0 0.0
        %5426 = vmatprep.subr.mxu0 0.0
        %5427 = vmatpush1.xpose.msra.mxu0 0.0
        %5428 = vmatprep.subr.mxu0 0.0
        %5429 = vmatpush1.xpose.msra.mxu0 0.0
        %5430 = vmatprep.subr.mxu0 0.0
        %5431 = vmatpush1.xpose.msra.mxu0 0.0
        %5432 = vmatprep.subr.mxu0 0.0
        %5433 = vmatpush1.xpose.msra.mxu0 0.0
        %5434 = vmatprep.subr.mxu0 0.0
        %5435 = vmatpush1.xpose.msra.mxu0 0.0
        %5436 = vmatprep.subr.mxu0 0.0
        %5437 = vmatpush1.xpose.msra.mxu0 0.0
        %5438 = vmatprep.subr.mxu0 0.0
        %5439 = vmatpush1.xpose.msra.mxu0 0.0
        %5440 = vmatprep.subr.mxu0 0.0
        %5441 = vmatpush1.xpose.msra.mxu0 0.0
        %5442 = vmatprep.subr.mxu0 0.0
        %5443 = vmatpush1.xpose.msra.mxu0 0.0
        %5444 = vmatprep.subr.mxu0 0.0
        %5445 = vmatpush1.xpose.msra.mxu0 0.0
        %5446 = vmatprep.subr.mxu0 0.0
        %5447 = vmatpush1.xpose.msra.mxu0 0.0
        %5448 = vmatprep.subr.mxu0 0.0
        %5449 = vmatpush1.xpose.msra.mxu0 0.0
        %5450 = vmatprep.subr.mxu0 0.0
        %5451 = vmatpush1.xpose.msra.mxu0 0.0
        %5452 = vmatprep.subr.mxu0 0.0
        %5453 = vmatpush1.xpose.msra.mxu0 0.0
        %5454 = vmatprep.subr.mxu0 0.0
        %5455 = vmatpush1.xpose.msra.mxu0 0.0
        %5456 = vmatprep.subr.mxu0 0.0
        %5457 = vmatpush1.xpose.msra.mxu0 0.0
        %5458 = vmatprep.subr.mxu0 0.0
        %5459 = vmatpush1.xpose.msra.mxu0 0.0
        %5460 = vmatprep.subr.mxu0 0.0
        %5461 = vmatpush1.xpose.msra.mxu0 0.0
        %5462 = vmatprep.subr.mxu0 0.0
        %5463 = vmatpush1.xpose.msra.mxu0 0.0
        %5464 = vmatprep.subr.mxu0 0.0
        %5465 = vmatpush1.xpose.msra.mxu0 0.0
        %5466 = vmatprep.subr.mxu0 0.0
        %5467 = vmatpush1.xpose.msra.mxu0 0.0
        %5468 = vmatprep.subr.mxu0 0.0
        %5469 = vmatpush1.xpose.msra.mxu0 0.0
        %5470 = vmatprep.subr.mxu0 0.0
        %5471 = vmatpush1.xpose.msra.mxu0 0.0
        %5472 = vmatprep.subr.mxu0 0.0
        %5473 = vmatpush1.xpose.msra.mxu0 0.0
        %5474 = vmatprep.subr.mxu0 0.0
        %5475 = vmatpush1.xpose.msra.mxu0 0.0
        %5476 = vmatprep.mubr.f32.mxu0 0.0
        %5477 = vmatmul.mubr.f32.gmra.mrb[0].mxu0 %v1490
        %v5478 = vpop.f32.mrb[0].mxu0
        %v5479 = vadd.f32 0.0, %v5478
        %v5480 = vpop.f32.mrb[0].mxu0
        %5481 = vmatprep.mubr.f32.mxu0 0.0
        %5482 = vmatmul.mubr.f32.gmra.mrb[0].mxu0 %v1493
        %v5483 = vpop.f32.mrb[0].mxu0
        %v5484 = vadd.f32 0.0, %v5483
        %v5485 = vpop.f32.mrb[0].mxu0
        %5486 = vmatprep.mubr.f32.mxu0 0.0
        %5487 = vmatmul.mubr.f32.gmra.mrb[0].mxu0 %v1496
        %v5488 = vpop.f32.mrb[0].mxu0
        %v5489 = vadd.f32 0.0, %v5488
        %v5490 = vpop.f32.mrb[0].mxu0
        %5491 = vmatprep.mubr.f32.mxu0 0.0
        %5492 = vmatmul.mubr.f32.gmra.mrb[0].mxu0 %v1499
        %v5493 = vpop.f32.mrb[0].mxu0
        %v5494 = vadd.f32 0.0, %v5493
        %v5495 = vpop.f32.mrb[0].mxu0
        %5496 = vdwg.mxu0
        %5499 = vrot.lane.b32.xlu0 %v5323, 112
        %v5500 = vpop.permute.xlu0 %5499
        %5501 = vrot.lane.b32.xlu0 %v5324, 112
        %v5502 = vpop.permute.xlu0 %5501
        %5505 = vrot.lane.b32.xlu0 %v5331, 112
        %v5506 = vpop.permute.xlu0 %5505
        %v5509 = vsel %vm1258, %v5479, 0
        %v5512 = vsel %vm1258, %v5484, 0
        %v5515 = vsel %vm1258, %v5489, 0
        %v5518 = vsel %vm1258, %v5494, 0
        %5520 = vmatprep.subr.mxu0 0.0
        %5521 = vmatpush1.msra.mxu0 %v5500
        %5522 = vmatprep.subr.mxu0 0.0
        %5523 = vmatpush1.msra.mxu0 %v5502
        %5524 = vmatprep.subr.mxu0 0.0
        %5525 = vmatpush1.msra.mxu0 0.0
        %5526 = vmatprep.subr.mxu0 0.0
        %5527 = vmatpush1.msra.mxu0 0.0
        %5528 = vmatprep.subr.mxu0 0.0
        %5529 = vmatpush1.msra.mxu0 0.0
        %5530 = vmatprep.subr.mxu0 0.0
        %5531 = vmatpush1.msra.mxu0 0.0
        %5532 = vmatprep.subr.mxu0 0.0
        %5533 = vmatpush1.msra.mxu0 0.0
        %5534 = vmatprep.subr.mxu0 0.0
        %5535 = vmatpush1.msra.mxu0 0.0
        %5536 = vmatprep.subr.mxu0 0.0
        %5537 = vmatpush1.msra.mxu0 0.0
        %5538 = vmatprep.subr.mxu0 0.0
        %5539 = vmatpush1.msra.mxu0 0.0
        %5540 = vmatprep.subr.mxu0 0.0
        %5541 = vmatpush1.msra.mxu0 0.0
        %5542 = vmatprep.subr.mxu0 0.0
        %5543 = vmatpush1.msra.mxu0 0.0
        %5544 = vmatprep.subr.mxu0 0.0
        %5545 = vmatpush1.msra.mxu0 0.0
        %5546 = vmatprep.subr.mxu0 0.0
        %5547 = vmatpush1.msra.mxu0 0.0
        %5548 = vmatprep.subr.mxu0 0.0
        %5549 = vmatpush1.msra.mxu0 0.0
        %5550 = vmatprep.subr.mxu0 0.0
        %5551 = vmatpush1.msra.mxu0 0.0
        %5552 = vmatprep.subr.mxu0 0.0
        %5553 = vmatpush1.msra.mxu0 0.0
        %5554 = vmatprep.subr.mxu0 0.0
        %5555 = vmatpush1.msra.mxu0 0.0
        %5556 = vmatprep.subr.mxu0 0.0
        %5557 = vmatpush1.msra.mxu0 0.0
        %5558 = vmatprep.subr.mxu0 0.0
        %5559 = vmatpush1.msra.mxu0 0.0
        %5560 = vmatprep.subr.mxu0 0.0
        %5561 = vmatpush1.msra.mxu0 0.0
        %5562 = vmatprep.subr.mxu0 0.0
        %5563 = vmatpush1.msra.mxu0 0.0
        %5564 = vmatprep.subr.mxu0 0.0
        %5565 = vmatpush1.msra.mxu0 0.0
        %5566 = vmatprep.subr.mxu0 0.0
        %5567 = vmatpush1.msra.mxu0 0.0
        %5568 = vmatprep.subr.mxu0 0.0
        %5569 = vmatpush1.msra.mxu0 0.0
        %5570 = vmatprep.subr.mxu0 0.0
        %5571 = vmatpush1.msra.mxu0 0.0
        %5572 = vmatprep.subr.mxu0 0.0
        %5573 = vmatpush1.msra.mxu0 0.0
        %5574 = vmatprep.subr.mxu0 0.0
        %5575 = vmatpush1.msra.mxu0 0.0
        %5576 = vmatprep.subr.mxu0 0.0
        %5577 = vmatpush1.msra.mxu0 0.0
        %5578 = vmatprep.subr.mxu0 0.0
        %5579 = vmatpush1.msra.mxu0 0.0
        %5580 = vmatprep.subr.mxu0 0.0
        %5581 = vmatpush1.msra.mxu0 0.0
        %5582 = vmatprep.subr.mxu0 0.0
        %5583 = vmatpush1.msra.mxu0 0.0
        %5584 = vmatprep.mubr.f32.mxu0 0.0
        %5585 = vmatmul.mubr.f32.gmra.mrb[0].mxu0 %v5509
        %v5586 = vpop.f32.mrb[0].mxu0
        %v5587 = vadd.f32 %v5506, %v5586
        %v5588 = vpop.f32.mrb[0].mxu0
        %5589 = vmatprep.mubr.f32.mxu0 0.0
        %5590 = vmatmul.mubr.f32.gmra.mrb[0].mxu0 %v5512
        %v5591 = vpop.f32.mrb[0].mxu0
        %v5592 = vadd.f32 %v5506, %v5591
        %v5593 = vpop.f32.mrb[0].mxu0
        %5594 = vmatprep.mubr.f32.mxu0 0.0
        %5595 = vmatmul.mubr.f32.gmra.mrb[0].mxu0 %v5515
        %v5596 = vpop.f32.mrb[0].mxu0
        %v5597 = vadd.f32 %v5506, %v5596
        %v5598 = vpop.f32.mrb[0].mxu0
        %5599 = vmatprep.mubr.f32.mxu0 0.0
        %5600 = vmatmul.mubr.f32.gmra.mrb[0].mxu0 %v5518
        %v5601 = vpop.f32.mrb[0].mxu0
        %v5602 = vadd.f32 %v5506, %v5601
        %v5603 = vpop.f32.mrb[0].mxu0
        %5604 = vdwg.mxu0
        %s5605 = scalar_lea.vmem %s71, 16
        %v5606 = vld [vmem:[%s5605] sm:$0xff]
        %v5607 = vld [vmem:[%s5605 + $0x8] sm:$0xff]
        %s5608 = scalar_lea.vmem %s73, 1
        %v5609 = vld [vmem:[%s5608] sm:$0x1]
        %v5610 = vmul.f32 %v5403, %v1456
        %v5611 = vmul.f32 %v5403, %v1457
        %v5612 = vmul.f32 %v5403, %v1458
        %v5613 = vmul.f32 %v5403, %v1459
        %v5615 = vsel %vm1258, %v5610, 0
        %v5618 = vsel %vm1258, %v5611, 0
        %v5621 = vsel %vm1258, %v5612, 0
        %v5624 = vsel %vm1258, %v5613, 0
        %v5627 = vsel %vm1258, %v5587, 0
        %v5630 = vsel %vm1258, %v5592, 0
        %v5633 = vsel %vm1258, %v5597, 0
        %v5636 = vsel %vm1258, %v5602, 0
        %5638 = vmatprep.subr.mxu0 0.0
        %5639 = vmatpush1.xpose.msra.mxu0 %v5627
        %5640 = vmatprep.subr.mxu0 0.0
        %5641 = vmatpush1.xpose.msra.mxu0 %v5630
        %5642 = vmatprep.subr.mxu0 0.0
        %5643 = vmatpush1.xpose.msra.mxu0 %v5633
        %5644 = vmatprep.subr.mxu0 0.0
        %5645 = vmatpush1.xpose.msra.mxu0 %v5636
        %5646 = vmatprep.subr.mxu0 0.0
        %5647 = vmatpush1.xpose.msra.mxu0 %v5627
        %5648 = vmatprep.subr.mxu0 0.0
        %5649 = vmatpush1.xpose.msra.mxu0 %v5630
        %5650 = vmatprep.subr.mxu0 0.0
        %5651 = vmatpush1.xpose.msra.mxu0 %v5633
        %5652 = vmatprep.subr.mxu0 0.0
        %5653 = vmatpush1.xpose.msra.mxu0 %v5636
        %5654 = vmatprep.subr.mxu0 0.0
        %5655 = vmatpush1.xpose.msra.mxu0 %v5627
        %5656 = vmatprep.subr.mxu0 0.0
        %5657 = vmatpush1.xpose.msra.mxu0 %v5630
        %5658 = vmatprep.subr.mxu0 0.0
        %5659 = vmatpush1.xpose.msra.mxu0 %v5633
        %5660 = vmatprep.subr.mxu0 0.0
        %5661 = vmatpush1.xpose.msra.mxu0 %v5636
        %5662 = vmatprep.subr.mxu0 0.0
        %5663 = vmatpush1.xpose.msra.mxu0 %v5627
        %5664 = vmatprep.subr.mxu0 0.0
        %5665 = vmatpush1.xpose.msra.mxu0 %v5630
        %5666 = vmatprep.subr.mxu0 0.0
        %5667 = vmatpush1.xpose.msra.mxu0 %v5633
        %5668 = vmatprep.subr.mxu0 0.0
        %5669 = vmatpush1.xpose.msra.mxu0 %v5636
        %5670 = vmatprep.subr.mxu0 0.0
        %5671 = vmatpush1.xpose.msra.mxu0 0.0
        %5672 = vmatprep.subr.mxu0 0.0
        %5673 = vmatpush1.xpose.msra.mxu0 0.0
        %5674 = vmatprep.subr.mxu0 0.0
        %5675 = vmatpush1.xpose.msra.mxu0 0.0
        %5676 = vmatprep.subr.mxu0 0.0
        %5677 = vmatpush1.xpose.msra.mxu0 0.0
        %5678 = vmatprep.subr.mxu0 0.0
        %5679 = vmatpush1.xpose.msra.mxu0 0.0
        %5680 = vmatprep.subr.mxu0 0.0
        %5681 = vmatpush1.xpose.msra.mxu0 0.0
        %5682 = vmatprep.subr.mxu0 0.0
        %5683 = vmatpush1.xpose.msra.mxu0 0.0
        %5684 = vmatprep.subr.mxu0 0.0
        %5685 = vmatpush1.xpose.msra.mxu0 0.0
        %5686 = vmatprep.subr.mxu0 0.0
        %5687 = vmatpush1.xpose.msra.mxu0 0.0
        %5688 = vmatprep.subr.mxu0 0.0
        %5689 = vmatpush1.xpose.msra.mxu0 0.0
        %5690 = vmatprep.subr.mxu0 0.0
        %5691 = vmatpush1.xpose.msra.mxu0 0.0
        %5692 = vmatprep.subr.mxu0 0.0
        %5693 = vmatpush1.xpose.msra.mxu0 0.0
        %5694 = vmatprep.subr.mxu0 0.0
        %5695 = vmatpush1.xpose.msra.mxu0 0.0
        %5696 = vmatprep.subr.mxu0 0.0
        %5697 = vmatpush1.xpose.msra.mxu0 0.0
        %5698 = vmatprep.subr.mxu0 0.0
        %5699 = vmatpush1.xpose.msra.mxu0 0.0
        %5700 = vmatprep.subr.mxu0 0.0
        %5701 = vmatpush1.xpose.msra.mxu0 0.0
        %5702 = vmatprep.mubr.f32.mxu0 0.0
        %5703 = vmatmul.mubr.f32.gmra.mrb[0].mxu0 %v5615
        %v5704 = vpop.f32.mrb[0].mxu0
        %v5705 = vadd.f32 0.0, %v5704
        %v5706 = vpop.f32.mrb[0].mxu0
        %5707 = vmatprep.mubr.f32.mxu0 0.0
        %5708 = vmatmul.mubr.f32.gmra.mrb[0].mxu0 %v5618
        %v5709 = vpop.f32.mrb[0].mxu0
        %v5710 = vadd.f32 0.0, %v5709
        %v5711 = vpop.f32.mrb[0].mxu0
        %5712 = vmatprep.mubr.f32.mxu0 0.0
        %5713 = vmatmul.mubr.f32.gmra.mrb[0].mxu0 %v5621
        %v5714 = vpop.f32.mrb[0].mxu0
        %v5715 = vadd.f32 0.0, %v5714
        %v5716 = vpop.f32.mrb[0].mxu0
        %5717 = vmatprep.mubr.f32.mxu0 0.0
        %5718 = vmatmul.mubr.f32.gmra.mrb[0].mxu0 %v5624
        %v5719 = vpop.f32.mrb[0].mxu0
        %v5720 = vadd.f32 0.0, %v5719
        %v5721 = vpop.f32.mrb[0].mxu0
        %5722 = vdwg.mxu0
        %v5723 = vmul.f32 %v5705, 0.5
        %v5724 = vmul.f32 %v5710, 0.5
        %v5725 = vmul.f32 %v5715, 0.5
        %v5726 = vmul.f32 %v5720, 0.5
        %v5727 = vadd.f32 %v5723, %v1484
        %v5728 = vadd.f32 %v5724, %v1485
        %v5729 = vadd.f32 %v5725, %v1486
        %v5730 = vadd.f32 %v5726, %v1487
        %5731 = vmax.xlane.f32.xlu0 %v5727
        %v5732 = vpop.xlane.xlu0 %5731
        %5733 = vmax.xlane.f32.xlu0 %v5728
        %v5734 = vpop.xlane.xlu0 %5733
        %5735 = vmax.xlane.f32.xlu0 %v5729
        %v5736 = vpop.xlane.xlu0 %5735
        %5737 = vmax.xlane.f32.xlu0 %v5730
        %v5738 = vpop.xlane.xlu0 %5737
        %v5739 = vsub.f32 %v5727, %v5732
        %v5740 = vsub.f32 %v5728, %v5734
        %v5741 = vsub.f32 %v5729, %v5736
        %v5742 = vsub.f32 %v5730, %v5738
        %v5743 = vmul.f32 %v5739, 1.442695
        %v5744 = vpow.pop %v5743
        %v5745 = vmul.f32 %v5740, 1.442695
        %v5746 = vpow.pop %v5745
        %v5747 = vmul.f32 %v5741, 1.442695
        %v5748 = vpow.pop %v5747
        %v5749 = vmul.f32 %v5742, 1.442695
        %v5750 = vpow.pop %v5749
        %5751 = vadd.xlane.f32.xlu0 %v5744
        %v5752 = vpop.xlane.xlu0 %5751
        %5753 = vadd.xlane.f32.xlu0 %v5746
        %v5754 = vpop.xlane.xlu0 %5753
        %5755 = vadd.xlane.f32.xlu0 %v5748
        %v5756 = vpop.xlane.xlu0 %5755
        %5757 = vadd.xlane.f32.xlu0 %v5750
        %v5758 = vpop.xlane.xlu0 %5757
        %v5759 = vrcp.pop %v5752
        %v5760 = vmul.f32 %v5744, %v5759
        %v5761 = vrcp.pop %v5754
        %v5762 = vmul.f32 %v5746, %v5761
        %v5763 = vrcp.pop %v5756
        %v5764 = vmul.f32 %v5748, %v5763
        %v5765 = vrcp.pop %v5758
        %v5766 = vmul.f32 %v5750, %v5765
        %5767 = vrot.lane.b32.xlu0 %v5587, 112
        %v5768 = vpop.permute.xlu0 %5767
        %5769 = vrot.lane.b32.xlu0 %v5592, 112
        %v5770 = vpop.permute.xlu0 %5769
        %5771 = vrot.lane.b32.xlu0 %v5597, 112
        %v5772 = vpop.permute.xlu0 %5771
        %5773 = vrot.lane.b32.xlu0 %v5602, 112
        %v5774 = vpop.permute.xlu0 %5773
        %5779 = vmatprep.subr.mxu0 0.0
        %5780 = vmatpush1.msra.mxu0 %v5768
        %5781 = vmatprep.subr.mxu0 0.0
        %5782 = vmatpush1.msra.mxu0 %v5770
        %5783 = vmatprep.subr.mxu0 0.0
        %5784 = vmatpush1.msra.mxu0 %v5772
        %5785 = vmatprep.subr.mxu0 0.0
        %5786 = vmatpush1.msra.mxu0 %v5774
        %5787 = vmatprep.subr.mxu0 0.0
        %5788 = vmatpush1.msra.mxu0 %v5768
        %5789 = vmatprep.subr.mxu0 0.0
        %5790 = vmatpush1.msra.mxu0 %v5770
        %5791 = vmatprep.subr.mxu0 0.0
        %5792 = vmatpush1.msra.mxu0 %v5772
        %5793 = vmatprep.subr.mxu0 0.0
        %5794 = vmatpush1.msra.mxu0 %v5774
        %5795 = vmatprep.subr.mxu0 0.0
        %5796 = vmatpush1.msra.mxu0 %v5768
        %5797 = vmatprep.subr.mxu0 0.0
        %5798 = vmatpush1.msra.mxu0 %v5770
        %5799 = vmatprep.subr.mxu0 0.0
        %5800 = vmatpush1.msra.mxu0 %v5772
        %5801 = vmatprep.subr.mxu0 0.0
        %5802 = vmatpush1.msra.mxu0 %v5774
        %5803 = vmatprep.subr.mxu0 0.0
        %5804 = vmatpush1.msra.mxu0 %v5768
        %5805 = vmatprep.subr.mxu0 0.0
        %5806 = vmatpush1.msra.mxu0 %v5770
        %5807 = vmatprep.subr.mxu0 0.0
        %5808 = vmatpush1.msra.mxu0 %v5772
        %5809 = vmatprep.subr.mxu0 0.0
        %5810 = vmatpush1.msra.mxu0 %v5774
        %5811 = vmatprep.subr.mxu0 0.0
        %5812 = vmatpush1.msra.mxu0 0.0
        %5813 = vmatprep.subr.mxu0 0.0
        %5814 = vmatpush1.msra.mxu0 0.0
        %5815 = vmatprep.subr.mxu0 0.0
        %5816 = vmatpush1.msra.mxu0 0.0
        %5817 = vmatprep.subr.mxu0 0.0
        %5818 = vmatpush1.msra.mxu0 0.0
        %5819 = vmatprep.subr.mxu0 0.0
        %5820 = vmatpush1.msra.mxu0 0.0
        %5821 = vmatprep.subr.mxu0 0.0
        %5822 = vmatpush1.msra.mxu0 0.0
        %5823 = vmatprep.subr.mxu0 0.0
        %5824 = vmatpush1.msra.mxu0 0.0
        %5825 = vmatprep.subr.mxu0 0.0
        %5826 = vmatpush1.msra.mxu0 0.0
        %5827 = vmatprep.subr.mxu0 0.0
        %5828 = vmatpush1.msra.mxu0 0.0
        %5829 = vmatprep.subr.mxu0 0.0
        %5830 = vmatpush1.msra.mxu0 0.0
        %5831 = vmatprep.subr.mxu0 0.0
        %5832 = vmatpush1.msra.mxu0 0.0
        %5833 = vmatprep.subr.mxu0 0.0
        %5834 = vmatpush1.msra.mxu0 0.0
        %5835 = vmatprep.subr.mxu0 0.0
        %5836 = vmatpush1.msra.mxu0 0.0
        %5837 = vmatprep.subr.mxu0 0.0
        %5838 = vmatpush1.msra.mxu0 0.0
        %5839 = vmatprep.subr.mxu0 0.0
        %5840 = vmatpush1.msra.mxu0 0.0
        %5841 = vmatprep.subr.mxu0 0.0
        %5842 = vmatpush1.msra.mxu0 0.0
        %5843 = vmatprep.mubr.f32.mxu0 0.0
        %5844 = vmatmul.mubr.f32.gmra.mrb[0].mxu0 %v5760
        %v5845 = vpop.f32.mrb[0].mxu0
        %v5846 = vadd.f32 0.0, %v5845
        %v5847 = vpop.f32.mrb[0].mxu0
        %5848 = vmatprep.mubr.f32.mxu0 0.0
        %5849 = vmatmul.mubr.f32.gmra.mrb[0].mxu0 %v5762
        %v5850 = vpop.f32.mrb[0].mxu0
        %v5851 = vadd.f32 0.0, %v5850
        %v5852 = vpop.f32.mrb[0].mxu0
        %5853 = vmatprep.mubr.f32.mxu0 0.0
        %5854 = vmatmul.mubr.f32.gmra.mrb[0].mxu0 %v5764
        %v5855 = vpop.f32.mrb[0].mxu0
        %v5856 = vadd.f32 0.0, %v5855
        %v5857 = vpop.f32.mrb[0].mxu0
        %5858 = vmatprep.mubr.f32.mxu0 0.0
        %5859 = vmatmul.mubr.f32.gmra.mrb[0].mxu0 %v5766
        %v5860 = vpop.f32.mrb[0].mxu0
        %v5861 = vadd.f32 0.0, %v5860
        %v5862 = vpop.f32.mrb[0].mxu0
        %5863 = vdwg.mxu0
        %v5864 = vmul.f32 %v5846, %v1456
        %v5865 = vmul.f32 %v5851, %v1457
        %v5866 = vmul.f32 %v5856, %v1458
        %v5867 = vmul.f32 %v5861, %v1459
        %v5869 = vsel %vm1258, %v5864, 0
        %v5872 = vsel %vm1258, %v5865, 0
        %v5875 = vsel %vm1258, %v5866, 0
        %v5878 = vsel %vm1258, %v5867, 0
        %5880 = vmatprep.subr.mxu0 0.0
        %5881 = vmatpush1.msra.mxu0 %v5606
        %5882 = vmatprep.subr.mxu0 0.0
        %5883 = vmatpush1.msra.mxu0 %v5607
        %5884 = vmatprep.subr.mxu0 0.0
        %5885 = vmatpush1.msra.mxu0 0.0
        %5886 = vmatprep.subr.mxu0 0.0
        %5887 = vmatpush1.msra.mxu0 0.0
        %5888 = vmatprep.subr.mxu0 0.0
        %5889 = vmatpush1.msra.mxu0 0.0
        %5890 = vmatprep.subr.mxu0 0.0
        %5891 = vmatpush1.msra.mxu0 0.0
        %5892 = vmatprep.subr.mxu0 0.0
        %5893 = vmatpush1.msra.mxu0 0.0
        %5894 = vmatprep.subr.mxu0 0.0
        %5895 = vmatpush1.msra.mxu0 0.0
        %5896 = vmatprep.subr.mxu0 0.0
        %5897 = vmatpush1.msra.mxu0 0.0
        %5898 = vmatprep.subr.mxu0 0.0
        %5899 = vmatpush1.msra.mxu0 0.0
        %5900 = vmatprep.subr.mxu0 0.0
        %5901 = vmatpush1.msra.mxu0 0.0
        %5902 = vmatprep.subr.mxu0 0.0
        %5903 = vmatpush1.msra.mxu0 0.0
        %5904 = vmatprep.subr.mxu0 0.0
        %5905 = vmatpush1.msra.mxu0 0.0
        %5906 = vmatprep.subr.mxu0 0.0
        %5907 = vmatpush1.msra.mxu0 0.0
        %5908 = vmatprep.subr.mxu0 0.0
        %5909 = vmatpush1.msra.mxu0 0.0
        %5910 = vmatprep.subr.mxu0 0.0
        %5911 = vmatpush1.msra.mxu0 0.0
        %5912 = vmatprep.subr.mxu0 0.0
        %5913 = vmatpush1.msra.mxu0 0.0
        %5914 = vmatprep.subr.mxu0 0.0
        %5915 = vmatpush1.msra.mxu0 0.0
        %5916 = vmatprep.subr.mxu0 0.0
        %5917 = vmatpush1.msra.mxu0 0.0
        %5918 = vmatprep.subr.mxu0 0.0
        %5919 = vmatpush1.msra.mxu0 0.0
        %5920 = vmatprep.subr.mxu0 0.0
        %5921 = vmatpush1.msra.mxu0 0.0
        %5922 = vmatprep.subr.mxu0 0.0
        %5923 = vmatpush1.msra.mxu0 0.0
        %5924 = vmatprep.subr.mxu0 0.0
        %5925 = vmatpush1.msra.mxu0 0.0
        %5926 = vmatprep.subr.mxu0 0.0
        %5927 = vmatpush1.msra.mxu0 0.0
        %5928 = vmatprep.subr.mxu0 0.0
        %5929 = vmatpush1.msra.mxu0 0.0
        %5930 = vmatprep.subr.mxu0 0.0
        %5931 = vmatpush1.msra.mxu0 0.0
        %5932 = vmatprep.subr.mxu0 0.0
        %5933 = vmatpush1.msra.mxu0 0.0
        %5934 = vmatprep.subr.mxu0 0.0
        %5935 = vmatpush1.msra.mxu0 0.0
        %5936 = vmatprep.subr.mxu0 0.0
        %5937 = vmatpush1.msra.mxu0 0.0
        %5938 = vmatprep.subr.mxu0 0.0
        %5939 = vmatpush1.msra.mxu0 0.0
        %5940 = vmatprep.subr.mxu0 0.0
        %5941 = vmatpush1.msra.mxu0 0.0
        %5942 = vmatprep.subr.mxu0 0.0
        %5943 = vmatpush1.msra.mxu0 0.0
        %5944 = vmatprep.mubr.f32.mxu0 0.0
        %5945 = vmatmul.mubr.f32.gmra.mrb[0].mxu0 %v5869
        %v5946 = vpop.f32.mrb[0].mxu0
        %v5947 = vadd.f32 0.0, %v5946
        %v5948 = vpop.f32.mrb[0].mxu0
        %5949 = vmatprep.mubr.f32.mxu0 0.0
        %5950 = vmatmul.mubr.f32.gmra.mrb[0].mxu0 %v5872
        %v5951 = vpop.f32.mrb[0].mxu0
        %v5952 = vadd.f32 0.0, %v5951
        %v5953 = vpop.f32.mrb[0].mxu0
        %5954 = vmatprep.mubr.f32.mxu0 0.0
        %5955 = vmatmul.mubr.f32.gmra.mrb[0].mxu0 %v5875
        %v5956 = vpop.f32.mrb[0].mxu0
        %v5957 = vadd.f32 0.0, %v5956
        %v5958 = vpop.f32.mrb[0].mxu0
        %5959 = vmatprep.mubr.f32.mxu0 0.0
        %5960 = vmatmul.mubr.f32.gmra.mrb[0].mxu0 %v5878
        %v5961 = vpop.f32.mrb[0].mxu0
        %v5962 = vadd.f32 0.0, %v5961
        %v5963 = vpop.f32.mrb[0].mxu0
        %5964 = vdwg.mxu0
        %v5965 = vadd.f32 %v5947, %v5952
        %v5966 = vadd.f32 %v5965, %v5957
        %v5967 = vadd.f32 %v5966, %v5962
        %v5969 = vlaneseq
        %v5970 = vshrl.u32 %v5969, 7
        %v5971 = vsub.s32 0, %v5970
        %v5972 = vrot.slane %v5609, %v5971
        %v5974 = vadd.f32 %v5967, %v5972
        %v5975 = vadd.f32 %v4383, %v5974
        %v5976 = vld [vmem:[%s75] sm:$0xff]
        %v5977 = vld [vmem:[%s75 + $0x8] sm:$0xff]
        %v5978 = vld [vmem:[%s77] sm:$0x1]
        %v5980 = vlaneseq
        %v5981 = vshrl.u32 %v5980, 7
        %v5982 = vsub.s32 0, %v5981
        %v5983 = vrot.slane %v5978, %v5982
        %v5986 = vsel %vm1258, %v5975, 0
        %5988 = vmatprep.subr.mxu0 0.0
        %5989 = vmatpush1.msra.mxu0 %v5976
        %5990 = vmatprep.subr.mxu0 0.0
        %5991 = vmatpush1.msra.mxu0 %v5977
        %5992 = vmatprep.subr.mxu0 0.0
        %5993 = vmatpush1.msra.mxu0 0.0
        %5994 = vmatprep.subr.mxu0 0.0
        %5995 = vmatpush1.msra.mxu0 0.0
        %5996 = vmatprep.subr.mxu0 0.0
        %5997 = vmatpush1.msra.mxu0 0.0
        %5998 = vmatprep.subr.mxu0 0.0
        %5999 = vmatpush1.msra.mxu0 0.0
        %6000 = vmatprep.subr.mxu0 0.0
        %6001 = vmatpush1.msra.mxu0 0.0
        %6002 = vmatprep.subr.mxu0 0.0
        %6003 = vmatpush1.msra.mxu0 0.0
        %6004 = vmatprep.subr.mxu0 0.0
        %6005 = vmatpush1.msra.mxu0 0.0
        %6006 = vmatprep.subr.mxu0 0.0
        %6007 = vmatpush1.msra.mxu0 0.0
        %6008 = vmatprep.subr.mxu0 0.0
        %6009 = vmatpush1.msra.mxu0 0.0
        %6010 = vmatprep.subr.mxu0 0.0
        %6011 = vmatpush1.msra.mxu0 0.0
        %6012 = vmatprep.subr.mxu0 0.0
        %6013 = vmatpush1.msra.mxu0 0.0
        %6014 = vmatprep.subr.mxu0 0.0
        %6015 = vmatpush1.msra.mxu0 0.0
        %6016 = vmatprep.subr.mxu0 0.0
        %6017 = vmatpush1.msra.mxu0 0.0
        %6018 = vmatprep.subr.mxu0 0.0
        %6019 = vmatpush1.msra.mxu0 0.0
        %6020 = vmatprep.subr.mxu0 0.0
        %6021 = vmatpush1.msra.mxu0 0.0
        %6022 = vmatprep.subr.mxu0 0.0
        %6023 = vmatpush1.msra.mxu0 0.0
        %6024 = vmatprep.subr.mxu0 0.0
        %6025 = vmatpush1.msra.mxu0 0.0
        %6026 = vmatprep.subr.mxu0 0.0
        %6027 = vmatpush1.msra.mxu0 0.0
        %6028 = vmatprep.subr.mxu0 0.0
        %6029 = vmatpush1.msra.mxu0 0.0
        %6030 = vmatprep.subr.mxu0 0.0
        %6031 = vmatpush1.msra.mxu0 0.0
        %6032 = vmatprep.subr.mxu0 0.0
        %6033 = vmatpush1.msra.mxu0 0.0
        %6034 = vmatprep.subr.mxu0 0.0
        %6035 = vmatpush1.msra.mxu0 0.0
        %6036 = vmatprep.subr.mxu0 0.0
        %6037 = vmatpush1.msra.mxu0 0.0
        %6038 = vmatprep.subr.mxu0 0.0
        %6039 = vmatpush1.msra.mxu0 0.0
        %6040 = vmatprep.subr.mxu0 0.0
        %6041 = vmatpush1.msra.mxu0 0.0
        %6042 = vmatprep.subr.mxu0 0.0
        %6043 = vmatpush1.msra.mxu0 0.0
        %6044 = vmatprep.subr.mxu0 0.0
        %6045 = vmatpush1.msra.mxu0 0.0
        %6046 = vmatprep.subr.mxu0 0.0
        %6047 = vmatpush1.msra.mxu0 0.0
        %6048 = vmatprep.subr.mxu0 0.0
        %6049 = vmatpush1.msra.mxu0 0.0
        %6050 = vmatprep.subr.mxu0 0.0
        %6051 = vmatpush1.msra.mxu0 0.0
        %6052 = vmatprep.mubr.f32.mxu0 0.0
        %6053 = vmatmul.mubr.f32.gmra.mrb[0].mxu0 %v5986
        %v6054 = vpop.f32.mrb[0].mxu0
        %v6055 = vadd.f32 %v5983, %v6054
        %v6056 = vpop.f32.mrb[0].mxu0
        %6057 = vdwg.mxu0
        %v6058 = vmul.f32 %v6055, %v1276
        %v6059 = vadd.f32 %v6058, %v1262
        %6060 = vst.msk [vmem:[%s1203] sm:$0xff] %vm1221, %v6059
        %s6061 = sand.u32 %s935, 1
        %s6062 = scalar_lea.sflag [#allocation3], %s6061
        %s6063 = sand.u32 %s935, 1
        %s6064 = smul.addr %s6063, 8
        %s6065 = scalar_lea.vmem [#allocation2], %s6064
        // Predicated region
        $region177: #{tpu_custom_call.1} parent=175 // pred_check
          %p6066 = pneg %p945
        $region178: #{tpu_custom_call.1} parent=175 // pred_check_branch
          %6068 = sbr.rel (%p6066) target = $region180
        $region179: #{tpu_custom_call.1} parent=175 // pred_region
          %s6070 = ssub.s32 128, 128
          %6071 = vsyncadd %s6062, %s6070
          %s6072 = smul.addr %s93, 128
          %s6073 = scalar_lea.hbm %s79, %s6072
          %s6075 = sshll.u32 %s6065, 4
          %s6076 = int_to_ptr.vmem [resolvable:$true] %s6075
          %6078 = dma.vmem_to_hbm [thread:$0]  %s6076, 128, %s6073, %s6062
        $region180: #{tpu_custom_call.1} parent=175 // pred_fallthru
          _
      $region176: #{tpu_custom_call.1} parent=5 // pred_fallthru
        _
      %p6079 = scmp.le.s32.totalorder 2, %s88
      // Predicated region
      $region181: #{tpu_custom_call.1} parent=5 // pred_check
        %p6080 = pneg %p6079
      $region182: #{tpu_custom_call.1} parent=5 // pred_check_branch
        %6082 = sbr.rel (%p6080) target = $region184
      $region183: #{tpu_custom_call.1} parent=5 // pred_region
        %s6083 = ssub.s32 %s88, 2
        // Predicated region
        $region185: #{tpu_custom_call.1} parent=183 // pred_check
          %p6084 = pneg %p951
        $region186: #{tpu_custom_call.1} parent=183 // pred_check_branch
          %6086 = sbr.rel (%p6084) target = $region188
        $region187: #{tpu_custom_call.1} parent=183 // pred_region
          %s6087 = sand.u32 %s936, 1
          %s6088 = scalar_lea.sflag [#allocation3], %s6087
          %s6089 = sand.u32 %s936, 1
          %s6090 = smul.addr %s6089, 8
          %s6091 = scalar_lea.vmem [#allocation2], %s6090
          %6092 = dma.done %s6088, 128
        $region188: #{tpu_custom_call.1} parent=183 // pred_fallthru
          _
      $region184: #{tpu_custom_call.1} parent=5 // pred_fallthru
        _
    $region6: #{tpu_custom_call.1} parent=1 // loop_footer
      %s92 = sadd.s32 1, %s88
    $region7: #{tpu_custom_call.1} parent=1 // loop_footer_branch
      %87 = sbr.rel target = $region3
    $region8: #{tpu_custom_call.1} parent=1 // loop_exit
      _
    %6093 = vsyncpa [#allocation3], 1
    %s6094 = scalar_lea.sflag [#allocation3], 1
    %6095 = vsyncpa %s6094, 1

</llo_original>
